<compile_context>
chip_gen: v6e
topology: v6e:2x2x1
jax: 0.10.0
libtpu: 0.0.40
codegen_flags: <defaults>
</compile_context>

<pallas_src>
import functools
import numpy as np

import jax
import jax.numpy as jnp
from jax import lax
from jax.experimental import pallas as pl
from jax.experimental.pallas import tpu as pltpu


_VMEM_LIMIT = 32 * 1024 * 1024  # explicit scoped-VMEM budget (safe on v5e/v6e/v7x)


def _cparams():
    return pltpu.CompilerParams(dimension_semantics=("parallel",),
                                vmem_limit_bytes=_VMEM_LIMIT)


def _leaky(x, slope):
    return jnp.where(x >= 0.0, x, slope * x)


# ----------------------------------------------------------------------------
# Kernel bodies
# ----------------------------------------------------------------------------

def _bicubic_kernel(x_ref, mwT_ref, mh_ref, y_ref, s_ref, q_ref,
                    *, C, H, W, Hout, Wout, Hc, Wc, dh, dw):
    """Separable bicubic x2 upsample for one batch element + BN1 partial stats.

    x_ref:   (1, C, H, W) f32
    mwT_ref: (W, Wout) bf16    (width interpolation matrix, transposed)
    mh_ref:  (Hout, H) bf16    (height interpolation matrix)
    y_ref:   (1, C, Hc*Wc) bf16   cropped, flattened (lane-dense) output
    s_ref/q_ref: (1, C, 1) f32    per-channel sum / sum-of-squares (for BN1)
    """
    x = x_ref[0].astype(jnp.bfloat16)                               # (C, H, W)
    # Width interpolation: one matmul over all channels*rows (M = C*H).
    xw = x.reshape(C * H, W)
    t = jnp.dot(xw, mwT_ref[...], preferred_element_type=jnp.float32)   # (C*H, Wout)
    t = t.reshape(C, H, Wout).astype(jnp.bfloat16)
    # Height interpolation: batched matmul over channels (in-VMEM, no HBM transpose).
    mh_b = jnp.broadcast_to(mh_ref[...], (C, Hout, H))
    up = lax.dot_general(mh_b, t, (((2,), (1,)), ((0,), (0,))),
                         preferred_element_type=jnp.float32)        # (C, Hout, Wout)
    # Concat's center crop (static offsets; identity when shapes already match).
    up = up[:, dh:dh + Hc, dw:dw + Wc]
    upf = up.reshape(C, Hc * Wc)
    s_ref[0] = jnp.sum(upf, axis=1, keepdims=True)
    q_ref[0] = jnp.sum(upf * upf, axis=1, keepdims=True)
    y_ref[0] = upf.astype(y_ref.dtype)


def _channel_stats_kernel(x_ref, s_ref, q_ref):
    """Per-channel sum / sum-of-squares for one batch element; x_ref: (1, C, S)."""
    x = x_ref[0].astype(jnp.float32)
    s_ref[0] = jnp.sum(x, axis=1, keepdims=True)
    q_ref[0] = jnp.sum(x * x, axis=1, keepdims=True)


def _conv3x3_reflectpad_flat(x, wmat, bias, Cout, Hc, Wc):
    """3x3 'valid' conv (cross-correlation, PyTorch Conv2d) as ONE im2col matmul,
    followed by ReflectionPad2d(1) done in VMEM.

    x:    (Cin, Hc, Wc) bf16
    wmat: (Cout, 9*Cin) bf16, tap order kh-major/kw-minor, channel-minor
    bias: (Cout, 1) f32
    returns (Cout, Hc*Wc) f32   (the padded conv output, flattened)
    """
    Ho, Wo = Hc - 2, Wc - 2
    taps = []
    for kh in range(3):
        for kw in range(3):
            taps.append(x[:, kh:kh + Ho, kw:kw + Wo])               # (Cin, Ho, Wo)
    patches = jnp.concatenate(taps, axis=0)                          # (9*Cin, Ho, Wo)
    patches = patches.reshape(patches.shape[0], Ho * Wo)             # im2col slab
    acc = jnp.dot(wmat, patches, preferred_element_type=jnp.float32)  # (Cout, Ho*Wo)
    acc = acc + bias
    y = acc.reshape(Cout, Ho, Wo)
    # ReflectionPad2d(1): mirror without repeating the edge (rows then cols).
    y = jnp.concatenate([y[:, 1:2, :], y, y[:, Ho - 2:Ho - 1, :]], axis=1)
    y = jnp.concatenate([y[:, :, 1:2], y, y[:, :, Wo - 2:Wo - 1]], axis=2)
    return y.reshape(Cout, Hc * Wc)


def _concat_conv_kernel(x1_ref, x2_ref, w_ref, b_ref, y_ref, s_ref, q_ref,
                        *, C1, C2, Cout, Hc, Wc):
    """Concat(x1_up, x2) in VMEM + conv1 (BN1 pre-folded into w/b) + reflect-pad
    + BN2 partial stats. Outputs the padded conv1 activation (bf16, flattened)."""
    x1 = x1_ref[0].reshape(C1, Hc, Wc)                               # bf16
    x2 = x2_ref[0].reshape(C2, Hc, Wc).astype(jnp.bfloat16)
    x = jnp.concatenate([x1, x2], axis=0)                            # (Cin, Hc, Wc)
    yp = _conv3x3_reflectpad_flat(x, w_ref[...], b_ref[...], Cout, Hc, Wc)
    s_ref[0] = jnp.sum(yp, axis=1, keepdims=True)
    q_ref[0] = jnp.sum(yp * yp, axis=1, keepdims=True)
    y_ref[0] = yp.astype(y_ref.dtype)


def _bn_act_conv_kernel(x_ref, sc_ref, sh_ref, w_ref, b_ref, y_ref, s_ref, q_ref,
                        *, Cout, Hc, Wc, slope):
    """Fused BN2-normalize + LeakyReLU prologue, conv2 im2col matmul, reflect-pad,
    BN3 partial stats."""
    x = x_ref[0].astype(jnp.float32)                                 # (Cout, Hc*Wc)
    x = _leaky(x * sc_ref[...] + sh_ref[...], slope)
    x = x.reshape(Cout, Hc, Wc).astype(jnp.bfloat16)
    yp = _conv3x3_reflectpad_flat(x, w_ref[...], b_ref[...], Cout, Hc, Wc)
    s_ref[0] = jnp.sum(yp, axis=1, keepdims=True)
    q_ref[0] = jnp.sum(yp * yp, axis=1, keepdims=True)
    y_ref[0] = yp.astype(y_ref.dtype)


def _bn_leaky_kernel(x_ref, sc_ref, sh_ref, o_ref, *, slope):
    """Final BN3-normalize + LeakyReLU on the flattened lane-dense layout."""
    x = x_ref[0].astype(jnp.float32)
    y = x * sc_ref[...] + sh_ref[...]
    o_ref[0] = _leaky(y, slope).astype(o_ref.dtype)


# ----------------------------------------------------------------------------
# Bicubic interpolation matrix (torch bicubic, align_corners=True)
# ----------------------------------------------------------------------------

def bicubic_weight_matrix(n_in, n_out):
    A = -0.75
    scale = 0.0 if n_out <= 1 else (n_in - 1) / (n_out - 1)

    def cc1(t):  # |x| <= 1
        return ((A + 2.0) * t - (A + 3.0)) * t * t + 1.0

    def cc2(t):  # 1 < |x| < 2
        return ((A * t - 5.0 * A) * t + 8.0 * A) * t - 4.0 * A

    M = np.zeros((n_out, n_in), dtype=np.float64)
    for i in range(n_out):
        s = i * scale
        f = int(np.floor(s))
        t = s - f
        w = (cc2(t + 1.0), cc1(t), cc1(1.0 - t), cc2(2.0 - t))
        for k in range(4):
            idx = min(max(f - 1 + k, 0), n_in - 1)   # torch clamps out-of-range taps
            M[i, idx] += w[k]
    return np.asarray(M, dtype=np.float32)


# ----------------------------------------------------------------------------
# BN helpers (tiny (C,)-vector math -> XLA glue) and parameter packing (hoisted)
# ----------------------------------------------------------------------------

def _bn_from_sums(sum_c, ssq_c, gamma, beta, cnt, eps):
    mean = sum_c / cnt
    var = jnp.maximum(ssq_c / cnt - mean * mean, 0.0)   # biased var (training-mode BN)
    scale = gamma * lax.rsqrt(var + eps)
    shift = beta - mean * scale
    return scale, shift


def init_params(key, in_ch, out_ch, skip_ch):
    cin = in_ch + (skip_ch if skip_ch > 0 else 1)
    ks = jax.random.split(key, 10)
    p = {}
    p['conv1_w'] = 0.1 * jax.random.normal(ks[0], (out_ch, cin, 3, 3), jnp.float32)
    p['conv1_b'] = 0.1 * jax.random.normal(ks[1], (out_ch,), jnp.float32)
    p['conv2_w'] = 0.1 * jax.random.normal(ks[2], (out_ch, out_ch, 3, 3), jnp.float32)
    p['conv2_b'] = 0.1 * jax.random.normal(ks[3], (out_ch,), jnp.float32)
    p['bn1_g'] = 1.0 + 0.1 * jax.random.normal(ks[4], (cin,), jnp.float32)
    p['bn1_b'] = 0.1 * jax.random.normal(ks[5], (cin,), jnp.float32)
    p['bn2_g'] = 1.0 + 0.1 * jax.random.normal(ks[6], (out_ch,), jnp.float32)
    p['bn2_b'] = 0.1 * jax.random.normal(ks[7], (out_ch,), jnp.float32)
    p['bn3_g'] = 1.0 + 0.1 * jax.random.normal(ks[8], (out_ch,), jnp.float32)
    p['bn3_b'] = 0.1 * jax.random.normal(ks[9], (out_ch,), jnp.float32)
    return p


def prepare_params(p, in_ch, out_ch, skip_ch):
    """One-time weight repacking (hoisted out of the per-forward path)."""
    cin = in_ch + (skip_ch if skip_ch > 0 else 1)
    q = {k: v for k, v in p.items() if not k.startswith('conv')}
    q['conv1_b'] = p['conv1_b']
    # (Cout, Cin, 3, 3) -> (Cout, 9, Cin): tap kh-major/kw-minor, channel-minor.
    q['w1_pack'] = jnp.transpose(p['conv1_w'], (0, 2, 3, 1)).reshape(out_ch, 9, cin)
    q['w2_pack'] = jnp.transpose(p['conv2_w'], (0, 2, 3, 1)).reshape(
        out_ch, 9 * out_ch).astype(jnp.bfloat16)
    q['conv2_b_col'] = p['conv2_b'].reshape(out_ch, 1).astype(jnp.float32)
    return q


# ----------------------------------------------------------------------------
# Forward
# ----------------------------------------------------------------------------

def uupblock_forward(params, x1, x2, negative_slope=0.2, eps=1e-5):
    """x1: (N, in_ch, H, W), x2: (N, skip_ch, 2H, 2W), NCHW (PyTorch convention)."""
    N, C1, H, W = x1.shape
    _, C2, H2, W2 = x2.shape
    Cout = params['conv1_b'].shape[0]
    Cin = C1 + C2
    Hup, Wup = 2 * H, 2 * W
    Hc, Wc = min(Hup, H2), min(Wup, W2)      # Concat's target spatial size
    Sc = Hc * Wc
    Ho, Wo = Hc - 2, Wc - 2
    cnt = float(N * Sc)

    # Static center-crop offsets for Concat (no-op when shapes already match).
    dh1, dw1 = (Hup - Hc) // 2, (Wup - Wc) // 2
    dh2, dw2 = (H2 - Hc) // 2, (W2 - Wc) // 2
    x2c = x2[:, :, dh2:dh2 + Hc, dw2:dw2 + Wc].reshape(N, C2, Sc)    # glue only

    # ---- 1) bicubic x2 upsample + BN1 partial stats (upsampled branch) -----------
    mh = jnp.asarray(bicubic_weight_matrix(H, Hup), jnp.bfloat16)        # (Hup, H)
    mwT = jnp.asarray(bicubic_weight_matrix(W, Wup).T, jnp.bfloat16)     # (W, Wup)

    x1u, s_a, q_a = pl.pallas_call(
        functools.partial(_bicubic_kernel, C=C1, H=H, W=W, Hout=Hup, Wout=Wup,
                          Hc=Hc, Wc=Wc, dh=dh1, dw=dw1),
        grid=(N,),
        in_specs=[pl.BlockSpec((1, C1, H, W), lambda n: (n, 0, 0, 0)),
                  pl.BlockSpec((W, Wup), lambda n: (0, 0)),
                  pl.BlockSpec((Hup, H), lambda n: (0, 0))],
        out_specs=(pl.BlockSpec((1, C1, Sc), lambda n: (n, 0, 0)),
                   pl.BlockSpec((1, C1, 1), lambda n: (n, 0, 0)),
                   pl.BlockSpec((1, C1, 1), lambda n: (n, 0, 0))),
        out_shape=(jax.ShapeDtypeStruct((N, C1, Sc), jnp.bfloat16),
                   jax.ShapeDtypeStruct((N, C1, 1), jnp.float32),
                   jax.ShapeDtypeStruct((N, C1, 1), jnp.float32)),
        compiler_params=_cparams(),
    )(x1, mwT, mh)

    # ---- 2) BN1 partial stats of the skip branch ---------------------------------
    s_b, q_b = pl.pallas_call(
        _channel_stats_kernel,
        grid=(N,),
        in_specs=[pl.BlockSpec((1, C2, Sc), lambda n: (n, 0, 0))],
        out_specs=(pl.BlockSpec((1, C2, 1), lambda n: (n, 0, 0)),
                   pl.BlockSpec((1, C2, 1), lambda n: (n, 0, 0))),
        out_shape=(jax.ShapeDtypeStruct((N, C2, 1), jnp.float32),
                   jax.ShapeDtypeStruct((N, C2, 1), jnp.float32)),
        compiler_params=_cparams(),
    )(x2c)

    # BN1 batch stats over the concatenated (cropped) tensor -> fold into conv1.
    sum1 = jnp.concatenate([jnp.sum(s_a[:, :, 0], axis=0),
                            jnp.sum(s_b[:, :, 0], axis=0)], axis=0)      # (Cin,)
    ssq1 = jnp.concatenate([jnp.sum(q_a[:, :, 0], axis=0),
                            jnp.sum(q_b[:, :, 0], axis=0)], axis=0)
    scale1, shift1 = _bn_from_sums(sum1, ssq1, params['bn1_g'], params['bn1_b'],
                                   cnt, eps)
    w1f = (params['w1_pack'] * scale1[None, None, :]).reshape(
        Cout, 9 * Cin).astype(jnp.bfloat16)
    b1f = (params['conv1_b'] +
           jnp.sum(params['w1_pack'] * shift1[None, None, :], axis=(1, 2))
           ).reshape(Cout, 1).astype(jnp.float32)

    # ---- 3) conv1 (concat-in-VMEM, im2col matmul, reflect-pad, BN2 stats) --------
    conv1_cost = pl.CostEstimate(
        flops=2 * N * Ho * Wo * 9 * Cin * Cout,
        transcendentals=0,
        bytes_accessed=int(N * C1 * Sc * 2 + N * C2 * Sc * 4 +
                           Cout * 9 * Cin * 2 + N * Cout * Sc * 2))
    y1, s2, q2 = pl.pallas_call(
        functools.partial(_concat_conv_kernel, C1=C1, C2=C2, Cout=Cout, Hc=Hc, Wc=Wc),
        grid=(N,),
        in_specs=[pl.BlockSpec((1, C1, Sc), lambda n: (n, 0, 0)),
                  pl.BlockSpec((1, C2, Sc), lambda n: (n, 0, 0)),
                  pl.BlockSpec((Cout, 9 * Cin), lambda n: (0, 0)),
                  pl.BlockSpec((Cout, 1), lambda n: (0, 0))],
        out_specs=(pl.BlockSpec((1, Cout, Sc), lambda n: (n, 0, 0)),
                   pl.BlockSpec((1, Cout, 1), lambda n: (n, 0, 0)),
                   pl.BlockSpec((1, Cout, 1), lambda n: (n, 0, 0))),
        out_shape=(jax.ShapeDtypeStruct((N, Cout, Sc), jnp.bfloat16),
                   jax.ShapeDtypeStruct((N, Cout, 1), jnp.float32),
                   jax.ShapeDtypeStruct((N, Cout, 1), jnp.float32)),
        compiler_params=_cparams(),
        cost_estimate=conv1_cost,
    )(x1u, x2c, w1f, b1f)

    scale2, shift2 = _bn_from_sums(jnp.sum(s2[:, :, 0], axis=0),
                                   jnp.sum(q2[:, :, 0], axis=0),
                                   params['bn2_g'], params['bn2_b'], cnt, eps)

    # ---- 4) BN2 + LeakyReLU prologue fused with conv2 (+ reflect-pad, BN3 stats) -
    conv2_cost = pl.CostEstimate(
        flops=2 * N * Ho * Wo * 9 * Cout * Cout,
        transcendentals=0,
        bytes_accessed=int(N * Cout * Sc * 2 * 2 + Cout * 9 * Cout * 2))
    y2, s3, q3 = pl.pallas_call(
        functools.partial(_bn_act_conv_kernel, Cout=Cout, Hc=Hc, Wc=Wc,
                          slope=float(negative_slope)),
        grid=(N,),
        in_specs=[pl.BlockSpec((1, Cout, Sc), lambda n: (n, 0, 0)),
                  pl.BlockSpec((Cout, 1), lambda n: (0, 0)),
                  pl.BlockSpec((Cout, 1), lambda n: (0, 0)),
                  pl.BlockSpec((Cout, 9 * Cout), lambda n: (0, 0)),
                  pl.BlockSpec((Cout, 1), lambda n: (0, 0))],
        out_specs=(pl.BlockSpec((1, Cout, Sc), lambda n: (n, 0, 0)),
                   pl.BlockSpec((1, Cout, 1), lambda n: (n, 0, 0)),
                   pl.BlockSpec((1, Cout, 1), lambda n: (n, 0, 0))),
        out_shape=(jax.ShapeDtypeStruct((N, Cout, Sc), jnp.bfloat16),
                   jax.ShapeDtypeStruct((N, Cout, 1), jnp.float32),
                   jax.ShapeDtypeStruct((N, Cout, 1), jnp.float32)),
        compiler_params=_cparams(),
        cost_estimate=conv2_cost,
    )(y1, scale2.reshape(Cout, 1), shift2.reshape(Cout, 1),
      params['w2_pack'], params['conv2_b_col'])

    scale3, shift3 = _bn_from_sums(jnp.sum(s3[:, :, 0], axis=0),
                                   jnp.sum(q3[:, :, 0], axis=0),
                                   params['bn3_g'], params['bn3_b'], cnt, eps)

    # ---- 5) final BN3 + LeakyReLU (lane-dense flattened layout) ------------------
    out = pl.pallas_call(
        functools.partial(_bn_leaky_kernel, slope=float(negative_slope)),
        grid=(N,),
        in_specs=[pl.BlockSpec((1, Cout, Sc), lambda n: (n, 0, 0)),
                  pl.BlockSpec((Cout, 1), lambda n: (0, 0)),
                  pl.BlockSpec((Cout, 1), lambda n: (0, 0))],
        out_specs=pl.BlockSpec((1, Cout, Sc), lambda n: (n, 0, 0)),
        out_shape=jax.ShapeDtypeStruct((N, Cout, Sc), jnp.float32),
        compiler_params=_cparams(),
    )(y2, scale3.reshape(Cout, 1), shift3.reshape(Cout, 1))

    return out.reshape(N, Cout, Hc, Wc)       # free bitcast back to NCHW


# ----------------------------------------------------------------------------
# Demo
# ----------------------------------------------------------------------------

if __name__ == "__main__":
    key = jax.random.PRNGKey(0)
    k1, k2, kp = jax.random.split(key, 3)

    in_ch, out_ch, skip_ch = 8, 8, 4
    N, H, W = 2, 8, 8                                      # x1 spatial; x2 is 2x larger

    x1 = jax.random.normal(k1, (N, in_ch, H, W), jnp.float32)             # NCHW
    x2 = jax.random.normal(k2, (N, skip_ch, 2 * H, 2 * W), jnp.float32)   # NCHW
    params = prepare_params(init_params(kp, in_ch, out_ch, skip_ch),
                            in_ch, out_ch, skip_ch)

    out = jax.jit(uupblock_forward)(params, x1, x2)
    out = jax.block_until_ready(out)
    assert out.shape == (N, out_ch, 2 * H, 2 * W), out.shape
    assert bool(jnp.all(jnp.isfinite(out)))
    print("KERNEL_OK")
</pallas_src>

<mosaic_0001>
module attributes {stable_mosaic.version = 11 : i64} {
  func.func @_channel_stats_kernel(%arg0: i32, %arg1: memref<1x4x256xf32, #tpu.memory_space<vmem>>, %arg2: memref<1x4x1xf32, #tpu.memory_space<vmem>>, %arg3: memref<1x4x1xf32, #tpu.memory_space<vmem>>) attributes {dimension_semantics = [#tpu.dimension_semantics<parallel>], iteration_bounds = array<i64: 2>, scalar_prefetch = 0 : i64, scratch_operands = 0 : i64, tpu.core_type = #tpu.core_type<tc>, window_params = [{transform_indices = @transform_0, window_bounds = array<i64: 1, 4, 256>}, {transform_indices = @transform_1, window_bounds = array<i64: 1, 4, 1>}, {transform_indices = @transform_2, window_bounds = array<i64: 1, 4, 1>}]} {
    %c0 = arith.constant 0 : index
    %c0_0 = arith.constant 0 : index
    %c0_1 = arith.constant 0 : index
    %0 = vector.load %arg1[%c0, %c0_0, %c0_1] : memref<1x4x256xf32, #tpu.memory_space<vmem>>, vector<1x4x256xf32>
    %1 = vector.shape_cast %0 : vector<1x4x256xf32> to vector<4x256xf32>
    %cst = arith.constant dense<0.000000e+00> : vector<4xf32>
    %2 = vector.multi_reduction <add>, %1, %cst [1] : vector<4x256xf32> to vector<4xf32>
    %3 = vector.shape_cast %2 : vector<4xf32> to vector<4x1xf32>
    %c0_2 = arith.constant 0 : index
    %c0_3 = arith.constant 0 : index
    %c0_4 = arith.constant 0 : index
    %4 = vector.load %arg2[%c0_2, %c0_3, %c0_4] : memref<1x4x1xf32, #tpu.memory_space<vmem>>, vector<1x4x1xf32>
    %5 = vector.shape_cast %4 : vector<1x4x1xf32> to vector<4x1xf32>
    %6 = vector.shape_cast %3 : vector<4x1xf32> to vector<1x4x1xf32>
    tpu.vector_store %arg2[%c0_2, %c0_3, %c0_4], %6 {strides = array<i32>} : memref<1x4x1xf32, #tpu.memory_space<vmem>>, vector<1x4x1xf32>,
    %7 = arith.mulf %1, %1 : vector<4x256xf32>
    %cst_5 = arith.constant dense<0.000000e+00> : vector<4xf32>
    %8 = vector.multi_reduction <add>, %7, %cst_5 [1] : vector<4x256xf32> to vector<4xf32>
    %9 = vector.shape_cast %8 : vector<4xf32> to vector<4x1xf32>
    %c0_6 = arith.constant 0 : index
    %c0_7 = arith.constant 0 : index
    %c0_8 = arith.constant 0 : index
    %10 = vector.load %arg3[%c0_6, %c0_7, %c0_8] : memref<1x4x1xf32, #tpu.memory_space<vmem>>, vector<1x4x1xf32>
    %11 = vector.shape_cast %10 : vector<1x4x1xf32> to vector<4x1xf32>
    %12 = vector.shape_cast %9 : vector<4x1xf32> to vector<1x4x1xf32>
    tpu.vector_store %arg3[%c0_6, %c0_7, %c0_8], %12 {strides = array<i32>} : memref<1x4x1xf32, #tpu.memory_space<vmem>>, vector<1x4x1xf32>,
    return
  }
  func.func @transform_0(%arg0: i32) -> (i32, i32, i32) {
    %c0_i32 = arith.constant 0 : i32
    %c0_i32_0 = arith.constant 0 : i32
    %c0_i32_1 = arith.constant 0 : i32
    return %arg0, %c0_i32, %c0_i32_0 : i32, i32, i32
  }
  func.func @transform_1(%arg0: i32) -> (i32, i32, i32) {
    %c0_i32 = arith.constant 0 : i32
    %c0_i32_0 = arith.constant 0 : i32
    %c0_i32_1 = arith.constant 0 : i32
    return %arg0, %c0_i32, %c0_i32_0 : i32, i32, i32
  }
  func.func @transform_2(%arg0: i32) -> (i32, i32, i32) {
    %c0_i32 = arith.constant 0 : i32
    %c0_i32_0 = arith.constant 0 : i32
    %c0_i32_1 = arith.constant 0 : i32
    return %arg0, %c0_i32, %c0_i32_0 : i32, i32, i32
  }
}

module attributes {stable_mosaic.version = 11 : i64} {
  func.func @_bicubic_kernel(%arg0: i32, %arg1: memref<1x8x8x8xf32, #tpu.memory_space<vmem>>, %arg2: memref<8x16xbf16, #tpu.memory_space<vmem>>, %arg3: memref<16x8xbf16, #tpu.memory_space<vmem>>, %arg4: memref<1x8x256xbf16, #tpu.memory_space<vmem>>, %arg5: memref<1x8x1xf32, #tpu.memory_space<vmem>>, %arg6: memref<1x8x1xf32, #tpu.memory_space<vmem>>) attributes {dimension_semantics = [#tpu.dimension_semantics<parallel>], iteration_bounds = array<i64: 2>, scalar_prefetch = 0 : i64, scratch_operands = 0 : i64, tpu.core_type = #tpu.core_type<tc>, window_params = [{transform_indices = @transform_0, window_bounds = array<i64: 1, 8, 8, 8>}, {pipeline_mode = #tpu.pipeline_mode<synchronous>, transform_indices = @transform_1, window_bounds = array<i64: 8, 16>}, {pipeline_mode = #tpu.pipeline_mode<synchronous>, transform_indices = @transform_2, window_bounds = array<i64: 16, 8>}, {transform_indices = @transform_3, window_bounds = array<i64: 1, 8, 256>}, {transform_indices = @transform_4, window_bounds = array<i64: 1, 8, 1>}, {transform_indices = @transform_5, window_bounds = array<i64: 1, 8, 1>}]} {
    %c0 = arith.constant 0 : index
    %c0_0 = arith.constant 0 : index
    %c0_1 = arith.constant 0 : index
    %c0_2 = arith.constant 0 : index
    %0 = vector.load %arg1[%c0, %c0_0, %c0_1, %c0_2] : memref<1x8x8x8xf32, #tpu.memory_space<vmem>>, vector<1x8x8x8xf32>
    %1 = vector.shape_cast %0 : vector<1x8x8x8xf32> to vector<8x8x8xf32>
    %2 = arith.truncf %1 : vector<8x8x8xf32> to vector<8x8x8xbf16>
    %3 = vector.shape_cast %2 : vector<8x8x8xbf16> to vector<64x8xbf16>
    %c0_3 = arith.constant 0 : index
    %c0_4 = arith.constant 0 : index
    %4 = vector.load %arg2[%c0_3, %c0_4] : memref<8x16xbf16, #tpu.memory_space<vmem>>, vector<8x16xbf16>
    %cst = arith.constant dense<0.000000e+00> : vector<64x16xf32>
    %5 = tpu.matmul %3, %4, %cst {dimension_numbers = #tpu.dot_dimension_numbers<[1], [0], [0], [1], [0, 0, 1, 1], [], []>} : vector<64x8xbf16>, vector<8x16xbf16>, vector<64x16xf32> -> vector<64x16xf32>
    %6 = vector.shape_cast %5 : vector<64x16xf32> to vector<8x8x16xf32>
    %7 = arith.truncf %6 : vector<8x8x16xf32> to vector<8x8x16xbf16>
    %c0_5 = arith.constant 0 : index
    %c0_6 = arith.constant 0 : index
    %8 = vector.load %arg3[%c0_5, %c0_6] : memref<16x8xbf16, #tpu.memory_space<vmem>>, vector<16x8xbf16>
    %9 = vector.shape_cast %8 : vector<16x8xbf16> to vector<1x16x8xbf16>
    %10 = vector.broadcast %9 : vector<1x16x8xbf16> to vector<8x16x8xbf16>
    %cst_7 = arith.constant dense<0.000000e+00> : vector<8x16x16xf32>
    %11 = tpu.matmul %10, %7, %cst_7 {dimension_numbers = #tpu.dot_dimension_numbers<[2], [1], [1], [2], [0, 0, 0, 1, 1, 2], [0], [0]>} : vector<8x16x8xbf16>, vector<8x8x16xbf16>, vector<8x16x16xf32> -> vector<8x16x16xf32>
    %12 = vector.shape_cast %11 : vector<8x16x16xf32> to vector<8x256xf32>
    %cst_8 = arith.constant dense<0.000000e+00> : vector<8xf32>
    %13 = vector.multi_reduction <add>, %12, %cst_8 [1] : vector<8x256xf32> to vector<8xf32>
    %14 = vector.shape_cast %13 : vector<8xf32> to vector<8x1xf32>
    %c0_9 = arith.constant 0 : index
    %c0_10 = arith.constant 0 : index
    %c0_11 = arith.constant 0 : index
    %15 = vector.load %arg5[%c0_9, %c0_10, %c0_11] : memref<1x8x1xf32, #tpu.memory_space<vmem>>, vector<1x8x1xf32>
    %16 = vector.shape_cast %15 : vector<1x8x1xf32> to vector<8x1xf32>
    %17 = vector.shape_cast %14 : vector<8x1xf32> to vector<1x8x1xf32>
    tpu.vector_store %arg5[%c0_9, %c0_10, %c0_11], %17 {strides = array<i32>} : memref<1x8x1xf32, #tpu.memory_space<vmem>>, vector<1x8x1xf32>,
    %18 = arith.mulf %12, %12 : vector<8x256xf32>
    %cst_12 = arith.constant dense<0.000000e+00> : vector<8xf32>
    %19 = vector.multi_reduction <add>, %18, %cst_12 [1] : vector<8x256xf32> to vector<8xf32>
    %20 = vector.shape_cast %19 : vector<8xf32> to vector<8x1xf32>
    %c0_13 = arith.constant 0 : index
    %c0_14 = arith.constant 0 : index
    %c0_15 = arith.constant 0 : index
    %21 = vector.load %arg6[%c0_13, %c0_14, %c0_15] : memref<1x8x1xf32, #tpu.memory_space<vmem>>, vector<1x8x1xf32>
    %22 = vector.shape_cast %21 : vector<1x8x1xf32> to vector<8x1xf32>
    %23 = vector.shape_cast %20 : vector<8x1xf32> to vector<1x8x1xf32>
    tpu.vector_store %arg6[%c0_13, %c0_14, %c0_15], %23 {strides = array<i32>} : memref<1x8x1xf32, #tpu.memory_space<vmem>>, vector<1x8x1xf32>,
    %24 = arith.truncf %12 : vector<8x256xf32> to vector<8x256xbf16>
    %c0_16 = arith.constant 0 : index
    %c0_17 = arith.constant 0 : index
    %c0_18 = arith.constant 0 : index
    %25 = vector.load %arg4[%c0_16, %c0_17, %c0_18] : memref<1x8x256xbf16, #tpu.memory_space<vmem>>, vector<1x8x256xbf16>
    %26 = vector.shape_cast %25 : vector<1x8x256xbf16> to vector<8x256xbf16>
    %27 = vector.shape_cast %24 : vector<8x256xbf16> to vector<1x8x256xbf16>
    tpu.vector_store %arg4[%c0_16, %c0_17, %c0_18], %27 {strides = array<i32>} : memref<1x8x256xbf16, #tpu.memory_space<vmem>>, vector<1x8x256xbf16>,
    return
  }
  func.func @transform_0(%arg0: i32) -> (i32, i32, i32, i32) {
    %c0_i32 = arith.constant 0 : i32
    %c0_i32_0 = arith.constant 0 : i32
    %c0_i32_1 = arith.constant 0 : i32
    %c0_i32_2 = arith.constant 0 : i32
    return %arg0, %c0_i32, %c0_i32_0, %c0_i32_1 : i32, i32, i32, i32
  }
  func.func @transform_1(%arg0: i32) -> (i32, i32) {
    %c0_i32 = arith.constant 0 : i32
    %c0_i32_0 = arith.constant 0 : i32
    %c0_i32_1 = arith.constant 0 : i32
    return %c0_i32, %c0_i32_0 : i32, i32
  }
  func.func @transform_2(%arg0: i32) -> (i32, i32) {
    %c0_i32 = arith.constant 0 : i32
    %c0_i32_0 = arith.constant 0 : i32
    %c0_i32_1 = arith.constant 0 : i32
    return %c0_i32, %c0_i32_0 : i32, i32
  }
  func.func @transform_3(%arg0: i32) -> (i32, i32, i32) {
    %c0_i32 = arith.constant 0 : i32
    %c0_i32_0 = arith.constant 0 : i32
    %c0_i32_1 = arith.constant 0 : i32
    return %arg0, %c0_i32, %c0_i32_0 : i32, i32, i32
  }
  func.func @transform_4(%arg0: i32) -> (i32, i32, i32) {
    %c0_i32 = arith.constant 0 : i32
    %c0_i32_0 = arith.constant 0 : i32
    %c0_i32_1 = arith.constant 0 : i32
    return %arg0, %c0_i32, %c0_i32_0 : i32, i32, i32
  }
  func.func @transform_5(%arg0: i32) -> (i32, i32, i32) {
    %c0_i32 = arith.constant 0 : i32
    %c0_i32_0 = arith.constant 0 : i32
    %c0_i32_1 = arith.constant 0 : i32
    return %arg0, %c0_i32, %c0_i32_0 : i32, i32, i32
  }
}

module attributes {stable_mosaic.version = 11 : i64} {
  func.func @_concat_conv_kernel(%arg0: i32, %arg1: memref<1x8x256xbf16, #tpu.memory_space<vmem>>, %arg2: memref<1x4x256xf32, #tpu.memory_space<vmem>>, %arg3: memref<8x108xbf16, #tpu.memory_space<vmem>>, %arg4: memref<8x1xf32, #tpu.memory_space<vmem>>, %arg5: memref<1x8x256xbf16, #tpu.memory_space<vmem>>, %arg6: memref<1x8x1xf32, #tpu.memory_space<vmem>>, %arg7: memref<1x8x1xf32, #tpu.memory_space<vmem>>) attributes {dimension_semantics = [#tpu.dimension_semantics<parallel>], iteration_bounds = array<i64: 2>, scalar_prefetch = 0 : i64, scratch_operands = 0 : i64, tpu.core_type = #tpu.core_type<tc>, window_params = [{transform_indices = @transform_0, window_bounds = array<i64: 1, 8, 256>}, {transform_indices = @transform_1, window_bounds = array<i64: 1, 4, 256>}, {pipeline_mode = #tpu.pipeline_mode<synchronous>, transform_indices = @transform_2, window_bounds = array<i64: 8, 108>}, {pipeline_mode = #tpu.pipeline_mode<synchronous>, transform_indices = @transform_3, window_bounds = array<i64: 8, 1>}, {transform_indices = @transform_4, window_bounds = array<i64: 1, 8, 256>}, {transform_indices = @transform_5, window_bounds = array<i64: 1, 8, 1>}, {transform_indices = @transform_6, window_bounds = array<i64: 1, 8, 1>}]} {
    %c0 = arith.constant 0 : index
    %c0_0 = arith.constant 0 : index
    %c0_1 = arith.constant 0 : index
    %0 = vector.load %arg1[%c0, %c0_0, %c0_1] : memref<1x8x256xbf16, #tpu.memory_space<vmem>>, vector<1x8x256xbf16>
    %1 = vector.shape_cast %0 : vector<1x8x256xbf16> to vector<8x256xbf16>
    %2 = vector.shape_cast %1 : vector<8x256xbf16> to vector<8x16x16xbf16>
    %c0_2 = arith.constant 0 : index
    %c0_3 = arith.constant 0 : index
    %c0_4 = arith.constant 0 : index
    %3 = vector.load %arg2[%c0_2, %c0_3, %c0_4] : memref<1x4x256xf32, #tpu.memory_space<vmem>>, vector<1x4x256xf32>
    %4 = vector.shape_cast %3 : vector<1x4x256xf32> to vector<4x256xf32>
    %5 = vector.shape_cast %4 : vector<4x256xf32> to vector<4x16x16xf32>
    %6 = arith.truncf %5 : vector<4x16x16xf32> to vector<4x16x16xbf16>
    %7 = tpu.concatenate %2, %6 in 0 : vector<8x16x16xbf16>, vector<4x16x16xbf16> -> vector<12x16x16xbf16>
    %c0_5 = arith.constant 0 : index
    %c0_6 = arith.constant 0 : index
    %8 = vector.load %arg3[%c0_5, %c0_6] : memref<8x108xbf16, #tpu.memory_space<vmem>>, vector<8x108xbf16>
    %c0_7 = arith.constant 0 : index
    %c0_8 = arith.constant 0 : index
    %9 = vector.load %arg4[%c0_7, %c0_8] : memref<8x1xf32, #tpu.memory_space<vmem>>, vector<8x1xf32>
    %10 = vector.extract_strided_slice %7 {offsets = [0, 0, 0], sizes = [12, 14, 14], strides = [1, 1, 1]} : vector<12x16x16xbf16> to vector<12x14x14xbf16>
    %11 = vector.extract_strided_slice %7 {offsets = [0, 0, 1], sizes = [12, 14, 14], strides = [1, 1, 1]} : vector<12x16x16xbf16> to vector<12x14x14xbf16>
    %12 = vector.extract_strided_slice %7 {offsets = [0, 0, 2], sizes = [12, 14, 14], strides = [1, 1, 1]} : vector<12x16x16xbf16> to vector<12x14x14xbf16>
    %13 = vector.extract_strided_slice %7 {offsets = [0, 1, 0], sizes = [12, 14, 14], strides = [1, 1, 1]} : vector<12x16x16xbf16> to vector<12x14x14xbf16>
    %14 = vector.extract_strided_slice %7 {offsets = [0, 1, 1], sizes = [12, 14, 14], strides = [1, 1, 1]} : vector<12x16x16xbf16> to vector<12x14x14xbf16>
    %15 = vector.extract_strided_slice %7 {offsets = [0, 1, 2], sizes = [12, 14, 14], strides = [1, 1, 1]} : vector<12x16x16xbf16> to vector<12x14x14xbf16>
    %16 = vector.extract_strided_slice %7 {offsets = [0, 2, 0], sizes = [12, 14, 14], strides = [1, 1, 1]} : vector<12x16x16xbf16> to vector<12x14x14xbf16>
    %17 = vector.extract_strided_slice %7 {offsets = [0, 2, 1], sizes = [12, 14, 14], strides = [1, 1, 1]} : vector<12x16x16xbf16> to vector<12x14x14xbf16>
    %18 = vector.extract_strided_slice %7 {offsets = [0, 2, 2], sizes = [12, 14, 14], strides = [1, 1, 1]} : vector<12x16x16xbf16> to vector<12x14x14xbf16>
    %19 = tpu.concatenate %10, %11, %12, %13, %14, %15, %16, %17, %18 in 0 : vector<12x14x14xbf16>, vector<12x14x14xbf16>, vector<12x14x14xbf16>, vector<12x14x14xbf16>, vector<12x14x14xbf16>, vector<12x14x14xbf16>, vector<12x14x14xbf16>, vector<12x14x14xbf16>, vector<12x14x14xbf16> -> vector<108x14x14xbf16>
    %20 = vector.shape_cast %19 : vector<108x14x14xbf16> to vector<108x196xbf16>
    %cst = arith.constant dense<0.000000e+00> : vector<8x196xf32>
    %21 = tpu.matmul %8, %20, %cst {dimension_numbers = #tpu.dot_dimension_numbers<[1], [0], [0], [1], [0, 0, 1, 1], [], []>} : vector<8x108xbf16>, vector<108x196xbf16>, vector<8x196xf32> -> vector<8x196xf32>
    %22 = vector.broadcast %9 : vector<8x1xf32> to vector<8x196xf32>
    %23 = arith.addf %21, %22 : vector<8x196xf32>
    %24 = vector.shape_cast %23 : vector<8x196xf32> to vector<8x14x14xf32>
    %25 = vector.extract_strided_slice %24 {offsets = [0, 1, 0], sizes = [8, 1, 14], strides = [1, 1, 1]} : vector<8x14x14xf32> to vector<8x1x14xf32>
    %26 = vector.extract_strided_slice %24 {offsets = [0, 12, 0], sizes = [8, 1, 14], strides = [1, 1, 1]} : vector<8x14x14xf32> to vector<8x1x14xf32>
    %27 = tpu.concatenate %25, %24, %26 in 1 : vector<8x1x14xf32>, vector<8x14x14xf32>, vector<8x1x14xf32> -> vector<8x16x14xf32>
    %28 = vector.extract_strided_slice %27 {offsets = [0, 0, 1], sizes = [8, 16, 1], strides = [1, 1, 1]} : vector<8x16x14xf32> to vector<8x16x1xf32>
    %29 = vector.extract_strided_slice %27 {offsets = [0, 0, 12], sizes = [8, 16, 1], strides = [1, 1, 1]} : vector<8x16x14xf32> to vector<8x16x1xf32>
    %30 = tpu.concatenate %28, %27, %29 in 2 : vector<8x16x1xf32>, vector<8x16x14xf32>, vector<8x16x1xf32> -> vector<8x16x16xf32>
    %31 = vector.shape_cast %30 : vector<8x16x16xf32> to vector<8x256xf32>
    %cst_9 = arith.constant dense<0.000000e+00> : vector<8xf32>
    %32 = vector.multi_reduction <add>, %31, %cst_9 [1] : vector<8x256xf32> to vector<8xf32>
    %33 = vector.shape_cast %32 : vector<8xf32> to vector<8x1xf32>
    %c0_10 = arith.constant 0 : index
    %c0_11 = arith.constant 0 : index
    %c0_12 = arith.constant 0 : index
    %34 = vector.load %arg6[%c0_10, %c0_11, %c0_12] : memref<1x8x1xf32, #tpu.memory_space<vmem>>, vector<1x8x1xf32>
    %35 = vector.shape_cast %34 : vector<1x8x1xf32> to vector<8x1xf32>
    %36 = vector.shape_cast %33 : vector<8x1xf32> to vector<1x8x1xf32>
    tpu.vector_store %arg6[%c0_10, %c0_11, %c0_12], %36 {strides = array<i32>} : memref<1x8x1xf32, #tpu.memory_space<vmem>>, vector<1x8x1xf32>,
    %37 = arith.mulf %31, %31 : vector<8x256xf32>
    %cst_13 = arith.constant dense<0.000000e+00> : vector<8xf32>
    %38 = vector.multi_reduction <add>, %37, %cst_13 [1] : vector<8x256xf32> to vector<8xf32>
    %39 = vector.shape_cast %38 : vector<8xf32> to vector<8x1xf32>
    %c0_14 = arith.constant 0 : index
    %c0_15 = arith.constant 0 : index
    %c0_16 = arith.constant 0 : index
    %40 = vector.load %arg7[%c0_14, %c0_15, %c0_16] : memref<1x8x1xf32, #tpu.memory_space<vmem>>, vector<1x8x1xf32>
    %41 = vector.shape_cast %40 : vector<1x8x1xf32> to vector<8x1xf32>
    %42 = vector.shape_cast %39 : vector<8x1xf32> to vector<1x8x1xf32>
    tpu.vector_store %arg7[%c0_14, %c0_15, %c0_16], %42 {strides = array<i32>} : memref<1x8x1xf32, #tpu.memory_space<vmem>>, vector<1x8x1xf32>,
    %43 = arith.truncf %31 : vector<8x256xf32> to vector<8x256xbf16>
    %c0_17 = arith.constant 0 : index
    %c0_18 = arith.constant 0 : index
    %c0_19 = arith.constant 0 : index
    %44 = vector.load %arg5[%c0_17, %c0_18, %c0_19] : memref<1x8x256xbf16, #tpu.memory_space<vmem>>, vector<1x8x256xbf16>
    %45 = vector.shape_cast %44 : vector<1x8x256xbf16> to vector<8x256xbf16>
    %46 = vector.shape_cast %43 : vector<8x256xbf16> to vector<1x8x256xbf16>
    tpu.vector_store %arg5[%c0_17, %c0_18, %c0_19], %46 {strides = array<i32>} : memref<1x8x256xbf16, #tpu.memory_space<vmem>>, vector<1x8x256xbf16>,
    return
  }
  func.func @transform_0(%arg0: i32) -> (i32, i32, i32) {
    %c0_i32 = arith.constant 0 : i32
    %c0_i32_0 = arith.constant 0 : i32
    %c0_i32_1 = arith.constant 0 : i32
    return %arg0, %c0_i32, %c0_i32_0 : i32, i32, i32
  }
  func.func @transform_1(%arg0: i32) -> (i32, i32, i32) {
    %c0_i32 = arith.constant 0 : i32
    %c0_i32_0 = arith.constant 0 : i32
    %c0_i32_1 = arith.constant 0 : i32
    return %arg0, %c0_i32, %c0_i32_0 : i32, i32, i32
  }
  func.func @transform_2(%arg0: i32) -> (i32, i32) {
    %c0_i32 = arith.constant 0 : i32
    %c0_i32_0 = arith.constant 0 : i32
    %c0_i32_1 = arith.constant 0 : i32
    return %c0_i32, %c0_i32_0 : i32, i32
  }
  func.func @transform_3(%arg0: i32) -> (i32, i32) {
    %c0_i32 = arith.constant 0 : i32
    %c0_i32_0 = arith.constant 0 : i32
    %c0_i32_1 = arith.constant 0 : i32
    return %c0_i32, %c0_i32_0 : i32, i32
  }
  func.func @transform_4(%arg0: i32) -> (i32, i32, i32) {
    %c0_i32 = arith.constant 0 : i32
    %c0_i32_0 = arith.constant 0 : i32
    %c0_i32_1 = arith.constant 0 : i32
    return %arg0, %c0_i32, %c0_i32_0 : i32, i32, i32
  }
  func.func @transform_5(%arg0: i32) -> (i32, i32, i32) {
    %c0_i32 = arith.constant 0 : i32
    %c0_i32_0 = arith.constant 0 : i32
    %c0_i32_1 = arith.constant 0 : i32
    return %arg0, %c0_i32, %c0_i32_0 : i32, i32, i32
  }
  func.func @transform_6(%arg0: i32) -> (i32, i32, i32) {
    %c0_i32 = arith.constant 0 : i32
    %c0_i32_0 = arith.constant 0 : i32
    %c0_i32_1 = arith.constant 0 : i32
    return %arg0, %c0_i32, %c0_i32_0 : i32, i32, i32
  }
}

module attributes {stable_mosaic.version = 11 : i64} {
  func.func @_bn_leaky_kernel(%arg0: i32, %arg1: memref<1x8x256xbf16, #tpu.memory_space<vmem>>, %arg2: memref<8x1xf32, #tpu.memory_space<vmem>>, %arg3: memref<8x1xf32, #tpu.memory_space<vmem>>, %arg4: memref<1x8x256xf32, #tpu.memory_space<vmem>>) attributes {dimension_semantics = [#tpu.dimension_semantics<parallel>], iteration_bounds = array<i64: 2>, scalar_prefetch = 0 : i64, scratch_operands = 0 : i64, tpu.core_type = #tpu.core_type<tc>, window_params = [{transform_indices = @transform_0, window_bounds = array<i64: 1, 8, 256>}, {pipeline_mode = #tpu.pipeline_mode<synchronous>, transform_indices = @transform_1, window_bounds = array<i64: 8, 1>}, {pipeline_mode = #tpu.pipeline_mode<synchronous>, transform_indices = @transform_2, window_bounds = array<i64: 8, 1>}, {transform_indices = @transform_3, window_bounds = array<i64: 1, 8, 256>}]} {
    %c0 = arith.constant 0 : index
    %c0_0 = arith.constant 0 : index
    %c0_1 = arith.constant 0 : index
    %0 = vector.load %arg1[%c0, %c0_0, %c0_1] : memref<1x8x256xbf16, #tpu.memory_space<vmem>>, vector<1x8x256xbf16>
    %1 = vector.shape_cast %0 : vector<1x8x256xbf16> to vector<8x256xbf16>
    %2 = arith.extf %1 : vector<8x256xbf16> to vector<8x256xf32>
    %c0_2 = arith.constant 0 : index
    %c0_3 = arith.constant 0 : index
    %3 = vector.load %arg2[%c0_2, %c0_3] : memref<8x1xf32, #tpu.memory_space<vmem>>, vector<8x1xf32>
    %4 = vector.broadcast %3 : vector<8x1xf32> to vector<8x256xf32>
    %5 = arith.mulf %2, %4 : vector<8x256xf32>
    %c0_4 = arith.constant 0 : index
    %c0_5 = arith.constant 0 : index
    %6 = vector.load %arg3[%c0_4, %c0_5] : memref<8x1xf32, #tpu.memory_space<vmem>>, vector<8x1xf32>
    %7 = vector.broadcast %6 : vector<8x1xf32> to vector<8x256xf32>
    %8 = arith.addf %5, %7 : vector<8x256xf32>
    %cst = arith.constant 0.000000e+00 : f32
    %9 = vector.broadcast %cst : f32 to vector<8x256xf32>
    %10 = arith.cmpf oge, %8, %9 : vector<8x256xf32>
    %cst_6 = arith.constant 2.000000e-01 : f32
    %11 = vector.broadcast %cst_6 : f32 to vector<8x256xf32>
    %12 = arith.mulf %11, %8 : vector<8x256xf32>
    %13 = arith.select %10, %8, %12 : vector<8x256xi1>, vector<8x256xf32>
    %c0_7 = arith.constant 0 : index
    %c0_8 = arith.constant 0 : index
    %c0_9 = arith.constant 0 : index
    %14 = vector.load %arg4[%c0_7, %c0_8, %c0_9] : memref<1x8x256xf32, #tpu.memory_space<vmem>>, vector<1x8x256xf32>
    %15 = vector.shape_cast %14 : vector<1x8x256xf32> to vector<8x256xf32>
    %16 = vector.shape_cast %13 : vector<8x256xf32> to vector<1x8x256xf32>
    tpu.vector_store %arg4[%c0_7, %c0_8, %c0_9], %16 {strides = array<i32>} : memref<1x8x256xf32, #tpu.memory_space<vmem>>, vector<1x8x256xf32>,
    return
  }
  func.func @transform_0(%arg0: i32) -> (i32, i32, i32) {
    %c0_i32 = arith.constant 0 : i32
    %c0_i32_0 = arith.constant 0 : i32
    %c0_i32_1 = arith.constant 0 : i32
    return %arg0, %c0_i32, %c0_i32_0 : i32, i32, i32
  }
  func.func @transform_1(%arg0: i32) -> (i32, i32) {
    %c0_i32 = arith.constant 0 : i32
    %c0_i32_0 = arith.constant 0 : i32
    %c0_i32_1 = arith.constant 0 : i32
    return %c0_i32, %c0_i32_0 : i32, i32
  }
  func.func @transform_2(%arg0: i32) -> (i32, i32) {
    %c0_i32 = arith.constant 0 : i32
    %c0_i32_0 = arith.constant 0 : i32
    %c0_i32_1 = arith.constant 0 : i32
    return %c0_i32, %c0_i32_0 : i32, i32
  }
  func.func @transform_3(%arg0: i32) -> (i32, i32, i32) {
    %c0_i32 = arith.constant 0 : i32
    %c0_i32_0 = arith.constant 0 : i32
    %c0_i32_1 = arith.constant 0 : i32
    return %arg0, %c0_i32, %c0_i32_0 : i32, i32, i32
  }
}

module attributes {stable_mosaic.version = 11 : i64} {
  func.func @_bn_act_conv_kernel(%arg0: i32, %arg1: memref<1x8x256xbf16, #tpu.memory_space<vmem>>, %arg2: memref<8x1xf32, #tpu.memory_space<vmem>>, %arg3: memref<8x1xf32, #tpu.memory_space<vmem>>, %arg4: memref<8x72xbf16, #tpu.memory_space<vmem>>, %arg5: memref<8x1xf32, #tpu.memory_space<vmem>>, %arg6: memref<1x8x256xbf16, #tpu.memory_space<vmem>>, %arg7: memref<1x8x1xf32, #tpu.memory_space<vmem>>, %arg8: memref<1x8x1xf32, #tpu.memory_space<vmem>>) attributes {dimension_semantics = [#tpu.dimension_semantics<parallel>], iteration_bounds = array<i64: 2>, scalar_prefetch = 0 : i64, scratch_operands = 0 : i64, tpu.core_type = #tpu.core_type<tc>, window_params = [{transform_indices = @transform_0, window_bounds = array<i64: 1, 8, 256>}, {pipeline_mode = #tpu.pipeline_mode<synchronous>, transform_indices = @transform_1, window_bounds = array<i64: 8, 1>}, {pipeline_mode = #tpu.pipeline_mode<synchronous>, transform_indices = @transform_2, window_bounds = array<i64: 8, 1>}, {pipeline_mode = #tpu.pipeline_mode<synchronous>, transform_indices = @transform_3, window_bounds = array<i64: 8, 72>}, {pipeline_mode = #tpu.pipeline_mode<synchronous>, transform_indices = @transform_4, window_bounds = array<i64: 8, 1>}, {transform_indices = @transform_5, window_bounds = array<i64: 1, 8, 256>}, {transform_indices = @transform_6, window_bounds = array<i64: 1, 8, 1>}, {transform_indices = @transform_7, window_bounds = array<i64: 1, 8, 1>}]} {
    %c0 = arith.constant 0 : index
    %c0_0 = arith.constant 0 : index
    %c0_1 = arith.constant 0 : index
    %0 = vector.load %arg1[%c0, %c0_0, %c0_1] : memref<1x8x256xbf16, #tpu.memory_space<vmem>>, vector<1x8x256xbf16>
    %1 = vector.shape_cast %0 : vector<1x8x256xbf16> to vector<8x256xbf16>
    %2 = arith.extf %1 : vector<8x256xbf16> to vector<8x256xf32>
    %c0_2 = arith.constant 0 : index
    %c0_3 = arith.constant 0 : index
    %3 = vector.load %arg2[%c0_2, %c0_3] : memref<8x1xf32, #tpu.memory_space<vmem>>, vector<8x1xf32>
    %4 = vector.broadcast %3 : vector<8x1xf32> to vector<8x256xf32>
    %5 = arith.mulf %2, %4 : vector<8x256xf32>
    %c0_4 = arith.constant 0 : index
    %c0_5 = arith.constant 0 : index
    %6 = vector.load %arg3[%c0_4, %c0_5] : memref<8x1xf32, #tpu.memory_space<vmem>>, vector<8x1xf32>
    %7 = vector.broadcast %6 : vector<8x1xf32> to vector<8x256xf32>
    %8 = arith.addf %5, %7 : vector<8x256xf32>
    %cst = arith.constant 0.000000e+00 : f32
    %9 = vector.broadcast %cst : f32 to vector<8x256xf32>
    %10 = arith.cmpf oge, %8, %9 : vector<8x256xf32>
    %cst_6 = arith.constant 2.000000e-01 : f32
    %11 = vector.broadcast %cst_6 : f32 to vector<8x256xf32>
    %12 = arith.mulf %11, %8 : vector<8x256xf32>
    %13 = arith.select %10, %8, %12 : vector<8x256xi1>, vector<8x256xf32>
    %14 = vector.shape_cast %13 : vector<8x256xf32> to vector<8x16x16xf32>
    %15 = arith.truncf %14 : vector<8x16x16xf32> to vector<8x16x16xbf16>
    %c0_7 = arith.constant 0 : index
    %c0_8 = arith.constant 0 : index
    %16 = vector.load %arg4[%c0_7, %c0_8] : memref<8x72xbf16, #tpu.memory_space<vmem>>, vector<8x72xbf16>
    %c0_9 = arith.constant 0 : index
    %c0_10 = arith.constant 0 : index
    %17 = vector.load %arg5[%c0_9, %c0_10] : memref<8x1xf32, #tpu.memory_space<vmem>>, vector<8x1xf32>
    %18 = vector.extract_strided_slice %15 {offsets = [0, 0, 0], sizes = [8, 14, 14], strides = [1, 1, 1]} : vector<8x16x16xbf16> to vector<8x14x14xbf16>
    %19 = vector.extract_strided_slice %15 {offsets = [0, 0, 1], sizes = [8, 14, 14], strides = [1, 1, 1]} : vector<8x16x16xbf16> to vector<8x14x14xbf16>
    %20 = vector.extract_strided_slice %15 {offsets = [0, 0, 2], sizes = [8, 14, 14], strides = [1, 1, 1]} : vector<8x16x16xbf16> to vector<8x14x14xbf16>
    %21 = vector.extract_strided_slice %15 {offsets = [0, 1, 0], sizes = [8, 14, 14], strides = [1, 1, 1]} : vector<8x16x16xbf16> to vector<8x14x14xbf16>
    %22 = vector.extract_strided_slice %15 {offsets = [0, 1, 1], sizes = [8, 14, 14], strides = [1, 1, 1]} : vector<8x16x16xbf16> to vector<8x14x14xbf16>
    %23 = vector.extract_strided_slice %15 {offsets = [0, 1, 2], sizes = [8, 14, 14], strides = [1, 1, 1]} : vector<8x16x16xbf16> to vector<8x14x14xbf16>
    %24 = vector.extract_strided_slice %15 {offsets = [0, 2, 0], sizes = [8, 14, 14], strides = [1, 1, 1]} : vector<8x16x16xbf16> to vector<8x14x14xbf16>
    %25 = vector.extract_strided_slice %15 {offsets = [0, 2, 1], sizes = [8, 14, 14], strides = [1, 1, 1]} : vector<8x16x16xbf16> to vector<8x14x14xbf16>
    %26 = vector.extract_strided_slice %15 {offsets = [0, 2, 2], sizes = [8, 14, 14], strides = [1, 1, 1]} : vector<8x16x16xbf16> to vector<8x14x14xbf16>
    %27 = tpu.concatenate %18, %19, %20, %21, %22, %23, %24, %25, %26 in 0 : vector<8x14x14xbf16>, vector<8x14x14xbf16>, vector<8x14x14xbf16>, vector<8x14x14xbf16>, vector<8x14x14xbf16>, vector<8x14x14xbf16>, vector<8x14x14xbf16>, vector<8x14x14xbf16>, vector<8x14x14xbf16> -> vector<72x14x14xbf16>
    %28 = vector.shape_cast %27 : vector<72x14x14xbf16> to vector<72x196xbf16>
    %cst_11 = arith.constant dense<0.000000e+00> : vector<8x196xf32>
    %29 = tpu.matmul %16, %28, %cst_11 {dimension_numbers = #tpu.dot_dimension_numbers<[1], [0], [0], [1], [0, 0, 1, 1], [], []>} : vector<8x72xbf16>, vector<72x196xbf16>, vector<8x196xf32> -> vector<8x196xf32>
    %30 = vector.broadcast %17 : vector<8x1xf32> to vector<8x196xf32>
    %31 = arith.addf %29, %30 : vector<8x196xf32>
    %32 = vector.shape_cast %31 : vector<8x196xf32> to vector<8x14x14xf32>
    %33 = vector.extract_strided_slice %32 {offsets = [0, 1, 0], sizes = [8, 1, 14], strides = [1, 1, 1]} : vector<8x14x14xf32> to vector<8x1x14xf32>
    %34 = vector.extract_strided_slice %32 {offsets = [0, 12, 0], sizes = [8, 1, 14], strides = [1, 1, 1]} : vector<8x14x14xf32> to vector<8x1x14xf32>
    %35 = tpu.concatenate %33, %32, %34 in 1 : vector<8x1x14xf32>, vector<8x14x14xf32>, vector<8x1x14xf32> -> vector<8x16x14xf32>
    %36 = vector.extract_strided_slice %35 {offsets = [0, 0, 1], sizes = [8, 16, 1], strides = [1, 1, 1]} : vector<8x16x14xf32> to vector<8x16x1xf32>
    %37 = vector.extract_strided_slice %35 {offsets = [0, 0, 12], sizes = [8, 16, 1], strides = [1, 1, 1]} : vector<8x16x14xf32> to vector<8x16x1xf32>
    %38 = tpu.concatenate %36, %35, %37 in 2 : vector<8x16x1xf32>, vector<8x16x14xf32>, vector<8x16x1xf32> -> vector<8x16x16xf32>
    %39 = vector.shape_cast %38 : vector<8x16x16xf32> to vector<8x256xf32>
    %cst_12 = arith.constant dense<0.000000e+00> : vector<8xf32>
    %40 = vector.multi_reduction <add>, %39, %cst_12 [1] : vector<8x256xf32> to vector<8xf32>
    %41 = vector.shape_cast %40 : vector<8xf32> to vector<8x1xf32>
    %c0_13 = arith.constant 0 : index
    %c0_14 = arith.constant 0 : index
    %c0_15 = arith.constant 0 : index
    %42 = vector.load %arg7[%c0_13, %c0_14, %c0_15] : memref<1x8x1xf32, #tpu.memory_space<vmem>>, vector<1x8x1xf32>
    %43 = vector.shape_cast %42 : vector<1x8x1xf32> to vector<8x1xf32>
    %44 = vector.shape_cast %41 : vector<8x1xf32> to vector<1x8x1xf32>
    tpu.vector_store %arg7[%c0_13, %c0_14, %c0_15], %44 {strides = array<i32>} : memref<1x8x1xf32, #tpu.memory_space<vmem>>, vector<1x8x1xf32>,
    %45 = arith.mulf %39, %39 : vector<8x256xf32>
    %cst_16 = arith.constant dense<0.000000e+00> : vector<8xf32>
    %46 = vector.multi_reduction <add>, %45, %cst_16 [1] : vector<8x256xf32> to vector<8xf32>
    %47 = vector.shape_cast %46 : vector<8xf32> to vector<8x1xf32>
    %c0_17 = arith.constant 0 : index
    %c0_18 = arith.constant 0 : index
    %c0_19 = arith.constant 0 : index
    %48 = vector.load %arg8[%c0_17, %c0_18, %c0_19] : memref<1x8x1xf32, #tpu.memory_space<vmem>>, vector<1x8x1xf32>
    %49 = vector.shape_cast %48 : vector<1x8x1xf32> to vector<8x1xf32>
    %50 = vector.shape_cast %47 : vector<8x1xf32> to vector<1x8x1xf32>
    tpu.vector_store %arg8[%c0_17, %c0_18, %c0_19], %50 {strides = array<i32>} : memref<1x8x1xf32, #tpu.memory_space<vmem>>, vector<1x8x1xf32>,
    %51 = arith.truncf %39 : vector<8x256xf32> to vector<8x256xbf16>
    %c0_20 = arith.constant 0 : index
    %c0_21 = arith.constant 0 : index
    %c0_22 = arith.constant 0 : index
    %52 = vector.load %arg6[%c0_20, %c0_21, %c0_22] : memref<1x8x256xbf16, #tpu.memory_space<vmem>>, vector<1x8x256xbf16>
    %53 = vector.shape_cast %52 : vector<1x8x256xbf16> to vector<8x256xbf16>
    %54 = vector.shape_cast %51 : vector<8x256xbf16> to vector<1x8x256xbf16>
    tpu.vector_store %arg6[%c0_20, %c0_21, %c0_22], %54 {strides = array<i32>} : memref<1x8x256xbf16, #tpu.memory_space<vmem>>, vector<1x8x256xbf16>,
    return
  }
  func.func @transform_0(%arg0: i32) -> (i32, i32, i32) {
    %c0_i32 = arith.constant 0 : i32
    %c0_i32_0 = arith.constant 0 : i32
    %c0_i32_1 = arith.constant 0 : i32
    return %arg0, %c0_i32, %c0_i32_0 : i32, i32, i32
  }
  func.func @transform_1(%arg0: i32) -> (i32, i32) {
    %c0_i32 = arith.constant 0 : i32
    %c0_i32_0 = arith.constant 0 : i32
    %c0_i32_1 = arith.constant 0 : i32
    return %c0_i32, %c0_i32_0 : i32, i32
  }
  func.func @transform_2(%arg0: i32) -> (i32, i32) {
    %c0_i32 = arith.constant 0 : i32
    %c0_i32_0 = arith.constant 0 : i32
    %c0_i32_1 = arith.constant 0 : i32
    return %c0_i32, %c0_i32_0 : i32, i32
  }
  func.func @transform_3(%arg0: i32) -> (i32, i32) {
    %c0_i32 = arith.constant 0 : i32
    %c0_i32_0 = arith.constant 0 : i32
    %c0_i32_1 = arith.constant 0 : i32
    return %c0_i32, %c0_i32_0 : i32, i32
  }
  func.func @transform_4(%arg0: i32) -> (i32, i32) {
    %c0_i32 = arith.constant 0 : i32
    %c0_i32_0 = arith.constant 0 : i32
    %c0_i32_1 = arith.constant 0 : i32
    return %c0_i32, %c0_i32_0 : i32, i32
  }
  func.func @transform_5(%arg0: i32) -> (i32, i32, i32) {
    %c0_i32 = arith.constant 0 : i32
    %c0_i32_0 = arith.constant 0 : i32
    %c0_i32_1 = arith.constant 0 : i32
    return %arg0, %c0_i32, %c0_i32_0 : i32, i32, i32
  }
  func.func @transform_6(%arg0: i32) -> (i32, i32, i32) {
    %c0_i32 = arith.constant 0 : i32
    %c0_i32_0 = arith.constant 0 : i32
    %c0_i32_1 = arith.constant 0 : i32
    return %arg0, %c0_i32, %c0_i32_0 : i32, i32, i32
  }
  func.func @transform_7(%arg0: i32) -> (i32, i32, i32) {
    %c0_i32 = arith.constant 0 : i32
    %c0_i32_0 = arith.constant 0 : i32
    %c0_i32_1 = arith.constant 0 : i32
    return %arg0, %c0_i32, %c0_i32_0 : i32, i32, i32
  }
}

</mosaic_0001>

<llo_original>
// kernel: uupblock_forward.6
$region0: #{uupblock_forward.6}
  #allocation0 [shape = 'u32[]', space=smem, size = 0x4, offset = 0x4, fixed_abs, tag = 'smem constant byte address 0x4 - core index']
  #allocation1 [shape = 'u32[144,128]{1,0:T(1,128)}', space=vmem, size = 0x12000, scoped, tag = 'internal scratch']
  %s0 = inlined_call_operand.vmem [shape: f32[2,4,256], index: 0, kind: input, shape index: {}]
  %s1 = inlined_call_operand.vmem [shape: f32[2,4,1], index: 1, kind: output, shape index: {0}]
  %s2 = inlined_call_operand.vmem [shape: f32[2,4,1], index: 2, kind: output, shape index: {1}]
  %3 = xla_tuple %s1, %s2
  %s4 = sld [smem:[#allocation0]]
  $region45: #{uupblock_forward.6} parent=0
    _
  %s6 = ssub.s32 1, %s4
  %s7 = scalar_select 0, %s6, %s4
  loop: start=0, step=1, limit=4
  $region2: #{uupblock_forward.6} parent=0 // loop_pre_header
    _
  $region3: #{uupblock_forward.6} parent=0 // loop_header
    %s9 = sphi 0, %s13
    %p10 = scmp.ge.s32.totalorder %s9, 4
    %s19 = sphi 0, %s21
    %s22 = sphi 0, %s19
    %s23 = sphi 0, %s22
    %s39 = sphi 0, %s23
    %s45 = sphi 0, %s47
    %s48 = sphi 0, %s45
    %s49 = sphi 0, %s48
    %s65 = sphi 0, %s49
    %s71 = sphi 0, %s73
    %s74 = sphi 0, %s71
    %s75 = sphi 0, %s74
    %s91 = sphi 0, %s75
  $region4: #{uupblock_forward.6} parent=0 // loop_header_branch
    %12 = sbr.rel (%p10) target = $region8
  $region5: #{uupblock_forward.6} parent=0 // loop_body
    %s14 = ssub.s32 %s9, 1
    %s15 = ssub.s32 %s9, 2
    %s16 = sadd.s32 %s9, 1
    %s17 = ssub.s32 %s9, %s16
    %p18 = scmp.eq.s32.totalorder %s17, 0
    %s20 = sadd.s32 %s19, 1
    %s21 = scalar_select %p18, %s19, %s20
    %p24 = pneg %p18
    %p25 = scmp.eq.s32.totalorder %s9, 1
    %p26 = por %p24, %p25
    %p27 = scmp.ne.s32.totalorder %s19, %s22
    %p28 = scmp.eq.s32.totalorder %s9, 0
    %p29 = por %p27, %p28
    %p30 = scmp.ne.s32.totalorder %s19, %s22
    %p31 = scmp.eq.s32.totalorder %s14, 1
    %p32 = por %p30, %p31
    %p33 = scmp.ne.s32.totalorder %s22, %s23
    %p34 = scmp.eq.s32.totalorder %s14, 0
    %p35 = por %p33, %p34
    %p36 = scmp.ne.s32.totalorder %s22, %s23
    %p37 = scmp.eq.s32.totalorder %s15, 1
    %p38 = por %p36, %p37
    %p40 = scmp.ne.s32.totalorder %s23, %s39
    %p41 = scmp.eq.s32.totalorder %s15, 0
    %p42 = por %p40, %p41
    %s43 = ssub.s32 %s9, %s16
    %p44 = scmp.eq.s32.totalorder %s43, 0
    %s46 = sadd.s32 %s45, 1
    %s47 = scalar_select %p44, %s45, %s46
    %p50 = pneg %p44
    %p51 = scmp.eq.s32.totalorder %s9, 1
    %p52 = por %p50, %p51
    %p53 = scmp.ne.s32.totalorder %s45, %s48
    %p54 = scmp.eq.s32.totalorder %s9, 0
    %p55 = por %p53, %p54
    %p56 = scmp.ne.s32.totalorder %s45, %s48
    %p57 = scmp.eq.s32.totalorder %s14, 1
    %p58 = por %p56, %p57
    %p59 = scmp.ne.s32.totalorder %s48, %s49
    %p60 = scmp.eq.s32.totalorder %s14, 0
    %p61 = por %p59, %p60
    %p62 = scmp.ne.s32.totalorder %s48, %s49
    %p63 = scmp.eq.s32.totalorder %s15, 1
    %p64 = por %p62, %p63
    %p66 = scmp.ne.s32.totalorder %s49, %s65
    %p67 = scmp.eq.s32.totalorder %s15, 0
    %p68 = por %p66, %p67
    %s69 = ssub.s32 %s9, %s16
    %p70 = scmp.eq.s32.totalorder %s69, 0
    %s72 = sadd.s32 %s71, 1
    %s73 = scalar_select %p70, %s71, %s72
    %p76 = pneg %p70
    %p77 = scmp.eq.s32.totalorder %s9, 1
    %p78 = por %p76, %p77
    %p79 = scmp.ne.s32.totalorder %s71, %s74
    %p80 = scmp.eq.s32.totalorder %s9, 0
    %p81 = por %p79, %p80
    %p82 = scmp.ne.s32.totalorder %s71, %s74
    %p83 = scmp.eq.s32.totalorder %s14, 1
    %p84 = por %p82, %p83
    %p85 = scmp.ne.s32.totalorder %s74, %s75
    %p86 = scmp.eq.s32.totalorder %s14, 0
    %p87 = por %p85, %p86
    %p88 = scmp.ne.s32.totalorder %s74, %s75
    %p89 = scmp.eq.s32.totalorder %s15, 1
    %p90 = por %p88, %p89
    %p92 = scmp.ne.s32.totalorder %s75, %s91
    %p93 = scmp.eq.s32.totalorder %s15, 0
    %p94 = por %p92, %p93
    %p95 = scmp.le.s32.totalorder 1, %s9
    %p96 = scmp.lt.s32.totalorder %s9, 3
    %p97 = pnand %p95, %p96
    %p98 = pneg %p97
    // Predicated region
    $region9: #{uupblock_forward.6} parent=5 // pred_check
      _
    $region10: #{uupblock_forward.6} parent=5 // pred_check_branch
      %100 = sbr.rel (%p97) target = $region12
    $region11: #{uupblock_forward.6} parent=5 // pred_region
      %s101 = ssub.s32 %s9, 1
    $region12: #{uupblock_forward.6} parent=5 // pred_fallthru
      _
    %p102 = scmp.lt.s32.totalorder %s9, 2
    // Predicated region
    $region13: #{uupblock_forward.6} parent=5 // pred_check
      %p103 = pneg %p102
    $region14: #{uupblock_forward.6} parent=5 // pred_check_branch
      %105 = sbr.rel (%p103) target = $region16
    $region15: #{uupblock_forward.6} parent=5 // pred_region
      // Predicated region
      $region17: #{uupblock_forward.6} parent=15 // pred_check
        %p106 = pneg %p29
      $region18: #{uupblock_forward.6} parent=15 // pred_check_branch
        %108 = sbr.rel (%p106) target = $region20
      $region19: #{uupblock_forward.6} parent=15 // pred_region
        %p109 = scmp.lt.s32.totalorder %s9, 1
        %s110 = scalar_select %p109, %s9, 1
        %s111 = smul.addr %s110, 2
        %s112 = smul.addr %s111, 4
        %s113 = scalar_lea.vmem %s0, %s112
      $region20: #{uupblock_forward.6} parent=15 // pred_fallthru
        _
    $region16: #{uupblock_forward.6} parent=5 // pred_fallthru
      _
    %p114 = scmp.le.s32.totalorder 1, %s9
    %p115 = scmp.lt.s32.totalorder %s9, 3
    %p116 = pnand %p114, %p115
    %p117 = pneg %p116
    // Predicated region
    $region21: #{uupblock_forward.6} parent=5 // pred_check
      _
    $region22: #{uupblock_forward.6} parent=5 // pred_check_branch
      %119 = sbr.rel (%p116) target = $region24
    $region23: #{uupblock_forward.6} parent=5 // pred_region
      %s120 = ssub.s32 %s9, 1
      %p121 = scmp.lt.s32.totalorder %s14, 1
      %s122 = scalar_select %p121, %s14, 1
      %s123 = smul.addr %s122, 2
      %s124 = smul.addr %s123, 4
      %s125 = scalar_lea.vmem %s0, %s124
      %p126 = pneg %p35
      %p127 = pneg %p32
      %p128 = pneg %p61
      %p129 = pneg %p58
      %p130 = scmp.lt.s32.totalorder %s14, 1
      %s131 = scalar_select %p130, %s14, 1
      %s132 = smul.addr %s131, 4
      %s133 = scalar_lea.vmem %s1, %s132
      %p134 = pneg %p87
      %p135 = pneg %p84
      %p136 = scmp.lt.s32.totalorder %s14, 1
      %s137 = scalar_select %p136, %s14, 1
      %s138 = smul.addr %s137, 4
      %s139 = scalar_lea.vmem %s2, %s138
      %p140 = scmp.lt.s32.totalorder %s14, 1
      %s141 = scalar_select %p140, %s14, 1
      %s142 = smul.addr %s141, 2
      %s143 = smul.addr %s142, 4
      %s144 = scalar_lea.vmem %s0, %s143
      %p145 = scmp.lt.s32.totalorder %s14, 1
      %s146 = scalar_select %p145, %s14, 1
      %s147 = smul.addr %s146, 4
      %s148 = scalar_lea.vmem %s1, %s147
      %p149 = scmp.lt.s32.totalorder %s14, 1
      %s150 = scalar_select %p149, %s14, 1
      %s151 = smul.addr %s150, 4
      %s152 = scalar_lea.vmem %s2, %s151
      %v153 = vld [vmem:[%s144] sm:$0xff]
      %v155 = vcombine.high %v153, %v153
      %vm157 = vcmask 1043456
      %v158 = vsel %vm157, %v153, 0.0
      %v159 = vsel %vm157, %v155, 0.0
      %v160 = vadd.f32 %v158, %v159
      %161 = vadd.xlane.f32.xlu0 %v160
      %v162 = vpop.xlane.xlu0 %161
      %vm163 = vcmask 3072
      %164 = vst.msk [vmem:[%s148] sm:$0xf] %vm163, %v162
      %v165 = vmul.f32 %v153, %v153
      %v167 = vcombine.high %v165, %v165
      %v169 = vsel %vm157, %v165, 0.0
      %v170 = vsel %vm157, %v167, 0.0
      %v171 = vadd.f32 %v169, %v170
      %172 = vadd.xlane.f32.xlu0 %v171
      %v173 = vpop.xlane.xlu0 %172
      %174 = vst.msk [vmem:[%s152] sm:$0xf] %vm163, %v173
      %p175 = scmp.lt.s32.totalorder %s14, 1
      %s176 = scalar_select %p175, %s14, 1
      %s177 = smul.addr %s176, 4
      %s178 = scalar_lea.vmem %s1, %s177
      %p179 = scmp.lt.s32.totalorder %s14, 1
      %s180 = scalar_select %p179, %s14, 1
      %s181 = smul.addr %s180, 4
      %s182 = scalar_lea.vmem %s2, %s181
      // Predicated region
      $region25: #{uupblock_forward.6} parent=23 // pred_check
        %p183 = pneg %p58
      $region26: #{uupblock_forward.6} parent=23 // pred_check_branch
        %185 = sbr.rel (%p183) target = $region28
      $region27: #{uupblock_forward.6} parent=23 // pred_region
        _
      $region28: #{uupblock_forward.6} parent=23 // pred_fallthru
        _
      // Predicated region
      $region29: #{uupblock_forward.6} parent=23 // pred_check
        %p186 = pneg %p84
      $region30: #{uupblock_forward.6} parent=23 // pred_check_branch
        %188 = sbr.rel (%p186) target = $region32
      $region31: #{uupblock_forward.6} parent=23 // pred_region
        _
      $region32: #{uupblock_forward.6} parent=23 // pred_fallthru
        _
    $region24: #{uupblock_forward.6} parent=5 // pred_fallthru
      _
    %p189 = scmp.le.s32.totalorder 2, %s9
    // Predicated region
    $region33: #{uupblock_forward.6} parent=5 // pred_check
      %p190 = pneg %p189
    $region34: #{uupblock_forward.6} parent=5 // pred_check_branch
      %192 = sbr.rel (%p190) target = $region36
    $region35: #{uupblock_forward.6} parent=5 // pred_region
      %s193 = ssub.s32 %s9, 2
      // Predicated region
      $region37: #{uupblock_forward.6} parent=35 // pred_check
        %p194 = pneg %p64
      $region38: #{uupblock_forward.6} parent=35 // pred_check_branch
        %196 = sbr.rel (%p194) target = $region40
      $region39: #{uupblock_forward.6} parent=35 // pred_region
        %p197 = scmp.lt.s32.totalorder %s15, 1
        %s198 = scalar_select %p197, %s15, 1
        %s199 = smul.addr %s198, 4
        %s200 = scalar_lea.vmem %s1, %s199
      $region40: #{uupblock_forward.6} parent=35 // pred_fallthru
        _
      // Predicated region
      $region41: #{uupblock_forward.6} parent=35 // pred_check
        %p201 = pneg %p90
      $region42: #{uupblock_forward.6} parent=35 // pred_check_branch
        %203 = sbr.rel (%p201) target = $region44
      $region43: #{uupblock_forward.6} parent=35 // pred_region
        %p204 = scmp.lt.s32.totalorder %s15, 1
        %s205 = scalar_select %p204, %s15, 1
        %s206 = smul.addr %s205, 4
        %s207 = scalar_lea.vmem %s2, %s206
      $region44: #{uupblock_forward.6} parent=35 // pred_fallthru
        _
    $region36: #{uupblock_forward.6} parent=5 // pred_fallthru
      _
  $region6: #{uupblock_forward.6} parent=0 // loop_footer
    %s13 = sadd.s32 1, %s9
  $region7: #{uupblock_forward.6} parent=0 // loop_footer_branch
    %8 = sbr.rel target = $region3
  $region8: #{uupblock_forward.6} parent=0 // loop_exit
    _

// kernel: uupblock_forward.5
$region0: #{uupblock_forward.5}
  #allocation0 [shape = 'u32[]', space=smem, size = 0x4, offset = 0x4, fixed_abs, tag = 'smem constant byte address 0x4 - core index']
  #allocation1 [shape = 'u32[144,128]{1,0:T(1,128)}', space=vmem, size = 0x12000, scoped, tag = 'internal scratch']
  %s0 = inlined_call_operand.vmem [shape: f32[2,8,8,8], index: 0, kind: input, shape index: {}]
  %s1 = inlined_call_operand.vmem [shape: bf16[8,16], index: 1, kind: input, shape index: {}]
  %s2 = inlined_call_operand.vmem [shape: bf16[16,8], index: 2, kind: input, shape index: {}]
  %s3 = inlined_call_operand.vmem [shape: bf16[2,8,256], index: 3, kind: output, shape index: {0}]
  %s4 = inlined_call_operand.vmem [shape: f32[2,8,1], index: 4, kind: output, shape index: {1}]
  %s5 = inlined_call_operand.vmem [shape: f32[2,8,1], index: 5, kind: output, shape index: {2}]
  %6 = xla_tuple %s3, %s4, %s5
  %s7 = sld [smem:[#allocation0]]
  $region61: #{uupblock_forward.5} parent=0
    _
  %s9 = ssub.s32 1, %s7
  %s10 = scalar_select 0, %s9, %s7
  loop: start=0, step=1, limit=4
  $region2: #{uupblock_forward.5} parent=0 // loop_pre_header
    _
  $region3: #{uupblock_forward.5} parent=0 // loop_header
    %s12 = sphi 0, %s16
    %p13 = scmp.ge.s32.totalorder %s12, 4
    %s22 = sphi 0, %s24
    %s25 = sphi 0, %s22
    %s26 = sphi 0, %s25
    %s42 = sphi 0, %s26
    %s46 = sphi 0, %s46
    %s48 = sphi 0, %s46
    %s49 = sphi 0, %s48
    %s63 = sphi 0, %s49
    %s67 = sphi 0, %s67
    %s69 = sphi 0, %s67
    %s70 = sphi 0, %s69
    %s84 = sphi 0, %s70
    %s90 = sphi 0, %s92
    %s93 = sphi 0, %s90
    %s94 = sphi 0, %s93
    %s110 = sphi 0, %s94
    %s116 = sphi 0, %s118
    %s119 = sphi 0, %s116
    %s120 = sphi 0, %s119
    %s136 = sphi 0, %s120
    %s142 = sphi 0, %s144
    %s145 = sphi 0, %s142
    %s146 = sphi 0, %s145
    %s162 = sphi 0, %s146
  $region4: #{uupblock_forward.5} parent=0 // loop_header_branch
    %15 = sbr.rel (%p13) target = $region8
  $region5: #{uupblock_forward.5} parent=0 // loop_body
    %s17 = ssub.s32 %s12, 1
    %s18 = ssub.s32 %s12, 2
    %s19 = sadd.s32 %s12, 1
    %s20 = ssub.s32 %s12, %s19
    %p21 = scmp.eq.s32.totalorder %s20, 0
    %s23 = sadd.s32 %s22, 1
    %s24 = scalar_select %p21, %s22, %s23
    %p27 = pneg %p21
    %p28 = scmp.eq.s32.totalorder %s12, 1
    %p29 = por %p27, %p28
    %p30 = scmp.ne.s32.totalorder %s22, %s25
    %p31 = scmp.eq.s32.totalorder %s12, 0
    %p32 = por %p30, %p31
    %p33 = scmp.ne.s32.totalorder %s22, %s25
    %p34 = scmp.eq.s32.totalorder %s17, 1
    %p35 = por %p33, %p34
    %p36 = scmp.ne.s32.totalorder %s25, %s26
    %p37 = scmp.eq.s32.totalorder %s17, 0
    %p38 = por %p36, %p37
    %p39 = scmp.ne.s32.totalorder %s25, %s26
    %p40 = scmp.eq.s32.totalorder %s18, 1
    %p41 = por %p39, %p40
    %p43 = scmp.ne.s32.totalorder %s26, %s42
    %p44 = scmp.eq.s32.totalorder %s18, 0
    %p45 = por %p43, %p44
    %s47 = sadd.s32 %s46, 1
    %p50 = scmp.eq.s32.totalorder %s12, 1
    %p51 = scmp.ne.s32.totalorder %s46, %s48
    %p52 = scmp.eq.s32.totalorder %s12, 0
    %p53 = por %p51, %p52
    %p54 = scmp.ne.s32.totalorder %s46, %s48
    %p55 = scmp.eq.s32.totalorder %s17, 1
    %p56 = por %p54, %p55
    %p57 = scmp.ne.s32.totalorder %s48, %s49
    %p58 = scmp.eq.s32.totalorder %s17, 0
    %p59 = por %p57, %p58
    %p60 = scmp.ne.s32.totalorder %s48, %s49
    %p61 = scmp.eq.s32.totalorder %s18, 1
    %p62 = por %p60, %p61
    %p64 = scmp.ne.s32.totalorder %s49, %s63
    %p65 = scmp.eq.s32.totalorder %s18, 0
    %p66 = por %p64, %p65
    %s68 = sadd.s32 %s67, 1
    %p71 = scmp.eq.s32.totalorder %s12, 1
    %p72 = scmp.ne.s32.totalorder %s67, %s69
    %p73 = scmp.eq.s32.totalorder %s12, 0
    %p74 = por %p72, %p73
    %p75 = scmp.ne.s32.totalorder %s67, %s69
    %p76 = scmp.eq.s32.totalorder %s17, 1
    %p77 = por %p75, %p76
    %p78 = scmp.ne.s32.totalorder %s69, %s70
    %p79 = scmp.eq.s32.totalorder %s17, 0
    %p80 = por %p78, %p79
    %p81 = scmp.ne.s32.totalorder %s69, %s70
    %p82 = scmp.eq.s32.totalorder %s18, 1
    %p83 = por %p81, %p82
    %p85 = scmp.ne.s32.totalorder %s70, %s84
    %p86 = scmp.eq.s32.totalorder %s18, 0
    %p87 = por %p85, %p86
    %s88 = ssub.s32 %s12, %s19
    %p89 = scmp.eq.s32.totalorder %s88, 0
    %s91 = sadd.s32 %s90, 1
    %s92 = scalar_select %p89, %s90, %s91
    %p95 = pneg %p89
    %p96 = scmp.eq.s32.totalorder %s12, 1
    %p97 = por %p95, %p96
    %p98 = scmp.ne.s32.totalorder %s90, %s93
    %p99 = scmp.eq.s32.totalorder %s12, 0
    %p100 = por %p98, %p99
    %p101 = scmp.ne.s32.totalorder %s90, %s93
    %p102 = scmp.eq.s32.totalorder %s17, 1
    %p103 = por %p101, %p102
    %p104 = scmp.ne.s32.totalorder %s93, %s94
    %p105 = scmp.eq.s32.totalorder %s17, 0
    %p106 = por %p104, %p105
    %p107 = scmp.ne.s32.totalorder %s93, %s94
    %p108 = scmp.eq.s32.totalorder %s18, 1
    %p109 = por %p107, %p108
    %p111 = scmp.ne.s32.totalorder %s94, %s110
    %p112 = scmp.eq.s32.totalorder %s18, 0
    %p113 = por %p111, %p112
    %s114 = ssub.s32 %s12, %s19
    %p115 = scmp.eq.s32.totalorder %s114, 0
    %s117 = sadd.s32 %s116, 1
    %s118 = scalar_select %p115, %s116, %s117
    %p121 = pneg %p115
    %p122 = scmp.eq.s32.totalorder %s12, 1
    %p123 = por %p121, %p122
    %p124 = scmp.ne.s32.totalorder %s116, %s119
    %p125 = scmp.eq.s32.totalorder %s12, 0
    %p126 = por %p124, %p125
    %p127 = scmp.ne.s32.totalorder %s116, %s119
    %p128 = scmp.eq.s32.totalorder %s17, 1
    %p129 = por %p127, %p128
    %p130 = scmp.ne.s32.totalorder %s119, %s120
    %p131 = scmp.eq.s32.totalorder %s17, 0
    %p132 = por %p130, %p131
    %p133 = scmp.ne.s32.totalorder %s119, %s120
    %p134 = scmp.eq.s32.totalorder %s18, 1
    %p135 = por %p133, %p134
    %p137 = scmp.ne.s32.totalorder %s120, %s136
    %p138 = scmp.eq.s32.totalorder %s18, 0
    %p139 = por %p137, %p138
    %s140 = ssub.s32 %s12, %s19
    %p141 = scmp.eq.s32.totalorder %s140, 0
    %s143 = sadd.s32 %s142, 1
    %s144 = scalar_select %p141, %s142, %s143
    %p147 = pneg %p141
    %p148 = scmp.eq.s32.totalorder %s12, 1
    %p149 = por %p147, %p148
    %p150 = scmp.ne.s32.totalorder %s142, %s145
    %p151 = scmp.eq.s32.totalorder %s12, 0
    %p152 = por %p150, %p151
    %p153 = scmp.ne.s32.totalorder %s142, %s145
    %p154 = scmp.eq.s32.totalorder %s17, 1
    %p155 = por %p153, %p154
    %p156 = scmp.ne.s32.totalorder %s145, %s146
    %p157 = scmp.eq.s32.totalorder %s17, 0
    %p158 = por %p156, %p157
    %p159 = scmp.ne.s32.totalorder %s145, %s146
    %p160 = scmp.eq.s32.totalorder %s18, 1
    %p161 = por %p159, %p160
    %p163 = scmp.ne.s32.totalorder %s146, %s162
    %p164 = scmp.eq.s32.totalorder %s18, 0
    %p165 = por %p163, %p164
    %p166 = scmp.le.s32.totalorder 1, %s12
    %p167 = scmp.lt.s32.totalorder %s12, 3
    %p168 = pnand %p166, %p167
    %p169 = pneg %p168
    // Predicated region
    $region9: #{uupblock_forward.5} parent=5 // pred_check
      _
    $region10: #{uupblock_forward.5} parent=5 // pred_check_branch
      %171 = sbr.rel (%p168) target = $region12
    $region11: #{uupblock_forward.5} parent=5 // pred_region
      %s172 = ssub.s32 %s12, 1
      // Predicated region
      $region13: #{uupblock_forward.5} parent=11 // pred_check
        %p173 = pneg %p59
      $region14: #{uupblock_forward.5} parent=11 // pred_check_branch
        %175 = sbr.rel (%p173) target = $region16
      $region15: #{uupblock_forward.5} parent=11 // pred_region
        _
      $region16: #{uupblock_forward.5} parent=11 // pred_fallthru
        _
      // Predicated region
      $region17: #{uupblock_forward.5} parent=11 // pred_check
        %p176 = pneg %p80
      $region18: #{uupblock_forward.5} parent=11 // pred_check_branch
        %178 = sbr.rel (%p176) target = $region20
      $region19: #{uupblock_forward.5} parent=11 // pred_region
        _
      $region20: #{uupblock_forward.5} parent=11 // pred_fallthru
        _
    $region12: #{uupblock_forward.5} parent=5 // pred_fallthru
      _
    %p179 = scmp.lt.s32.totalorder %s12, 2
    // Predicated region
    $region21: #{uupblock_forward.5} parent=5 // pred_check
      %p180 = pneg %p179
    $region22: #{uupblock_forward.5} parent=5 // pred_check_branch
      %182 = sbr.rel (%p180) target = $region24
    $region23: #{uupblock_forward.5} parent=5 // pred_region
      // Predicated region
      $region25: #{uupblock_forward.5} parent=23 // pred_check
        %p183 = pneg %p32
      $region26: #{uupblock_forward.5} parent=23 // pred_check_branch
        %185 = sbr.rel (%p183) target = $region28
      $region27: #{uupblock_forward.5} parent=23 // pred_region
        %p186 = scmp.lt.s32.totalorder %s12, 1
        %s187 = scalar_select %p186, %s12, 1
        %s188 = smul.addr %s187, 8
        %s189 = smul.addr %s188, 8
        %s190 = scalar_lea.vmem %s0, %s189
      $region28: #{uupblock_forward.5} parent=23 // pred_fallthru
        _
    $region24: #{uupblock_forward.5} parent=5 // pred_fallthru
      _
    %p191 = scmp.le.s32.totalorder 1, %s12
    %p192 = scmp.lt.s32.totalorder %s12, 3
    %p193 = pnand %p191, %p192
    %p194 = pneg %p193
    // Predicated region
    $region29: #{uupblock_forward.5} parent=5 // pred_check
      _
    $region30: #{uupblock_forward.5} parent=5 // pred_check_branch
      %196 = sbr.rel (%p193) target = $region32
    $region31: #{uupblock_forward.5} parent=5 // pred_region
      %s197 = ssub.s32 %s12, 1
      %p198 = scmp.lt.s32.totalorder %s17, 1
      %s199 = scalar_select %p198, %s17, 1
      %s200 = smul.addr %s199, 8
      %s201 = smul.addr %s200, 8
      %s202 = scalar_lea.vmem %s0, %s201
      %p203 = pneg %p38
      %p204 = pneg %p35
      %p205 = pneg %p59
      %p206 = pneg %p56
      %p207 = pneg %p80
      %p208 = pneg %p77
      %p209 = pneg %p106
      %p210 = pneg %p103
      %p211 = scmp.lt.s32.totalorder %s17, 1
      %s212 = scalar_select %p211, %s17, 1
      %s213 = smul.addr %s212, 2
      %s214 = smul.addr %s213, 4
      %s215 = scalar_lea.vmem %s3, %s214
      %p216 = pneg %p132
      %p217 = pneg %p129
      %p218 = scmp.lt.s32.totalorder %s17, 1
      %s219 = scalar_select %p218, %s17, 1
      %s220 = smul.addr %s219, 8
      %s221 = scalar_lea.vmem %s4, %s220
      %p222 = pneg %p158
      %p223 = pneg %p155
      %p224 = scmp.lt.s32.totalorder %s17, 1
      %s225 = scalar_select %p224, %s17, 1
      %s226 = smul.addr %s225, 8
      %s227 = scalar_lea.vmem %s5, %s226
      %p228 = scmp.lt.s32.totalorder %s17, 1
      %s229 = scalar_select %p228, %s17, 1
      %s230 = smul.addr %s229, 8
      %s231 = smul.addr %s230, 8
      %s232 = scalar_lea.vmem %s0, %s231
      %p233 = scmp.lt.s32.totalorder %s17, 1
      %s234 = scalar_select %p233, %s17, 1
      %s235 = smul.addr %s234, 2
      %s236 = smul.addr %s235, 4
      %s237 = scalar_lea.vmem %s3, %s236
      %p238 = scmp.lt.s32.totalorder %s17, 1
      %s239 = scalar_select %p238, %s17, 1
      %s240 = smul.addr %s239, 8
      %s241 = scalar_lea.vmem %s4, %s240
      %p242 = scmp.lt.s32.totalorder %s17, 1
      %s243 = scalar_select %p242, %s17, 1
      %s244 = smul.addr %s243, 8
      %s245 = scalar_lea.vmem %s5, %s244
      %v247 = vld [vmem:[%s232] sm:$0xff]
      %v248 = vld [vmem:[%s232 + $0x8] sm:$0xff]
      %v249 = vld [vmem:[%s232 + $0x10] sm:$0xff]
      %v250 = vld [vmem:[%s232 + $0x18] sm:$0xff]
      %v251 = vld [vmem:[%s232 + $0x20] sm:$0xff]
      %v252 = vld [vmem:[%s232 + $0x28] sm:$0xff]
      %v253 = vld [vmem:[%s232 + $0x30] sm:$0xff]
      %v254 = vld [vmem:[%s232 + $0x38] sm:$0xff]
      %v255 = vpack.c.bf16 %v247, %v247
      %v256 = vpack.c.bf16 %v248, %v248
      %v257 = vpack.c.bf16 %v249, %v249
      %v258 = vpack.c.bf16 %v250, %v250
      %v259 = vpack.c.bf16 %v251, %v251
      %v260 = vpack.c.bf16 %v252, %v252
      %v261 = vpack.c.bf16 %v253, %v253
      %v262 = vpack.c.bf16 %v254, %v254
      %v263 = vld [vmem:[%s1] sm:$0xf]
      %v272 = vunpack.c.l.b16 %v255
      %v273 = vunpack.c.l.b16 %v256
      %v274 = vunpack.c.l.b16 %v257
      %v275 = vunpack.c.l.b16 %v258
      %v276 = vunpack.c.l.b16 %v259
      %v277 = vunpack.c.l.b16 %v260
      %v278 = vunpack.c.l.b16 %v261
      %v279 = vunpack.c.l.b16 %v262
      %v280 = vpack.c.b16 %v273, %v272
      %v281 = vpack.c.b16 %v275, %v274
      %v282 = vpack.c.b16 %v277, %v276
      %v283 = vpack.c.b16 %v279, %v278
      %vm284 = vcmask 64512
      %v286 = vsel %vm284, %v280, 0
      %v289 = vsel %vm284, %v281, 0
      %v292 = vsel %vm284, %v282, 0
      %v295 = vsel %vm284, %v283, 0
      %vm297 = vcmask 1043456
      %v299 = vsel %vm297, %v263, 0
      %301 = vmatprep.subr.bf16.mxu0 0
      %302 = vmatpush1.bf16.msra.mxu0 0
      %303 = vmatprep.subr.bf16.mxu0 0
      %304 = vmatpush1.bf16.msra.mxu0 0
      %305 = vmatprep.subr.bf16.mxu0 0
      %306 = vmatpush1.bf16.msra.mxu0 0
      %307 = vmatprep.subr.bf16.mxu0 0
      %308 = vmatpush1.bf16.msra.mxu0 0
      %309 = vmatprep.subr.bf16.mxu0 0
      %310 = vmatpush1.bf16.msra.mxu0 0
      %311 = vmatprep.subr.bf16.mxu0 0
      %312 = vmatpush1.bf16.msra.mxu0 0
      %313 = vmatprep.subr.bf16.mxu0 0
      %314 = vmatpush1.bf16.msra.mxu0 0
      %315 = vmatprep.subr.bf16.mxu0 0
      %316 = vmatpush1.bf16.msra.mxu0 %v299
      %317 = vmatprep.subr.bf16.mxu0 0
      %318 = vmatpush2.bf16.msra.mxu0 0
      %319 = vmatprep.subr.bf16.mxu0 0
      %320 = vmatpush2.bf16.msra.mxu0 0
      %321 = vmatprep.subr.bf16.mxu0 0
      %322 = vmatpush2.bf16.msra.mxu0 0
      %323 = vmatprep.subr.bf16.mxu0 0
      %324 = vmatpush2.bf16.msra.mxu0 0
      %325 = vmatprep.subr.bf16.mxu0 0
      %326 = vmatpush2.bf16.msra.mxu0 0
      %327 = vmatprep.subr.bf16.mxu0 0
      %328 = vmatpush2.bf16.msra.mxu0 0
      %329 = vmatprep.subr.bf16.mxu0 0
      %330 = vmatpush2.bf16.msra.mxu0 0
      %331 = vmatprep.subr.bf16.mxu0 0
      %332 = vmatpush2.bf16.msra.mxu0 0
      %333 = vmatprep.mubr.bf16.mxu0 0
      %334 = vmatmul.mubr.bf16.gmra.mxu0 %v286
      %v335 = vpop.f32.mrf.mxu0
      %v336 = vadd.f32 0.0, %v335
      %v337 = vpop.f32.mrf.mxu0
      %v338 = vpop.f32.mrf.mxu0
      %v339 = vadd.f32 0.0, %v338
      %v340 = vpop.f32.mrf.mxu0
      %341 = vmatprep.mubr.bf16.mxu0 0
      %342 = vmatmul.mubr.bf16.gmra.mxu0 %v289
      %v343 = vpop.f32.mrf.mxu0
      %v344 = vadd.f32 0.0, %v343
      %v345 = vpop.f32.mrf.mxu0
      %v346 = vpop.f32.mrf.mxu0
      %v347 = vadd.f32 0.0, %v346
      %v348 = vpop.f32.mrf.mxu0
      %349 = vmatprep.mubr.bf16.mxu0 0
      %350 = vmatmul.mubr.bf16.gmra.mxu0 %v292
      %v351 = vpop.f32.mrf.mxu0
      %v352 = vadd.f32 0.0, %v351
      %v353 = vpop.f32.mrf.mxu0
      %v354 = vpop.f32.mrf.mxu0
      %v355 = vadd.f32 0.0, %v354
      %v356 = vpop.f32.mrf.mxu0
      %357 = vmatprep.mubr.bf16.mxu0 0
      %358 = vmatmul.mubr.bf16.gmra.mxu0 %v295
      %v359 = vpop.f32.mrf.mxu0
      %v360 = vadd.f32 0.0, %v359
      %v361 = vpop.f32.mrf.mxu0
      %v362 = vpop.f32.mrf.mxu0
      %v363 = vadd.f32 0.0, %v362
      %v364 = vpop.f32.mrf.mxu0
      %365 = vdwg.mxu0
      %v366 = vpack.c.bf16 %v336, %v336
      %v367 = vpack.c.bf16 %v339, %v339
      %v368 = vpack.c.bf16 %v344, %v344
      %v369 = vpack.c.bf16 %v347, %v347
      %v370 = vpack.c.bf16 %v352, %v352
      %v371 = vpack.c.bf16 %v355, %v355
      %v372 = vpack.c.bf16 %v360, %v360
      %v373 = vpack.c.bf16 %v363, %v363
      %v374 = vld [vmem:[%s2] sm:$0xf]
      %v375 = vld [vmem:[%s2 + $0x4] sm:$0xf]
      %v378 = vunpack.c.l.b16 %v374
      %v379 = vunpack.c.l.b16 %v375
      %v380 = vpack.c.b16 %v379, %v378
      %v382 = vsel %vm284, %v380, 0
      %v385 = vsel %vm297, %v366, 0
      %387 = vmatprep.subr.bf16.mxu0 0
      %388 = vmatpush1.bf16.msra.mxu0 0
      %389 = vmatprep.subr.bf16.mxu0 0
      %390 = vmatpush1.bf16.msra.mxu0 0
      %391 = vmatprep.subr.bf16.mxu0 0
      %392 = vmatpush1.bf16.msra.mxu0 0
      %393 = vmatprep.subr.bf16.mxu0 0
      %394 = vmatpush1.bf16.msra.mxu0 0
      %395 = vmatprep.subr.bf16.mxu0 0
      %396 = vmatpush1.bf16.msra.mxu0 0
      %397 = vmatprep.subr.bf16.mxu0 0
      %398 = vmatpush1.bf16.msra.mxu0 0
      %399 = vmatprep.subr.bf16.mxu0 0
      %400 = vmatpush1.bf16.msra.mxu0 0
      %401 = vmatprep.subr.bf16.mxu0 0
      %402 = vmatpush1.bf16.msra.mxu0 %v385
      %403 = vmatprep.subr.bf16.mxu0 0
      %404 = vmatpush2.bf16.msra.mxu0 0
      %405 = vmatprep.subr.bf16.mxu0 0
      %406 = vmatpush2.bf16.msra.mxu0 0
      %407 = vmatprep.subr.bf16.mxu0 0
      %408 = vmatpush2.bf16.msra.mxu0 0
      %409 = vmatprep.subr.bf16.mxu0 0
      %410 = vmatpush2.bf16.msra.mxu0 0
      %411 = vmatprep.subr.bf16.mxu0 0
      %412 = vmatpush2.bf16.msra.mxu0 0
      %413 = vmatprep.subr.bf16.mxu0 0
      %414 = vmatpush2.bf16.msra.mxu0 0
      %415 = vmatprep.subr.bf16.mxu0 0
      %416 = vmatpush2.bf16.msra.mxu0 0
      %417 = vmatprep.subr.bf16.mxu0 0
      %418 = vmatpush2.bf16.msra.mxu0 0
      %419 = vmatprep.mubr.bf16.mxu0 0
      %420 = vmatmul.mubr.bf16.gmra.mxu0 %v382
      %v421 = vpop.f32.mrf.mxu0
      %v422 = vadd.f32 0.0, %v421
      %v423 = vpop.f32.mrf.mxu0
      %v424 = vpop.f32.mrf.mxu0
      %v425 = vadd.f32 0.0, %v424
      %v426 = vpop.f32.mrf.mxu0
      %427 = vdwg.mxu0
      %v429 = vsel %vm297, %v367, 0
      %431 = vmatprep.subr.bf16.mxu0 0
      %432 = vmatpush1.bf16.msra.mxu0 0
      %433 = vmatprep.subr.bf16.mxu0 0
      %434 = vmatpush1.bf16.msra.mxu0 0
      %435 = vmatprep.subr.bf16.mxu0 0
      %436 = vmatpush1.bf16.msra.mxu0 0
      %437 = vmatprep.subr.bf16.mxu0 0
      %438 = vmatpush1.bf16.msra.mxu0 0
      %439 = vmatprep.subr.bf16.mxu0 0
      %440 = vmatpush1.bf16.msra.mxu0 0
      %441 = vmatprep.subr.bf16.mxu0 0
      %442 = vmatpush1.bf16.msra.mxu0 0
      %443 = vmatprep.subr.bf16.mxu0 0
      %444 = vmatpush1.bf16.msra.mxu0 0
      %445 = vmatprep.subr.bf16.mxu0 0
      %446 = vmatpush1.bf16.msra.mxu0 %v429
      %447 = vmatprep.subr.bf16.mxu0 0
      %448 = vmatpush2.bf16.msra.mxu0 0
      %449 = vmatprep.subr.bf16.mxu0 0
      %450 = vmatpush2.bf16.msra.mxu0 0
      %451 = vmatprep.subr.bf16.mxu0 0
      %452 = vmatpush2.bf16.msra.mxu0 0
      %453 = vmatprep.subr.bf16.mxu0 0
      %454 = vmatpush2.bf16.msra.mxu0 0
      %455 = vmatprep.subr.bf16.mxu0 0
      %456 = vmatpush2.bf16.msra.mxu0 0
      %457 = vmatprep.subr.bf16.mxu0 0
      %458 = vmatpush2.bf16.msra.mxu0 0
      %459 = vmatprep.subr.bf16.mxu0 0
      %460 = vmatpush2.bf16.msra.mxu0 0
      %461 = vmatprep.subr.bf16.mxu0 0
      %462 = vmatpush2.bf16.msra.mxu0 0
      %463 = vmatprep.mubr.bf16.mxu0 0
      %464 = vmatmul.mubr.bf16.gmra.mxu0 %v382
      %v465 = vpop.f32.mrf.mxu0
      %v466 = vadd.f32 0.0, %v465
      %v467 = vpop.f32.mrf.mxu0
      %v468 = vpop.f32.mrf.mxu0
      %v469 = vadd.f32 0.0, %v468
      %v470 = vpop.f32.mrf.mxu0
      %471 = vdwg.mxu0
      %v473 = vsel %vm297, %v368, 0
      %475 = vmatprep.subr.bf16.mxu0 0
      %476 = vmatpush1.bf16.msra.mxu0 0
      %477 = vmatprep.subr.bf16.mxu0 0
      %478 = vmatpush1.bf16.msra.mxu0 0
      %479 = vmatprep.subr.bf16.mxu0 0
      %480 = vmatpush1.bf16.msra.mxu0 0
      %481 = vmatprep.subr.bf16.mxu0 0
      %482 = vmatpush1.bf16.msra.mxu0 0
      %483 = vmatprep.subr.bf16.mxu0 0
      %484 = vmatpush1.bf16.msra.mxu0 0
      %485 = vmatprep.subr.bf16.mxu0 0
      %486 = vmatpush1.bf16.msra.mxu0 0
      %487 = vmatprep.subr.bf16.mxu0 0
      %488 = vmatpush1.bf16.msra.mxu0 0
      %489 = vmatprep.subr.bf16.mxu0 0
      %490 = vmatpush1.bf16.msra.mxu0 %v473
      %491 = vmatprep.subr.bf16.mxu0 0
      %492 = vmatpush2.bf16.msra.mxu0 0
      %493 = vmatprep.subr.bf16.mxu0 0
      %494 = vmatpush2.bf16.msra.mxu0 0
      %495 = vmatprep.subr.bf16.mxu0 0
      %496 = vmatpush2.bf16.msra.mxu0 0
      %497 = vmatprep.subr.bf16.mxu0 0
      %498 = vmatpush2.bf16.msra.mxu0 0
      %499 = vmatprep.subr.bf16.mxu0 0
      %500 = vmatpush2.bf16.msra.mxu0 0
      %501 = vmatprep.subr.bf16.mxu0 0
      %502 = vmatpush2.bf16.msra.mxu0 0
      %503 = vmatprep.subr.bf16.mxu0 0
      %504 = vmatpush2.bf16.msra.mxu0 0
      %505 = vmatprep.subr.bf16.mxu0 0
      %506 = vmatpush2.bf16.msra.mxu0 0
      %507 = vmatprep.mubr.bf16.mxu0 0
      %508 = vmatmul.mubr.bf16.gmra.mxu0 %v382
      %v509 = vpop.f32.mrf.mxu0
      %v510 = vadd.f32 0.0, %v509
      %v511 = vpop.f32.mrf.mxu0
      %v512 = vpop.f32.mrf.mxu0
      %v513 = vadd.f32 0.0, %v512
      %v514 = vpop.f32.mrf.mxu0
      %515 = vdwg.mxu0
      %v517 = vsel %vm297, %v369, 0
      %519 = vmatprep.subr.bf16.mxu0 0
      %520 = vmatpush1.bf16.msra.mxu0 0
      %521 = vmatprep.subr.bf16.mxu0 0
      %522 = vmatpush1.bf16.msra.mxu0 0
      %523 = vmatprep.subr.bf16.mxu0 0
      %524 = vmatpush1.bf16.msra.mxu0 0
      %525 = vmatprep.subr.bf16.mxu0 0
      %526 = vmatpush1.bf16.msra.mxu0 0
      %527 = vmatprep.subr.bf16.mxu0 0
      %528 = vmatpush1.bf16.msra.mxu0 0
      %529 = vmatprep.subr.bf16.mxu0 0
      %530 = vmatpush1.bf16.msra.mxu0 0
      %531 = vmatprep.subr.bf16.mxu0 0
      %532 = vmatpush1.bf16.msra.mxu0 0
      %533 = vmatprep.subr.bf16.mxu0 0
      %534 = vmatpush1.bf16.msra.mxu0 %v517
      %535 = vmatprep.subr.bf16.mxu0 0
      %536 = vmatpush2.bf16.msra.mxu0 0
      %537 = vmatprep.subr.bf16.mxu0 0
      %538 = vmatpush2.bf16.msra.mxu0 0
      %539 = vmatprep.subr.bf16.mxu0 0
      %540 = vmatpush2.bf16.msra.mxu0 0
      %541 = vmatprep.subr.bf16.mxu0 0
      %542 = vmatpush2.bf16.msra.mxu0 0
      %543 = vmatprep.subr.bf16.mxu0 0
      %544 = vmatpush2.bf16.msra.mxu0 0
      %545 = vmatprep.subr.bf16.mxu0 0
      %546 = vmatpush2.bf16.msra.mxu0 0
      %547 = vmatprep.subr.bf16.mxu0 0
      %548 = vmatpush2.bf16.msra.mxu0 0
      %549 = vmatprep.subr.bf16.mxu0 0
      %550 = vmatpush2.bf16.msra.mxu0 0
      %551 = vmatprep.mubr.bf16.mxu0 0
      %552 = vmatmul.mubr.bf16.gmra.mxu0 %v382
      %v553 = vpop.f32.mrf.mxu0
      %v554 = vadd.f32 0.0, %v553
      %v555 = vpop.f32.mrf.mxu0
      %v556 = vpop.f32.mrf.mxu0
      %v557 = vadd.f32 0.0, %v556
      %v558 = vpop.f32.mrf.mxu0
      %559 = vdwg.mxu0
      %v561 = vsel %vm297, %v370, 0
      %563 = vmatprep.subr.bf16.mxu0 0
      %564 = vmatpush1.bf16.msra.mxu0 0
      %565 = vmatprep.subr.bf16.mxu0 0
      %566 = vmatpush1.bf16.msra.mxu0 0
      %567 = vmatprep.subr.bf16.mxu0 0
      %568 = vmatpush1.bf16.msra.mxu0 0
      %569 = vmatprep.subr.bf16.mxu0 0
      %570 = vmatpush1.bf16.msra.mxu0 0
      %571 = vmatprep.subr.bf16.mxu0 0
      %572 = vmatpush1.bf16.msra.mxu0 0
      %573 = vmatprep.subr.bf16.mxu0 0
      %574 = vmatpush1.bf16.msra.mxu0 0
      %575 = vmatprep.subr.bf16.mxu0 0
      %576 = vmatpush1.bf16.msra.mxu0 0
      %577 = vmatprep.subr.bf16.mxu0 0
      %578 = vmatpush1.bf16.msra.mxu0 %v561
      %579 = vmatprep.subr.bf16.mxu0 0
      %580 = vmatpush2.bf16.msra.mxu0 0
      %581 = vmatprep.subr.bf16.mxu0 0
      %582 = vmatpush2.bf16.msra.mxu0 0
      %583 = vmatprep.subr.bf16.mxu0 0
      %584 = vmatpush2.bf16.msra.mxu0 0
      %585 = vmatprep.subr.bf16.mxu0 0
      %586 = vmatpush2.bf16.msra.mxu0 0
      %587 = vmatprep.subr.bf16.mxu0 0
      %588 = vmatpush2.bf16.msra.mxu0 0
      %589 = vmatprep.subr.bf16.mxu0 0
      %590 = vmatpush2.bf16.msra.mxu0 0
      %591 = vmatprep.subr.bf16.mxu0 0
      %592 = vmatpush2.bf16.msra.mxu0 0
      %593 = vmatprep.subr.bf16.mxu0 0
      %594 = vmatpush2.bf16.msra.mxu0 0
      %595 = vmatprep.mubr.bf16.mxu0 0
      %596 = vmatmul.mubr.bf16.gmra.mxu0 %v382
      %v597 = vpop.f32.mrf.mxu0
      %v598 = vadd.f32 0.0, %v597
      %v599 = vpop.f32.mrf.mxu0
      %v600 = vpop.f32.mrf.mxu0
      %v601 = vadd.f32 0.0, %v600
      %v602 = vpop.f32.mrf.mxu0
      %603 = vdwg.mxu0
      %v605 = vsel %vm297, %v371, 0
      %607 = vmatprep.subr.bf16.mxu0 0
      %608 = vmatpush1.bf16.msra.mxu0 0
      %609 = vmatprep.subr.bf16.mxu0 0
      %610 = vmatpush1.bf16.msra.mxu0 0
      %611 = vmatprep.subr.bf16.mxu0 0
      %612 = vmatpush1.bf16.msra.mxu0 0
      %613 = vmatprep.subr.bf16.mxu0 0
      %614 = vmatpush1.bf16.msra.mxu0 0
      %615 = vmatprep.subr.bf16.mxu0 0
      %616 = vmatpush1.bf16.msra.mxu0 0
      %617 = vmatprep.subr.bf16.mxu0 0
      %618 = vmatpush1.bf16.msra.mxu0 0
      %619 = vmatprep.subr.bf16.mxu0 0
      %620 = vmatpush1.bf16.msra.mxu0 0
      %621 = vmatprep.subr.bf16.mxu0 0
      %622 = vmatpush1.bf16.msra.mxu0 %v605
      %623 = vmatprep.subr.bf16.mxu0 0
      %624 = vmatpush2.bf16.msra.mxu0 0
      %625 = vmatprep.subr.bf16.mxu0 0
      %626 = vmatpush2.bf16.msra.mxu0 0
      %627 = vmatprep.subr.bf16.mxu0 0
      %628 = vmatpush2.bf16.msra.mxu0 0
      %629 = vmatprep.subr.bf16.mxu0 0
      %630 = vmatpush2.bf16.msra.mxu0 0
      %631 = vmatprep.subr.bf16.mxu0 0
      %632 = vmatpush2.bf16.msra.mxu0 0
      %633 = vmatprep.subr.bf16.mxu0 0
      %634 = vmatpush2.bf16.msra.mxu0 0
      %635 = vmatprep.subr.bf16.mxu0 0
      %636 = vmatpush2.bf16.msra.mxu0 0
      %637 = vmatprep.subr.bf16.mxu0 0
      %638 = vmatpush2.bf16.msra.mxu0 0
      %639 = vmatprep.mubr.bf16.mxu0 0
      %640 = vmatmul.mubr.bf16.gmra.mxu0 %v382
      %v641 = vpop.f32.mrf.mxu0
      %v642 = vadd.f32 0.0, %v641
      %v643 = vpop.f32.mrf.mxu0
      %v644 = vpop.f32.mrf.mxu0
      %v645 = vadd.f32 0.0, %v644
      %v646 = vpop.f32.mrf.mxu0
      %647 = vdwg.mxu0
      %v649 = vsel %vm297, %v372, 0
      %651 = vmatprep.subr.bf16.mxu0 0
      %652 = vmatpush1.bf16.msra.mxu0 0
      %653 = vmatprep.subr.bf16.mxu0 0
      %654 = vmatpush1.bf16.msra.mxu0 0
      %655 = vmatprep.subr.bf16.mxu0 0
      %656 = vmatpush1.bf16.msra.mxu0 0
      %657 = vmatprep.subr.bf16.mxu0 0
      %658 = vmatpush1.bf16.msra.mxu0 0
      %659 = vmatprep.subr.bf16.mxu0 0
      %660 = vmatpush1.bf16.msra.mxu0 0
      %661 = vmatprep.subr.bf16.mxu0 0
      %662 = vmatpush1.bf16.msra.mxu0 0
      %663 = vmatprep.subr.bf16.mxu0 0
      %664 = vmatpush1.bf16.msra.mxu0 0
      %665 = vmatprep.subr.bf16.mxu0 0
      %666 = vmatpush1.bf16.msra.mxu0 %v649
      %667 = vmatprep.subr.bf16.mxu0 0
      %668 = vmatpush2.bf16.msra.mxu0 0
      %669 = vmatprep.subr.bf16.mxu0 0
      %670 = vmatpush2.bf16.msra.mxu0 0
      %671 = vmatprep.subr.bf16.mxu0 0
      %672 = vmatpush2.bf16.msra.mxu0 0
      %673 = vmatprep.subr.bf16.mxu0 0
      %674 = vmatpush2.bf16.msra.mxu0 0
      %675 = vmatprep.subr.bf16.mxu0 0
      %676 = vmatpush2.bf16.msra.mxu0 0
      %677 = vmatprep.subr.bf16.mxu0 0
      %678 = vmatpush2.bf16.msra.mxu0 0
      %679 = vmatprep.subr.bf16.mxu0 0
      %680 = vmatpush2.bf16.msra.mxu0 0
      %681 = vmatprep.subr.bf16.mxu0 0
      %682 = vmatpush2.bf16.msra.mxu0 0
      %683 = vmatprep.mubr.bf16.mxu0 0
      %684 = vmatmul.mubr.bf16.gmra.mxu0 %v382
      %v685 = vpop.f32.mrf.mxu0
      %v686 = vadd.f32 0.0, %v685
      %v687 = vpop.f32.mrf.mxu0
      %v688 = vpop.f32.mrf.mxu0
      %v689 = vadd.f32 0.0, %v688
      %v690 = vpop.f32.mrf.mxu0
      %691 = vdwg.mxu0
      %v693 = vsel %vm297, %v373, 0
      %695 = vmatprep.subr.bf16.mxu0 0
      %696 = vmatpush1.bf16.msra.mxu0 0
      %697 = vmatprep.subr.bf16.mxu0 0
      %698 = vmatpush1.bf16.msra.mxu0 0
      %699 = vmatprep.subr.bf16.mxu0 0
      %700 = vmatpush1.bf16.msra.mxu0 0
      %701 = vmatprep.subr.bf16.mxu0 0
      %702 = vmatpush1.bf16.msra.mxu0 0
      %703 = vmatprep.subr.bf16.mxu0 0
      %704 = vmatpush1.bf16.msra.mxu0 0
      %705 = vmatprep.subr.bf16.mxu0 0
      %706 = vmatpush1.bf16.msra.mxu0 0
      %707 = vmatprep.subr.bf16.mxu0 0
      %708 = vmatpush1.bf16.msra.mxu0 0
      %709 = vmatprep.subr.bf16.mxu0 0
      %710 = vmatpush1.bf16.msra.mxu0 %v693
      %711 = vmatprep.subr.bf16.mxu0 0
      %712 = vmatpush2.bf16.msra.mxu0 0
      %713 = vmatprep.subr.bf16.mxu0 0
      %714 = vmatpush2.bf16.msra.mxu0 0
      %715 = vmatprep.subr.bf16.mxu0 0
      %716 = vmatpush2.bf16.msra.mxu0 0
      %717 = vmatprep.subr.bf16.mxu0 0
      %718 = vmatpush2.bf16.msra.mxu0 0
      %719 = vmatprep.subr.bf16.mxu0 0
      %720 = vmatpush2.bf16.msra.mxu0 0
      %721 = vmatprep.subr.bf16.mxu0 0
      %722 = vmatpush2.bf16.msra.mxu0 0
      %723 = vmatprep.subr.bf16.mxu0 0
      %724 = vmatpush2.bf16.msra.mxu0 0
      %725 = vmatprep.subr.bf16.mxu0 0
      %726 = vmatpush2.bf16.msra.mxu0 0
      %727 = vmatprep.mubr.bf16.mxu0 0
      %728 = vmatmul.mubr.bf16.gmra.mxu0 %v382
      %v729 = vpop.f32.mrf.mxu0
      %v730 = vadd.f32 0.0, %v729
      %v731 = vpop.f32.mrf.mxu0
      %v732 = vpop.f32.mrf.mxu0
      %v733 = vadd.f32 0.0, %v732
      %v734 = vpop.f32.mrf.mxu0
      %735 = vdwg.mxu0
      %v736 = vcombine.low %v422, %v510
      %v737 = vcombine.high %v422, %v510
      %v739 = vunpack.c.l.s4 1983009808
      %v740 = vunpack.c.0.s8 %v739
      %v741 = vlaneseq
      %v742 = vshrl.u32 %v741, 7
      %v743 = vsub.s32 %v740, %v742
      %v744 = vrot.slane %v736, %v743
      %v746 = vunpack.c.l.s4 1983009808
      %v747 = vunpack.c.0.s8 %v746
      %v748 = vlaneseq
      %v749 = vshrl.u32 %v748, 7
      %v750 = vsub.s32 %v747, %v749
      %v751 = vrot.slane %v737, %v750
      %v752 = vcombine.low %v466, %v554
      %v753 = vcombine.high %v466, %v554
      %v755 = vunpack.c.l.s4 1983009808
      %v756 = vunpack.c.0.s8 %v755
      %v757 = vlaneseq
      %v758 = vshrl.u32 %v757, 7
      %v759 = vsub.s32 %v756, %v758
      %v760 = vrot.slane %v752, %v759
      %v762 = vunpack.c.l.s4 1983009808
      %v763 = vunpack.c.0.s8 %v762
      %v764 = vlaneseq
      %v765 = vshrl.u32 %v764, 7
      %v766 = vsub.s32 %v763, %v765
      %v767 = vrot.slane %v753, %v766
      %v768 = vcombine.low %v598, %v686
      %v769 = vcombine.high %v598, %v686
      %v771 = vunpack.c.l.s4 1983009808
      %v772 = vunpack.c.0.s8 %v771
      %v773 = vlaneseq
      %v774 = vshrl.u32 %v773, 7
      %v775 = vsub.s32 %v772, %v774
      %v776 = vrot.slane %v768, %v775
      %v778 = vunpack.c.l.s4 1983009808
      %v779 = vunpack.c.0.s8 %v778
      %v780 = vlaneseq
      %v781 = vshrl.u32 %v780, 7
      %v782 = vsub.s32 %v779, %v781
      %v783 = vrot.slane %v769, %v782
      %v784 = vcombine.low %v642, %v730
      %v785 = vcombine.high %v642, %v730
      %v787 = vunpack.c.l.s4 1983009808
      %v788 = vunpack.c.0.s8 %v787
      %v789 = vlaneseq
      %v790 = vshrl.u32 %v789, 7
      %v791 = vsub.s32 %v788, %v790
      %v792 = vrot.slane %v784, %v791
      %v794 = vunpack.c.l.s4 1983009808
      %v795 = vunpack.c.0.s8 %v794
      %v796 = vlaneseq
      %v797 = vshrl.u32 %v796, 7
      %v798 = vsub.s32 %v795, %v797
      %v799 = vrot.slane %v785, %v798
      %v800 = vcombine.low %v744, %v760
      %v801 = vcombine.high %v744, %v760
      %v803 = vunpack.c.l.s4 1934713408
      %v804 = vunpack.c.0.s8 %v803
      %v805 = vlaneseq
      %v806 = vshrl.u32 %v805, 7
      %v807 = vsub.s32 %v804, %v806
      %v808 = vrot.slane %v800, %v807
      %v810 = vunpack.c.l.s4 1934713408
      %v811 = vunpack.c.0.s8 %v810
      %v812 = vlaneseq
      %v813 = vshrl.u32 %v812, 7
      %v814 = vsub.s32 %v811, %v813
      %v815 = vrot.slane %v801, %v814
      %v816 = vcombine.low %v751, %v767
      %v817 = vcombine.high %v751, %v767
      %v819 = vunpack.c.l.s4 1934713408
      %v820 = vunpack.c.0.s8 %v819
      %v821 = vlaneseq
      %v822 = vshrl.u32 %v821, 7
      %v823 = vsub.s32 %v820, %v822
      %v824 = vrot.slane %v816, %v823
      %v826 = vunpack.c.l.s4 1934713408
      %v827 = vunpack.c.0.s8 %v826
      %v828 = vlaneseq
      %v829 = vshrl.u32 %v828, 7
      %v830 = vsub.s32 %v827, %v829
      %v831 = vrot.slane %v817, %v830
      %v832 = vcombine.low %v776, %v792
      %v833 = vcombine.high %v776, %v792
      %v835 = vunpack.c.l.s4 1934713408
      %v836 = vunpack.c.0.s8 %v835
      %v837 = vlaneseq
      %v838 = vshrl.u32 %v837, 7
      %v839 = vsub.s32 %v836, %v838
      %v840 = vrot.slane %v832, %v839
      %v842 = vunpack.c.l.s4 1934713408
      %v843 = vunpack.c.0.s8 %v842
      %v844 = vlaneseq
      %v845 = vshrl.u32 %v844, 7
      %v846 = vsub.s32 %v843, %v845
      %v847 = vrot.slane %v833, %v846
      %v848 = vcombine.low %v783, %v799
      %v849 = vcombine.high %v783, %v799
      %v851 = vunpack.c.l.s4 1934713408
      %v852 = vunpack.c.0.s8 %v851
      %v853 = vlaneseq
      %v854 = vshrl.u32 %v853, 7
      %v855 = vsub.s32 %v852, %v854
      %v856 = vrot.slane %v848, %v855
      %v858 = vunpack.c.l.s4 1934713408
      %v859 = vunpack.c.0.s8 %v858
      %v860 = vlaneseq
      %v861 = vshrl.u32 %v860, 7
      %v862 = vsub.s32 %v859, %v861
      %v863 = vrot.slane %v849, %v862
      %v864 = vcombine.low %v808, %v840
      %v865 = vcombine.high %v808, %v840
      %v866 = vcombine.low %v815, %v847
      %v867 = vcombine.high %v815, %v847
      %v868 = vcombine.low %v824, %v856
      %v869 = vcombine.high %v824, %v856
      %v870 = vcombine.low %v831, %v863
      %v871 = vcombine.high %v831, %v863
      %v872 = vcombine.low %v425, %v513
      %v873 = vcombine.high %v425, %v513
      %v875 = vunpack.c.l.s4 1983009808
      %v876 = vunpack.c.0.s8 %v875
      %v877 = vlaneseq
      %v878 = vshrl.u32 %v877, 7
      %v879 = vsub.s32 %v876, %v878
      %v880 = vrot.slane %v872, %v879
      %v882 = vunpack.c.l.s4 1983009808
      %v883 = vunpack.c.0.s8 %v882
      %v884 = vlaneseq
      %v885 = vshrl.u32 %v884, 7
      %v886 = vsub.s32 %v883, %v885
      %v887 = vrot.slane %v873, %v886
      %v888 = vcombine.low %v469, %v557
      %v889 = vcombine.high %v469, %v557
      %v891 = vunpack.c.l.s4 1983009808
      %v892 = vunpack.c.0.s8 %v891
      %v893 = vlaneseq
      %v894 = vshrl.u32 %v893, 7
      %v895 = vsub.s32 %v892, %v894
      %v896 = vrot.slane %v888, %v895
      %v898 = vunpack.c.l.s4 1983009808
      %v899 = vunpack.c.0.s8 %v898
      %v900 = vlaneseq
      %v901 = vshrl.u32 %v900, 7
      %v902 = vsub.s32 %v899, %v901
      %v903 = vrot.slane %v889, %v902
      %v904 = vcombine.low %v601, %v689
      %v905 = vcombine.high %v601, %v689
      %v907 = vunpack.c.l.s4 1983009808
      %v908 = vunpack.c.0.s8 %v907
      %v909 = vlaneseq
      %v910 = vshrl.u32 %v909, 7
      %v911 = vsub.s32 %v908, %v910
      %v912 = vrot.slane %v904, %v911
      %v914 = vunpack.c.l.s4 1983009808
      %v915 = vunpack.c.0.s8 %v914
      %v916 = vlaneseq
      %v917 = vshrl.u32 %v916, 7
      %v918 = vsub.s32 %v915, %v917
      %v919 = vrot.slane %v905, %v918
      %v920 = vcombine.low %v645, %v733
      %v921 = vcombine.high %v645, %v733
      %v923 = vunpack.c.l.s4 1983009808
      %v924 = vunpack.c.0.s8 %v923
      %v925 = vlaneseq
      %v926 = vshrl.u32 %v925, 7
      %v927 = vsub.s32 %v924, %v926
      %v928 = vrot.slane %v920, %v927
      %v930 = vunpack.c.l.s4 1983009808
      %v931 = vunpack.c.0.s8 %v930
      %v932 = vlaneseq
      %v933 = vshrl.u32 %v932, 7
      %v934 = vsub.s32 %v931, %v933
      %v935 = vrot.slane %v921, %v934
      %v936 = vcombine.low %v880, %v896
      %v937 = vcombine.high %v880, %v896
      %v939 = vunpack.c.l.s4 1934713408
      %v940 = vunpack.c.0.s8 %v939
      %v941 = vlaneseq
      %v942 = vshrl.u32 %v941, 7
      %v943 = vsub.s32 %v940, %v942
      %v944 = vrot.slane %v936, %v943
      %v946 = vunpack.c.l.s4 1934713408
      %v947 = vunpack.c.0.s8 %v946
      %v948 = vlaneseq
      %v949 = vshrl.u32 %v948, 7
      %v950 = vsub.s32 %v947, %v949
      %v951 = vrot.slane %v937, %v950
      %v952 = vcombine.low %v887, %v903
      %v953 = vcombine.high %v887, %v903
      %v955 = vunpack.c.l.s4 1934713408
      %v956 = vunpack.c.0.s8 %v955
      %v957 = vlaneseq
      %v958 = vshrl.u32 %v957, 7
      %v959 = vsub.s32 %v956, %v958
      %v960 = vrot.slane %v952, %v959
      %v962 = vunpack.c.l.s4 1934713408
      %v963 = vunpack.c.0.s8 %v962
      %v964 = vlaneseq
      %v965 = vshrl.u32 %v964, 7
      %v966 = vsub.s32 %v963, %v965
      %v967 = vrot.slane %v953, %v966
      %v968 = vcombine.low %v912, %v928
      %v969 = vcombine.high %v912, %v928
      %v971 = vunpack.c.l.s4 1934713408
      %v972 = vunpack.c.0.s8 %v971
      %v973 = vlaneseq
      %v974 = vshrl.u32 %v973, 7
      %v975 = vsub.s32 %v972, %v974
      %v976 = vrot.slane %v968, %v975
      %v978 = vunpack.c.l.s4 1934713408
      %v979 = vunpack.c.0.s8 %v978
      %v980 = vlaneseq
      %v981 = vshrl.u32 %v980, 7
      %v982 = vsub.s32 %v979, %v981
      %v983 = vrot.slane %v969, %v982
      %v984 = vcombine.low %v919, %v935
      %v985 = vcombine.high %v919, %v935
      %v987 = vunpack.c.l.s4 1934713408
      %v988 = vunpack.c.0.s8 %v987
      %v989 = vlaneseq
      %v990 = vshrl.u32 %v989, 7
      %v991 = vsub.s32 %v988, %v990
      %v992 = vrot.slane %v984, %v991
      %v994 = vunpack.c.l.s4 1934713408
      %v995 = vunpack.c.0.s8 %v994
      %v996 = vlaneseq
      %v997 = vshrl.u32 %v996, 7
      %v998 = vsub.s32 %v995, %v997
      %v999 = vrot.slane %v985, %v998
      %v1000 = vcombine.low %v944, %v976
      %v1001 = vcombine.high %v944, %v976
      %v1002 = vcombine.low %v951, %v983
      %v1003 = vcombine.high %v951, %v983
      %v1004 = vcombine.low %v960, %v992
      %v1005 = vcombine.high %v960, %v992
      %v1006 = vcombine.low %v967, %v999
      %v1007 = vcombine.high %v967, %v999
      %1009 = vrot.lane.b32.xlu0 %v865, 16
      %v1010 = vpop.permute.xlu0 %1009
      %1013 = vrot.lane.b32.xlu0 %v866, 32
      %v1014 = vpop.permute.xlu0 %1013
      %1017 = vrot.lane.b32.xlu0 %v867, 48
      %v1018 = vpop.permute.xlu0 %1017
      %1021 = vrot.lane.b32.xlu0 %v868, 64
      %v1022 = vpop.permute.xlu0 %1021
      %1025 = vrot.lane.b32.xlu0 %v869, 80
      %v1026 = vpop.permute.xlu0 %1025
      %1029 = vrot.lane.b32.xlu0 %v870, 96
      %v1030 = vpop.permute.xlu0 %1029
      %1033 = vrot.lane.b32.xlu0 %v871, 112
      %v1034 = vpop.permute.xlu0 %1033
      %1037 = vrot.lane.b32.xlu0 %v1001, 16
      %v1038 = vpop.permute.xlu0 %1037
      %1041 = vrot.lane.b32.xlu0 %v1002, 32
      %v1042 = vpop.permute.xlu0 %1041
      %1045 = vrot.lane.b32.xlu0 %v1003, 48
      %v1046 = vpop.permute.xlu0 %1045
      %1049 = vrot.lane.b32.xlu0 %v1004, 64
      %v1050 = vpop.permute.xlu0 %1049
      %1053 = vrot.lane.b32.xlu0 %v1005, 80
      %v1054 = vpop.permute.xlu0 %1053
      %1057 = vrot.lane.b32.xlu0 %v1006, 96
      %v1058 = vpop.permute.xlu0 %1057
      %1061 = vrot.lane.b32.xlu0 %v1007, 112
      %v1062 = vpop.permute.xlu0 %1061
      %vm1064 = vcmask 130048
      %v1065 = vsel %vm1064, %v864, %v1010
      %vm1066 = vcmask 261120
      %v1067 = vsel %vm1066, %v1065, %v1014
      %vm1068 = vcmask 392192
      %v1069 = vsel %vm1068, %v1067, %v1018
      %vm1070 = vcmask 523264
      %v1071 = vsel %vm1070, %v1069, %v1022
      %vm1072 = vcmask 654336
      %v1073 = vsel %vm1072, %v1071, %v1026
      %vm1074 = vcmask 785408
      %v1075 = vsel %vm1074, %v1073, %v1030
      %vm1076 = vcmask 916480
      %v1077 = vsel %vm1076, %v1075, %v1034
      %v1078 = vsel %vm1064, %v1000, %v1038
      %v1079 = vsel %vm1066, %v1078, %v1042
      %v1080 = vsel %vm1068, %v1079, %v1046
      %v1081 = vsel %vm1070, %v1080, %v1050
      %v1082 = vsel %vm1072, %v1081, %v1054
      %v1083 = vsel %vm1074, %v1082, %v1058
      %v1084 = vsel %vm1076, %v1083, %v1062
      %v1085 = vadd.f32 %v1077, %v1084
      %1086 = vadd.xlane.f32.xlu0 %v1085
      %v1087 = vpop.xlane.xlu0 %1086
      %vm1088 = vcmask 7168
      %1089 = vst.msk [vmem:[%s241] sm:$0xff] %vm1088, %v1087
      %v1090 = vmul.f32 %v1077, %v1077
      %v1091 = vmul.f32 %v1084, %v1084
      %v1092 = vadd.f32 %v1090, %v1091
      %1093 = vadd.xlane.f32.xlu0 %v1092
      %v1094 = vpop.xlane.xlu0 %1093
      %1095 = vst.msk [vmem:[%s245] sm:$0xff] %vm1088, %v1094
      %v1096 = vpack.c.bf16 %v1077, %v1077
      %v1097 = vpack.c.bf16 %v1084, %v1084
      %v1100 = vunpack.c.l.b16 %v1096
      %v1101 = vunpack.c.l.b16 %v1097
      %v1102 = vpack.c.b16 %v1101, %v1100
      %1104 = vst [vmem:[%s237] sm:$0xff] %v1102
      %p1105 = scmp.lt.s32.totalorder %s17, 1
      %s1106 = scalar_select %p1105, %s17, 1
      %s1107 = smul.addr %s1106, 2
      %s1108 = smul.addr %s1107, 4
      %s1109 = scalar_lea.vmem %s3, %s1108
      %p1110 = scmp.lt.s32.totalorder %s17, 1
      %s1111 = scalar_select %p1110, %s17, 1
      %s1112 = smul.addr %s1111, 8
      %s1113 = scalar_lea.vmem %s4, %s1112
      %p1114 = scmp.lt.s32.totalorder %s17, 1
      %s1115 = scalar_select %p1114, %s17, 1
      %s1116 = smul.addr %s1115, 8
      %s1117 = scalar_lea.vmem %s5, %s1116
      // Predicated region
      $region33: #{uupblock_forward.5} parent=31 // pred_check
        %p1118 = pneg %p103
      $region34: #{uupblock_forward.5} parent=31 // pred_check_branch
        %1120 = sbr.rel (%p1118) target = $region36
      $region35: #{uupblock_forward.5} parent=31 // pred_region
        _
      $region36: #{uupblock_forward.5} parent=31 // pred_fallthru
        _
      // Predicated region
      $region37: #{uupblock_forward.5} parent=31 // pred_check
        %p1121 = pneg %p129
      $region38: #{uupblock_forward.5} parent=31 // pred_check_branch
        %1123 = sbr.rel (%p1121) target = $region40
      $region39: #{uupblock_forward.5} parent=31 // pred_region
        _
      $region40: #{uupblock_forward.5} parent=31 // pred_fallthru
        _
      // Predicated region
      $region41: #{uupblock_forward.5} parent=31 // pred_check
        %p1124 = pneg %p155
      $region42: #{uupblock_forward.5} parent=31 // pred_check_branch
        %1126 = sbr.rel (%p1124) target = $region44
      $region43: #{uupblock_forward.5} parent=31 // pred_region
        _
      $region44: #{uupblock_forward.5} parent=31 // pred_fallthru
        _
    $region32: #{uupblock_forward.5} parent=5 // pred_fallthru
      _
    %p1127 = scmp.le.s32.totalorder 2, %s12
    // Predicated region
    $region45: #{uupblock_forward.5} parent=5 // pred_check
      %p1128 = pneg %p1127
    $region46: #{uupblock_forward.5} parent=5 // pred_check_branch
      %1130 = sbr.rel (%p1128) target = $region48
    $region47: #{uupblock_forward.5} parent=5 // pred_region
      %s1131 = ssub.s32 %s12, 2
      // Predicated region
      $region49: #{uupblock_forward.5} parent=47 // pred_check
        %p1132 = pneg %p109
      $region50: #{uupblock_forward.5} parent=47 // pred_check_branch
        %1134 = sbr.rel (%p1132) target = $region52
      $region51: #{uupblock_forward.5} parent=47 // pred_region
        %p1135 = scmp.lt.s32.totalorder %s18, 1
        %s1136 = scalar_select %p1135, %s18, 1
        %s1137 = smul.addr %s1136, 2
        %s1138 = smul.addr %s1137, 4
        %s1139 = scalar_lea.vmem %s3, %s1138
      $region52: #{uupblock_forward.5} parent=47 // pred_fallthru
        _
      // Predicated region
      $region53: #{uupblock_forward.5} parent=47 // pred_check
        %p1140 = pneg %p135
      $region54: #{uupblock_forward.5} parent=47 // pred_check_branch
        %1142 = sbr.rel (%p1140) target = $region56
      $region55: #{uupblock_forward.5} parent=47 // pred_region
        %p1143 = scmp.lt.s32.totalorder %s18, 1
        %s1144 = scalar_select %p1143, %s18, 1
        %s1145 = smul.addr %s1144, 8
        %s1146 = scalar_lea.vmem %s4, %s1145
      $region56: #{uupblock_forward.5} parent=47 // pred_fallthru
        _
      // Predicated region
      $region57: #{uupblock_forward.5} parent=47 // pred_check
        %p1147 = pneg %p161
      $region58: #{uupblock_forward.5} parent=47 // pred_check_branch
        %1149 = sbr.rel (%p1147) target = $region60
      $region59: #{uupblock_forward.5} parent=47 // pred_region
        %p1150 = scmp.lt.s32.totalorder %s18, 1
        %s1151 = scalar_select %p1150, %s18, 1
        %s1152 = smul.addr %s1151, 8
        %s1153 = scalar_lea.vmem %s5, %s1152
      $region60: #{uupblock_forward.5} parent=47 // pred_fallthru
        _
    $region48: #{uupblock_forward.5} parent=5 // pred_fallthru
      _
  $region6: #{uupblock_forward.5} parent=0 // loop_footer
    %s16 = sadd.s32 1, %s12
  $region7: #{uupblock_forward.5} parent=0 // loop_footer_branch
    %11 = sbr.rel target = $region3
  $region8: #{uupblock_forward.5} parent=0 // loop_exit
    _

// kernel: uupblock_forward.9
$region0: #{uupblock_forward.9}
  #allocation0 [shape = 'u32[]', space=smem, size = 0x4, offset = 0x4, fixed_abs, tag = 'smem constant byte address 0x4 - core index']
  #allocation1 [shape = 'u32[144,128]{1,0:T(1,128)}', space=vmem, size = 0x12000, scoped, tag = 'internal scratch']
  %s0 = inlined_call_operand.vmem [shape: bf16[2,8,256], index: 0, kind: input, shape index: {}]
  %s1 = inlined_call_operand.vmem [shape: f32[8,1], index: 1, kind: input, shape index: {}]
  %s2 = inlined_call_operand.vmem [shape: f32[8,1], index: 2, kind: input, shape index: {}]
  %s3 = inlined_call_operand.vmem [shape: f32[2,8,256], index: 3, kind: output, shape index: {}]
  %s4 = sld [smem:[#allocation0]]
  $region45: #{uupblock_forward.9} parent=0
    _
  %s6 = ssub.s32 1, %s4
  %s7 = scalar_select 0, %s6, %s4
  loop: start=0, step=1, limit=4
  $region2: #{uupblock_forward.9} parent=0 // loop_pre_header
    _
  $region3: #{uupblock_forward.9} parent=0 // loop_header
    %s9 = sphi 0, %s13
    %p10 = scmp.ge.s32.totalorder %s9, 4
    %s19 = sphi 0, %s21
    %s22 = sphi 0, %s19
    %s23 = sphi 0, %s22
    %s39 = sphi 0, %s23
    %s43 = sphi 0, %s43
    %s45 = sphi 0, %s43
    %s46 = sphi 0, %s45
    %s60 = sphi 0, %s46
    %s64 = sphi 0, %s64
    %s66 = sphi 0, %s64
    %s67 = sphi 0, %s66
    %s81 = sphi 0, %s67
    %s87 = sphi 0, %s89
    %s90 = sphi 0, %s87
    %s91 = sphi 0, %s90
    %s107 = sphi 0, %s91
  $region4: #{uupblock_forward.9} parent=0 // loop_header_branch
    %12 = sbr.rel (%p10) target = $region8
  $region5: #{uupblock_forward.9} parent=0 // loop_body
    %s14 = ssub.s32 %s9, 1
    %s15 = ssub.s32 %s9, 2
    %s16 = sadd.s32 %s9, 1
    %s17 = ssub.s32 %s9, %s16
    %p18 = scmp.eq.s32.totalorder %s17, 0
    %s20 = sadd.s32 %s19, 1
    %s21 = scalar_select %p18, %s19, %s20
    %p24 = pneg %p18
    %p25 = scmp.eq.s32.totalorder %s9, 1
    %p26 = por %p24, %p25
    %p27 = scmp.ne.s32.totalorder %s19, %s22
    %p28 = scmp.eq.s32.totalorder %s9, 0
    %p29 = por %p27, %p28
    %p30 = scmp.ne.s32.totalorder %s19, %s22
    %p31 = scmp.eq.s32.totalorder %s14, 1
    %p32 = por %p30, %p31
    %p33 = scmp.ne.s32.totalorder %s22, %s23
    %p34 = scmp.eq.s32.totalorder %s14, 0
    %p35 = por %p33, %p34
    %p36 = scmp.ne.s32.totalorder %s22, %s23
    %p37 = scmp.eq.s32.totalorder %s15, 1
    %p38 = por %p36, %p37
    %p40 = scmp.ne.s32.totalorder %s23, %s39
    %p41 = scmp.eq.s32.totalorder %s15, 0
    %p42 = por %p40, %p41
    %s44 = sadd.s32 %s43, 1
    %p47 = scmp.eq.s32.totalorder %s9, 1
    %p48 = scmp.ne.s32.totalorder %s43, %s45
    %p49 = scmp.eq.s32.totalorder %s9, 0
    %p50 = por %p48, %p49
    %p51 = scmp.ne.s32.totalorder %s43, %s45
    %p52 = scmp.eq.s32.totalorder %s14, 1
    %p53 = por %p51, %p52
    %p54 = scmp.ne.s32.totalorder %s45, %s46
    %p55 = scmp.eq.s32.totalorder %s14, 0
    %p56 = por %p54, %p55
    %p57 = scmp.ne.s32.totalorder %s45, %s46
    %p58 = scmp.eq.s32.totalorder %s15, 1
    %p59 = por %p57, %p58
    %p61 = scmp.ne.s32.totalorder %s46, %s60
    %p62 = scmp.eq.s32.totalorder %s15, 0
    %p63 = por %p61, %p62
    %s65 = sadd.s32 %s64, 1
    %p68 = scmp.eq.s32.totalorder %s9, 1
    %p69 = scmp.ne.s32.totalorder %s64, %s66
    %p70 = scmp.eq.s32.totalorder %s9, 0
    %p71 = por %p69, %p70
    %p72 = scmp.ne.s32.totalorder %s64, %s66
    %p73 = scmp.eq.s32.totalorder %s14, 1
    %p74 = por %p72, %p73
    %p75 = scmp.ne.s32.totalorder %s66, %s67
    %p76 = scmp.eq.s32.totalorder %s14, 0
    %p77 = por %p75, %p76
    %p78 = scmp.ne.s32.totalorder %s66, %s67
    %p79 = scmp.eq.s32.totalorder %s15, 1
    %p80 = por %p78, %p79
    %p82 = scmp.ne.s32.totalorder %s67, %s81
    %p83 = scmp.eq.s32.totalorder %s15, 0
    %p84 = por %p82, %p83
    %s85 = ssub.s32 %s9, %s16
    %p86 = scmp.eq.s32.totalorder %s85, 0
    %s88 = sadd.s32 %s87, 1
    %s89 = scalar_select %p86, %s87, %s88
    %p92 = pneg %p86
    %p93 = scmp.eq.s32.totalorder %s9, 1
    %p94 = por %p92, %p93
    %p95 = scmp.ne.s32.totalorder %s87, %s90
    %p96 = scmp.eq.s32.totalorder %s9, 0
    %p97 = por %p95, %p96
    %p98 = scmp.ne.s32.totalorder %s87, %s90
    %p99 = scmp.eq.s32.totalorder %s14, 1
    %p100 = por %p98, %p99
    %p101 = scmp.ne.s32.totalorder %s90, %s91
    %p102 = scmp.eq.s32.totalorder %s14, 0
    %p103 = por %p101, %p102
    %p104 = scmp.ne.s32.totalorder %s90, %s91
    %p105 = scmp.eq.s32.totalorder %s15, 1
    %p106 = por %p104, %p105
    %p108 = scmp.ne.s32.totalorder %s91, %s107
    %p109 = scmp.eq.s32.totalorder %s15, 0
    %p110 = por %p108, %p109
    %p111 = scmp.le.s32.totalorder 1, %s9
    %p112 = scmp.lt.s32.totalorder %s9, 3
    %p113 = pnand %p111, %p112
    %p114 = pneg %p113
    // Predicated region
    $region9: #{uupblock_forward.9} parent=5 // pred_check
      _
    $region10: #{uupblock_forward.9} parent=5 // pred_check_branch
      %116 = sbr.rel (%p113) target = $region12
    $region11: #{uupblock_forward.9} parent=5 // pred_region
      %s117 = ssub.s32 %s9, 1
      // Predicated region
      $region13: #{uupblock_forward.9} parent=11 // pred_check
        %p118 = pneg %p56
      $region14: #{uupblock_forward.9} parent=11 // pred_check_branch
        %120 = sbr.rel (%p118) target = $region16
      $region15: #{uupblock_forward.9} parent=11 // pred_region
        _
      $region16: #{uupblock_forward.9} parent=11 // pred_fallthru
        _
      // Predicated region
      $region17: #{uupblock_forward.9} parent=11 // pred_check
        %p121 = pneg %p77
      $region18: #{uupblock_forward.9} parent=11 // pred_check_branch
        %123 = sbr.rel (%p121) target = $region20
      $region19: #{uupblock_forward.9} parent=11 // pred_region
        _
      $region20: #{uupblock_forward.9} parent=11 // pred_fallthru
        _
    $region12: #{uupblock_forward.9} parent=5 // pred_fallthru
      _
    %p124 = scmp.lt.s32.totalorder %s9, 2
    // Predicated region
    $region21: #{uupblock_forward.9} parent=5 // pred_check
      %p125 = pneg %p124
    $region22: #{uupblock_forward.9} parent=5 // pred_check_branch
      %127 = sbr.rel (%p125) target = $region24
    $region23: #{uupblock_forward.9} parent=5 // pred_region
      // Predicated region
      $region25: #{uupblock_forward.9} parent=23 // pred_check
        %p128 = pneg %p29
      $region26: #{uupblock_forward.9} parent=23 // pred_check_branch
        %130 = sbr.rel (%p128) target = $region28
      $region27: #{uupblock_forward.9} parent=23 // pred_region
        %p131 = scmp.lt.s32.totalorder %s9, 1
        %s132 = scalar_select %p131, %s9, 1
        %s133 = smul.addr %s132, 2
        %s134 = smul.addr %s133, 4
        %s135 = scalar_lea.vmem %s0, %s134
      $region28: #{uupblock_forward.9} parent=23 // pred_fallthru
        _
    $region24: #{uupblock_forward.9} parent=5 // pred_fallthru
      _
    %p136 = scmp.le.s32.totalorder 1, %s9
    %p137 = scmp.lt.s32.totalorder %s9, 3
    %p138 = pnand %p136, %p137
    %p139 = pneg %p138
    // Predicated region
    $region29: #{uupblock_forward.9} parent=5 // pred_check
      _
    $region30: #{uupblock_forward.9} parent=5 // pred_check_branch
      %141 = sbr.rel (%p138) target = $region32
    $region31: #{uupblock_forward.9} parent=5 // pred_region
      %s142 = ssub.s32 %s9, 1
      %p143 = scmp.lt.s32.totalorder %s14, 1
      %s144 = scalar_select %p143, %s14, 1
      %s145 = smul.addr %s144, 2
      %s146 = smul.addr %s145, 4
      %s147 = scalar_lea.vmem %s0, %s146
      %p148 = pneg %p35
      %p149 = pneg %p32
      %p150 = pneg %p56
      %p151 = pneg %p53
      %p152 = pneg %p77
      %p153 = pneg %p74
      %p154 = pneg %p103
      %p155 = pneg %p100
      %p156 = scmp.lt.s32.totalorder %s14, 1
      %s157 = scalar_select %p156, %s14, 1
      %s158 = smul.addr %s157, 2
      %s159 = smul.addr %s158, 8
      %s160 = scalar_lea.vmem %s3, %s159
      %p161 = scmp.lt.s32.totalorder %s14, 1
      %s162 = scalar_select %p161, %s14, 1
      %s163 = smul.addr %s162, 2
      %s164 = smul.addr %s163, 4
      %s165 = scalar_lea.vmem %s0, %s164
      %p166 = scmp.lt.s32.totalorder %s14, 1
      %s167 = scalar_select %p166, %s14, 1
      %s168 = smul.addr %s167, 2
      %s169 = smul.addr %s168, 8
      %s170 = scalar_lea.vmem %s3, %s169
      %v171 = vld [vmem:[%s165] sm:$0xff]
      %v172 = vunpack.c.l.bf16 %v171
      %v173 = vunpack.c.h.bf16 %v171
      %v174 = vld [vmem:[%s1] sm:$0xff]
      %176 = vset.pattern.permute.xlu0 0
      %177 = vperm.xlu0 %176, %v174
      %v178 = vpop.permute.xlu0 %177
      %v180 = vmul.f32 %v172, %v178
      %v181 = vmul.f32 %v173, %v178
      %v182 = vld [vmem:[%s2] sm:$0xff]
      %184 = vset.pattern.permute.xlu0 0
      %185 = vperm.xlu0 %184, %v182
      %v186 = vpop.permute.xlu0 %185
      %v188 = vadd.f32 %v180, %v186
      %v189 = vadd.f32 %v181, %v186
      %vm190 = vcmp.ge.f32.partialorder %v188, 0.0
      %vm191 = vcmp.ge.f32.partialorder %v189, 0.0
      %v192 = vmul.f32 %v188, 0.2
      %v193 = vmul.f32 %v189, 0.2
      %v194 = vsel %vm190, %v188, %v192
      %v195 = vsel %vm191, %v189, %v193
      %196 = vst [vmem:[%s170] sm:$0xff] %v194
      %197 = vst [vmem:[%s170 + $0x8] sm:$0xff] %v195
      %p198 = scmp.lt.s32.totalorder %s14, 1
      %s199 = scalar_select %p198, %s14, 1
      %s200 = smul.addr %s199, 2
      %s201 = smul.addr %s200, 8
      %s202 = scalar_lea.vmem %s3, %s201
      // Predicated region
      $region33: #{uupblock_forward.9} parent=31 // pred_check
        %p203 = pneg %p100
      $region34: #{uupblock_forward.9} parent=31 // pred_check_branch
        %205 = sbr.rel (%p203) target = $region36
      $region35: #{uupblock_forward.9} parent=31 // pred_region
        _
      $region36: #{uupblock_forward.9} parent=31 // pred_fallthru
        _
    $region32: #{uupblock_forward.9} parent=5 // pred_fallthru
      _
    %p206 = scmp.le.s32.totalorder 2, %s9
    // Predicated region
    $region37: #{uupblock_forward.9} parent=5 // pred_check
      %p207 = pneg %p206
    $region38: #{uupblock_forward.9} parent=5 // pred_check_branch
      %209 = sbr.rel (%p207) target = $region40
    $region39: #{uupblock_forward.9} parent=5 // pred_region
      %s210 = ssub.s32 %s9, 2
      // Predicated region
      $region41: #{uupblock_forward.9} parent=39 // pred_check
        %p211 = pneg %p106
      $region42: #{uupblock_forward.9} parent=39 // pred_check_branch
        %213 = sbr.rel (%p211) target = $region44
      $region43: #{uupblock_forward.9} parent=39 // pred_region
        %p214 = scmp.lt.s32.totalorder %s15, 1
        %s215 = scalar_select %p214, %s15, 1
        %s216 = smul.addr %s215, 2
        %s217 = smul.addr %s216, 8
        %s218 = scalar_lea.vmem %s3, %s217
      $region44: #{uupblock_forward.9} parent=39 // pred_fallthru
        _
    $region40: #{uupblock_forward.9} parent=5 // pred_fallthru
      _
  $region6: #{uupblock_forward.9} parent=0 // loop_footer
    %s13 = sadd.s32 1, %s9
  $region7: #{uupblock_forward.9} parent=0 // loop_footer_branch
    %8 = sbr.rel target = $region3
  $region8: #{uupblock_forward.9} parent=0 // loop_exit
    _

// kernel: uupblock_forward.8
$region0: #{uupblock_forward.8}
  #allocation0 [shape = 'u32[]', space=smem, size = 0x4, offset = 0x4, fixed_abs, tag = 'smem constant byte address 0x4 - core index']
  #allocation1 [shape = 'u32[144,128]{1,0:T(1,128)}', space=vmem, size = 0x12000, scoped, tag = 'internal scratch']
  %s0 = inlined_call_operand.vmem [shape: bf16[2,8,256], index: 0, kind: input, shape index: {}]
  %s1 = inlined_call_operand.vmem [shape: f32[8,1], index: 1, kind: input, shape index: {}]
  %s2 = inlined_call_operand.vmem [shape: f32[8,1], index: 2, kind: input, shape index: {}]
  %s3 = inlined_call_operand.vmem [shape: bf16[8,72], index: 3, kind: input, shape index: {}]
  %s4 = inlined_call_operand.vmem [shape: f32[8,1], index: 4, kind: input, shape index: {}]
  %s5 = inlined_call_operand.vmem [shape: bf16[2,8,256], index: 5, kind: output, shape index: {0}]
  %s6 = inlined_call_operand.vmem [shape: f32[2,8,1], index: 6, kind: output, shape index: {1}]
  %s7 = inlined_call_operand.vmem [shape: f32[2,8,1], index: 7, kind: output, shape index: {2}]
  %8 = xla_tuple %s5, %s6, %s7
  %s9 = sld [smem:[#allocation0]]
  $region69: #{uupblock_forward.8} parent=0
    _
  %s11 = ssub.s32 1, %s9
  %s12 = scalar_select 0, %s11, %s9
  loop: start=0, step=1, limit=4
  $region2: #{uupblock_forward.8} parent=0 // loop_pre_header
    _
  $region3: #{uupblock_forward.8} parent=0 // loop_header
    %s14 = sphi 0, %s18
    %p15 = scmp.ge.s32.totalorder %s14, 4
    %s24 = sphi 0, %s26
    %s27 = sphi 0, %s24
    %s28 = sphi 0, %s27
    %s44 = sphi 0, %s28
    %s48 = sphi 0, %s48
    %s50 = sphi 0, %s48
    %s51 = sphi 0, %s50
    %s65 = sphi 0, %s51
    %s69 = sphi 0, %s69
    %s71 = sphi 0, %s69
    %s72 = sphi 0, %s71
    %s86 = sphi 0, %s72
    %s90 = sphi 0, %s90
    %s92 = sphi 0, %s90
    %s93 = sphi 0, %s92
    %s107 = sphi 0, %s93
    %s111 = sphi 0, %s111
    %s113 = sphi 0, %s111
    %s114 = sphi 0, %s113
    %s128 = sphi 0, %s114
    %s134 = sphi 0, %s136
    %s137 = sphi 0, %s134
    %s138 = sphi 0, %s137
    %s154 = sphi 0, %s138
    %s160 = sphi 0, %s162
    %s163 = sphi 0, %s160
    %s164 = sphi 0, %s163
    %s180 = sphi 0, %s164
    %s186 = sphi 0, %s188
    %s189 = sphi 0, %s186
    %s190 = sphi 0, %s189
    %s206 = sphi 0, %s190
  $region4: #{uupblock_forward.8} parent=0 // loop_header_branch
    %17 = sbr.rel (%p15) target = $region8
  $region5: #{uupblock_forward.8} parent=0 // loop_body
    %s19 = ssub.s32 %s14, 1
    %s20 = ssub.s32 %s14, 2
    %s21 = sadd.s32 %s14, 1
    %s22 = ssub.s32 %s14, %s21
    %p23 = scmp.eq.s32.totalorder %s22, 0
    %s25 = sadd.s32 %s24, 1
    %s26 = scalar_select %p23, %s24, %s25
    %p29 = pneg %p23
    %p30 = scmp.eq.s32.totalorder %s14, 1
    %p31 = por %p29, %p30
    %p32 = scmp.ne.s32.totalorder %s24, %s27
    %p33 = scmp.eq.s32.totalorder %s14, 0
    %p34 = por %p32, %p33
    %p35 = scmp.ne.s32.totalorder %s24, %s27
    %p36 = scmp.eq.s32.totalorder %s19, 1
    %p37 = por %p35, %p36
    %p38 = scmp.ne.s32.totalorder %s27, %s28
    %p39 = scmp.eq.s32.totalorder %s19, 0
    %p40 = por %p38, %p39
    %p41 = scmp.ne.s32.totalorder %s27, %s28
    %p42 = scmp.eq.s32.totalorder %s20, 1
    %p43 = por %p41, %p42
    %p45 = scmp.ne.s32.totalorder %s28, %s44
    %p46 = scmp.eq.s32.totalorder %s20, 0
    %p47 = por %p45, %p46
    %s49 = sadd.s32 %s48, 1
    %p52 = scmp.eq.s32.totalorder %s14, 1
    %p53 = scmp.ne.s32.totalorder %s48, %s50
    %p54 = scmp.eq.s32.totalorder %s14, 0
    %p55 = por %p53, %p54
    %p56 = scmp.ne.s32.totalorder %s48, %s50
    %p57 = scmp.eq.s32.totalorder %s19, 1
    %p58 = por %p56, %p57
    %p59 = scmp.ne.s32.totalorder %s50, %s51
    %p60 = scmp.eq.s32.totalorder %s19, 0
    %p61 = por %p59, %p60
    %p62 = scmp.ne.s32.totalorder %s50, %s51
    %p63 = scmp.eq.s32.totalorder %s20, 1
    %p64 = por %p62, %p63
    %p66 = scmp.ne.s32.totalorder %s51, %s65
    %p67 = scmp.eq.s32.totalorder %s20, 0
    %p68 = por %p66, %p67
    %s70 = sadd.s32 %s69, 1
    %p73 = scmp.eq.s32.totalorder %s14, 1
    %p74 = scmp.ne.s32.totalorder %s69, %s71
    %p75 = scmp.eq.s32.totalorder %s14, 0
    %p76 = por %p74, %p75
    %p77 = scmp.ne.s32.totalorder %s69, %s71
    %p78 = scmp.eq.s32.totalorder %s19, 1
    %p79 = por %p77, %p78
    %p80 = scmp.ne.s32.totalorder %s71, %s72
    %p81 = scmp.eq.s32.totalorder %s19, 0
    %p82 = por %p80, %p81
    %p83 = scmp.ne.s32.totalorder %s71, %s72
    %p84 = scmp.eq.s32.totalorder %s20, 1
    %p85 = por %p83, %p84
    %p87 = scmp.ne.s32.totalorder %s72, %s86
    %p88 = scmp.eq.s32.totalorder %s20, 0
    %p89 = por %p87, %p88
    %s91 = sadd.s32 %s90, 1
    %p94 = scmp.eq.s32.totalorder %s14, 1
    %p95 = scmp.ne.s32.totalorder %s90, %s92
    %p96 = scmp.eq.s32.totalorder %s14, 0
    %p97 = por %p95, %p96
    %p98 = scmp.ne.s32.totalorder %s90, %s92
    %p99 = scmp.eq.s32.totalorder %s19, 1
    %p100 = por %p98, %p99
    %p101 = scmp.ne.s32.totalorder %s92, %s93
    %p102 = scmp.eq.s32.totalorder %s19, 0
    %p103 = por %p101, %p102
    %p104 = scmp.ne.s32.totalorder %s92, %s93
    %p105 = scmp.eq.s32.totalorder %s20, 1
    %p106 = por %p104, %p105
    %p108 = scmp.ne.s32.totalorder %s93, %s107
    %p109 = scmp.eq.s32.totalorder %s20, 0
    %p110 = por %p108, %p109
    %s112 = sadd.s32 %s111, 1
    %p115 = scmp.eq.s32.totalorder %s14, 1
    %p116 = scmp.ne.s32.totalorder %s111, %s113
    %p117 = scmp.eq.s32.totalorder %s14, 0
    %p118 = por %p116, %p117
    %p119 = scmp.ne.s32.totalorder %s111, %s113
    %p120 = scmp.eq.s32.totalorder %s19, 1
    %p121 = por %p119, %p120
    %p122 = scmp.ne.s32.totalorder %s113, %s114
    %p123 = scmp.eq.s32.totalorder %s19, 0
    %p124 = por %p122, %p123
    %p125 = scmp.ne.s32.totalorder %s113, %s114
    %p126 = scmp.eq.s32.totalorder %s20, 1
    %p127 = por %p125, %p126
    %p129 = scmp.ne.s32.totalorder %s114, %s128
    %p130 = scmp.eq.s32.totalorder %s20, 0
    %p131 = por %p129, %p130
    %s132 = ssub.s32 %s14, %s21
    %p133 = scmp.eq.s32.totalorder %s132, 0
    %s135 = sadd.s32 %s134, 1
    %s136 = scalar_select %p133, %s134, %s135
    %p139 = pneg %p133
    %p140 = scmp.eq.s32.totalorder %s14, 1
    %p141 = por %p139, %p140
    %p142 = scmp.ne.s32.totalorder %s134, %s137
    %p143 = scmp.eq.s32.totalorder %s14, 0
    %p144 = por %p142, %p143
    %p145 = scmp.ne.s32.totalorder %s134, %s137
    %p146 = scmp.eq.s32.totalorder %s19, 1
    %p147 = por %p145, %p146
    %p148 = scmp.ne.s32.totalorder %s137, %s138
    %p149 = scmp.eq.s32.totalorder %s19, 0
    %p150 = por %p148, %p149
    %p151 = scmp.ne.s32.totalorder %s137, %s138
    %p152 = scmp.eq.s32.totalorder %s20, 1
    %p153 = por %p151, %p152
    %p155 = scmp.ne.s32.totalorder %s138, %s154
    %p156 = scmp.eq.s32.totalorder %s20, 0
    %p157 = por %p155, %p156
    %s158 = ssub.s32 %s14, %s21
    %p159 = scmp.eq.s32.totalorder %s158, 0
    %s161 = sadd.s32 %s160, 1
    %s162 = scalar_select %p159, %s160, %s161
    %p165 = pneg %p159
    %p166 = scmp.eq.s32.totalorder %s14, 1
    %p167 = por %p165, %p166
    %p168 = scmp.ne.s32.totalorder %s160, %s163
    %p169 = scmp.eq.s32.totalorder %s14, 0
    %p170 = por %p168, %p169
    %p171 = scmp.ne.s32.totalorder %s160, %s163
    %p172 = scmp.eq.s32.totalorder %s19, 1
    %p173 = por %p171, %p172
    %p174 = scmp.ne.s32.totalorder %s163, %s164
    %p175 = scmp.eq.s32.totalorder %s19, 0
    %p176 = por %p174, %p175
    %p177 = scmp.ne.s32.totalorder %s163, %s164
    %p178 = scmp.eq.s32.totalorder %s20, 1
    %p179 = por %p177, %p178
    %p181 = scmp.ne.s32.totalorder %s164, %s180
    %p182 = scmp.eq.s32.totalorder %s20, 0
    %p183 = por %p181, %p182
    %s184 = ssub.s32 %s14, %s21
    %p185 = scmp.eq.s32.totalorder %s184, 0
    %s187 = sadd.s32 %s186, 1
    %s188 = scalar_select %p185, %s186, %s187
    %p191 = pneg %p185
    %p192 = scmp.eq.s32.totalorder %s14, 1
    %p193 = por %p191, %p192
    %p194 = scmp.ne.s32.totalorder %s186, %s189
    %p195 = scmp.eq.s32.totalorder %s14, 0
    %p196 = por %p194, %p195
    %p197 = scmp.ne.s32.totalorder %s186, %s189
    %p198 = scmp.eq.s32.totalorder %s19, 1
    %p199 = por %p197, %p198
    %p200 = scmp.ne.s32.totalorder %s189, %s190
    %p201 = scmp.eq.s32.totalorder %s19, 0
    %p202 = por %p200, %p201
    %p203 = scmp.ne.s32.totalorder %s189, %s190
    %p204 = scmp.eq.s32.totalorder %s20, 1
    %p205 = por %p203, %p204
    %p207 = scmp.ne.s32.totalorder %s190, %s206
    %p208 = scmp.eq.s32.totalorder %s20, 0
    %p209 = por %p207, %p208
    %p210 = scmp.le.s32.totalorder 1, %s14
    %p211 = scmp.lt.s32.totalorder %s14, 3
    %p212 = pnand %p210, %p211
    %p213 = pneg %p212
    // Predicated region
    $region9: #{uupblock_forward.8} parent=5 // pred_check
      _
    $region10: #{uupblock_forward.8} parent=5 // pred_check_branch
      %215 = sbr.rel (%p212) target = $region12
    $region11: #{uupblock_forward.8} parent=5 // pred_region
      %s216 = ssub.s32 %s14, 1
      // Predicated region
      $region13: #{uupblock_forward.8} parent=11 // pred_check
        %p217 = pneg %p61
      $region14: #{uupblock_forward.8} parent=11 // pred_check_branch
        %219 = sbr.rel (%p217) target = $region16
      $region15: #{uupblock_forward.8} parent=11 // pred_region
        _
      $region16: #{uupblock_forward.8} parent=11 // pred_fallthru
        _
      // Predicated region
      $region17: #{uupblock_forward.8} parent=11 // pred_check
        %p220 = pneg %p82
      $region18: #{uupblock_forward.8} parent=11 // pred_check_branch
        %222 = sbr.rel (%p220) target = $region20
      $region19: #{uupblock_forward.8} parent=11 // pred_region
        _
      $region20: #{uupblock_forward.8} parent=11 // pred_fallthru
        _
      // Predicated region
      $region21: #{uupblock_forward.8} parent=11 // pred_check
        %p223 = pneg %p103
      $region22: #{uupblock_forward.8} parent=11 // pred_check_branch
        %225 = sbr.rel (%p223) target = $region24
      $region23: #{uupblock_forward.8} parent=11 // pred_region
        _
      $region24: #{uupblock_forward.8} parent=11 // pred_fallthru
        _
      // Predicated region
      $region25: #{uupblock_forward.8} parent=11 // pred_check
        %p226 = pneg %p124
      $region26: #{uupblock_forward.8} parent=11 // pred_check_branch
        %228 = sbr.rel (%p226) target = $region28
      $region27: #{uupblock_forward.8} parent=11 // pred_region
        _
      $region28: #{uupblock_forward.8} parent=11 // pred_fallthru
        _
    $region12: #{uupblock_forward.8} parent=5 // pred_fallthru
      _
    %p229 = scmp.lt.s32.totalorder %s14, 2
    // Predicated region
    $region29: #{uupblock_forward.8} parent=5 // pred_check
      %p230 = pneg %p229
    $region30: #{uupblock_forward.8} parent=5 // pred_check_branch
      %232 = sbr.rel (%p230) target = $region32
    $region31: #{uupblock_forward.8} parent=5 // pred_region
      // Predicated region
      $region33: #{uupblock_forward.8} parent=31 // pred_check
        %p233 = pneg %p34
      $region34: #{uupblock_forward.8} parent=31 // pred_check_branch
        %235 = sbr.rel (%p233) target = $region36
      $region35: #{uupblock_forward.8} parent=31 // pred_region
        %p236 = scmp.lt.s32.totalorder %s14, 1
        %s237 = scalar_select %p236, %s14, 1
        %s238 = smul.addr %s237, 2
        %s239 = smul.addr %s238, 4
        %s240 = scalar_lea.vmem %s0, %s239
      $region36: #{uupblock_forward.8} parent=31 // pred_fallthru
        _
    $region32: #{uupblock_forward.8} parent=5 // pred_fallthru
      _
    %p241 = scmp.le.s32.totalorder 1, %s14
    %p242 = scmp.lt.s32.totalorder %s14, 3
    %p243 = pnand %p241, %p242
    %p244 = pneg %p243
    // Predicated region
    $region37: #{uupblock_forward.8} parent=5 // pred_check
      _
    $region38: #{uupblock_forward.8} parent=5 // pred_check_branch
      %246 = sbr.rel (%p243) target = $region40
    $region39: #{uupblock_forward.8} parent=5 // pred_region
      %s247 = ssub.s32 %s14, 1
      %p248 = scmp.lt.s32.totalorder %s19, 1
      %s249 = scalar_select %p248, %s19, 1
      %s250 = smul.addr %s249, 2
      %s251 = smul.addr %s250, 4
      %s252 = scalar_lea.vmem %s0, %s251
      %p253 = pneg %p40
      %p254 = pneg %p37
      %p255 = pneg %p61
      %p256 = pneg %p58
      %p257 = pneg %p82
      %p258 = pneg %p79
      %p259 = pneg %p103
      %p260 = pneg %p100
      %p261 = pneg %p124
      %p262 = pneg %p121
      %p263 = pneg %p150
      %p264 = pneg %p147
      %p265 = scmp.lt.s32.totalorder %s19, 1
      %s266 = scalar_select %p265, %s19, 1
      %s267 = smul.addr %s266, 2
      %s268 = smul.addr %s267, 4
      %s269 = scalar_lea.vmem %s5, %s268
      %p270 = pneg %p176
      %p271 = pneg %p173
      %p272 = scmp.lt.s32.totalorder %s19, 1
      %s273 = scalar_select %p272, %s19, 1
      %s274 = smul.addr %s273, 8
      %s275 = scalar_lea.vmem %s6, %s274
      %p276 = pneg %p202
      %p277 = pneg %p199
      %p278 = scmp.lt.s32.totalorder %s19, 1
      %s279 = scalar_select %p278, %s19, 1
      %s280 = smul.addr %s279, 8
      %s281 = scalar_lea.vmem %s7, %s280
      %p282 = scmp.lt.s32.totalorder %s19, 1
      %s283 = scalar_select %p282, %s19, 1
      %s284 = smul.addr %s283, 2
      %s285 = smul.addr %s284, 4
      %s286 = scalar_lea.vmem %s0, %s285
      %p287 = scmp.lt.s32.totalorder %s19, 1
      %s288 = scalar_select %p287, %s19, 1
      %s289 = smul.addr %s288, 2
      %s290 = smul.addr %s289, 4
      %s291 = scalar_lea.vmem %s5, %s290
      %p292 = scmp.lt.s32.totalorder %s19, 1
      %s293 = scalar_select %p292, %s19, 1
      %s294 = smul.addr %s293, 8
      %s295 = scalar_lea.vmem %s6, %s294
      %p296 = scmp.lt.s32.totalorder %s19, 1
      %s297 = scalar_select %p296, %s19, 1
      %s298 = smul.addr %s297, 8
      %s299 = scalar_lea.vmem %s7, %s298
      %v301 = vld [vmem:[%s286] sm:$0xff]
      %v302 = vunpack.c.l.bf16 %v301
      %v303 = vunpack.c.h.bf16 %v301
      %v304 = vld [vmem:[%s1] sm:$0xff]
      %306 = vset.pattern.permute.xlu0 0
      %307 = vperm.xlu0 %306, %v304
      %v308 = vpop.permute.xlu0 %307
      %v310 = vmul.f32 %v302, %v308
      %v311 = vmul.f32 %v303, %v308
      %v312 = vld [vmem:[%s2] sm:$0xff]
      %314 = vset.pattern.permute.xlu0 0
      %315 = vperm.xlu0 %314, %v312
      %v316 = vpop.permute.xlu0 %315
      %v318 = vadd.f32 %v310, %v316
      %v319 = vadd.f32 %v311, %v316
      %vm320 = vcmp.ge.f32.partialorder %v318, 0.0
      %vm321 = vcmp.ge.f32.partialorder %v319, 0.0
      %v322 = vmul.f32 %v318, 0.2
      %v323 = vmul.f32 %v319, 0.2
      %v324 = vsel %vm320, %v318, %v322
      %v325 = vsel %vm321, %v319, %v323
      %327 = vrot.lane.b32.xlu0 %v324, 112
      %v328 = vpop.permute.xlu0 %327
      %330 = vrot.lane.b32.xlu0 %v324, 96
      %v331 = vpop.permute.xlu0 %330
      %333 = vrot.lane.b32.xlu0 %v324, 80
      %v334 = vpop.permute.xlu0 %333
      %336 = vrot.lane.b32.xlu0 %v324, 64
      %v337 = vpop.permute.xlu0 %336
      %339 = vrot.lane.b32.xlu0 %v324, 48
      %v340 = vpop.permute.xlu0 %339
      %342 = vrot.lane.b32.xlu0 %v324, 32
      %v343 = vpop.permute.xlu0 %342
      %345 = vrot.lane.b32.xlu0 %v324, 16
      %v346 = vpop.permute.xlu0 %345
      %349 = vrot.lane.b32.xlu0 %v325, 112
      %v350 = vpop.permute.xlu0 %349
      %352 = vrot.lane.b32.xlu0 %v325, 96
      %v353 = vpop.permute.xlu0 %352
      %355 = vrot.lane.b32.xlu0 %v325, 80
      %v356 = vpop.permute.xlu0 %355
      %358 = vrot.lane.b32.xlu0 %v325, 64
      %v359 = vpop.permute.xlu0 %358
      %361 = vrot.lane.b32.xlu0 %v325, 48
      %v362 = vpop.permute.xlu0 %361
      %364 = vrot.lane.b32.xlu0 %v325, 32
      %v365 = vpop.permute.xlu0 %364
      %367 = vrot.lane.b32.xlu0 %v325, 16
      %v368 = vpop.permute.xlu0 %367
      %v370 = vcombine.low %v324, %v331
      %v371 = vcombine.high %v324, %v331
      %v373 = vunpack.c.l.s4 1983009808
      %v374 = vunpack.c.0.s8 %v373
      %v375 = vlaneseq
      %v376 = vshrl.u32 %v375, 7
      %v377 = vsub.s32 %v374, %v376
      %v378 = vrot.slane %v370, %v377
      %v380 = vunpack.c.l.s4 1983009808
      %v381 = vunpack.c.0.s8 %v380
      %v382 = vlaneseq
      %v383 = vshrl.u32 %v382, 7
      %v384 = vsub.s32 %v381, %v383
      %v385 = vrot.slane %v371, %v384
      %v386 = vcombine.low %v328, %v334
      %v387 = vcombine.high %v328, %v334
      %v389 = vunpack.c.l.s4 1983009808
      %v390 = vunpack.c.0.s8 %v389
      %v391 = vlaneseq
      %v392 = vshrl.u32 %v391, 7
      %v393 = vsub.s32 %v390, %v392
      %v394 = vrot.slane %v386, %v393
      %v396 = vunpack.c.l.s4 1983009808
      %v397 = vunpack.c.0.s8 %v396
      %v398 = vlaneseq
      %v399 = vshrl.u32 %v398, 7
      %v400 = vsub.s32 %v397, %v399
      %v401 = vrot.slane %v387, %v400
      %v402 = vcombine.low %v337, %v343
      %v403 = vcombine.high %v337, %v343
      %v405 = vunpack.c.l.s4 1983009808
      %v406 = vunpack.c.0.s8 %v405
      %v407 = vlaneseq
      %v408 = vshrl.u32 %v407, 7
      %v409 = vsub.s32 %v406, %v408
      %v410 = vrot.slane %v402, %v409
      %v412 = vunpack.c.l.s4 1983009808
      %v413 = vunpack.c.0.s8 %v412
      %v414 = vlaneseq
      %v415 = vshrl.u32 %v414, 7
      %v416 = vsub.s32 %v413, %v415
      %v417 = vrot.slane %v403, %v416
      %v418 = vcombine.low %v340, %v346
      %v419 = vcombine.high %v340, %v346
      %v421 = vunpack.c.l.s4 1983009808
      %v422 = vunpack.c.0.s8 %v421
      %v423 = vlaneseq
      %v424 = vshrl.u32 %v423, 7
      %v425 = vsub.s32 %v422, %v424
      %v426 = vrot.slane %v418, %v425
      %v428 = vunpack.c.l.s4 1983009808
      %v429 = vunpack.c.0.s8 %v428
      %v430 = vlaneseq
      %v431 = vshrl.u32 %v430, 7
      %v432 = vsub.s32 %v429, %v431
      %v433 = vrot.slane %v419, %v432
      %v434 = vcombine.low %v378, %v394
      %v435 = vcombine.high %v378, %v394
      %v437 = vunpack.c.l.s4 1934713408
      %v438 = vunpack.c.0.s8 %v437
      %v439 = vlaneseq
      %v440 = vshrl.u32 %v439, 7
      %v441 = vsub.s32 %v438, %v440
      %v442 = vrot.slane %v434, %v441
      %v444 = vunpack.c.l.s4 1934713408
      %v445 = vunpack.c.0.s8 %v444
      %v446 = vlaneseq
      %v447 = vshrl.u32 %v446, 7
      %v448 = vsub.s32 %v445, %v447
      %v449 = vrot.slane %v435, %v448
      %v450 = vcombine.low %v385, %v401
      %v451 = vcombine.high %v385, %v401
      %v453 = vunpack.c.l.s4 1934713408
      %v454 = vunpack.c.0.s8 %v453
      %v455 = vlaneseq
      %v456 = vshrl.u32 %v455, 7
      %v457 = vsub.s32 %v454, %v456
      %v458 = vrot.slane %v450, %v457
      %v460 = vunpack.c.l.s4 1934713408
      %v461 = vunpack.c.0.s8 %v460
      %v462 = vlaneseq
      %v463 = vshrl.u32 %v462, 7
      %v464 = vsub.s32 %v461, %v463
      %v465 = vrot.slane %v451, %v464
      %v466 = vcombine.low %v410, %v426
      %v467 = vcombine.high %v410, %v426
      %v469 = vunpack.c.l.s4 1934713408
      %v470 = vunpack.c.0.s8 %v469
      %v471 = vlaneseq
      %v472 = vshrl.u32 %v471, 7
      %v473 = vsub.s32 %v470, %v472
      %v474 = vrot.slane %v466, %v473
      %v476 = vunpack.c.l.s4 1934713408
      %v477 = vunpack.c.0.s8 %v476
      %v478 = vlaneseq
      %v479 = vshrl.u32 %v478, 7
      %v480 = vsub.s32 %v477, %v479
      %v481 = vrot.slane %v467, %v480
      %v482 = vcombine.low %v417, %v433
      %v483 = vcombine.high %v417, %v433
      %v485 = vunpack.c.l.s4 1934713408
      %v486 = vunpack.c.0.s8 %v485
      %v487 = vlaneseq
      %v488 = vshrl.u32 %v487, 7
      %v489 = vsub.s32 %v486, %v488
      %v490 = vrot.slane %v482, %v489
      %v492 = vunpack.c.l.s4 1934713408
      %v493 = vunpack.c.0.s8 %v492
      %v494 = vlaneseq
      %v495 = vshrl.u32 %v494, 7
      %v496 = vsub.s32 %v493, %v495
      %v497 = vrot.slane %v483, %v496
      %v498 = vcombine.low %v442, %v474
      %v499 = vcombine.high %v442, %v474
      %v500 = vcombine.low %v449, %v481
      %v501 = vcombine.high %v449, %v481
      %v502 = vcombine.low %v458, %v490
      %v503 = vcombine.high %v458, %v490
      %v504 = vcombine.low %v465, %v497
      %v505 = vcombine.high %v465, %v497
      %v506 = vcombine.low %v325, %v353
      %v507 = vcombine.high %v325, %v353
      %v509 = vunpack.c.l.s4 1983009808
      %v510 = vunpack.c.0.s8 %v509
      %v511 = vlaneseq
      %v512 = vshrl.u32 %v511, 7
      %v513 = vsub.s32 %v510, %v512
      %v514 = vrot.slane %v506, %v513
      %v516 = vunpack.c.l.s4 1983009808
      %v517 = vunpack.c.0.s8 %v516
      %v518 = vlaneseq
      %v519 = vshrl.u32 %v518, 7
      %v520 = vsub.s32 %v517, %v519
      %v521 = vrot.slane %v507, %v520
      %v522 = vcombine.low %v350, %v356
      %v523 = vcombine.high %v350, %v356
      %v525 = vunpack.c.l.s4 1983009808
      %v526 = vunpack.c.0.s8 %v525
      %v527 = vlaneseq
      %v528 = vshrl.u32 %v527, 7
      %v529 = vsub.s32 %v526, %v528
      %v530 = vrot.slane %v522, %v529
      %v532 = vunpack.c.l.s4 1983009808
      %v533 = vunpack.c.0.s8 %v532
      %v534 = vlaneseq
      %v535 = vshrl.u32 %v534, 7
      %v536 = vsub.s32 %v533, %v535
      %v537 = vrot.slane %v523, %v536
      %v538 = vcombine.low %v359, %v365
      %v539 = vcombine.high %v359, %v365
      %v541 = vunpack.c.l.s4 1983009808
      %v542 = vunpack.c.0.s8 %v541
      %v543 = vlaneseq
      %v544 = vshrl.u32 %v543, 7
      %v545 = vsub.s32 %v542, %v544
      %v546 = vrot.slane %v538, %v545
      %v548 = vunpack.c.l.s4 1983009808
      %v549 = vunpack.c.0.s8 %v548
      %v550 = vlaneseq
      %v551 = vshrl.u32 %v550, 7
      %v552 = vsub.s32 %v549, %v551
      %v553 = vrot.slane %v539, %v552
      %v554 = vcombine.low %v362, %v368
      %v555 = vcombine.high %v362, %v368
      %v557 = vunpack.c.l.s4 1983009808
      %v558 = vunpack.c.0.s8 %v557
      %v559 = vlaneseq
      %v560 = vshrl.u32 %v559, 7
      %v561 = vsub.s32 %v558, %v560
      %v562 = vrot.slane %v554, %v561
      %v564 = vunpack.c.l.s4 1983009808
      %v565 = vunpack.c.0.s8 %v564
      %v566 = vlaneseq
      %v567 = vshrl.u32 %v566, 7
      %v568 = vsub.s32 %v565, %v567
      %v569 = vrot.slane %v555, %v568
      %v570 = vcombine.low %v514, %v530
      %v571 = vcombine.high %v514, %v530
      %v573 = vunpack.c.l.s4 1934713408
      %v574 = vunpack.c.0.s8 %v573
      %v575 = vlaneseq
      %v576 = vshrl.u32 %v575, 7
      %v577 = vsub.s32 %v574, %v576
      %v578 = vrot.slane %v570, %v577
      %v580 = vunpack.c.l.s4 1934713408
      %v581 = vunpack.c.0.s8 %v580
      %v582 = vlaneseq
      %v583 = vshrl.u32 %v582, 7
      %v584 = vsub.s32 %v581, %v583
      %v585 = vrot.slane %v571, %v584
      %v586 = vcombine.low %v521, %v537
      %v587 = vcombine.high %v521, %v537
      %v589 = vunpack.c.l.s4 1934713408
      %v590 = vunpack.c.0.s8 %v589
      %v591 = vlaneseq
      %v592 = vshrl.u32 %v591, 7
      %v593 = vsub.s32 %v590, %v592
      %v594 = vrot.slane %v586, %v593
      %v596 = vunpack.c.l.s4 1934713408
      %v597 = vunpack.c.0.s8 %v596
      %v598 = vlaneseq
      %v599 = vshrl.u32 %v598, 7
      %v600 = vsub.s32 %v597, %v599
      %v601 = vrot.slane %v587, %v600
      %v602 = vcombine.low %v546, %v562
      %v603 = vcombine.high %v546, %v562
      %v605 = vunpack.c.l.s4 1934713408
      %v606 = vunpack.c.0.s8 %v605
      %v607 = vlaneseq
      %v608 = vshrl.u32 %v607, 7
      %v609 = vsub.s32 %v606, %v608
      %v610 = vrot.slane %v602, %v609
      %v612 = vunpack.c.l.s4 1934713408
      %v613 = vunpack.c.0.s8 %v612
      %v614 = vlaneseq
      %v615 = vshrl.u32 %v614, 7
      %v616 = vsub.s32 %v613, %v615
      %v617 = vrot.slane %v603, %v616
      %v618 = vcombine.low %v553, %v569
      %v619 = vcombine.high %v553, %v569
      %v621 = vunpack.c.l.s4 1934713408
      %v622 = vunpack.c.0.s8 %v621
      %v623 = vlaneseq
      %v624 = vshrl.u32 %v623, 7
      %v625 = vsub.s32 %v622, %v624
      %v626 = vrot.slane %v618, %v625
      %v628 = vunpack.c.l.s4 1934713408
      %v629 = vunpack.c.0.s8 %v628
      %v630 = vlaneseq
      %v631 = vshrl.u32 %v630, 7
      %v632 = vsub.s32 %v629, %v631
      %v633 = vrot.slane %v619, %v632
      %v634 = vcombine.low %v578, %v610
      %v635 = vcombine.high %v578, %v610
      %v636 = vcombine.low %v585, %v617
      %v637 = vcombine.high %v585, %v617
      %v638 = vcombine.low %v594, %v626
      %v639 = vcombine.high %v594, %v626
      %v640 = vcombine.low %v601, %v633
      %v641 = vcombine.high %v601, %v633
      %v642 = vpack.c.bf16 %v634, %v498
      %v643 = vpack.c.bf16 %v635, %v499
      %v644 = vpack.c.bf16 %v636, %v500
      %v645 = vpack.c.bf16 %v637, %v501
      %v646 = vpack.c.bf16 %v638, %v502
      %v647 = vpack.c.bf16 %v639, %v503
      %v648 = vpack.c.bf16 %v640, %v504
      %v649 = vpack.c.bf16 %v641, %v505
      %v650 = vld [vmem:[%s3] sm:$0xf]
      %v651 = vld [vmem:[%s4] sm:$0xff]
      %660 = vrot.lane.b32.xlu0 %v642, 127
      %v661 = vpop.permute.xlu0 %660
      %662 = vrot.lane.b32.xlu0 %v643, 127
      %v663 = vpop.permute.xlu0 %662
      %664 = vrot.lane.b32.xlu0 %v644, 127
      %v665 = vpop.permute.xlu0 %664
      %666 = vrot.lane.b32.xlu0 %v645, 127
      %v667 = vpop.permute.xlu0 %666
      %668 = vrot.lane.b32.xlu0 %v646, 127
      %v669 = vpop.permute.xlu0 %668
      %670 = vrot.lane.b32.xlu0 %v647, 127
      %v671 = vpop.permute.xlu0 %670
      %672 = vrot.lane.b32.xlu0 %v648, 127
      %v673 = vpop.permute.xlu0 %672
      %674 = vrot.lane.b32.xlu0 %v649, 127
      %v675 = vpop.permute.xlu0 %674
      %684 = vrot.lane.b32.xlu0 %v642, 126
      %v685 = vpop.permute.xlu0 %684
      %686 = vrot.lane.b32.xlu0 %v643, 126
      %v687 = vpop.permute.xlu0 %686
      %688 = vrot.lane.b32.xlu0 %v644, 126
      %v689 = vpop.permute.xlu0 %688
      %690 = vrot.lane.b32.xlu0 %v645, 126
      %v691 = vpop.permute.xlu0 %690
      %692 = vrot.lane.b32.xlu0 %v646, 126
      %v693 = vpop.permute.xlu0 %692
      %694 = vrot.lane.b32.xlu0 %v647, 126
      %v695 = vpop.permute.xlu0 %694
      %696 = vrot.lane.b32.xlu0 %v648, 126
      %v697 = vpop.permute.xlu0 %696
      %698 = vrot.lane.b32.xlu0 %v649, 126
      %v699 = vpop.permute.xlu0 %698
      %v709 = vshrl.u32 %v642, 16
      %v711 = vshll.u32 %v642, 16
      %v713 = vrot.slane %v711, 1
      %v714 = vor.u32 %v709, %v713
      %v716 = vshrl.u32 %v643, 16
      %v718 = vshll.u32 %v643, 16
      %v720 = vrot.slane %v718, 1
      %v721 = vor.u32 %v716, %v720
      %v723 = vshrl.u32 %v644, 16
      %v725 = vshll.u32 %v644, 16
      %v727 = vrot.slane %v725, 1
      %v728 = vor.u32 %v723, %v727
      %v730 = vshrl.u32 %v645, 16
      %v732 = vshll.u32 %v645, 16
      %v734 = vrot.slane %v732, 1
      %v735 = vor.u32 %v730, %v734
      %v737 = vshrl.u32 %v646, 16
      %v739 = vshll.u32 %v646, 16
      %v741 = vrot.slane %v739, 1
      %v742 = vor.u32 %v737, %v741
      %v744 = vshrl.u32 %v647, 16
      %v746 = vshll.u32 %v647, 16
      %v748 = vrot.slane %v746, 1
      %v749 = vor.u32 %v744, %v748
      %v751 = vshrl.u32 %v648, 16
      %v753 = vshll.u32 %v648, 16
      %v755 = vrot.slane %v753, 1
      %v756 = vor.u32 %v751, %v755
      %v758 = vshrl.u32 %v649, 16
      %v760 = vshll.u32 %v649, 16
      %v762 = vrot.slane %v760, 1
      %v763 = vor.u32 %v758, %v762
      %772 = vrot.lane.b32.xlu0 %v714, 127
      %v773 = vpop.permute.xlu0 %772
      %774 = vrot.lane.b32.xlu0 %v721, 127
      %v775 = vpop.permute.xlu0 %774
      %776 = vrot.lane.b32.xlu0 %v728, 127
      %v777 = vpop.permute.xlu0 %776
      %778 = vrot.lane.b32.xlu0 %v735, 127
      %v779 = vpop.permute.xlu0 %778
      %780 = vrot.lane.b32.xlu0 %v742, 127
      %v781 = vpop.permute.xlu0 %780
      %782 = vrot.lane.b32.xlu0 %v749, 127
      %v783 = vpop.permute.xlu0 %782
      %784 = vrot.lane.b32.xlu0 %v756, 127
      %v785 = vpop.permute.xlu0 %784
      %786 = vrot.lane.b32.xlu0 %v763, 127
      %v787 = vpop.permute.xlu0 %786
      %796 = vrot.lane.b32.xlu0 %v714, 126
      %v797 = vpop.permute.xlu0 %796
      %798 = vrot.lane.b32.xlu0 %v721, 126
      %v799 = vpop.permute.xlu0 %798
      %800 = vrot.lane.b32.xlu0 %v728, 126
      %v801 = vpop.permute.xlu0 %800
      %802 = vrot.lane.b32.xlu0 %v735, 126
      %v803 = vpop.permute.xlu0 %802
      %804 = vrot.lane.b32.xlu0 %v742, 126
      %v805 = vpop.permute.xlu0 %804
      %806 = vrot.lane.b32.xlu0 %v749, 126
      %v807 = vpop.permute.xlu0 %806
      %808 = vrot.lane.b32.xlu0 %v756, 126
      %v809 = vpop.permute.xlu0 %808
      %810 = vrot.lane.b32.xlu0 %v763, 126
      %v811 = vpop.permute.xlu0 %810
      %v820 = vrot.slane %v642, 1
      %v821 = vrot.slane %v643, 1
      %v822 = vrot.slane %v644, 1
      %v823 = vrot.slane %v645, 1
      %v824 = vrot.slane %v646, 1
      %v825 = vrot.slane %v647, 1
      %v826 = vrot.slane %v648, 1
      %v827 = vrot.slane %v649, 1
      %836 = vrot.lane.b32.xlu0 %v820, 127
      %v837 = vpop.permute.xlu0 %836
      %838 = vrot.lane.b32.xlu0 %v821, 127
      %v839 = vpop.permute.xlu0 %838
      %840 = vrot.lane.b32.xlu0 %v822, 127
      %v841 = vpop.permute.xlu0 %840
      %842 = vrot.lane.b32.xlu0 %v823, 127
      %v843 = vpop.permute.xlu0 %842
      %844 = vrot.lane.b32.xlu0 %v824, 127
      %v845 = vpop.permute.xlu0 %844
      %846 = vrot.lane.b32.xlu0 %v825, 127
      %v847 = vpop.permute.xlu0 %846
      %848 = vrot.lane.b32.xlu0 %v826, 127
      %v849 = vpop.permute.xlu0 %848
      %850 = vrot.lane.b32.xlu0 %v827, 127
      %v851 = vpop.permute.xlu0 %850
      %860 = vrot.lane.b32.xlu0 %v820, 126
      %v861 = vpop.permute.xlu0 %860
      %862 = vrot.lane.b32.xlu0 %v821, 126
      %v863 = vpop.permute.xlu0 %862
      %864 = vrot.lane.b32.xlu0 %v822, 126
      %v865 = vpop.permute.xlu0 %864
      %866 = vrot.lane.b32.xlu0 %v823, 126
      %v867 = vpop.permute.xlu0 %866
      %868 = vrot.lane.b32.xlu0 %v824, 126
      %v869 = vpop.permute.xlu0 %868
      %870 = vrot.lane.b32.xlu0 %v825, 126
      %v871 = vpop.permute.xlu0 %870
      %872 = vrot.lane.b32.xlu0 %v826, 126
      %v873 = vpop.permute.xlu0 %872
      %874 = vrot.lane.b32.xlu0 %v827, 126
      %v875 = vpop.permute.xlu0 %874
      %v884 = vcombine.low %v642, %v646
      %v885 = vcombine.high %v642, %v646
      %v887 = vunpack.c.l.s4 1983009808
      %v888 = vunpack.c.0.s8 %v887
      %v889 = vlaneseq
      %v890 = vshrl.u32 %v889, 7
      %v891 = vsub.s32 %v888, %v890
      %v892 = vrot.slane %v884, %v891
      %v894 = vunpack.c.l.s4 1983009808
      %v895 = vunpack.c.0.s8 %v894
      %v896 = vlaneseq
      %v897 = vshrl.u32 %v896, 7
      %v898 = vsub.s32 %v895, %v897
      %v899 = vrot.slane %v885, %v898
      %v900 = vcombine.low %v644, %v648
      %v901 = vcombine.high %v644, %v648
      %v903 = vunpack.c.l.s4 1983009808
      %v904 = vunpack.c.0.s8 %v903
      %v905 = vlaneseq
      %v906 = vshrl.u32 %v905, 7
      %v907 = vsub.s32 %v904, %v906
      %v908 = vrot.slane %v900, %v907
      %v910 = vunpack.c.l.s4 1983009808
      %v911 = vunpack.c.0.s8 %v910
      %v912 = vlaneseq
      %v913 = vshrl.u32 %v912, 7
      %v914 = vsub.s32 %v911, %v913
      %v915 = vrot.slane %v901, %v914
      %v916 = vcombine.low %v661, %v669
      %v917 = vcombine.high %v661, %v669
      %v919 = vunpack.c.l.s4 1983009808
      %v920 = vunpack.c.0.s8 %v919
      %v921 = vlaneseq
      %v922 = vshrl.u32 %v921, 7
      %v923 = vsub.s32 %v920, %v922
      %v924 = vrot.slane %v916, %v923
      %v926 = vunpack.c.l.s4 1983009808
      %v927 = vunpack.c.0.s8 %v926
      %v928 = vlaneseq
      %v929 = vshrl.u32 %v928, 7
      %v930 = vsub.s32 %v927, %v929
      %v931 = vrot.slane %v917, %v930
      %v932 = vcombine.low %v665, %v673
      %v933 = vcombine.high %v665, %v673
      %v935 = vunpack.c.l.s4 1983009808
      %v936 = vunpack.c.0.s8 %v935
      %v937 = vlaneseq
      %v938 = vshrl.u32 %v937, 7
      %v939 = vsub.s32 %v936, %v938
      %v940 = vrot.slane %v932, %v939
      %v942 = vunpack.c.l.s4 1983009808
      %v943 = vunpack.c.0.s8 %v942
      %v944 = vlaneseq
      %v945 = vshrl.u32 %v944, 7
      %v946 = vsub.s32 %v943, %v945
      %v947 = vrot.slane %v933, %v946
      %v948 = vcombine.low %v892, %v908
      %v949 = vcombine.high %v892, %v908
      %v951 = vunpack.c.l.s4 1934713408
      %v952 = vunpack.c.0.s8 %v951
      %v953 = vlaneseq
      %v954 = vshrl.u32 %v953, 7
      %v955 = vsub.s32 %v952, %v954
      %v956 = vrot.slane %v948, %v955
      %v958 = vunpack.c.l.s4 1934713408
      %v959 = vunpack.c.0.s8 %v958
      %v960 = vlaneseq
      %v961 = vshrl.u32 %v960, 7
      %v962 = vsub.s32 %v959, %v961
      %v963 = vrot.slane %v949, %v962
      %v964 = vcombine.low %v899, %v915
      %v965 = vcombine.high %v899, %v915
      %v967 = vunpack.c.l.s4 1934713408
      %v968 = vunpack.c.0.s8 %v967
      %v969 = vlaneseq
      %v970 = vshrl.u32 %v969, 7
      %v971 = vsub.s32 %v968, %v970
      %v972 = vrot.slane %v964, %v971
      %v974 = vunpack.c.l.s4 1934713408
      %v975 = vunpack.c.0.s8 %v974
      %v976 = vlaneseq
      %v977 = vshrl.u32 %v976, 7
      %v978 = vsub.s32 %v975, %v977
      %v979 = vrot.slane %v965, %v978
      %v980 = vcombine.low %v924, %v940
      %v981 = vcombine.high %v924, %v940
      %v983 = vunpack.c.l.s4 1934713408
      %v984 = vunpack.c.0.s8 %v983
      %v985 = vlaneseq
      %v986 = vshrl.u32 %v985, 7
      %v987 = vsub.s32 %v984, %v986
      %v988 = vrot.slane %v980, %v987
      %v990 = vunpack.c.l.s4 1934713408
      %v991 = vunpack.c.0.s8 %v990
      %v992 = vlaneseq
      %v993 = vshrl.u32 %v992, 7
      %v994 = vsub.s32 %v991, %v993
      %v995 = vrot.slane %v981, %v994
      %v996 = vcombine.low %v931, %v947
      %v997 = vcombine.high %v931, %v947
      %v999 = vunpack.c.l.s4 1934713408
      %v1000 = vunpack.c.0.s8 %v999
      %v1001 = vlaneseq
      %v1002 = vshrl.u32 %v1001, 7
      %v1003 = vsub.s32 %v1000, %v1002
      %v1004 = vrot.slane %v996, %v1003
      %v1006 = vunpack.c.l.s4 1934713408
      %v1007 = vunpack.c.0.s8 %v1006
      %v1008 = vlaneseq
      %v1009 = vshrl.u32 %v1008, 7
      %v1010 = vsub.s32 %v1007, %v1009
      %v1011 = vrot.slane %v997, %v1010
      %v1012 = vcombine.low %v956, %v988
      %v1013 = vcombine.high %v956, %v988
      %v1014 = vcombine.low %v963, %v995
      %v1015 = vcombine.high %v963, %v995
      %v1016 = vcombine.low %v972, %v1004
      %v1017 = vcombine.high %v972, %v1004
      %v1018 = vcombine.low %v979, %v1011
      %v1019 = vcombine.low %v643, %v647
      %v1020 = vcombine.high %v643, %v647
      %v1022 = vunpack.c.l.s4 1983009808
      %v1023 = vunpack.c.0.s8 %v1022
      %v1024 = vlaneseq
      %v1025 = vshrl.u32 %v1024, 7
      %v1026 = vsub.s32 %v1023, %v1025
      %v1027 = vrot.slane %v1019, %v1026
      %v1029 = vunpack.c.l.s4 1983009808
      %v1030 = vunpack.c.0.s8 %v1029
      %v1031 = vlaneseq
      %v1032 = vshrl.u32 %v1031, 7
      %v1033 = vsub.s32 %v1030, %v1032
      %v1034 = vrot.slane %v1020, %v1033
      %v1035 = vcombine.low %v645, %v649
      %v1036 = vcombine.high %v645, %v649
      %v1038 = vunpack.c.l.s4 1983009808
      %v1039 = vunpack.c.0.s8 %v1038
      %v1040 = vlaneseq
      %v1041 = vshrl.u32 %v1040, 7
      %v1042 = vsub.s32 %v1039, %v1041
      %v1043 = vrot.slane %v1035, %v1042
      %v1045 = vunpack.c.l.s4 1983009808
      %v1046 = vunpack.c.0.s8 %v1045
      %v1047 = vlaneseq
      %v1048 = vshrl.u32 %v1047, 7
      %v1049 = vsub.s32 %v1046, %v1048
      %v1050 = vrot.slane %v1036, %v1049
      %v1051 = vcombine.low %v663, %v671
      %v1052 = vcombine.high %v663, %v671
      %v1054 = vunpack.c.l.s4 1983009808
      %v1055 = vunpack.c.0.s8 %v1054
      %v1056 = vlaneseq
      %v1057 = vshrl.u32 %v1056, 7
      %v1058 = vsub.s32 %v1055, %v1057
      %v1059 = vrot.slane %v1051, %v1058
      %v1061 = vunpack.c.l.s4 1983009808
      %v1062 = vunpack.c.0.s8 %v1061
      %v1063 = vlaneseq
      %v1064 = vshrl.u32 %v1063, 7
      %v1065 = vsub.s32 %v1062, %v1064
      %v1066 = vrot.slane %v1052, %v1065
      %v1067 = vcombine.low %v667, %v675
      %v1068 = vcombine.high %v667, %v675
      %v1070 = vunpack.c.l.s4 1983009808
      %v1071 = vunpack.c.0.s8 %v1070
      %v1072 = vlaneseq
      %v1073 = vshrl.u32 %v1072, 7
      %v1074 = vsub.s32 %v1071, %v1073
      %v1075 = vrot.slane %v1067, %v1074
      %v1077 = vunpack.c.l.s4 1983009808
      %v1078 = vunpack.c.0.s8 %v1077
      %v1079 = vlaneseq
      %v1080 = vshrl.u32 %v1079, 7
      %v1081 = vsub.s32 %v1078, %v1080
      %v1082 = vrot.slane %v1068, %v1081
      %v1083 = vcombine.low %v1027, %v1043
      %v1084 = vcombine.high %v1027, %v1043
      %v1086 = vunpack.c.l.s4 1934713408
      %v1087 = vunpack.c.0.s8 %v1086
      %v1088 = vlaneseq
      %v1089 = vshrl.u32 %v1088, 7
      %v1090 = vsub.s32 %v1087, %v1089
      %v1091 = vrot.slane %v1083, %v1090
      %v1093 = vunpack.c.l.s4 1934713408
      %v1094 = vunpack.c.0.s8 %v1093
      %v1095 = vlaneseq
      %v1096 = vshrl.u32 %v1095, 7
      %v1097 = vsub.s32 %v1094, %v1096
      %v1098 = vrot.slane %v1084, %v1097
      %v1099 = vcombine.low %v1034, %v1050
      %v1100 = vcombine.high %v1034, %v1050
      %v1102 = vunpack.c.l.s4 1934713408
      %v1103 = vunpack.c.0.s8 %v1102
      %v1104 = vlaneseq
      %v1105 = vshrl.u32 %v1104, 7
      %v1106 = vsub.s32 %v1103, %v1105
      %v1107 = vrot.slane %v1099, %v1106
      %v1109 = vunpack.c.l.s4 1934713408
      %v1110 = vunpack.c.0.s8 %v1109
      %v1111 = vlaneseq
      %v1112 = vshrl.u32 %v1111, 7
      %v1113 = vsub.s32 %v1110, %v1112
      %v1114 = vrot.slane %v1100, %v1113
      %v1115 = vcombine.low %v1059, %v1075
      %v1116 = vcombine.high %v1059, %v1075
      %v1118 = vunpack.c.l.s4 1934713408
      %v1119 = vunpack.c.0.s8 %v1118
      %v1120 = vlaneseq
      %v1121 = vshrl.u32 %v1120, 7
      %v1122 = vsub.s32 %v1119, %v1121
      %v1123 = vrot.slane %v1115, %v1122
      %v1125 = vunpack.c.l.s4 1934713408
      %v1126 = vunpack.c.0.s8 %v1125
      %v1127 = vlaneseq
      %v1128 = vshrl.u32 %v1127, 7
      %v1129 = vsub.s32 %v1126, %v1128
      %v1130 = vrot.slane %v1116, %v1129
      %v1131 = vcombine.low %v1066, %v1082
      %v1132 = vcombine.high %v1066, %v1082
      %v1134 = vunpack.c.l.s4 1934713408
      %v1135 = vunpack.c.0.s8 %v1134
      %v1136 = vlaneseq
      %v1137 = vshrl.u32 %v1136, 7
      %v1138 = vsub.s32 %v1135, %v1137
      %v1139 = vrot.slane %v1131, %v1138
      %v1141 = vunpack.c.l.s4 1934713408
      %v1142 = vunpack.c.0.s8 %v1141
      %v1143 = vlaneseq
      %v1144 = vshrl.u32 %v1143, 7
      %v1145 = vsub.s32 %v1142, %v1144
      %v1146 = vrot.slane %v1132, %v1145
      %v1147 = vcombine.low %v1091, %v1123
      %v1148 = vcombine.high %v1091, %v1123
      %v1149 = vcombine.low %v1098, %v1130
      %v1150 = vcombine.high %v1098, %v1130
      %v1151 = vcombine.low %v1107, %v1139
      %v1152 = vcombine.high %v1107, %v1139
      %v1153 = vcombine.low %v1114, %v1146
      %v1154 = vcombine.low %v685, %v693
      %v1155 = vcombine.high %v685, %v693
      %v1157 = vunpack.c.l.s4 1983009808
      %v1158 = vunpack.c.0.s8 %v1157
      %v1159 = vlaneseq
      %v1160 = vshrl.u32 %v1159, 7
      %v1161 = vsub.s32 %v1158, %v1160
      %v1162 = vrot.slane %v1154, %v1161
      %v1164 = vunpack.c.l.s4 1983009808
      %v1165 = vunpack.c.0.s8 %v1164
      %v1166 = vlaneseq
      %v1167 = vshrl.u32 %v1166, 7
      %v1168 = vsub.s32 %v1165, %v1167
      %v1169 = vrot.slane %v1155, %v1168
      %v1170 = vcombine.low %v689, %v697
      %v1171 = vcombine.high %v689, %v697
      %v1173 = vunpack.c.l.s4 1983009808
      %v1174 = vunpack.c.0.s8 %v1173
      %v1175 = vlaneseq
      %v1176 = vshrl.u32 %v1175, 7
      %v1177 = vsub.s32 %v1174, %v1176
      %v1178 = vrot.slane %v1170, %v1177
      %v1180 = vunpack.c.l.s4 1983009808
      %v1181 = vunpack.c.0.s8 %v1180
      %v1182 = vlaneseq
      %v1183 = vshrl.u32 %v1182, 7
      %v1184 = vsub.s32 %v1181, %v1183
      %v1185 = vrot.slane %v1171, %v1184
      %v1186 = vcombine.low %v714, %v742
      %v1187 = vcombine.high %v714, %v742
      %v1189 = vunpack.c.l.s4 1983009808
      %v1190 = vunpack.c.0.s8 %v1189
      %v1191 = vlaneseq
      %v1192 = vshrl.u32 %v1191, 7
      %v1193 = vsub.s32 %v1190, %v1192
      %v1194 = vrot.slane %v1186, %v1193
      %v1196 = vunpack.c.l.s4 1983009808
      %v1197 = vunpack.c.0.s8 %v1196
      %v1198 = vlaneseq
      %v1199 = vshrl.u32 %v1198, 7
      %v1200 = vsub.s32 %v1197, %v1199
      %v1201 = vrot.slane %v1187, %v1200
      %v1202 = vcombine.low %v728, %v756
      %v1203 = vcombine.high %v728, %v756
      %v1205 = vunpack.c.l.s4 1983009808
      %v1206 = vunpack.c.0.s8 %v1205
      %v1207 = vlaneseq
      %v1208 = vshrl.u32 %v1207, 7
      %v1209 = vsub.s32 %v1206, %v1208
      %v1210 = vrot.slane %v1202, %v1209
      %v1212 = vunpack.c.l.s4 1983009808
      %v1213 = vunpack.c.0.s8 %v1212
      %v1214 = vlaneseq
      %v1215 = vshrl.u32 %v1214, 7
      %v1216 = vsub.s32 %v1213, %v1215
      %v1217 = vrot.slane %v1203, %v1216
      %v1218 = vcombine.low %v1162, %v1178
      %v1219 = vcombine.high %v1162, %v1178
      %v1221 = vunpack.c.l.s4 1934713408
      %v1222 = vunpack.c.0.s8 %v1221
      %v1223 = vlaneseq
      %v1224 = vshrl.u32 %v1223, 7
      %v1225 = vsub.s32 %v1222, %v1224
      %v1226 = vrot.slane %v1218, %v1225
      %v1228 = vunpack.c.l.s4 1934713408
      %v1229 = vunpack.c.0.s8 %v1228
      %v1230 = vlaneseq
      %v1231 = vshrl.u32 %v1230, 7
      %v1232 = vsub.s32 %v1229, %v1231
      %v1233 = vrot.slane %v1219, %v1232
      %v1234 = vcombine.low %v1169, %v1185
      %v1235 = vcombine.high %v1169, %v1185
      %v1237 = vunpack.c.l.s4 1934713408
      %v1238 = vunpack.c.0.s8 %v1237
      %v1239 = vlaneseq
      %v1240 = vshrl.u32 %v1239, 7
      %v1241 = vsub.s32 %v1238, %v1240
      %v1242 = vrot.slane %v1234, %v1241
      %v1244 = vunpack.c.l.s4 1934713408
      %v1245 = vunpack.c.0.s8 %v1244
      %v1246 = vlaneseq
      %v1247 = vshrl.u32 %v1246, 7
      %v1248 = vsub.s32 %v1245, %v1247
      %v1249 = vrot.slane %v1235, %v1248
      %v1250 = vcombine.low %v1194, %v1210
      %v1251 = vcombine.high %v1194, %v1210
      %v1253 = vunpack.c.l.s4 1934713408
      %v1254 = vunpack.c.0.s8 %v1253
      %v1255 = vlaneseq
      %v1256 = vshrl.u32 %v1255, 7
      %v1257 = vsub.s32 %v1254, %v1256
      %v1258 = vrot.slane %v1250, %v1257
      %v1260 = vunpack.c.l.s4 1934713408
      %v1261 = vunpack.c.0.s8 %v1260
      %v1262 = vlaneseq
      %v1263 = vshrl.u32 %v1262, 7
      %v1264 = vsub.s32 %v1261, %v1263
      %v1265 = vrot.slane %v1251, %v1264
      %v1266 = vcombine.low %v1201, %v1217
      %v1267 = vcombine.high %v1201, %v1217
      %v1269 = vunpack.c.l.s4 1934713408
      %v1270 = vunpack.c.0.s8 %v1269
      %v1271 = vlaneseq
      %v1272 = vshrl.u32 %v1271, 7
      %v1273 = vsub.s32 %v1270, %v1272
      %v1274 = vrot.slane %v1266, %v1273
      %v1276 = vunpack.c.l.s4 1934713408
      %v1277 = vunpack.c.0.s8 %v1276
      %v1278 = vlaneseq
      %v1279 = vshrl.u32 %v1278, 7
      %v1280 = vsub.s32 %v1277, %v1279
      %v1281 = vrot.slane %v1267, %v1280
      %v1282 = vcombine.low %v1226, %v1258
      %v1283 = vcombine.high %v1226, %v1258
      %v1284 = vcombine.low %v1233, %v1265
      %v1285 = vcombine.high %v1233, %v1265
      %v1286 = vcombine.low %v1242, %v1274
      %v1287 = vcombine.high %v1242, %v1274
      %v1288 = vcombine.low %v1249, %v1281
      %v1289 = vcombine.low %v687, %v695
      %v1290 = vcombine.high %v687, %v695
      %v1292 = vunpack.c.l.s4 1983009808
      %v1293 = vunpack.c.0.s8 %v1292
      %v1294 = vlaneseq
      %v1295 = vshrl.u32 %v1294, 7
      %v1296 = vsub.s32 %v1293, %v1295
      %v1297 = vrot.slane %v1289, %v1296
      %v1299 = vunpack.c.l.s4 1983009808
      %v1300 = vunpack.c.0.s8 %v1299
      %v1301 = vlaneseq
      %v1302 = vshrl.u32 %v1301, 7
      %v1303 = vsub.s32 %v1300, %v1302
      %v1304 = vrot.slane %v1290, %v1303
      %v1305 = vcombine.low %v691, %v699
      %v1306 = vcombine.high %v691, %v699
      %v1308 = vunpack.c.l.s4 1983009808
      %v1309 = vunpack.c.0.s8 %v1308
      %v1310 = vlaneseq
      %v1311 = vshrl.u32 %v1310, 7
      %v1312 = vsub.s32 %v1309, %v1311
      %v1313 = vrot.slane %v1305, %v1312
      %v1315 = vunpack.c.l.s4 1983009808
      %v1316 = vunpack.c.0.s8 %v1315
      %v1317 = vlaneseq
      %v1318 = vshrl.u32 %v1317, 7
      %v1319 = vsub.s32 %v1316, %v1318
      %v1320 = vrot.slane %v1306, %v1319
      %v1321 = vcombine.low %v721, %v749
      %v1322 = vcombine.high %v721, %v749
      %v1324 = vunpack.c.l.s4 1983009808
      %v1325 = vunpack.c.0.s8 %v1324
      %v1326 = vlaneseq
      %v1327 = vshrl.u32 %v1326, 7
      %v1328 = vsub.s32 %v1325, %v1327
      %v1329 = vrot.slane %v1321, %v1328
      %v1331 = vunpack.c.l.s4 1983009808
      %v1332 = vunpack.c.0.s8 %v1331
      %v1333 = vlaneseq
      %v1334 = vshrl.u32 %v1333, 7
      %v1335 = vsub.s32 %v1332, %v1334
      %v1336 = vrot.slane %v1322, %v1335
      %v1337 = vcombine.low %v735, %v763
      %v1338 = vcombine.high %v735, %v763
      %v1340 = vunpack.c.l.s4 1983009808
      %v1341 = vunpack.c.0.s8 %v1340
      %v1342 = vlaneseq
      %v1343 = vshrl.u32 %v1342, 7
      %v1344 = vsub.s32 %v1341, %v1343
      %v1345 = vrot.slane %v1337, %v1344
      %v1347 = vunpack.c.l.s4 1983009808
      %v1348 = vunpack.c.0.s8 %v1347
      %v1349 = vlaneseq
      %v1350 = vshrl.u32 %v1349, 7
      %v1351 = vsub.s32 %v1348, %v1350
      %v1352 = vrot.slane %v1338, %v1351
      %v1353 = vcombine.low %v1297, %v1313
      %v1354 = vcombine.high %v1297, %v1313
      %v1356 = vunpack.c.l.s4 1934713408
      %v1357 = vunpack.c.0.s8 %v1356
      %v1358 = vlaneseq
      %v1359 = vshrl.u32 %v1358, 7
      %v1360 = vsub.s32 %v1357, %v1359
      %v1361 = vrot.slane %v1353, %v1360
      %v1363 = vunpack.c.l.s4 1934713408
      %v1364 = vunpack.c.0.s8 %v1363
      %v1365 = vlaneseq
      %v1366 = vshrl.u32 %v1365, 7
      %v1367 = vsub.s32 %v1364, %v1366
      %v1368 = vrot.slane %v1354, %v1367
      %v1369 = vcombine.low %v1304, %v1320
      %v1370 = vcombine.high %v1304, %v1320
      %v1372 = vunpack.c.l.s4 1934713408
      %v1373 = vunpack.c.0.s8 %v1372
      %v1374 = vlaneseq
      %v1375 = vshrl.u32 %v1374, 7
      %v1376 = vsub.s32 %v1373, %v1375
      %v1377 = vrot.slane %v1369, %v1376
      %v1379 = vunpack.c.l.s4 1934713408
      %v1380 = vunpack.c.0.s8 %v1379
      %v1381 = vlaneseq
      %v1382 = vshrl.u32 %v1381, 7
      %v1383 = vsub.s32 %v1380, %v1382
      %v1384 = vrot.slane %v1370, %v1383
      %v1385 = vcombine.low %v1329, %v1345
      %v1386 = vcombine.high %v1329, %v1345
      %v1388 = vunpack.c.l.s4 1934713408
      %v1389 = vunpack.c.0.s8 %v1388
      %v1390 = vlaneseq
      %v1391 = vshrl.u32 %v1390, 7
      %v1392 = vsub.s32 %v1389, %v1391
      %v1393 = vrot.slane %v1385, %v1392
      %v1395 = vunpack.c.l.s4 1934713408
      %v1396 = vunpack.c.0.s8 %v1395
      %v1397 = vlaneseq
      %v1398 = vshrl.u32 %v1397, 7
      %v1399 = vsub.s32 %v1396, %v1398
      %v1400 = vrot.slane %v1386, %v1399
      %v1401 = vcombine.low %v1336, %v1352
      %v1402 = vcombine.high %v1336, %v1352
      %v1404 = vunpack.c.l.s4 1934713408
      %v1405 = vunpack.c.0.s8 %v1404
      %v1406 = vlaneseq
      %v1407 = vshrl.u32 %v1406, 7
      %v1408 = vsub.s32 %v1405, %v1407
      %v1409 = vrot.slane %v1401, %v1408
      %v1411 = vunpack.c.l.s4 1934713408
      %v1412 = vunpack.c.0.s8 %v1411
      %v1413 = vlaneseq
      %v1414 = vshrl.u32 %v1413, 7
      %v1415 = vsub.s32 %v1412, %v1414
      %v1416 = vrot.slane %v1402, %v1415
      %v1417 = vcombine.low %v1361, %v1393
      %v1418 = vcombine.high %v1361, %v1393
      %v1419 = vcombine.low %v1368, %v1400
      %v1420 = vcombine.high %v1368, %v1400
      %v1421 = vcombine.low %v1377, %v1409
      %v1422 = vcombine.high %v1377, %v1409
      %v1423 = vcombine.low %v1384, %v1416
      %v1424 = vcombine.low %v773, %v781
      %v1425 = vcombine.high %v773, %v781
      %v1427 = vunpack.c.l.s4 1983009808
      %v1428 = vunpack.c.0.s8 %v1427
      %v1429 = vlaneseq
      %v1430 = vshrl.u32 %v1429, 7
      %v1431 = vsub.s32 %v1428, %v1430
      %v1432 = vrot.slane %v1424, %v1431
      %v1434 = vunpack.c.l.s4 1983009808
      %v1435 = vunpack.c.0.s8 %v1434
      %v1436 = vlaneseq
      %v1437 = vshrl.u32 %v1436, 7
      %v1438 = vsub.s32 %v1435, %v1437
      %v1439 = vrot.slane %v1425, %v1438
      %v1440 = vcombine.low %v777, %v785
      %v1441 = vcombine.high %v777, %v785
      %v1443 = vunpack.c.l.s4 1983009808
      %v1444 = vunpack.c.0.s8 %v1443
      %v1445 = vlaneseq
      %v1446 = vshrl.u32 %v1445, 7
      %v1447 = vsub.s32 %v1444, %v1446
      %v1448 = vrot.slane %v1440, %v1447
      %v1450 = vunpack.c.l.s4 1983009808
      %v1451 = vunpack.c.0.s8 %v1450
      %v1452 = vlaneseq
      %v1453 = vshrl.u32 %v1452, 7
      %v1454 = vsub.s32 %v1451, %v1453
      %v1455 = vrot.slane %v1441, %v1454
      %v1456 = vcombine.low %v797, %v805
      %v1457 = vcombine.high %v797, %v805
      %v1459 = vunpack.c.l.s4 1983009808
      %v1460 = vunpack.c.0.s8 %v1459
      %v1461 = vlaneseq
      %v1462 = vshrl.u32 %v1461, 7
      %v1463 = vsub.s32 %v1460, %v1462
      %v1464 = vrot.slane %v1456, %v1463
      %v1466 = vunpack.c.l.s4 1983009808
      %v1467 = vunpack.c.0.s8 %v1466
      %v1468 = vlaneseq
      %v1469 = vshrl.u32 %v1468, 7
      %v1470 = vsub.s32 %v1467, %v1469
      %v1471 = vrot.slane %v1457, %v1470
      %v1472 = vcombine.low %v801, %v809
      %v1473 = vcombine.high %v801, %v809
      %v1475 = vunpack.c.l.s4 1983009808
      %v1476 = vunpack.c.0.s8 %v1475
      %v1477 = vlaneseq
      %v1478 = vshrl.u32 %v1477, 7
      %v1479 = vsub.s32 %v1476, %v1478
      %v1480 = vrot.slane %v1472, %v1479
      %v1482 = vunpack.c.l.s4 1983009808
      %v1483 = vunpack.c.0.s8 %v1482
      %v1484 = vlaneseq
      %v1485 = vshrl.u32 %v1484, 7
      %v1486 = vsub.s32 %v1483, %v1485
      %v1487 = vrot.slane %v1473, %v1486
      %v1488 = vcombine.low %v1432, %v1448
      %v1489 = vcombine.high %v1432, %v1448
      %v1491 = vunpack.c.l.s4 1934713408
      %v1492 = vunpack.c.0.s8 %v1491
      %v1493 = vlaneseq
      %v1494 = vshrl.u32 %v1493, 7
      %v1495 = vsub.s32 %v1492, %v1494
      %v1496 = vrot.slane %v1488, %v1495
      %v1498 = vunpack.c.l.s4 1934713408
      %v1499 = vunpack.c.0.s8 %v1498
      %v1500 = vlaneseq
      %v1501 = vshrl.u32 %v1500, 7
      %v1502 = vsub.s32 %v1499, %v1501
      %v1503 = vrot.slane %v1489, %v1502
      %v1504 = vcombine.low %v1439, %v1455
      %v1505 = vcombine.high %v1439, %v1455
      %v1507 = vunpack.c.l.s4 1934713408
      %v1508 = vunpack.c.0.s8 %v1507
      %v1509 = vlaneseq
      %v1510 = vshrl.u32 %v1509, 7
      %v1511 = vsub.s32 %v1508, %v1510
      %v1512 = vrot.slane %v1504, %v1511
      %v1514 = vunpack.c.l.s4 1934713408
      %v1515 = vunpack.c.0.s8 %v1514
      %v1516 = vlaneseq
      %v1517 = vshrl.u32 %v1516, 7
      %v1518 = vsub.s32 %v1515, %v1517
      %v1519 = vrot.slane %v1505, %v1518
      %v1520 = vcombine.low %v1464, %v1480
      %v1521 = vcombine.high %v1464, %v1480
      %v1523 = vunpack.c.l.s4 1934713408
      %v1524 = vunpack.c.0.s8 %v1523
      %v1525 = vlaneseq
      %v1526 = vshrl.u32 %v1525, 7
      %v1527 = vsub.s32 %v1524, %v1526
      %v1528 = vrot.slane %v1520, %v1527
      %v1530 = vunpack.c.l.s4 1934713408
      %v1531 = vunpack.c.0.s8 %v1530
      %v1532 = vlaneseq
      %v1533 = vshrl.u32 %v1532, 7
      %v1534 = vsub.s32 %v1531, %v1533
      %v1535 = vrot.slane %v1521, %v1534
      %v1536 = vcombine.low %v1471, %v1487
      %v1537 = vcombine.high %v1471, %v1487
      %v1539 = vunpack.c.l.s4 1934713408
      %v1540 = vunpack.c.0.s8 %v1539
      %v1541 = vlaneseq
      %v1542 = vshrl.u32 %v1541, 7
      %v1543 = vsub.s32 %v1540, %v1542
      %v1544 = vrot.slane %v1536, %v1543
      %v1546 = vunpack.c.l.s4 1934713408
      %v1547 = vunpack.c.0.s8 %v1546
      %v1548 = vlaneseq
      %v1549 = vshrl.u32 %v1548, 7
      %v1550 = vsub.s32 %v1547, %v1549
      %v1551 = vrot.slane %v1537, %v1550
      %v1552 = vcombine.low %v1496, %v1528
      %v1553 = vcombine.high %v1496, %v1528
      %v1554 = vcombine.low %v1503, %v1535
      %v1555 = vcombine.high %v1503, %v1535
      %v1556 = vcombine.low %v1512, %v1544
      %v1557 = vcombine.high %v1512, %v1544
      %v1558 = vcombine.low %v1519, %v1551
      %v1559 = vcombine.low %v775, %v783
      %v1560 = vcombine.high %v775, %v783
      %v1562 = vunpack.c.l.s4 1983009808
      %v1563 = vunpack.c.0.s8 %v1562
      %v1564 = vlaneseq
      %v1565 = vshrl.u32 %v1564, 7
      %v1566 = vsub.s32 %v1563, %v1565
      %v1567 = vrot.slane %v1559, %v1566
      %v1569 = vunpack.c.l.s4 1983009808
      %v1570 = vunpack.c.0.s8 %v1569
      %v1571 = vlaneseq
      %v1572 = vshrl.u32 %v1571, 7
      %v1573 = vsub.s32 %v1570, %v1572
      %v1574 = vrot.slane %v1560, %v1573
      %v1575 = vcombine.low %v779, %v787
      %v1576 = vcombine.high %v779, %v787
      %v1578 = vunpack.c.l.s4 1983009808
      %v1579 = vunpack.c.0.s8 %v1578
      %v1580 = vlaneseq
      %v1581 = vshrl.u32 %v1580, 7
      %v1582 = vsub.s32 %v1579, %v1581
      %v1583 = vrot.slane %v1575, %v1582
      %v1585 = vunpack.c.l.s4 1983009808
      %v1586 = vunpack.c.0.s8 %v1585
      %v1587 = vlaneseq
      %v1588 = vshrl.u32 %v1587, 7
      %v1589 = vsub.s32 %v1586, %v1588
      %v1590 = vrot.slane %v1576, %v1589
      %v1591 = vcombine.low %v799, %v807
      %v1592 = vcombine.high %v799, %v807
      %v1594 = vunpack.c.l.s4 1983009808
      %v1595 = vunpack.c.0.s8 %v1594
      %v1596 = vlaneseq
      %v1597 = vshrl.u32 %v1596, 7
      %v1598 = vsub.s32 %v1595, %v1597
      %v1599 = vrot.slane %v1591, %v1598
      %v1601 = vunpack.c.l.s4 1983009808
      %v1602 = vunpack.c.0.s8 %v1601
      %v1603 = vlaneseq
      %v1604 = vshrl.u32 %v1603, 7
      %v1605 = vsub.s32 %v1602, %v1604
      %v1606 = vrot.slane %v1592, %v1605
      %v1607 = vcombine.low %v803, %v811
      %v1608 = vcombine.high %v803, %v811
      %v1610 = vunpack.c.l.s4 1983009808
      %v1611 = vunpack.c.0.s8 %v1610
      %v1612 = vlaneseq
      %v1613 = vshrl.u32 %v1612, 7
      %v1614 = vsub.s32 %v1611, %v1613
      %v1615 = vrot.slane %v1607, %v1614
      %v1617 = vunpack.c.l.s4 1983009808
      %v1618 = vunpack.c.0.s8 %v1617
      %v1619 = vlaneseq
      %v1620 = vshrl.u32 %v1619, 7
      %v1621 = vsub.s32 %v1618, %v1620
      %v1622 = vrot.slane %v1608, %v1621
      %v1623 = vcombine.low %v1567, %v1583
      %v1624 = vcombine.high %v1567, %v1583
      %v1626 = vunpack.c.l.s4 1934713408
      %v1627 = vunpack.c.0.s8 %v1626
      %v1628 = vlaneseq
      %v1629 = vshrl.u32 %v1628, 7
      %v1630 = vsub.s32 %v1627, %v1629
      %v1631 = vrot.slane %v1623, %v1630
      %v1633 = vunpack.c.l.s4 1934713408
      %v1634 = vunpack.c.0.s8 %v1633
      %v1635 = vlaneseq
      %v1636 = vshrl.u32 %v1635, 7
      %v1637 = vsub.s32 %v1634, %v1636
      %v1638 = vrot.slane %v1624, %v1637
      %v1639 = vcombine.low %v1574, %v1590
      %v1640 = vcombine.high %v1574, %v1590
      %v1642 = vunpack.c.l.s4 1934713408
      %v1643 = vunpack.c.0.s8 %v1642
      %v1644 = vlaneseq
      %v1645 = vshrl.u32 %v1644, 7
      %v1646 = vsub.s32 %v1643, %v1645
      %v1647 = vrot.slane %v1639, %v1646
      %v1649 = vunpack.c.l.s4 1934713408
      %v1650 = vunpack.c.0.s8 %v1649
      %v1651 = vlaneseq
      %v1652 = vshrl.u32 %v1651, 7
      %v1653 = vsub.s32 %v1650, %v1652
      %v1654 = vrot.slane %v1640, %v1653
      %v1655 = vcombine.low %v1599, %v1615
      %v1656 = vcombine.high %v1599, %v1615
      %v1658 = vunpack.c.l.s4 1934713408
      %v1659 = vunpack.c.0.s8 %v1658
      %v1660 = vlaneseq
      %v1661 = vshrl.u32 %v1660, 7
      %v1662 = vsub.s32 %v1659, %v1661
      %v1663 = vrot.slane %v1655, %v1662
      %v1665 = vunpack.c.l.s4 1934713408
      %v1666 = vunpack.c.0.s8 %v1665
      %v1667 = vlaneseq
      %v1668 = vshrl.u32 %v1667, 7
      %v1669 = vsub.s32 %v1666, %v1668
      %v1670 = vrot.slane %v1656, %v1669
      %v1671 = vcombine.low %v1606, %v1622
      %v1672 = vcombine.high %v1606, %v1622
      %v1674 = vunpack.c.l.s4 1934713408
      %v1675 = vunpack.c.0.s8 %v1674
      %v1676 = vlaneseq
      %v1677 = vshrl.u32 %v1676, 7
      %v1678 = vsub.s32 %v1675, %v1677
      %v1679 = vrot.slane %v1671, %v1678
      %v1681 = vunpack.c.l.s4 1934713408
      %v1682 = vunpack.c.0.s8 %v1681
      %v1683 = vlaneseq
      %v1684 = vshrl.u32 %v1683, 7
      %v1685 = vsub.s32 %v1682, %v1684
      %v1686 = vrot.slane %v1672, %v1685
      %v1687 = vcombine.low %v1631, %v1663
      %v1688 = vcombine.high %v1631, %v1663
      %v1689 = vcombine.low %v1638, %v1670
      %v1690 = vcombine.high %v1638, %v1670
      %v1691 = vcombine.low %v1647, %v1679
      %v1692 = vcombine.high %v1647, %v1679
      %v1693 = vcombine.low %v1654, %v1686
      %v1694 = vcombine.low %v820, %v824
      %v1695 = vcombine.high %v820, %v824
      %v1697 = vunpack.c.l.s4 1983009808
      %v1698 = vunpack.c.0.s8 %v1697
      %v1699 = vlaneseq
      %v1700 = vshrl.u32 %v1699, 7
      %v1701 = vsub.s32 %v1698, %v1700
      %v1702 = vrot.slane %v1694, %v1701
      %v1704 = vunpack.c.l.s4 1983009808
      %v1705 = vunpack.c.0.s8 %v1704
      %v1706 = vlaneseq
      %v1707 = vshrl.u32 %v1706, 7
      %v1708 = vsub.s32 %v1705, %v1707
      %v1709 = vrot.slane %v1695, %v1708
      %v1710 = vcombine.low %v822, %v826
      %v1711 = vcombine.high %v822, %v826
      %v1713 = vunpack.c.l.s4 1983009808
      %v1714 = vunpack.c.0.s8 %v1713
      %v1715 = vlaneseq
      %v1716 = vshrl.u32 %v1715, 7
      %v1717 = vsub.s32 %v1714, %v1716
      %v1718 = vrot.slane %v1710, %v1717
      %v1720 = vunpack.c.l.s4 1983009808
      %v1721 = vunpack.c.0.s8 %v1720
      %v1722 = vlaneseq
      %v1723 = vshrl.u32 %v1722, 7
      %v1724 = vsub.s32 %v1721, %v1723
      %v1725 = vrot.slane %v1711, %v1724
      %v1726 = vcombine.low %v837, %v845
      %v1727 = vcombine.high %v837, %v845
      %v1729 = vunpack.c.l.s4 1983009808
      %v1730 = vunpack.c.0.s8 %v1729
      %v1731 = vlaneseq
      %v1732 = vshrl.u32 %v1731, 7
      %v1733 = vsub.s32 %v1730, %v1732
      %v1734 = vrot.slane %v1726, %v1733
      %v1736 = vunpack.c.l.s4 1983009808
      %v1737 = vunpack.c.0.s8 %v1736
      %v1738 = vlaneseq
      %v1739 = vshrl.u32 %v1738, 7
      %v1740 = vsub.s32 %v1737, %v1739
      %v1741 = vrot.slane %v1727, %v1740
      %v1742 = vcombine.low %v841, %v849
      %v1743 = vcombine.high %v841, %v849
      %v1745 = vunpack.c.l.s4 1983009808
      %v1746 = vunpack.c.0.s8 %v1745
      %v1747 = vlaneseq
      %v1748 = vshrl.u32 %v1747, 7
      %v1749 = vsub.s32 %v1746, %v1748
      %v1750 = vrot.slane %v1742, %v1749
      %v1752 = vunpack.c.l.s4 1983009808
      %v1753 = vunpack.c.0.s8 %v1752
      %v1754 = vlaneseq
      %v1755 = vshrl.u32 %v1754, 7
      %v1756 = vsub.s32 %v1753, %v1755
      %v1757 = vrot.slane %v1743, %v1756
      %v1758 = vcombine.low %v1702, %v1718
      %v1759 = vcombine.high %v1702, %v1718
      %v1761 = vunpack.c.l.s4 1934713408
      %v1762 = vunpack.c.0.s8 %v1761
      %v1763 = vlaneseq
      %v1764 = vshrl.u32 %v1763, 7
      %v1765 = vsub.s32 %v1762, %v1764
      %v1766 = vrot.slane %v1758, %v1765
      %v1768 = vunpack.c.l.s4 1934713408
      %v1769 = vunpack.c.0.s8 %v1768
      %v1770 = vlaneseq
      %v1771 = vshrl.u32 %v1770, 7
      %v1772 = vsub.s32 %v1769, %v1771
      %v1773 = vrot.slane %v1759, %v1772
      %v1774 = vcombine.low %v1709, %v1725
      %v1775 = vcombine.high %v1709, %v1725
      %v1777 = vunpack.c.l.s4 1934713408
      %v1778 = vunpack.c.0.s8 %v1777
      %v1779 = vlaneseq
      %v1780 = vshrl.u32 %v1779, 7
      %v1781 = vsub.s32 %v1778, %v1780
      %v1782 = vrot.slane %v1774, %v1781
      %v1784 = vunpack.c.l.s4 1934713408
      %v1785 = vunpack.c.0.s8 %v1784
      %v1786 = vlaneseq
      %v1787 = vshrl.u32 %v1786, 7
      %v1788 = vsub.s32 %v1785, %v1787
      %v1789 = vrot.slane %v1775, %v1788
      %v1790 = vcombine.low %v1734, %v1750
      %v1791 = vcombine.high %v1734, %v1750
      %v1793 = vunpack.c.l.s4 1934713408
      %v1794 = vunpack.c.0.s8 %v1793
      %v1795 = vlaneseq
      %v1796 = vshrl.u32 %v1795, 7
      %v1797 = vsub.s32 %v1794, %v1796
      %v1798 = vrot.slane %v1790, %v1797
      %v1800 = vunpack.c.l.s4 1934713408
      %v1801 = vunpack.c.0.s8 %v1800
      %v1802 = vlaneseq
      %v1803 = vshrl.u32 %v1802, 7
      %v1804 = vsub.s32 %v1801, %v1803
      %v1805 = vrot.slane %v1791, %v1804
      %v1806 = vcombine.low %v1741, %v1757
      %v1807 = vcombine.high %v1741, %v1757
      %v1809 = vunpack.c.l.s4 1934713408
      %v1810 = vunpack.c.0.s8 %v1809
      %v1811 = vlaneseq
      %v1812 = vshrl.u32 %v1811, 7
      %v1813 = vsub.s32 %v1810, %v1812
      %v1814 = vrot.slane %v1806, %v1813
      %v1816 = vunpack.c.l.s4 1934713408
      %v1817 = vunpack.c.0.s8 %v1816
      %v1818 = vlaneseq
      %v1819 = vshrl.u32 %v1818, 7
      %v1820 = vsub.s32 %v1817, %v1819
      %v1821 = vrot.slane %v1807, %v1820
      %v1822 = vcombine.low %v1766, %v1798
      %v1823 = vcombine.high %v1766, %v1798
      %v1824 = vcombine.low %v1773, %v1805
      %v1825 = vcombine.high %v1773, %v1805
      %v1826 = vcombine.low %v1782, %v1814
      %v1827 = vcombine.high %v1782, %v1814
      %v1828 = vcombine.low %v1789, %v1821
      %v1829 = vcombine.low %v821, %v825
      %v1830 = vcombine.high %v821, %v825
      %v1832 = vunpack.c.l.s4 1983009808
      %v1833 = vunpack.c.0.s8 %v1832
      %v1834 = vlaneseq
      %v1835 = vshrl.u32 %v1834, 7
      %v1836 = vsub.s32 %v1833, %v1835
      %v1837 = vrot.slane %v1829, %v1836
      %v1839 = vunpack.c.l.s4 1983009808
      %v1840 = vunpack.c.0.s8 %v1839
      %v1841 = vlaneseq
      %v1842 = vshrl.u32 %v1841, 7
      %v1843 = vsub.s32 %v1840, %v1842
      %v1844 = vrot.slane %v1830, %v1843
      %v1845 = vcombine.low %v823, %v827
      %v1846 = vcombine.high %v823, %v827
      %v1848 = vunpack.c.l.s4 1983009808
      %v1849 = vunpack.c.0.s8 %v1848
      %v1850 = vlaneseq
      %v1851 = vshrl.u32 %v1850, 7
      %v1852 = vsub.s32 %v1849, %v1851
      %v1853 = vrot.slane %v1845, %v1852
      %v1855 = vunpack.c.l.s4 1983009808
      %v1856 = vunpack.c.0.s8 %v1855
      %v1857 = vlaneseq
      %v1858 = vshrl.u32 %v1857, 7
      %v1859 = vsub.s32 %v1856, %v1858
      %v1860 = vrot.slane %v1846, %v1859
      %v1861 = vcombine.low %v839, %v847
      %v1862 = vcombine.high %v839, %v847
      %v1864 = vunpack.c.l.s4 1983009808
      %v1865 = vunpack.c.0.s8 %v1864
      %v1866 = vlaneseq
      %v1867 = vshrl.u32 %v1866, 7
      %v1868 = vsub.s32 %v1865, %v1867
      %v1869 = vrot.slane %v1861, %v1868
      %v1871 = vunpack.c.l.s4 1983009808
      %v1872 = vunpack.c.0.s8 %v1871
      %v1873 = vlaneseq
      %v1874 = vshrl.u32 %v1873, 7
      %v1875 = vsub.s32 %v1872, %v1874
      %v1876 = vrot.slane %v1862, %v1875
      %v1877 = vcombine.low %v843, %v851
      %v1878 = vcombine.high %v843, %v851
      %v1880 = vunpack.c.l.s4 1983009808
      %v1881 = vunpack.c.0.s8 %v1880
      %v1882 = vlaneseq
      %v1883 = vshrl.u32 %v1882, 7
      %v1884 = vsub.s32 %v1881, %v1883
      %v1885 = vrot.slane %v1877, %v1884
      %v1887 = vunpack.c.l.s4 1983009808
      %v1888 = vunpack.c.0.s8 %v1887
      %v1889 = vlaneseq
      %v1890 = vshrl.u32 %v1889, 7
      %v1891 = vsub.s32 %v1888, %v1890
      %v1892 = vrot.slane %v1878, %v1891
      %v1893 = vcombine.low %v1837, %v1853
      %v1894 = vcombine.high %v1837, %v1853
      %v1896 = vunpack.c.l.s4 1934713408
      %v1897 = vunpack.c.0.s8 %v1896
      %v1898 = vlaneseq
      %v1899 = vshrl.u32 %v1898, 7
      %v1900 = vsub.s32 %v1897, %v1899
      %v1901 = vrot.slane %v1893, %v1900
      %v1903 = vunpack.c.l.s4 1934713408
      %v1904 = vunpack.c.0.s8 %v1903
      %v1905 = vlaneseq
      %v1906 = vshrl.u32 %v1905, 7
      %v1907 = vsub.s32 %v1904, %v1906
      %v1908 = vrot.slane %v1894, %v1907
      %v1909 = vcombine.low %v1844, %v1860
      %v1910 = vcombine.high %v1844, %v1860
      %v1912 = vunpack.c.l.s4 1934713408
      %v1913 = vunpack.c.0.s8 %v1912
      %v1914 = vlaneseq
      %v1915 = vshrl.u32 %v1914, 7
      %v1916 = vsub.s32 %v1913, %v1915
      %v1917 = vrot.slane %v1909, %v1916
      %v1919 = vunpack.c.l.s4 1934713408
      %v1920 = vunpack.c.0.s8 %v1919
      %v1921 = vlaneseq
      %v1922 = vshrl.u32 %v1921, 7
      %v1923 = vsub.s32 %v1920, %v1922
      %v1924 = vrot.slane %v1910, %v1923
      %v1925 = vcombine.low %v1869, %v1885
      %v1926 = vcombine.high %v1869, %v1885
      %v1928 = vunpack.c.l.s4 1934713408
      %v1929 = vunpack.c.0.s8 %v1928
      %v1930 = vlaneseq
      %v1931 = vshrl.u32 %v1930, 7
      %v1932 = vsub.s32 %v1929, %v1931
      %v1933 = vrot.slane %v1925, %v1932
      %v1935 = vunpack.c.l.s4 1934713408
      %v1936 = vunpack.c.0.s8 %v1935
      %v1937 = vlaneseq
      %v1938 = vshrl.u32 %v1937, 7
      %v1939 = vsub.s32 %v1936, %v1938
      %v1940 = vrot.slane %v1926, %v1939
      %v1941 = vcombine.low %v1876, %v1892
      %v1942 = vcombine.high %v1876, %v1892
      %v1944 = vunpack.c.l.s4 1934713408
      %v1945 = vunpack.c.0.s8 %v1944
      %v1946 = vlaneseq
      %v1947 = vshrl.u32 %v1946, 7
      %v1948 = vsub.s32 %v1945, %v1947
      %v1949 = vrot.slane %v1941, %v1948
      %v1951 = vunpack.c.l.s4 1934713408
      %v1952 = vunpack.c.0.s8 %v1951
      %v1953 = vlaneseq
      %v1954 = vshrl.u32 %v1953, 7
      %v1955 = vsub.s32 %v1952, %v1954
      %v1956 = vrot.slane %v1942, %v1955
      %v1957 = vcombine.low %v1901, %v1933
      %v1958 = vcombine.high %v1901, %v1933
      %v1959 = vcombine.low %v1908, %v1940
      %v1960 = vcombine.high %v1908, %v1940
      %v1961 = vcombine.low %v1917, %v1949
      %v1962 = vcombine.high %v1917, %v1949
      %v1963 = vcombine.low %v1924, %v1956
      %v1964 = vcombine.low %v861, %v869
      %v1965 = vcombine.high %v861, %v869
      %v1967 = vunpack.c.l.s4 1983009808
      %v1968 = vunpack.c.0.s8 %v1967
      %v1969 = vlaneseq
      %v1970 = vshrl.u32 %v1969, 7
      %v1971 = vsub.s32 %v1968, %v1970
      %v1972 = vrot.slane %v1964, %v1971
      %v1974 = vunpack.c.l.s4 1983009808
      %v1975 = vunpack.c.0.s8 %v1974
      %v1976 = vlaneseq
      %v1977 = vshrl.u32 %v1976, 7
      %v1978 = vsub.s32 %v1975, %v1977
      %v1979 = vrot.slane %v1965, %v1978
      %v1980 = vcombine.low %v865, %v873
      %v1981 = vcombine.high %v865, %v873
      %v1983 = vunpack.c.l.s4 1983009808
      %v1984 = vunpack.c.0.s8 %v1983
      %v1985 = vlaneseq
      %v1986 = vshrl.u32 %v1985, 7
      %v1987 = vsub.s32 %v1984, %v1986
      %v1988 = vrot.slane %v1980, %v1987
      %v1990 = vunpack.c.l.s4 1983009808
      %v1991 = vunpack.c.0.s8 %v1990
      %v1992 = vlaneseq
      %v1993 = vshrl.u32 %v1992, 7
      %v1994 = vsub.s32 %v1991, %v1993
      %v1995 = vrot.slane %v1981, %v1994
      %v1996 = vcombine.low %v1972, %v1988
      %v1997 = vcombine.high %v1972, %v1988
      %v1999 = vunpack.c.l.s4 1934713408
      %v2000 = vunpack.c.0.s8 %v1999
      %v2001 = vlaneseq
      %v2002 = vshrl.u32 %v2001, 7
      %v2003 = vsub.s32 %v2000, %v2002
      %v2004 = vrot.slane %v1996, %v2003
      %v2006 = vunpack.c.l.s4 1934713408
      %v2007 = vunpack.c.0.s8 %v2006
      %v2008 = vlaneseq
      %v2009 = vshrl.u32 %v2008, 7
      %v2010 = vsub.s32 %v2007, %v2009
      %v2011 = vrot.slane %v1997, %v2010
      %v2012 = vcombine.low %v1979, %v1995
      %v2013 = vcombine.high %v1979, %v1995
      %v2015 = vunpack.c.l.s4 1934713408
      %v2016 = vunpack.c.0.s8 %v2015
      %v2017 = vlaneseq
      %v2018 = vshrl.u32 %v2017, 7
      %v2019 = vsub.s32 %v2016, %v2018
      %v2020 = vrot.slane %v2012, %v2019
      %v2021 = vcombine.high %v2004, 0
      %v2022 = vcombine.high %v2011, 0
      %v2023 = vcombine.high %v2020, 0
      %v2025 = vunpack.c.l.s4 1934713408
      %v2026 = vunpack.c.0.s8 %v2025
      %v2027 = vlaneseq
      %v2028 = vshrl.u32 %v2027, 7
      %v2029 = vsub.s32 %v2026, %v2028
      %v2030 = vrot.slane %v2013, %v2029
      %v2031 = vcombine.low %v863, %v871
      %v2032 = vcombine.high %v863, %v871
      %v2034 = vunpack.c.l.s4 1983009808
      %v2035 = vunpack.c.0.s8 %v2034
      %v2036 = vlaneseq
      %v2037 = vshrl.u32 %v2036, 7
      %v2038 = vsub.s32 %v2035, %v2037
      %v2039 = vrot.slane %v2031, %v2038
      %v2041 = vunpack.c.l.s4 1983009808
      %v2042 = vunpack.c.0.s8 %v2041
      %v2043 = vlaneseq
      %v2044 = vshrl.u32 %v2043, 7
      %v2045 = vsub.s32 %v2042, %v2044
      %v2046 = vrot.slane %v2032, %v2045
      %v2047 = vcombine.low %v867, %v875
      %v2048 = vcombine.high %v867, %v875
      %v2050 = vunpack.c.l.s4 1983009808
      %v2051 = vunpack.c.0.s8 %v2050
      %v2052 = vlaneseq
      %v2053 = vshrl.u32 %v2052, 7
      %v2054 = vsub.s32 %v2051, %v2053
      %v2055 = vrot.slane %v2047, %v2054
      %v2057 = vunpack.c.l.s4 1983009808
      %v2058 = vunpack.c.0.s8 %v2057
      %v2059 = vlaneseq
      %v2060 = vshrl.u32 %v2059, 7
      %v2061 = vsub.s32 %v2058, %v2060
      %v2062 = vrot.slane %v2048, %v2061
      %v2063 = vcombine.low %v2039, %v2055
      %v2064 = vcombine.high %v2039, %v2055
      %v2066 = vunpack.c.l.s4 1934713408
      %v2067 = vunpack.c.0.s8 %v2066
      %v2068 = vlaneseq
      %v2069 = vshrl.u32 %v2068, 7
      %v2070 = vsub.s32 %v2067, %v2069
      %v2071 = vrot.slane %v2063, %v2070
      %v2073 = vunpack.c.l.s4 1934713408
      %v2074 = vunpack.c.0.s8 %v2073
      %v2075 = vlaneseq
      %v2076 = vshrl.u32 %v2075, 7
      %v2077 = vsub.s32 %v2074, %v2076
      %v2078 = vrot.slane %v2064, %v2077
      %v2079 = vcombine.low %v2046, %v2062
      %v2080 = vcombine.high %v2046, %v2062
      %v2082 = vunpack.c.l.s4 1934713408
      %v2083 = vunpack.c.0.s8 %v2082
      %v2084 = vlaneseq
      %v2085 = vshrl.u32 %v2084, 7
      %v2086 = vsub.s32 %v2083, %v2085
      %v2087 = vrot.slane %v2079, %v2086
      %v2088 = vcombine.high %v2071, 0
      %v2089 = vcombine.high %v2078, 0
      %v2090 = vcombine.high %v2087, 0
      %v2092 = vunpack.c.l.s4 1934713408
      %v2093 = vunpack.c.0.s8 %v2092
      %v2094 = vlaneseq
      %v2095 = vshrl.u32 %v2094, 7
      %v2096 = vsub.s32 %v2093, %v2095
      %v2097 = vrot.slane %v2080, %v2096
      %v2100 = vpack.i.b16 %v1147, %v1012
      %v2101 = vshrl.u32 %v1012, 16
      %v2102 = vshrl.u32 %v1147, 16
      %v2103 = vpack.i.b16 %v2102, %v2101
      %v2106 = vpack.i.b16 %v1148, %v1013
      %v2107 = vshrl.u32 %v1013, 16
      %v2108 = vshrl.u32 %v1148, 16
      %v2109 = vpack.i.b16 %v2108, %v2107
      %v2112 = vpack.i.b16 %v1149, %v1014
      %v2113 = vshrl.u32 %v1014, 16
      %v2114 = vshrl.u32 %v1149, 16
      %v2115 = vpack.i.b16 %v2114, %v2113
      %v2118 = vpack.i.b16 %v1150, %v1015
      %v2119 = vshrl.u32 %v1015, 16
      %v2120 = vshrl.u32 %v1150, 16
      %v2121 = vpack.i.b16 %v2120, %v2119
      %v2124 = vpack.i.b16 %v1151, %v1016
      %v2125 = vshrl.u32 %v1016, 16
      %v2126 = vshrl.u32 %v1151, 16
      %v2127 = vpack.i.b16 %v2126, %v2125
      %v2130 = vpack.i.b16 %v1152, %v1017
      %v2131 = vshrl.u32 %v1017, 16
      %v2132 = vshrl.u32 %v1152, 16
      %v2133 = vpack.i.b16 %v2132, %v2131
      %v2136 = vpack.i.b16 %v1153, %v1018
      %v2137 = vshrl.u32 %v1018, 16
      %v2138 = vshrl.u32 %v1153, 16
      %v2139 = vpack.i.b16 %v2138, %v2137
      %v2142 = vpack.i.b16 %v1417, %v1282
      %v2143 = vshrl.u32 %v1282, 16
      %v2144 = vshrl.u32 %v1417, 16
      %v2145 = vpack.i.b16 %v2144, %v2143
      %v2148 = vpack.i.b16 %v1418, %v1283
      %v2149 = vshrl.u32 %v1283, 16
      %v2150 = vshrl.u32 %v1418, 16
      %v2151 = vpack.i.b16 %v2150, %v2149
      %v2154 = vpack.i.b16 %v1419, %v1284
      %v2155 = vshrl.u32 %v1284, 16
      %v2156 = vshrl.u32 %v1419, 16
      %v2157 = vpack.i.b16 %v2156, %v2155
      %v2160 = vpack.i.b16 %v1420, %v1285
      %v2161 = vshrl.u32 %v1285, 16
      %v2162 = vshrl.u32 %v1420, 16
      %v2163 = vpack.i.b16 %v2162, %v2161
      %v2166 = vpack.i.b16 %v1421, %v1286
      %v2167 = vshrl.u32 %v1286, 16
      %v2168 = vshrl.u32 %v1421, 16
      %v2169 = vpack.i.b16 %v2168, %v2167
      %v2172 = vpack.i.b16 %v1422, %v1287
      %v2173 = vshrl.u32 %v1287, 16
      %v2174 = vshrl.u32 %v1422, 16
      %v2175 = vpack.i.b16 %v2174, %v2173
      %v2178 = vpack.i.b16 %v1423, %v1288
      %v2179 = vshrl.u32 %v1288, 16
      %v2180 = vshrl.u32 %v1423, 16
      %v2181 = vpack.i.b16 %v2180, %v2179
      %v2184 = vpack.i.b16 %v1687, %v1552
      %v2185 = vshrl.u32 %v1552, 16
      %v2186 = vshrl.u32 %v1687, 16
      %v2187 = vpack.i.b16 %v2186, %v2185
      %v2190 = vpack.i.b16 %v1688, %v1553
      %v2191 = vshrl.u32 %v1553, 16
      %v2192 = vshrl.u32 %v1688, 16
      %v2193 = vpack.i.b16 %v2192, %v2191
      %v2196 = vpack.i.b16 %v1689, %v1554
      %v2197 = vshrl.u32 %v1554, 16
      %v2198 = vshrl.u32 %v1689, 16
      %v2199 = vpack.i.b16 %v2198, %v2197
      %v2202 = vpack.i.b16 %v1690, %v1555
      %v2203 = vshrl.u32 %v1555, 16
      %v2204 = vshrl.u32 %v1690, 16
      %v2205 = vpack.i.b16 %v2204, %v2203
      %v2208 = vpack.i.b16 %v1691, %v1556
      %v2209 = vshrl.u32 %v1556, 16
      %v2210 = vshrl.u32 %v1691, 16
      %v2211 = vpack.i.b16 %v2210, %v2209
      %v2214 = vpack.i.b16 %v1692, %v1557
      %v2215 = vshrl.u32 %v1557, 16
      %v2216 = vshrl.u32 %v1692, 16
      %v2217 = vpack.i.b16 %v2216, %v2215
      %v2220 = vpack.i.b16 %v1693, %v1558
      %v2221 = vshrl.u32 %v1558, 16
      %v2222 = vshrl.u32 %v1693, 16
      %v2223 = vpack.i.b16 %v2222, %v2221
      %v2226 = vpack.i.b16 %v1957, %v1822
      %v2227 = vshrl.u32 %v1822, 16
      %v2228 = vshrl.u32 %v1957, 16
      %v2229 = vpack.i.b16 %v2228, %v2227
      %v2232 = vpack.i.b16 %v1958, %v1823
      %v2233 = vshrl.u32 %v1823, 16
      %v2234 = vshrl.u32 %v1958, 16
      %v2235 = vpack.i.b16 %v2234, %v2233
      %v2238 = vpack.i.b16 %v1959, %v1824
      %v2239 = vshrl.u32 %v1824, 16
      %v2240 = vshrl.u32 %v1959, 16
      %v2241 = vpack.i.b16 %v2240, %v2239
      %v2244 = vpack.i.b16 %v1960, %v1825
      %v2245 = vshrl.u32 %v1825, 16
      %v2246 = vshrl.u32 %v1960, 16
      %v2247 = vpack.i.b16 %v2246, %v2245
      %v2250 = vpack.i.b16 %v1961, %v1826
      %v2251 = vshrl.u32 %v1826, 16
      %v2252 = vshrl.u32 %v1961, 16
      %v2253 = vpack.i.b16 %v2252, %v2251
      %v2256 = vpack.i.b16 %v1962, %v1827
      %v2257 = vshrl.u32 %v1827, 16
      %v2258 = vshrl.u32 %v1962, 16
      %v2259 = vpack.i.b16 %v2258, %v2257
      %v2262 = vpack.i.b16 %v1963, %v1828
      %v2263 = vshrl.u32 %v1828, 16
      %v2264 = vshrl.u32 %v1963, 16
      %v2265 = vpack.i.b16 %v2264, %v2263
      %v2268 = vpack.i.b16 %v2071, %v2004
      %v2269 = vshrl.u32 %v2004, 16
      %v2270 = vshrl.u32 %v2071, 16
      %v2271 = vpack.i.b16 %v2270, %v2269
      %v2274 = vpack.i.b16 %v2088, %v2021
      %v2275 = vshrl.u32 %v2021, 16
      %v2276 = vshrl.u32 %v2088, 16
      %v2277 = vpack.i.b16 %v2276, %v2275
      %v2280 = vpack.i.b16 %v2078, %v2011
      %v2281 = vshrl.u32 %v2011, 16
      %v2282 = vshrl.u32 %v2078, 16
      %v2283 = vpack.i.b16 %v2282, %v2281
      %v2286 = vpack.i.b16 %v2089, %v2022
      %v2287 = vshrl.u32 %v2022, 16
      %v2288 = vshrl.u32 %v2089, 16
      %v2289 = vpack.i.b16 %v2288, %v2287
      %v2292 = vpack.i.b16 %v2087, %v2020
      %v2293 = vshrl.u32 %v2020, 16
      %v2294 = vshrl.u32 %v2087, 16
      %v2295 = vpack.i.b16 %v2294, %v2293
      %v2298 = vpack.i.b16 %v2090, %v2023
      %v2299 = vshrl.u32 %v2023, 16
      %v2300 = vshrl.u32 %v2090, 16
      %v2301 = vpack.i.b16 %v2300, %v2299
      %v2304 = vpack.i.b16 %v2097, %v2030
      %v2305 = vshrl.u32 %v2030, 16
      %v2306 = vshrl.u32 %v2097, 16
      %v2307 = vpack.i.b16 %v2306, %v2305
      %2308 = vrot.lane.b32.xlu0 %v2103, 14
      %v2309 = vpop.permute.xlu0 %2308
      %2310 = vrot.lane.b32.xlu0 %v2145, 14
      %v2311 = vpop.permute.xlu0 %2310
      %2312 = vrot.lane.b32.xlu0 %v2187, 14
      %v2313 = vpop.permute.xlu0 %2312
      %2314 = vrot.lane.b32.xlu0 %v2229, 14
      %v2315 = vpop.permute.xlu0 %2314
      %2316 = vrot.lane.b32.xlu0 %v2271, 14
      %v2317 = vpop.permute.xlu0 %2316
      %2318 = vrot.lane.b32.xlu0 %v2106, 28
      %v2319 = vpop.permute.xlu0 %2318
      %2320 = vrot.lane.b32.xlu0 %v2148, 28
      %v2321 = vpop.permute.xlu0 %2320
      %2322 = vrot.lane.b32.xlu0 %v2190, 28
      %v2323 = vpop.permute.xlu0 %2322
      %2324 = vrot.lane.b32.xlu0 %v2232, 28
      %v2325 = vpop.permute.xlu0 %2324
      %2326 = vrot.lane.b32.xlu0 %v2274, 28
      %v2327 = vpop.permute.xlu0 %2326
      %2328 = vrot.lane.b32.xlu0 %v2109, 42
      %v2329 = vpop.permute.xlu0 %2328
      %2330 = vrot.lane.b32.xlu0 %v2151, 42
      %v2331 = vpop.permute.xlu0 %2330
      %2332 = vrot.lane.b32.xlu0 %v2193, 42
      %v2333 = vpop.permute.xlu0 %2332
      %2334 = vrot.lane.b32.xlu0 %v2235, 42
      %v2335 = vpop.permute.xlu0 %2334
      %2336 = vrot.lane.b32.xlu0 %v2277, 42
      %v2337 = vpop.permute.xlu0 %2336
      %2338 = vrot.lane.b32.xlu0 %v2112, 56
      %v2339 = vpop.permute.xlu0 %2338
      %2340 = vrot.lane.b32.xlu0 %v2154, 56
      %v2341 = vpop.permute.xlu0 %2340
      %2342 = vrot.lane.b32.xlu0 %v2196, 56
      %v2343 = vpop.permute.xlu0 %2342
      %2344 = vrot.lane.b32.xlu0 %v2238, 56
      %v2345 = vpop.permute.xlu0 %2344
      %2346 = vrot.lane.b32.xlu0 %v2280, 56
      %v2347 = vpop.permute.xlu0 %2346
      %2348 = vrot.lane.b32.xlu0 %v2115, 70
      %v2349 = vpop.permute.xlu0 %2348
      %2350 = vrot.lane.b32.xlu0 %v2157, 70
      %v2351 = vpop.permute.xlu0 %2350
      %2352 = vrot.lane.b32.xlu0 %v2199, 70
      %v2353 = vpop.permute.xlu0 %2352
      %2354 = vrot.lane.b32.xlu0 %v2241, 70
      %v2355 = vpop.permute.xlu0 %2354
      %2356 = vrot.lane.b32.xlu0 %v2283, 70
      %v2357 = vpop.permute.xlu0 %2356
      %2358 = vrot.lane.b32.xlu0 %v2118, 84
      %v2359 = vpop.permute.xlu0 %2358
      %2360 = vrot.lane.b32.xlu0 %v2160, 84
      %v2361 = vpop.permute.xlu0 %2360
      %2362 = vrot.lane.b32.xlu0 %v2202, 84
      %v2363 = vpop.permute.xlu0 %2362
      %2364 = vrot.lane.b32.xlu0 %v2244, 84
      %v2365 = vpop.permute.xlu0 %2364
      %2366 = vrot.lane.b32.xlu0 %v2286, 84
      %v2367 = vpop.permute.xlu0 %2366
      %2368 = vrot.lane.b32.xlu0 %v2121, 98
      %v2369 = vpop.permute.xlu0 %2368
      %2370 = vrot.lane.b32.xlu0 %v2163, 98
      %v2371 = vpop.permute.xlu0 %2370
      %2372 = vrot.lane.b32.xlu0 %v2205, 98
      %v2373 = vpop.permute.xlu0 %2372
      %2374 = vrot.lane.b32.xlu0 %v2247, 98
      %v2375 = vpop.permute.xlu0 %2374
      %2376 = vrot.lane.b32.xlu0 %v2289, 98
      %v2377 = vpop.permute.xlu0 %2376
      %2378 = vrot.lane.b32.xlu0 %v2124, 112
      %v2379 = vpop.permute.xlu0 %2378
      %2380 = vrot.lane.b32.xlu0 %v2166, 112
      %v2381 = vpop.permute.xlu0 %2380
      %2382 = vrot.lane.b32.xlu0 %v2208, 112
      %v2383 = vpop.permute.xlu0 %2382
      %2384 = vrot.lane.b32.xlu0 %v2250, 112
      %v2385 = vpop.permute.xlu0 %2384
      %2386 = vrot.lane.b32.xlu0 %v2292, 112
      %v2387 = vpop.permute.xlu0 %2386
      %2388 = vrot.lane.b32.xlu0 %v2127, 126
      %v2389 = vpop.permute.xlu0 %2388
      %2390 = vrot.lane.b32.xlu0 %v2169, 126
      %v2391 = vpop.permute.xlu0 %2390
      %2392 = vrot.lane.b32.xlu0 %v2211, 126
      %v2393 = vpop.permute.xlu0 %2392
      %2394 = vrot.lane.b32.xlu0 %v2253, 126
      %v2395 = vpop.permute.xlu0 %2394
      %2396 = vrot.lane.b32.xlu0 %v2295, 126
      %v2397 = vpop.permute.xlu0 %2396
      %2398 = vrot.lane.b32.xlu0 %v2130, 12
      %v2399 = vpop.permute.xlu0 %2398
      %2400 = vrot.lane.b32.xlu0 %v2172, 12
      %v2401 = vpop.permute.xlu0 %2400
      %2402 = vrot.lane.b32.xlu0 %v2214, 12
      %v2403 = vpop.permute.xlu0 %2402
      %2404 = vrot.lane.b32.xlu0 %v2256, 12
      %v2405 = vpop.permute.xlu0 %2404
      %2406 = vrot.lane.b32.xlu0 %v2298, 12
      %v2407 = vpop.permute.xlu0 %2406
      %2408 = vrot.lane.b32.xlu0 %v2133, 26
      %v2409 = vpop.permute.xlu0 %2408
      %2410 = vrot.lane.b32.xlu0 %v2175, 26
      %v2411 = vpop.permute.xlu0 %2410
      %2412 = vrot.lane.b32.xlu0 %v2217, 26
      %v2413 = vpop.permute.xlu0 %2412
      %2414 = vrot.lane.b32.xlu0 %v2259, 26
      %v2415 = vpop.permute.xlu0 %2414
      %2416 = vrot.lane.b32.xlu0 %v2301, 26
      %v2417 = vpop.permute.xlu0 %2416
      %2418 = vrot.lane.b32.xlu0 %v2136, 40
      %v2419 = vpop.permute.xlu0 %2418
      %2420 = vrot.lane.b32.xlu0 %v2178, 40
      %v2421 = vpop.permute.xlu0 %2420
      %2422 = vrot.lane.b32.xlu0 %v2220, 40
      %v2423 = vpop.permute.xlu0 %2422
      %2424 = vrot.lane.b32.xlu0 %v2262, 40
      %v2425 = vpop.permute.xlu0 %2424
      %2426 = vrot.lane.b32.xlu0 %v2304, 40
      %v2427 = vpop.permute.xlu0 %2426
      %2428 = vrot.lane.b32.xlu0 %v2139, 54
      %v2429 = vpop.permute.xlu0 %2428
      %2430 = vrot.lane.b32.xlu0 %v2181, 54
      %v2431 = vpop.permute.xlu0 %2430
      %2432 = vrot.lane.b32.xlu0 %v2223, 54
      %v2433 = vpop.permute.xlu0 %2432
      %2434 = vrot.lane.b32.xlu0 %v2265, 54
      %v2435 = vpop.permute.xlu0 %2434
      %2436 = vrot.lane.b32.xlu0 %v2307, 54
      %v2437 = vpop.permute.xlu0 %2436
      %vm2438 = vcmask 113664
      %v2441 = vsel %vm2438, %v2100, %v2309
      %v2444 = vsel %vm2438, %v2142, %v2311
      %v2447 = vsel %vm2438, %v2184, %v2313
      %v2450 = vsel %vm2438, %v2226, %v2315
      %v2453 = vsel %vm2438, %v2268, %v2317
      %vm2454 = vcmask 228352
      %v2456 = vsel %vm2454, %v2441, %v2319
      %v2458 = vsel %vm2454, %v2444, %v2321
      %v2460 = vsel %vm2454, %v2447, %v2323
      %v2462 = vsel %vm2454, %v2450, %v2325
      %v2464 = vsel %vm2454, %v2453, %v2327
      %vm2465 = vcmask 343040
      %v2467 = vsel %vm2465, %v2456, %v2329
      %v2469 = vsel %vm2465, %v2458, %v2331
      %v2471 = vsel %vm2465, %v2460, %v2333
      %v2473 = vsel %vm2465, %v2462, %v2335
      %v2475 = vsel %vm2465, %v2464, %v2337
      %vm2476 = vcmask 457728
      %v2478 = vsel %vm2476, %v2467, %v2339
      %v2480 = vsel %vm2476, %v2469, %v2341
      %v2482 = vsel %vm2476, %v2471, %v2343
      %v2484 = vsel %vm2476, %v2473, %v2345
      %v2486 = vsel %vm2476, %v2475, %v2347
      %vm2487 = vcmask 572416
      %v2489 = vsel %vm2487, %v2478, %v2349
      %v2491 = vsel %vm2487, %v2480, %v2351
      %v2493 = vsel %vm2487, %v2482, %v2353
      %v2495 = vsel %vm2487, %v2484, %v2355
      %v2497 = vsel %vm2487, %v2486, %v2357
      %vm2498 = vcmask 687104
      %v2500 = vsel %vm2498, %v2489, %v2359
      %v2502 = vsel %vm2498, %v2491, %v2361
      %v2504 = vsel %vm2498, %v2493, %v2363
      %v2506 = vsel %vm2498, %v2495, %v2365
      %v2508 = vsel %vm2498, %v2497, %v2367
      %vm2509 = vcmask 801792
      %v2511 = vsel %vm2509, %v2500, %v2369
      %v2513 = vsel %vm2509, %v2502, %v2371
      %v2515 = vsel %vm2509, %v2504, %v2373
      %v2517 = vsel %vm2509, %v2506, %v2375
      %v2519 = vsel %vm2509, %v2508, %v2377
      %vm2520 = vcmask 916480
      %v2522 = vsel %vm2520, %v2511, %v2379
      %v2524 = vsel %vm2520, %v2513, %v2381
      %v2526 = vsel %vm2520, %v2515, %v2383
      %v2528 = vsel %vm2520, %v2517, %v2385
      %v2530 = vsel %vm2520, %v2519, %v2387
      %vm2531 = vcmask 1031168
      %v2533 = vsel %vm2531, %v2522, %v2389
      %v2536 = vsel %vm2531, %v2524, %v2391
      %v2539 = vsel %vm2531, %v2526, %v2393
      %v2542 = vsel %vm2531, %v2528, %v2395
      %v2545 = vsel %vm2531, %v2530, %v2397
      %vm2546 = vcmask 97280
      %v2548 = vsel %vm2546, %v2389, %v2399
      %v2550 = vsel %vm2546, %v2391, %v2401
      %v2552 = vsel %vm2546, %v2393, %v2403
      %v2554 = vsel %vm2546, %v2395, %v2405
      %v2556 = vsel %vm2546, %v2397, %v2407
      %vm2557 = vcmask 211968
      %v2559 = vsel %vm2557, %v2548, %v2409
      %v2561 = vsel %vm2557, %v2550, %v2411
      %v2563 = vsel %vm2557, %v2552, %v2413
      %v2565 = vsel %vm2557, %v2554, %v2415
      %v2567 = vsel %vm2557, %v2556, %v2417
      %vm2568 = vcmask 326656
      %v2570 = vsel %vm2568, %v2559, %v2419
      %v2572 = vsel %vm2568, %v2561, %v2421
      %v2574 = vsel %vm2568, %v2563, %v2423
      %v2576 = vsel %vm2568, %v2565, %v2425
      %v2578 = vsel %vm2568, %v2567, %v2427
      %vm2579 = vcmask 441344
      %v2581 = vsel %vm2579, %v2570, %v2429
      %v2584 = vsel %vm2579, %v2572, %v2431
      %v2587 = vsel %vm2579, %v2574, %v2433
      %v2590 = vsel %vm2579, %v2576, %v2435
      %v2593 = vsel %vm2579, %v2578, %v2437
      %2595 = vset.pattern.permute.xlu0 0
      %2596 = vperm.xlu0 %2595, %v651
      %v2597 = vpop.permute.xlu0 %2596
      %vm2599 = vcmask 588800
      %v2601 = vsel %vm2599, %v650, 0
      %vm2603 = vcmask 1043456
      %v2604 = vsel %vm2603, %v2545, 0
      %v2606 = vsel %vm2603, %v2593, 0
      %2608 = vmatprep.subr.bf16.mxu0 0
      %2609 = vmatpush1.bf16.msra.mxu0 0
      %2610 = vmatprep.subr.bf16.mxu0 0
      %2611 = vmatpush1.bf16.msra.mxu0 0
      %2612 = vmatprep.subr.bf16.mxu0 0
      %2613 = vmatpush1.bf16.msra.mxu0 0
      %2614 = vmatprep.subr.bf16.mxu0 %v2606
      %2615 = vmatpush1.bf16.msra.mxu0 %v2604
      %2616 = vmatprep.subr.bf16.mxu0 %v2590
      %2617 = vmatpush1.bf16.msra.mxu0 %v2542
      %2618 = vmatprep.subr.bf16.mxu0 %v2587
      %2619 = vmatpush1.bf16.msra.mxu0 %v2539
      %2620 = vmatprep.subr.bf16.mxu0 %v2584
      %2621 = vmatpush1.bf16.msra.mxu0 %v2536
      %2622 = vmatprep.subr.bf16.mxu0 %v2581
      %2623 = vmatpush1.bf16.msra.mxu0 %v2533
      %2624 = vmatprep.subr.bf16.mxu0 0
      %2625 = vmatpush2.bf16.msra.mxu0 0
      %2626 = vmatprep.subr.bf16.mxu0 0
      %2627 = vmatpush2.bf16.msra.mxu0 0
      %2628 = vmatprep.subr.bf16.mxu0 0
      %2629 = vmatpush2.bf16.msra.mxu0 0
      %2630 = vmatprep.subr.bf16.mxu0 0
      %2631 = vmatpush2.bf16.msra.mxu0 0
      %2632 = vmatprep.subr.bf16.mxu0 0
      %2633 = vmatpush2.bf16.msra.mxu0 0
      %2634 = vmatprep.subr.bf16.mxu0 0
      %2635 = vmatpush2.bf16.msra.mxu0 0
      %2636 = vmatprep.subr.bf16.mxu0 0
      %2637 = vmatpush2.bf16.msra.mxu0 0
      %2638 = vmatprep.subr.bf16.mxu0 0
      %2639 = vmatpush2.bf16.msra.mxu0 0
      %2640 = vmatprep.mubr.bf16.mxu0 0
      %2641 = vmatmul.mubr.bf16.gmra.mxu0 %v2601
      %v2642 = vpop.f32.mrf.mxu0
      %v2643 = vadd.f32 %v2597, %v2642
      %v2644 = vpop.f32.mrf.mxu0
      %v2645 = vadd.f32 %v2597, %v2644
      %v2646 = vpop.f32.mrf.mxu0
      %v2647 = vpop.f32.mrf.mxu0
      %2648 = vdwg.mxu0
      %2650 = vrot.lane.b32.xlu0 %v2643, 114
      %v2651 = vpop.permute.xlu0 %2650
      %2653 = vrot.lane.b32.xlu0 %v2643, 100
      %v2654 = vpop.permute.xlu0 %2653
      %2656 = vrot.lane.b32.xlu0 %v2643, 86
      %v2657 = vpop.permute.xlu0 %2656
      %2659 = vrot.lane.b32.xlu0 %v2643, 72
      %v2660 = vpop.permute.xlu0 %2659
      %2662 = vrot.lane.b32.xlu0 %v2643, 58
      %v2663 = vpop.permute.xlu0 %2662
      %2665 = vrot.lane.b32.xlu0 %v2643, 44
      %v2666 = vpop.permute.xlu0 %2665
      %2668 = vrot.lane.b32.xlu0 %v2643, 30
      %v2669 = vpop.permute.xlu0 %2668
      %2671 = vrot.lane.b32.xlu0 %v2643, 16
      %v2672 = vpop.permute.xlu0 %2671
      %2675 = vrot.lane.b32.xlu0 %v2643, 2
      %v2676 = vpop.permute.xlu0 %2675
      %2677 = vrot.lane.b32.xlu0 %v2645, 2
      %v2678 = vpop.permute.xlu0 %2677
      %vm2679 = vcmask 15360
      %v2680 = vsel %vm2679, %v2676, %v2678
      %2682 = vrot.lane.b32.xlu0 %v2645, 116
      %v2683 = vpop.permute.xlu0 %2682
      %2685 = vrot.lane.b32.xlu0 %v2645, 102
      %v2686 = vpop.permute.xlu0 %2685
      %2688 = vrot.lane.b32.xlu0 %v2645, 88
      %v2689 = vpop.permute.xlu0 %2688
      %2691 = vrot.lane.b32.xlu0 %v2645, 74
      %v2692 = vpop.permute.xlu0 %2691
      %v2694 = vcombine.low %v2643, %v2654
      %v2695 = vcombine.high %v2643, %v2654
      %v2697 = vunpack.c.l.s4 1983009808
      %v2698 = vunpack.c.0.s8 %v2697
      %v2699 = vlaneseq
      %v2700 = vshrl.u32 %v2699, 7
      %v2701 = vsub.s32 %v2698, %v2700
      %v2702 = vrot.slane %v2694, %v2701
      %v2704 = vunpack.c.l.s4 1983009808
      %v2705 = vunpack.c.0.s8 %v2704
      %v2706 = vlaneseq
      %v2707 = vshrl.u32 %v2706, 7
      %v2708 = vsub.s32 %v2705, %v2707
      %v2709 = vrot.slane %v2695, %v2708
      %v2710 = vcombine.low %v2651, %v2657
      %v2711 = vcombine.high %v2651, %v2657
      %v2713 = vunpack.c.l.s4 1983009808
      %v2714 = vunpack.c.0.s8 %v2713
      %v2715 = vlaneseq
      %v2716 = vshrl.u32 %v2715, 7
      %v2717 = vsub.s32 %v2714, %v2716
      %v2718 = vrot.slane %v2710, %v2717
      %v2720 = vunpack.c.l.s4 1983009808
      %v2721 = vunpack.c.0.s8 %v2720
      %v2722 = vlaneseq
      %v2723 = vshrl.u32 %v2722, 7
      %v2724 = vsub.s32 %v2721, %v2723
      %v2725 = vrot.slane %v2711, %v2724
      %v2726 = vcombine.low %v2660, %v2666
      %v2727 = vcombine.high %v2660, %v2666
      %v2729 = vunpack.c.l.s4 1983009808
      %v2730 = vunpack.c.0.s8 %v2729
      %v2731 = vlaneseq
      %v2732 = vshrl.u32 %v2731, 7
      %v2733 = vsub.s32 %v2730, %v2732
      %v2734 = vrot.slane %v2726, %v2733
      %v2736 = vunpack.c.l.s4 1983009808
      %v2737 = vunpack.c.0.s8 %v2736
      %v2738 = vlaneseq
      %v2739 = vshrl.u32 %v2738, 7
      %v2740 = vsub.s32 %v2737, %v2739
      %v2741 = vrot.slane %v2727, %v2740
      %v2742 = vcombine.low %v2663, %v2669
      %v2743 = vcombine.high %v2663, %v2669
      %v2745 = vunpack.c.l.s4 1983009808
      %v2746 = vunpack.c.0.s8 %v2745
      %v2747 = vlaneseq
      %v2748 = vshrl.u32 %v2747, 7
      %v2749 = vsub.s32 %v2746, %v2748
      %v2750 = vrot.slane %v2742, %v2749
      %v2752 = vunpack.c.l.s4 1983009808
      %v2753 = vunpack.c.0.s8 %v2752
      %v2754 = vlaneseq
      %v2755 = vshrl.u32 %v2754, 7
      %v2756 = vsub.s32 %v2753, %v2755
      %v2757 = vrot.slane %v2743, %v2756
      %v2758 = vcombine.low %v2702, %v2718
      %v2759 = vcombine.high %v2702, %v2718
      %v2761 = vunpack.c.l.s4 1934713408
      %v2762 = vunpack.c.0.s8 %v2761
      %v2763 = vlaneseq
      %v2764 = vshrl.u32 %v2763, 7
      %v2765 = vsub.s32 %v2762, %v2764
      %v2766 = vrot.slane %v2758, %v2765
      %v2768 = vunpack.c.l.s4 1934713408
      %v2769 = vunpack.c.0.s8 %v2768
      %v2770 = vlaneseq
      %v2771 = vshrl.u32 %v2770, 7
      %v2772 = vsub.s32 %v2769, %v2771
      %v2773 = vrot.slane %v2759, %v2772
      %v2774 = vcombine.low %v2709, %v2725
      %v2775 = vcombine.high %v2709, %v2725
      %v2777 = vunpack.c.l.s4 1934713408
      %v2778 = vunpack.c.0.s8 %v2777
      %v2779 = vlaneseq
      %v2780 = vshrl.u32 %v2779, 7
      %v2781 = vsub.s32 %v2778, %v2780
      %v2782 = vrot.slane %v2774, %v2781
      %v2784 = vunpack.c.l.s4 1934713408
      %v2785 = vunpack.c.0.s8 %v2784
      %v2786 = vlaneseq
      %v2787 = vshrl.u32 %v2786, 7
      %v2788 = vsub.s32 %v2785, %v2787
      %v2789 = vrot.slane %v2775, %v2788
      %v2790 = vcombine.low %v2734, %v2750
      %v2791 = vcombine.high %v2734, %v2750
      %v2793 = vunpack.c.l.s4 1934713408
      %v2794 = vunpack.c.0.s8 %v2793
      %v2795 = vlaneseq
      %v2796 = vshrl.u32 %v2795, 7
      %v2797 = vsub.s32 %v2794, %v2796
      %v2798 = vrot.slane %v2790, %v2797
      %v2800 = vunpack.c.l.s4 1934713408
      %v2801 = vunpack.c.0.s8 %v2800
      %v2802 = vlaneseq
      %v2803 = vshrl.u32 %v2802, 7
      %v2804 = vsub.s32 %v2801, %v2803
      %v2805 = vrot.slane %v2791, %v2804
      %v2806 = vcombine.low %v2741, %v2757
      %v2807 = vcombine.high %v2741, %v2757
      %v2809 = vunpack.c.l.s4 1934713408
      %v2810 = vunpack.c.0.s8 %v2809
      %v2811 = vlaneseq
      %v2812 = vshrl.u32 %v2811, 7
      %v2813 = vsub.s32 %v2810, %v2812
      %v2814 = vrot.slane %v2806, %v2813
      %v2816 = vunpack.c.l.s4 1934713408
      %v2817 = vunpack.c.0.s8 %v2816
      %v2818 = vlaneseq
      %v2819 = vshrl.u32 %v2818, 7
      %v2820 = vsub.s32 %v2817, %v2819
      %v2821 = vrot.slane %v2807, %v2820
      %v2822 = vcombine.low %v2766, %v2798
      %v2823 = vcombine.high %v2766, %v2798
      %v2824 = vcombine.low %v2773, %v2805
      %v2825 = vcombine.high %v2773, %v2805
      %v2826 = vcombine.low %v2782, %v2814
      %v2827 = vcombine.high %v2782, %v2814
      %v2828 = vcombine.low %v2789, %v2821
      %v2829 = vcombine.high %v2789, %v2821
      %v2830 = vcombine.low %v2672, %v2683
      %v2831 = vcombine.high %v2672, %v2683
      %v2833 = vunpack.c.l.s4 1983009808
      %v2834 = vunpack.c.0.s8 %v2833
      %v2835 = vlaneseq
      %v2836 = vshrl.u32 %v2835, 7
      %v2837 = vsub.s32 %v2834, %v2836
      %v2838 = vrot.slane %v2830, %v2837
      %v2840 = vunpack.c.l.s4 1983009808
      %v2841 = vunpack.c.0.s8 %v2840
      %v2842 = vlaneseq
      %v2843 = vshrl.u32 %v2842, 7
      %v2844 = vsub.s32 %v2841, %v2843
      %v2845 = vrot.slane %v2831, %v2844
      %v2846 = vcombine.low %v2680, %v2686
      %v2847 = vcombine.high %v2680, %v2686
      %v2849 = vunpack.c.l.s4 1983009808
      %v2850 = vunpack.c.0.s8 %v2849
      %v2851 = vlaneseq
      %v2852 = vshrl.u32 %v2851, 7
      %v2853 = vsub.s32 %v2850, %v2852
      %v2854 = vrot.slane %v2846, %v2853
      %v2856 = vunpack.c.l.s4 1983009808
      %v2857 = vunpack.c.0.s8 %v2856
      %v2858 = vlaneseq
      %v2859 = vshrl.u32 %v2858, 7
      %v2860 = vsub.s32 %v2857, %v2859
      %v2861 = vrot.slane %v2847, %v2860
      %v2862 = vcombine.high %v2689, 0.0
      %v2864 = vunpack.c.l.s4 1983009808
      %v2865 = vunpack.c.0.s8 %v2864
      %v2866 = vlaneseq
      %v2867 = vshrl.u32 %v2866, 7
      %v2868 = vsub.s32 %v2865, %v2867
      %v2869 = vrot.slane %v2689, %v2868
      %v2871 = vunpack.c.l.s4 1983009808
      %v2872 = vunpack.c.0.s8 %v2871
      %v2873 = vlaneseq
      %v2874 = vshrl.u32 %v2873, 7
      %v2875 = vsub.s32 %v2872, %v2874
      %v2876 = vrot.slane %v2862, %v2875
      %v2877 = vcombine.high %v2692, 0.0
      %v2879 = vunpack.c.l.s4 1983009808
      %v2880 = vunpack.c.0.s8 %v2879
      %v2881 = vlaneseq
      %v2882 = vshrl.u32 %v2881, 7
      %v2883 = vsub.s32 %v2880, %v2882
      %v2884 = vrot.slane %v2692, %v2883
      %v2886 = vunpack.c.l.s4 1983009808
      %v2887 = vunpack.c.0.s8 %v2886
      %v2888 = vlaneseq
      %v2889 = vshrl.u32 %v2888, 7
      %v2890 = vsub.s32 %v2887, %v2889
      %v2891 = vrot.slane %v2877, %v2890
      %v2892 = vcombine.low %v2838, %v2854
      %v2893 = vcombine.high %v2838, %v2854
      %v2895 = vunpack.c.l.s4 1934713408
      %v2896 = vunpack.c.0.s8 %v2895
      %v2897 = vlaneseq
      %v2898 = vshrl.u32 %v2897, 7
      %v2899 = vsub.s32 %v2896, %v2898
      %v2900 = vrot.slane %v2892, %v2899
      %v2902 = vunpack.c.l.s4 1934713408
      %v2903 = vunpack.c.0.s8 %v2902
      %v2904 = vlaneseq
      %v2905 = vshrl.u32 %v2904, 7
      %v2906 = vsub.s32 %v2903, %v2905
      %v2907 = vrot.slane %v2893, %v2906
      %v2908 = vcombine.low %v2845, %v2861
      %v2909 = vcombine.high %v2845, %v2861
      %v2911 = vunpack.c.l.s4 1934713408
      %v2912 = vunpack.c.0.s8 %v2911
      %v2913 = vlaneseq
      %v2914 = vshrl.u32 %v2913, 7
      %v2915 = vsub.s32 %v2912, %v2914
      %v2916 = vrot.slane %v2908, %v2915
      %v2918 = vunpack.c.l.s4 1934713408
      %v2919 = vunpack.c.0.s8 %v2918
      %v2920 = vlaneseq
      %v2921 = vshrl.u32 %v2920, 7
      %v2922 = vsub.s32 %v2919, %v2921
      %v2923 = vrot.slane %v2909, %v2922
      %v2924 = vcombine.low %v2869, %v2884
      %v2925 = vcombine.high %v2869, %v2884
      %v2927 = vunpack.c.l.s4 1934713408
      %v2928 = vunpack.c.0.s8 %v2927
      %v2929 = vlaneseq
      %v2930 = vshrl.u32 %v2929, 7
      %v2931 = vsub.s32 %v2928, %v2930
      %v2932 = vrot.slane %v2924, %v2931
      %v2934 = vunpack.c.l.s4 1934713408
      %v2935 = vunpack.c.0.s8 %v2934
      %v2936 = vlaneseq
      %v2937 = vshrl.u32 %v2936, 7
      %v2938 = vsub.s32 %v2935, %v2937
      %v2939 = vrot.slane %v2925, %v2938
      %v2940 = vcombine.low %v2876, %v2891
      %v2941 = vcombine.high %v2876, %v2891
      %v2943 = vunpack.c.l.s4 1934713408
      %v2944 = vunpack.c.0.s8 %v2943
      %v2945 = vlaneseq
      %v2946 = vshrl.u32 %v2945, 7
      %v2947 = vsub.s32 %v2944, %v2946
      %v2948 = vrot.slane %v2940, %v2947
      %v2950 = vunpack.c.l.s4 1934713408
      %v2951 = vunpack.c.0.s8 %v2950
      %v2952 = vlaneseq
      %v2953 = vshrl.u32 %v2952, 7
      %v2954 = vsub.s32 %v2951, %v2953
      %v2955 = vrot.slane %v2941, %v2954
      %v2956 = vcombine.low %v2900, %v2932
      %v2957 = vcombine.high %v2900, %v2932
      %v2958 = vcombine.low %v2907, %v2939
      %v2959 = vcombine.high %v2907, %v2939
      %v2960 = vcombine.low %v2916, %v2948
      %v2961 = vcombine.high %v2916, %v2948
      %v2962 = vcombine.low %v2923, %v2955
      %v2963 = vcombine.high %v2923, %v2955
      %v2972 = vrot.slane %v2822, 1
      %v2973 = vrot.slane %v2823, 1
      %v2974 = vrot.slane %v2824, 1
      %v2975 = vrot.slane %v2825, 1
      %v2976 = vrot.slane %v2826, 1
      %v2977 = vrot.slane %v2827, 1
      %v2978 = vrot.slane %v2828, 1
      %v2979 = vrot.slane %v2829, 1
      %vm2996 = vcmask 1040384
      %v2997 = vrot.slane %v2822, 7
      %v2998 = vrot.slane %v2956, 7
      %v2999 = vsel %vm2996, %v2997, %v2998
      %v3000 = vrot.slane %v2823, 7
      %v3001 = vrot.slane %v2957, 7
      %v3002 = vsel %vm2996, %v3000, %v3001
      %v3003 = vrot.slane %v2824, 7
      %v3004 = vrot.slane %v2958, 7
      %v3005 = vsel %vm2996, %v3003, %v3004
      %v3006 = vrot.slane %v2825, 7
      %v3007 = vrot.slane %v2959, 7
      %v3008 = vsel %vm2996, %v3006, %v3007
      %v3009 = vrot.slane %v2826, 7
      %v3010 = vrot.slane %v2960, 7
      %v3011 = vsel %vm2996, %v3009, %v3010
      %v3012 = vrot.slane %v2827, 7
      %v3013 = vrot.slane %v2961, 7
      %v3014 = vsel %vm2996, %v3012, %v3013
      %v3015 = vrot.slane %v2828, 7
      %v3016 = vrot.slane %v2962, 7
      %v3017 = vsel %vm2996, %v3015, %v3016
      %v3018 = vrot.slane %v2829, 7
      %v3019 = vrot.slane %v2963, 7
      %v3020 = vsel %vm2996, %v3018, %v3019
      %v3037 = vrot.slane %v2956, 5
      %v3038 = vrot.slane %v2957, 5
      %v3039 = vrot.slane %v2958, 5
      %v3040 = vrot.slane %v2959, 5
      %v3041 = vrot.slane %v2960, 5
      %v3042 = vrot.slane %v2961, 5
      %v3043 = vrot.slane %v2962, 5
      %v3044 = vrot.slane %v2963, 5
      %v3053 = vsel %vm2996, %v2972, %v2997
      %v3054 = vsel %vm2996, %v2973, %v3000
      %v3055 = vsel %vm2996, %v2974, %v3003
      %v3056 = vsel %vm2996, %v2975, %v3006
      %v3057 = vsel %vm2996, %v2976, %v3009
      %v3058 = vsel %vm2996, %v2977, %v3012
      %v3059 = vsel %vm2996, %v2978, %v3015
      %v3060 = vsel %vm2996, %v2979, %v3018
      %vm3061 = vcmask 1046528
      %v3062 = vsel %vm3061, %v2999, %v3037
      %v3063 = vsel %vm3061, %v3002, %v3038
      %v3064 = vsel %vm3061, %v3005, %v3039
      %v3065 = vsel %vm3061, %v3008, %v3040
      %v3066 = vsel %vm3061, %v3011, %v3041
      %v3067 = vsel %vm3061, %v3014, %v3042
      %v3068 = vsel %vm3061, %v3017, %v3043
      %v3069 = vsel %vm3061, %v3020, %v3044
      %3086 = vrot.lane.b32.xlu0 %v3053, 127
      %v3087 = vpop.permute.xlu0 %3086
      %3088 = vrot.lane.b32.xlu0 %v3062, 127
      %v3089 = vpop.permute.xlu0 %3088
      %3090 = vrot.lane.b32.xlu0 %v3054, 127
      %v3091 = vpop.permute.xlu0 %3090
      %3092 = vrot.lane.b32.xlu0 %v3063, 127
      %v3093 = vpop.permute.xlu0 %3092
      %3094 = vrot.lane.b32.xlu0 %v3055, 127
      %v3095 = vpop.permute.xlu0 %3094
      %3096 = vrot.lane.b32.xlu0 %v3064, 127
      %v3097 = vpop.permute.xlu0 %3096
      %3098 = vrot.lane.b32.xlu0 %v3056, 127
      %v3099 = vpop.permute.xlu0 %3098
      %3100 = vrot.lane.b32.xlu0 %v3065, 127
      %v3101 = vpop.permute.xlu0 %3100
      %3102 = vrot.lane.b32.xlu0 %v3057, 127
      %v3103 = vpop.permute.xlu0 %3102
      %3104 = vrot.lane.b32.xlu0 %v3066, 127
      %v3105 = vpop.permute.xlu0 %3104
      %3106 = vrot.lane.b32.xlu0 %v3058, 127
      %v3107 = vpop.permute.xlu0 %3106
      %3108 = vrot.lane.b32.xlu0 %v3067, 127
      %v3109 = vpop.permute.xlu0 %3108
      %3110 = vrot.lane.b32.xlu0 %v3059, 127
      %v3111 = vpop.permute.xlu0 %3110
      %3112 = vrot.lane.b32.xlu0 %v3068, 127
      %v3113 = vpop.permute.xlu0 %3112
      %3114 = vrot.lane.b32.xlu0 %v3060, 127
      %v3115 = vpop.permute.xlu0 %3114
      %3116 = vrot.lane.b32.xlu0 %v3069, 127
      %v3117 = vpop.permute.xlu0 %3116
      %3134 = vrot.lane.b32.xlu0 %v3053, 1
      %v3135 = vpop.permute.xlu0 %3134
      %3136 = vrot.lane.b32.xlu0 %v3062, 1
      %v3137 = vpop.permute.xlu0 %3136
      %3138 = vrot.lane.b32.xlu0 %v3054, 1
      %v3139 = vpop.permute.xlu0 %3138
      %3140 = vrot.lane.b32.xlu0 %v3063, 1
      %v3141 = vpop.permute.xlu0 %3140
      %3142 = vrot.lane.b32.xlu0 %v3055, 1
      %v3143 = vpop.permute.xlu0 %3142
      %3144 = vrot.lane.b32.xlu0 %v3064, 1
      %v3145 = vpop.permute.xlu0 %3144
      %3146 = vrot.lane.b32.xlu0 %v3056, 1
      %v3147 = vpop.permute.xlu0 %3146
      %3148 = vrot.lane.b32.xlu0 %v3065, 1
      %v3149 = vpop.permute.xlu0 %3148
      %3150 = vrot.lane.b32.xlu0 %v3057, 1
      %v3151 = vpop.permute.xlu0 %3150
      %3152 = vrot.lane.b32.xlu0 %v3066, 1
      %v3153 = vpop.permute.xlu0 %3152
      %3154 = vrot.lane.b32.xlu0 %v3058, 1
      %v3155 = vpop.permute.xlu0 %3154
      %3156 = vrot.lane.b32.xlu0 %v3067, 1
      %v3157 = vpop.permute.xlu0 %3156
      %3158 = vrot.lane.b32.xlu0 %v3059, 1
      %v3159 = vpop.permute.xlu0 %3158
      %3160 = vrot.lane.b32.xlu0 %v3068, 1
      %v3161 = vpop.permute.xlu0 %3160
      %3162 = vrot.lane.b32.xlu0 %v3060, 1
      %v3163 = vpop.permute.xlu0 %3162
      %3164 = vrot.lane.b32.xlu0 %v3069, 1
      %v3165 = vpop.permute.xlu0 %3164
      %3182 = vrot.lane.b32.xlu0 %v3053, 3
      %v3183 = vpop.permute.xlu0 %3182
      %3184 = vrot.lane.b32.xlu0 %v3062, 3
      %v3185 = vpop.permute.xlu0 %3184
      %3186 = vrot.lane.b32.xlu0 %v3054, 3
      %v3187 = vpop.permute.xlu0 %3186
      %3188 = vrot.lane.b32.xlu0 %v3063, 3
      %v3189 = vpop.permute.xlu0 %3188
      %3190 = vrot.lane.b32.xlu0 %v3055, 3
      %v3191 = vpop.permute.xlu0 %3190
      %3192 = vrot.lane.b32.xlu0 %v3064, 3
      %v3193 = vpop.permute.xlu0 %3192
      %3194 = vrot.lane.b32.xlu0 %v3056, 3
      %v3195 = vpop.permute.xlu0 %3194
      %3196 = vrot.lane.b32.xlu0 %v3065, 3
      %v3197 = vpop.permute.xlu0 %3196
      %3198 = vrot.lane.b32.xlu0 %v3057, 3
      %v3199 = vpop.permute.xlu0 %3198
      %3200 = vrot.lane.b32.xlu0 %v3066, 3
      %v3201 = vpop.permute.xlu0 %3200
      %3202 = vrot.lane.b32.xlu0 %v3058, 3
      %v3203 = vpop.permute.xlu0 %3202
      %3204 = vrot.lane.b32.xlu0 %v3067, 3
      %v3205 = vpop.permute.xlu0 %3204
      %3206 = vrot.lane.b32.xlu0 %v3059, 3
      %v3207 = vpop.permute.xlu0 %3206
      %3208 = vrot.lane.b32.xlu0 %v3068, 3
      %v3209 = vpop.permute.xlu0 %3208
      %3210 = vrot.lane.b32.xlu0 %v3060, 3
      %v3211 = vpop.permute.xlu0 %3210
      %3212 = vrot.lane.b32.xlu0 %v3069, 3
      %v3213 = vpop.permute.xlu0 %3212
      %vm3230 = vcmask 7168
      %v3231 = vsel %vm3230, %v3087, %v3135
      %v3232 = vsel %vm3230, %v3089, %v3137
      %v3233 = vsel %vm3230, %v3091, %v3139
      %v3234 = vsel %vm3230, %v3093, %v3141
      %v3235 = vsel %vm3230, %v3095, %v3143
      %v3236 = vsel %vm3230, %v3097, %v3145
      %v3237 = vsel %vm3230, %v3099, %v3147
      %v3238 = vsel %vm3230, %v3101, %v3149
      %v3239 = vsel %vm3230, %v3103, %v3151
      %v3240 = vsel %vm3230, %v3105, %v3153
      %v3241 = vsel %vm3230, %v3107, %v3155
      %v3242 = vsel %vm3230, %v3109, %v3157
      %v3243 = vsel %vm3230, %v3111, %v3159
      %v3244 = vsel %vm3230, %v3113, %v3161
      %v3245 = vsel %vm3230, %v3115, %v3163
      %v3246 = vsel %vm3230, %v3117, %v3165
      %vm3247 = vcmask 121856
      %v3248 = vsel %vm3247, %v3231, %v3183
      %v3249 = vsel %vm3247, %v3232, %v3185
      %v3250 = vsel %vm3247, %v3233, %v3187
      %v3251 = vsel %vm3247, %v3234, %v3189
      %v3252 = vsel %vm3247, %v3235, %v3191
      %v3253 = vsel %vm3247, %v3236, %v3193
      %v3254 = vsel %vm3247, %v3237, %v3195
      %v3255 = vsel %vm3247, %v3238, %v3197
      %v3256 = vsel %vm3247, %v3239, %v3199
      %v3257 = vsel %vm3247, %v3240, %v3201
      %v3258 = vsel %vm3247, %v3241, %v3203
      %v3259 = vsel %vm3247, %v3242, %v3205
      %v3260 = vsel %vm3247, %v3243, %v3207
      %v3261 = vsel %vm3247, %v3244, %v3209
      %v3262 = vsel %vm3247, %v3245, %v3211
      %v3263 = vsel %vm3247, %v3246, %v3213
      %v3264 = vcombine.low %v3248, %v3252
      %v3265 = vcombine.high %v3248, %v3252
      %v3267 = vunpack.c.l.s4 1983009808
      %v3268 = vunpack.c.0.s8 %v3267
      %v3269 = vlaneseq
      %v3270 = vshrl.u32 %v3269, 7
      %v3271 = vsub.s32 %v3268, %v3270
      %v3272 = vrot.slane %v3264, %v3271
      %v3274 = vunpack.c.l.s4 1983009808
      %v3275 = vunpack.c.0.s8 %v3274
      %v3276 = vlaneseq
      %v3277 = vshrl.u32 %v3276, 7
      %v3278 = vsub.s32 %v3275, %v3277
      %v3279 = vrot.slane %v3265, %v3278
      %v3280 = vcombine.low %v3250, %v3254
      %v3281 = vcombine.high %v3250, %v3254
      %v3283 = vunpack.c.l.s4 1983009808
      %v3284 = vunpack.c.0.s8 %v3283
      %v3285 = vlaneseq
      %v3286 = vshrl.u32 %v3285, 7
      %v3287 = vsub.s32 %v3284, %v3286
      %v3288 = vrot.slane %v3280, %v3287
      %v3290 = vunpack.c.l.s4 1983009808
      %v3291 = vunpack.c.0.s8 %v3290
      %v3292 = vlaneseq
      %v3293 = vshrl.u32 %v3292, 7
      %v3294 = vsub.s32 %v3291, %v3293
      %v3295 = vrot.slane %v3281, %v3294
      %v3296 = vcombine.low %v3256, %v3260
      %v3297 = vcombine.high %v3256, %v3260
      %v3299 = vunpack.c.l.s4 1983009808
      %v3300 = vunpack.c.0.s8 %v3299
      %v3301 = vlaneseq
      %v3302 = vshrl.u32 %v3301, 7
      %v3303 = vsub.s32 %v3300, %v3302
      %v3304 = vrot.slane %v3296, %v3303
      %v3306 = vunpack.c.l.s4 1983009808
      %v3307 = vunpack.c.0.s8 %v3306
      %v3308 = vlaneseq
      %v3309 = vshrl.u32 %v3308, 7
      %v3310 = vsub.s32 %v3307, %v3309
      %v3311 = vrot.slane %v3297, %v3310
      %v3312 = vcombine.low %v3258, %v3262
      %v3313 = vcombine.high %v3258, %v3262
      %v3315 = vunpack.c.l.s4 1983009808
      %v3316 = vunpack.c.0.s8 %v3315
      %v3317 = vlaneseq
      %v3318 = vshrl.u32 %v3317, 7
      %v3319 = vsub.s32 %v3316, %v3318
      %v3320 = vrot.slane %v3312, %v3319
      %v3322 = vunpack.c.l.s4 1983009808
      %v3323 = vunpack.c.0.s8 %v3322
      %v3324 = vlaneseq
      %v3325 = vshrl.u32 %v3324, 7
      %v3326 = vsub.s32 %v3323, %v3325
      %v3327 = vrot.slane %v3313, %v3326
      %v3328 = vcombine.low %v3272, %v3288
      %v3329 = vcombine.high %v3272, %v3288
      %v3331 = vunpack.c.l.s4 1934713408
      %v3332 = vunpack.c.0.s8 %v3331
      %v3333 = vlaneseq
      %v3334 = vshrl.u32 %v3333, 7
      %v3335 = vsub.s32 %v3332, %v3334
      %v3336 = vrot.slane %v3328, %v3335
      %v3338 = vunpack.c.l.s4 1934713408
      %v3339 = vunpack.c.0.s8 %v3338
      %v3340 = vlaneseq
      %v3341 = vshrl.u32 %v3340, 7
      %v3342 = vsub.s32 %v3339, %v3341
      %v3343 = vrot.slane %v3329, %v3342
      %v3344 = vcombine.low %v3279, %v3295
      %v3345 = vcombine.high %v3279, %v3295
      %v3347 = vunpack.c.l.s4 1934713408
      %v3348 = vunpack.c.0.s8 %v3347
      %v3349 = vlaneseq
      %v3350 = vshrl.u32 %v3349, 7
      %v3351 = vsub.s32 %v3348, %v3350
      %v3352 = vrot.slane %v3344, %v3351
      %v3354 = vunpack.c.l.s4 1934713408
      %v3355 = vunpack.c.0.s8 %v3354
      %v3356 = vlaneseq
      %v3357 = vshrl.u32 %v3356, 7
      %v3358 = vsub.s32 %v3355, %v3357
      %v3359 = vrot.slane %v3345, %v3358
      %v3360 = vcombine.low %v3304, %v3320
      %v3361 = vcombine.high %v3304, %v3320
      %v3363 = vunpack.c.l.s4 1934713408
      %v3364 = vunpack.c.0.s8 %v3363
      %v3365 = vlaneseq
      %v3366 = vshrl.u32 %v3365, 7
      %v3367 = vsub.s32 %v3364, %v3366
      %v3368 = vrot.slane %v3360, %v3367
      %v3370 = vunpack.c.l.s4 1934713408
      %v3371 = vunpack.c.0.s8 %v3370
      %v3372 = vlaneseq
      %v3373 = vshrl.u32 %v3372, 7
      %v3374 = vsub.s32 %v3371, %v3373
      %v3375 = vrot.slane %v3361, %v3374
      %v3376 = vcombine.low %v3311, %v3327
      %v3377 = vcombine.high %v3311, %v3327
      %v3379 = vunpack.c.l.s4 1934713408
      %v3380 = vunpack.c.0.s8 %v3379
      %v3381 = vlaneseq
      %v3382 = vshrl.u32 %v3381, 7
      %v3383 = vsub.s32 %v3380, %v3382
      %v3384 = vrot.slane %v3376, %v3383
      %v3386 = vunpack.c.l.s4 1934713408
      %v3387 = vunpack.c.0.s8 %v3386
      %v3388 = vlaneseq
      %v3389 = vshrl.u32 %v3388, 7
      %v3390 = vsub.s32 %v3387, %v3389
      %v3391 = vrot.slane %v3377, %v3390
      %v3392 = vcombine.low %v3336, %v3368
      %v3393 = vcombine.high %v3336, %v3368
      %v3394 = vcombine.low %v3343, %v3375
      %v3395 = vcombine.high %v3343, %v3375
      %v3396 = vcombine.low %v3352, %v3384
      %v3397 = vcombine.high %v3352, %v3384
      %v3398 = vcombine.low %v3359, %v3391
      %v3399 = vcombine.high %v3359, %v3391
      %v3400 = vcombine.low %v3249, %v3253
      %v3401 = vcombine.high %v3249, %v3253
      %v3403 = vunpack.c.l.s4 1983009808
      %v3404 = vunpack.c.0.s8 %v3403
      %v3405 = vlaneseq
      %v3406 = vshrl.u32 %v3405, 7
      %v3407 = vsub.s32 %v3404, %v3406
      %v3408 = vrot.slane %v3400, %v3407
      %v3410 = vunpack.c.l.s4 1983009808
      %v3411 = vunpack.c.0.s8 %v3410
      %v3412 = vlaneseq
      %v3413 = vshrl.u32 %v3412, 7
      %v3414 = vsub.s32 %v3411, %v3413
      %v3415 = vrot.slane %v3401, %v3414
      %v3416 = vcombine.low %v3251, %v3255
      %v3417 = vcombine.high %v3251, %v3255
      %v3419 = vunpack.c.l.s4 1983009808
      %v3420 = vunpack.c.0.s8 %v3419
      %v3421 = vlaneseq
      %v3422 = vshrl.u32 %v3421, 7
      %v3423 = vsub.s32 %v3420, %v3422
      %v3424 = vrot.slane %v3416, %v3423
      %v3426 = vunpack.c.l.s4 1983009808
      %v3427 = vunpack.c.0.s8 %v3426
      %v3428 = vlaneseq
      %v3429 = vshrl.u32 %v3428, 7
      %v3430 = vsub.s32 %v3427, %v3429
      %v3431 = vrot.slane %v3417, %v3430
      %v3432 = vcombine.low %v3257, %v3261
      %v3433 = vcombine.high %v3257, %v3261
      %v3435 = vunpack.c.l.s4 1983009808
      %v3436 = vunpack.c.0.s8 %v3435
      %v3437 = vlaneseq
      %v3438 = vshrl.u32 %v3437, 7
      %v3439 = vsub.s32 %v3436, %v3438
      %v3440 = vrot.slane %v3432, %v3439
      %v3442 = vunpack.c.l.s4 1983009808
      %v3443 = vunpack.c.0.s8 %v3442
      %v3444 = vlaneseq
      %v3445 = vshrl.u32 %v3444, 7
      %v3446 = vsub.s32 %v3443, %v3445
      %v3447 = vrot.slane %v3433, %v3446
      %v3448 = vcombine.low %v3259, %v3263
      %v3449 = vcombine.high %v3259, %v3263
      %v3451 = vunpack.c.l.s4 1983009808
      %v3452 = vunpack.c.0.s8 %v3451
      %v3453 = vlaneseq
      %v3454 = vshrl.u32 %v3453, 7
      %v3455 = vsub.s32 %v3452, %v3454
      %v3456 = vrot.slane %v3448, %v3455
      %v3458 = vunpack.c.l.s4 1983009808
      %v3459 = vunpack.c.0.s8 %v3458
      %v3460 = vlaneseq
      %v3461 = vshrl.u32 %v3460, 7
      %v3462 = vsub.s32 %v3459, %v3461
      %v3463 = vrot.slane %v3449, %v3462
      %v3464 = vcombine.low %v3408, %v3424
      %v3465 = vcombine.high %v3408, %v3424
      %v3467 = vunpack.c.l.s4 1934713408
      %v3468 = vunpack.c.0.s8 %v3467
      %v3469 = vlaneseq
      %v3470 = vshrl.u32 %v3469, 7
      %v3471 = vsub.s32 %v3468, %v3470
      %v3472 = vrot.slane %v3464, %v3471
      %v3474 = vunpack.c.l.s4 1934713408
      %v3475 = vunpack.c.0.s8 %v3474
      %v3476 = vlaneseq
      %v3477 = vshrl.u32 %v3476, 7
      %v3478 = vsub.s32 %v3475, %v3477
      %v3479 = vrot.slane %v3465, %v3478
      %v3480 = vcombine.low %v3415, %v3431
      %v3481 = vcombine.high %v3415, %v3431
      %v3483 = vunpack.c.l.s4 1934713408
      %v3484 = vunpack.c.0.s8 %v3483
      %v3485 = vlaneseq
      %v3486 = vshrl.u32 %v3485, 7
      %v3487 = vsub.s32 %v3484, %v3486
      %v3488 = vrot.slane %v3480, %v3487
      %v3490 = vunpack.c.l.s4 1934713408
      %v3491 = vunpack.c.0.s8 %v3490
      %v3492 = vlaneseq
      %v3493 = vshrl.u32 %v3492, 7
      %v3494 = vsub.s32 %v3491, %v3493
      %v3495 = vrot.slane %v3481, %v3494
      %v3496 = vcombine.low %v3440, %v3456
      %v3497 = vcombine.high %v3440, %v3456
      %v3499 = vunpack.c.l.s4 1934713408
      %v3500 = vunpack.c.0.s8 %v3499
      %v3501 = vlaneseq
      %v3502 = vshrl.u32 %v3501, 7
      %v3503 = vsub.s32 %v3500, %v3502
      %v3504 = vrot.slane %v3496, %v3503
      %v3506 = vunpack.c.l.s4 1934713408
      %v3507 = vunpack.c.0.s8 %v3506
      %v3508 = vlaneseq
      %v3509 = vshrl.u32 %v3508, 7
      %v3510 = vsub.s32 %v3507, %v3509
      %v3511 = vrot.slane %v3497, %v3510
      %v3512 = vcombine.low %v3447, %v3463
      %v3513 = vcombine.high %v3447, %v3463
      %v3515 = vunpack.c.l.s4 1934713408
      %v3516 = vunpack.c.0.s8 %v3515
      %v3517 = vlaneseq
      %v3518 = vshrl.u32 %v3517, 7
      %v3519 = vsub.s32 %v3516, %v3518
      %v3520 = vrot.slane %v3512, %v3519
      %v3522 = vunpack.c.l.s4 1934713408
      %v3523 = vunpack.c.0.s8 %v3522
      %v3524 = vlaneseq
      %v3525 = vshrl.u32 %v3524, 7
      %v3526 = vsub.s32 %v3523, %v3525
      %v3527 = vrot.slane %v3513, %v3526
      %v3528 = vcombine.low %v3472, %v3504
      %v3529 = vcombine.high %v3472, %v3504
      %v3530 = vcombine.low %v3479, %v3511
      %v3531 = vcombine.high %v3479, %v3511
      %v3532 = vcombine.low %v3488, %v3520
      %v3533 = vcombine.high %v3488, %v3520
      %v3534 = vcombine.low %v3495, %v3527
      %v3535 = vcombine.high %v3495, %v3527
      %3537 = vrot.lane.b32.xlu0 %v3393, 16
      %v3538 = vpop.permute.xlu0 %3537
      %3541 = vrot.lane.b32.xlu0 %v3394, 32
      %v3542 = vpop.permute.xlu0 %3541
      %3545 = vrot.lane.b32.xlu0 %v3395, 48
      %v3546 = vpop.permute.xlu0 %3545
      %3549 = vrot.lane.b32.xlu0 %v3396, 64
      %v3550 = vpop.permute.xlu0 %3549
      %3553 = vrot.lane.b32.xlu0 %v3397, 80
      %v3554 = vpop.permute.xlu0 %3553
      %3557 = vrot.lane.b32.xlu0 %v3398, 96
      %v3558 = vpop.permute.xlu0 %3557
      %3561 = vrot.lane.b32.xlu0 %v3399, 112
      %v3562 = vpop.permute.xlu0 %3561
      %3565 = vrot.lane.b32.xlu0 %v3529, 16
      %v3566 = vpop.permute.xlu0 %3565
      %3569 = vrot.lane.b32.xlu0 %v3530, 32
      %v3570 = vpop.permute.xlu0 %3569
      %3573 = vrot.lane.b32.xlu0 %v3531, 48
      %v3574 = vpop.permute.xlu0 %3573
      %3577 = vrot.lane.b32.xlu0 %v3532, 64
      %v3578 = vpop.permute.xlu0 %3577
      %3581 = vrot.lane.b32.xlu0 %v3533, 80
      %v3582 = vpop.permute.xlu0 %3581
      %3585 = vrot.lane.b32.xlu0 %v3534, 96
      %v3586 = vpop.permute.xlu0 %3585
      %3589 = vrot.lane.b32.xlu0 %v3535, 112
      %v3590 = vpop.permute.xlu0 %3589
      %vm3592 = vcmask 130048
      %v3593 = vsel %vm3592, %v3392, %v3538
      %vm3594 = vcmask 261120
      %v3595 = vsel %vm3594, %v3593, %v3542
      %vm3596 = vcmask 392192
      %v3597 = vsel %vm3596, %v3595, %v3546
      %vm3598 = vcmask 523264
      %v3599 = vsel %vm3598, %v3597, %v3550
      %vm3600 = vcmask 654336
      %v3601 = vsel %vm3600, %v3599, %v3554
      %vm3602 = vcmask 785408
      %v3603 = vsel %vm3602, %v3601, %v3558
      %v3604 = vsel %vm2520, %v3603, %v3562
      %v3605 = vsel %vm3592, %v3528, %v3566
      %v3606 = vsel %vm3594, %v3605, %v3570
      %v3607 = vsel %vm3596, %v3606, %v3574
      %v3608 = vsel %vm3598, %v3607, %v3578
      %v3609 = vsel %vm3600, %v3608, %v3582
      %v3610 = vsel %vm3602, %v3609, %v3586
      %v3611 = vsel %vm2520, %v3610, %v3590
      %v3612 = vadd.f32 %v3604, %v3611
      %3613 = vadd.xlane.f32.xlu0 %v3612
      %v3614 = vpop.xlane.xlu0 %3613
      %3615 = vst.msk [vmem:[%s295] sm:$0xff] %vm3230, %v3614
      %v3616 = vmul.f32 %v3604, %v3604
      %v3617 = vmul.f32 %v3611, %v3611
      %v3618 = vadd.f32 %v3616, %v3617
      %3619 = vadd.xlane.f32.xlu0 %v3618
      %v3620 = vpop.xlane.xlu0 %3619
      %3621 = vst.msk [vmem:[%s299] sm:$0xff] %vm3230, %v3620
      %v3622 = vpack.c.bf16 %v3604, %v3604
      %v3623 = vpack.c.bf16 %v3611, %v3611
      %v3626 = vunpack.c.l.b16 %v3622
      %v3627 = vunpack.c.l.b16 %v3623
      %v3628 = vpack.c.b16 %v3627, %v3626
      %3630 = vst [vmem:[%s291] sm:$0xff] %v3628
      %p3631 = scmp.lt.s32.totalorder %s19, 1
      %s3632 = scalar_select %p3631, %s19, 1
      %s3633 = smul.addr %s3632, 2
      %s3634 = smul.addr %s3633, 4
      %s3635 = scalar_lea.vmem %s5, %s3634
      %p3636 = scmp.lt.s32.totalorder %s19, 1
      %s3637 = scalar_select %p3636, %s19, 1
      %s3638 = smul.addr %s3637, 8
      %s3639 = scalar_lea.vmem %s6, %s3638
      %p3640 = scmp.lt.s32.totalorder %s19, 1
      %s3641 = scalar_select %p3640, %s19, 1
      %s3642 = smul.addr %s3641, 8
      %s3643 = scalar_lea.vmem %s7, %s3642
      // Predicated region
      $region41: #{uupblock_forward.8} parent=39 // pred_check
        %p3644 = pneg %p147
      $region42: #{uupblock_forward.8} parent=39 // pred_check_branch
        %3646 = sbr.rel (%p3644) target = $region44
      $region43: #{uupblock_forward.8} parent=39 // pred_region
        _
      $region44: #{uupblock_forward.8} parent=39 // pred_fallthru
        _
      // Predicated region
      $region45: #{uupblock_forward.8} parent=39 // pred_check
        %p3647 = pneg %p173
      $region46: #{uupblock_forward.8} parent=39 // pred_check_branch
        %3649 = sbr.rel (%p3647) target = $region48
      $region47: #{uupblock_forward.8} parent=39 // pred_region
        _
      $region48: #{uupblock_forward.8} parent=39 // pred_fallthru
        _
      // Predicated region
      $region49: #{uupblock_forward.8} parent=39 // pred_check
        %p3650 = pneg %p199
      $region50: #{uupblock_forward.8} parent=39 // pred_check_branch
        %3652 = sbr.rel (%p3650) target = $region52
      $region51: #{uupblock_forward.8} parent=39 // pred_region
        _
      $region52: #{uupblock_forward.8} parent=39 // pred_fallthru
        _
    $region40: #{uupblock_forward.8} parent=5 // pred_fallthru
      _
    %p3653 = scmp.le.s32.totalorder 2, %s14
    // Predicated region
    $region53: #{uupblock_forward.8} parent=5 // pred_check
      %p3654 = pneg %p3653
    $region54: #{uupblock_forward.8} parent=5 // pred_check_branch
      %3656 = sbr.rel (%p3654) target = $region56
    $region55: #{uupblock_forward.8} parent=5 // pred_region
      %s3657 = ssub.s32 %s14, 2
      // Predicated region
      $region57: #{uupblock_forward.8} parent=55 // pred_check
        %p3658 = pneg %p153
      $region58: #{uupblock_forward.8} parent=55 // pred_check_branch
        %3660 = sbr.rel (%p3658) target = $region60
      $region59: #{uupblock_forward.8} parent=55 // pred_region
        %p3661 = scmp.lt.s32.totalorder %s20, 1
        %s3662 = scalar_select %p3661, %s20, 1
        %s3663 = smul.addr %s3662, 2
        %s3664 = smul.addr %s3663, 4
        %s3665 = scalar_lea.vmem %s5, %s3664
      $region60: #{uupblock_forward.8} parent=55 // pred_fallthru
        _
      // Predicated region
      $region61: #{uupblock_forward.8} parent=55 // pred_check
        %p3666 = pneg %p179
      $region62: #{uupblock_forward.8} parent=55 // pred_check_branch
        %3668 = sbr.rel (%p3666) target = $region64
      $region63: #{uupblock_forward.8} parent=55 // pred_region
        %p3669 = scmp.lt.s32.totalorder %s20, 1
        %s3670 = scalar_select %p3669, %s20, 1
        %s3671 = smul.addr %s3670, 8
        %s3672 = scalar_lea.vmem %s6, %s3671
      $region64: #{uupblock_forward.8} parent=55 // pred_fallthru
        _
      // Predicated region
      $region65: #{uupblock_forward.8} parent=55 // pred_check
        %p3673 = pneg %p205
      $region66: #{uupblock_forward.8} parent=55 // pred_check_branch
        %3675 = sbr.rel (%p3673) target = $region68
      $region67: #{uupblock_forward.8} parent=55 // pred_region
        %p3676 = scmp.lt.s32.totalorder %s20, 1
        %s3677 = scalar_select %p3676, %s20, 1
        %s3678 = smul.addr %s3677, 8
        %s3679 = scalar_lea.vmem %s7, %s3678
      $region68: #{uupblock_forward.8} parent=55 // pred_fallthru
        _
    $region56: #{uupblock_forward.8} parent=5 // pred_fallthru
      _
  $region6: #{uupblock_forward.8} parent=0 // loop_footer
    %s18 = sadd.s32 1, %s14
  $region7: #{uupblock_forward.8} parent=0 // loop_footer_branch
    %13 = sbr.rel target = $region3
  $region8: #{uupblock_forward.8} parent=0 // loop_exit
    _

// kernel: uupblock_forward.7
$region0: #{uupblock_forward.7}
  #allocation0 [shape = 'u32[]', space=smem, size = 0x4, offset = 0x4, fixed_abs, tag = 'smem constant byte address 0x4 - core index']
  #allocation1 [shape = 'u32[144,128]{1,0:T(1,128)}', space=vmem, size = 0x12000, scoped, tag = 'internal scratch']
  %s0 = inlined_call_operand.vmem [shape: bf16[2,8,256], index: 0, kind: input, shape index: {}]
  %s1 = inlined_call_operand.vmem [shape: f32[2,4,256], index: 1, kind: input, shape index: {}]
  %s2 = inlined_call_operand.vmem [shape: bf16[8,108], index: 2, kind: input, shape index: {}]
  %s3 = inlined_call_operand.vmem [shape: f32[8,1], index: 3, kind: input, shape index: {}]
  %s4 = inlined_call_operand.vmem [shape: bf16[2,8,256], index: 4, kind: output, shape index: {0}]
  %s5 = inlined_call_operand.vmem [shape: f32[2,8,1], index: 5, kind: output, shape index: {1}]
  %s6 = inlined_call_operand.vmem [shape: f32[2,8,1], index: 6, kind: output, shape index: {2}]
  %7 = xla_tuple %s4, %s5, %s6
  %s8 = sld [smem:[#allocation0]]
  $region65: #{uupblock_forward.7} parent=0
    _
  %s10 = ssub.s32 1, %s8
  %s11 = scalar_select 0, %s10, %s8
  loop: start=0, step=1, limit=4
  $region2: #{uupblock_forward.7} parent=0 // loop_pre_header
    _
  $region3: #{uupblock_forward.7} parent=0 // loop_header
    %s13 = sphi 0, %s17
    %p14 = scmp.ge.s32.totalorder %s13, 4
    %s23 = sphi 0, %s25
    %s26 = sphi 0, %s23
    %s27 = sphi 0, %s26
    %s43 = sphi 0, %s27
    %s49 = sphi 0, %s51
    %s52 = sphi 0, %s49
    %s53 = sphi 0, %s52
    %s69 = sphi 0, %s53
    %s73 = sphi 0, %s73
    %s75 = sphi 0, %s73
    %s76 = sphi 0, %s75
    %s90 = sphi 0, %s76
    %s94 = sphi 0, %s94
    %s96 = sphi 0, %s94
    %s97 = sphi 0, %s96
    %s111 = sphi 0, %s97
    %s117 = sphi 0, %s119
    %s120 = sphi 0, %s117
    %s121 = sphi 0, %s120
    %s137 = sphi 0, %s121
    %s143 = sphi 0, %s145
    %s146 = sphi 0, %s143
    %s147 = sphi 0, %s146
    %s163 = sphi 0, %s147
    %s169 = sphi 0, %s171
    %s172 = sphi 0, %s169
    %s173 = sphi 0, %s172
    %s189 = sphi 0, %s173
  $region4: #{uupblock_forward.7} parent=0 // loop_header_branch
    %16 = sbr.rel (%p14) target = $region8
  $region5: #{uupblock_forward.7} parent=0 // loop_body
    %s18 = ssub.s32 %s13, 1
    %s19 = ssub.s32 %s13, 2
    %s20 = sadd.s32 %s13, 1
    %s21 = ssub.s32 %s13, %s20
    %p22 = scmp.eq.s32.totalorder %s21, 0
    %s24 = sadd.s32 %s23, 1
    %s25 = scalar_select %p22, %s23, %s24
    %p28 = pneg %p22
    %p29 = scmp.eq.s32.totalorder %s13, 1
    %p30 = por %p28, %p29
    %p31 = scmp.ne.s32.totalorder %s23, %s26
    %p32 = scmp.eq.s32.totalorder %s13, 0
    %p33 = por %p31, %p32
    %p34 = scmp.ne.s32.totalorder %s23, %s26
    %p35 = scmp.eq.s32.totalorder %s18, 1
    %p36 = por %p34, %p35
    %p37 = scmp.ne.s32.totalorder %s26, %s27
    %p38 = scmp.eq.s32.totalorder %s18, 0
    %p39 = por %p37, %p38
    %p40 = scmp.ne.s32.totalorder %s26, %s27
    %p41 = scmp.eq.s32.totalorder %s19, 1
    %p42 = por %p40, %p41
    %p44 = scmp.ne.s32.totalorder %s27, %s43
    %p45 = scmp.eq.s32.totalorder %s19, 0
    %p46 = por %p44, %p45
    %s47 = ssub.s32 %s13, %s20
    %p48 = scmp.eq.s32.totalorder %s47, 0
    %s50 = sadd.s32 %s49, 1
    %s51 = scalar_select %p48, %s49, %s50
    %p54 = pneg %p48
    %p55 = scmp.eq.s32.totalorder %s13, 1
    %p56 = por %p54, %p55
    %p57 = scmp.ne.s32.totalorder %s49, %s52
    %p58 = scmp.eq.s32.totalorder %s13, 0
    %p59 = por %p57, %p58
    %p60 = scmp.ne.s32.totalorder %s49, %s52
    %p61 = scmp.eq.s32.totalorder %s18, 1
    %p62 = por %p60, %p61
    %p63 = scmp.ne.s32.totalorder %s52, %s53
    %p64 = scmp.eq.s32.totalorder %s18, 0
    %p65 = por %p63, %p64
    %p66 = scmp.ne.s32.totalorder %s52, %s53
    %p67 = scmp.eq.s32.totalorder %s19, 1
    %p68 = por %p66, %p67
    %p70 = scmp.ne.s32.totalorder %s53, %s69
    %p71 = scmp.eq.s32.totalorder %s19, 0
    %p72 = por %p70, %p71
    %s74 = sadd.s32 %s73, 1
    %p77 = scmp.eq.s32.totalorder %s13, 1
    %p78 = scmp.ne.s32.totalorder %s73, %s75
    %p79 = scmp.eq.s32.totalorder %s13, 0
    %p80 = por %p78, %p79
    %p81 = scmp.ne.s32.totalorder %s73, %s75
    %p82 = scmp.eq.s32.totalorder %s18, 1
    %p83 = por %p81, %p82
    %p84 = scmp.ne.s32.totalorder %s75, %s76
    %p85 = scmp.eq.s32.totalorder %s18, 0
    %p86 = por %p84, %p85
    %p87 = scmp.ne.s32.totalorder %s75, %s76
    %p88 = scmp.eq.s32.totalorder %s19, 1
    %p89 = por %p87, %p88
    %p91 = scmp.ne.s32.totalorder %s76, %s90
    %p92 = scmp.eq.s32.totalorder %s19, 0
    %p93 = por %p91, %p92
    %s95 = sadd.s32 %s94, 1
    %p98 = scmp.eq.s32.totalorder %s13, 1
    %p99 = scmp.ne.s32.totalorder %s94, %s96
    %p100 = scmp.eq.s32.totalorder %s13, 0
    %p101 = por %p99, %p100
    %p102 = scmp.ne.s32.totalorder %s94, %s96
    %p103 = scmp.eq.s32.totalorder %s18, 1
    %p104 = por %p102, %p103
    %p105 = scmp.ne.s32.totalorder %s96, %s97
    %p106 = scmp.eq.s32.totalorder %s18, 0
    %p107 = por %p105, %p106
    %p108 = scmp.ne.s32.totalorder %s96, %s97
    %p109 = scmp.eq.s32.totalorder %s19, 1
    %p110 = por %p108, %p109
    %p112 = scmp.ne.s32.totalorder %s97, %s111
    %p113 = scmp.eq.s32.totalorder %s19, 0
    %p114 = por %p112, %p113
    %s115 = ssub.s32 %s13, %s20
    %p116 = scmp.eq.s32.totalorder %s115, 0
    %s118 = sadd.s32 %s117, 1
    %s119 = scalar_select %p116, %s117, %s118
    %p122 = pneg %p116
    %p123 = scmp.eq.s32.totalorder %s13, 1
    %p124 = por %p122, %p123
    %p125 = scmp.ne.s32.totalorder %s117, %s120
    %p126 = scmp.eq.s32.totalorder %s13, 0
    %p127 = por %p125, %p126
    %p128 = scmp.ne.s32.totalorder %s117, %s120
    %p129 = scmp.eq.s32.totalorder %s18, 1
    %p130 = por %p128, %p129
    %p131 = scmp.ne.s32.totalorder %s120, %s121
    %p132 = scmp.eq.s32.totalorder %s18, 0
    %p133 = por %p131, %p132
    %p134 = scmp.ne.s32.totalorder %s120, %s121
    %p135 = scmp.eq.s32.totalorder %s19, 1
    %p136 = por %p134, %p135
    %p138 = scmp.ne.s32.totalorder %s121, %s137
    %p139 = scmp.eq.s32.totalorder %s19, 0
    %p140 = por %p138, %p139
    %s141 = ssub.s32 %s13, %s20
    %p142 = scmp.eq.s32.totalorder %s141, 0
    %s144 = sadd.s32 %s143, 1
    %s145 = scalar_select %p142, %s143, %s144
    %p148 = pneg %p142
    %p149 = scmp.eq.s32.totalorder %s13, 1
    %p150 = por %p148, %p149
    %p151 = scmp.ne.s32.totalorder %s143, %s146
    %p152 = scmp.eq.s32.totalorder %s13, 0
    %p153 = por %p151, %p152
    %p154 = scmp.ne.s32.totalorder %s143, %s146
    %p155 = scmp.eq.s32.totalorder %s18, 1
    %p156 = por %p154, %p155
    %p157 = scmp.ne.s32.totalorder %s146, %s147
    %p158 = scmp.eq.s32.totalorder %s18, 0
    %p159 = por %p157, %p158
    %p160 = scmp.ne.s32.totalorder %s146, %s147
    %p161 = scmp.eq.s32.totalorder %s19, 1
    %p162 = por %p160, %p161
    %p164 = scmp.ne.s32.totalorder %s147, %s163
    %p165 = scmp.eq.s32.totalorder %s19, 0
    %p166 = por %p164, %p165
    %s167 = ssub.s32 %s13, %s20
    %p168 = scmp.eq.s32.totalorder %s167, 0
    %s170 = sadd.s32 %s169, 1
    %s171 = scalar_select %p168, %s169, %s170
    %p174 = pneg %p168
    %p175 = scmp.eq.s32.totalorder %s13, 1
    %p176 = por %p174, %p175
    %p177 = scmp.ne.s32.totalorder %s169, %s172
    %p178 = scmp.eq.s32.totalorder %s13, 0
    %p179 = por %p177, %p178
    %p180 = scmp.ne.s32.totalorder %s169, %s172
    %p181 = scmp.eq.s32.totalorder %s18, 1
    %p182 = por %p180, %p181
    %p183 = scmp.ne.s32.totalorder %s172, %s173
    %p184 = scmp.eq.s32.totalorder %s18, 0
    %p185 = por %p183, %p184
    %p186 = scmp.ne.s32.totalorder %s172, %s173
    %p187 = scmp.eq.s32.totalorder %s19, 1
    %p188 = por %p186, %p187
    %p190 = scmp.ne.s32.totalorder %s173, %s189
    %p191 = scmp.eq.s32.totalorder %s19, 0
    %p192 = por %p190, %p191
    %p193 = scmp.le.s32.totalorder 1, %s13
    %p194 = scmp.lt.s32.totalorder %s13, 3
    %p195 = pnand %p193, %p194
    %p196 = pneg %p195
    // Predicated region
    $region9: #{uupblock_forward.7} parent=5 // pred_check
      _
    $region10: #{uupblock_forward.7} parent=5 // pred_check_branch
      %198 = sbr.rel (%p195) target = $region12
    $region11: #{uupblock_forward.7} parent=5 // pred_region
      %s199 = ssub.s32 %s13, 1
      // Predicated region
      $region13: #{uupblock_forward.7} parent=11 // pred_check
        %p200 = pneg %p86
      $region14: #{uupblock_forward.7} parent=11 // pred_check_branch
        %202 = sbr.rel (%p200) target = $region16
      $region15: #{uupblock_forward.7} parent=11 // pred_region
        _
      $region16: #{uupblock_forward.7} parent=11 // pred_fallthru
        _
      // Predicated region
      $region17: #{uupblock_forward.7} parent=11 // pred_check
        %p203 = pneg %p107
      $region18: #{uupblock_forward.7} parent=11 // pred_check_branch
        %205 = sbr.rel (%p203) target = $region20
      $region19: #{uupblock_forward.7} parent=11 // pred_region
        _
      $region20: #{uupblock_forward.7} parent=11 // pred_fallthru
        _
    $region12: #{uupblock_forward.7} parent=5 // pred_fallthru
      _
    %p206 = scmp.lt.s32.totalorder %s13, 2
    // Predicated region
    $region21: #{uupblock_forward.7} parent=5 // pred_check
      %p207 = pneg %p206
    $region22: #{uupblock_forward.7} parent=5 // pred_check_branch
      %209 = sbr.rel (%p207) target = $region24
    $region23: #{uupblock_forward.7} parent=5 // pred_region
      // Predicated region
      $region25: #{uupblock_forward.7} parent=23 // pred_check
        %p210 = pneg %p33
      $region26: #{uupblock_forward.7} parent=23 // pred_check_branch
        %212 = sbr.rel (%p210) target = $region28
      $region27: #{uupblock_forward.7} parent=23 // pred_region
        %p213 = scmp.lt.s32.totalorder %s13, 1
        %s214 = scalar_select %p213, %s13, 1
        %s215 = smul.addr %s214, 2
        %s216 = smul.addr %s215, 4
        %s217 = scalar_lea.vmem %s0, %s216
      $region28: #{uupblock_forward.7} parent=23 // pred_fallthru
        _
      // Predicated region
      $region29: #{uupblock_forward.7} parent=23 // pred_check
        %p218 = pneg %p59
      $region30: #{uupblock_forward.7} parent=23 // pred_check_branch
        %220 = sbr.rel (%p218) target = $region32
      $region31: #{uupblock_forward.7} parent=23 // pred_region
        %p221 = scmp.lt.s32.totalorder %s13, 1
        %s222 = scalar_select %p221, %s13, 1
        %s223 = smul.addr %s222, 2
        %s224 = smul.addr %s223, 4
        %s225 = scalar_lea.vmem %s1, %s224
      $region32: #{uupblock_forward.7} parent=23 // pred_fallthru
        _
    $region24: #{uupblock_forward.7} parent=5 // pred_fallthru
      _
    %p226 = scmp.le.s32.totalorder 1, %s13
    %p227 = scmp.lt.s32.totalorder %s13, 3
    %p228 = pnand %p226, %p227
    %p229 = pneg %p228
    // Predicated region
    $region33: #{uupblock_forward.7} parent=5 // pred_check
      _
    $region34: #{uupblock_forward.7} parent=5 // pred_check_branch
      %231 = sbr.rel (%p228) target = $region36
    $region35: #{uupblock_forward.7} parent=5 // pred_region
      %s232 = ssub.s32 %s13, 1
      %p233 = scmp.lt.s32.totalorder %s18, 1
      %s234 = scalar_select %p233, %s18, 1
      %s235 = smul.addr %s234, 2
      %s236 = smul.addr %s235, 4
      %s237 = scalar_lea.vmem %s0, %s236
      %p238 = pneg %p39
      %p239 = pneg %p36
      %p240 = scmp.lt.s32.totalorder %s18, 1
      %s241 = scalar_select %p240, %s18, 1
      %s242 = smul.addr %s241, 2
      %s243 = smul.addr %s242, 4
      %s244 = scalar_lea.vmem %s1, %s243
      %p245 = pneg %p65
      %p246 = pneg %p62
      %p247 = pneg %p86
      %p248 = pneg %p83
      %p249 = pneg %p107
      %p250 = pneg %p104
      %p251 = pneg %p133
      %p252 = pneg %p130
      %p253 = scmp.lt.s32.totalorder %s18, 1
      %s254 = scalar_select %p253, %s18, 1
      %s255 = smul.addr %s254, 2
      %s256 = smul.addr %s255, 4
      %s257 = scalar_lea.vmem %s4, %s256
      %p258 = pneg %p159
      %p259 = pneg %p156
      %p260 = scmp.lt.s32.totalorder %s18, 1
      %s261 = scalar_select %p260, %s18, 1
      %s262 = smul.addr %s261, 8
      %s263 = scalar_lea.vmem %s5, %s262
      %p264 = pneg %p185
      %p265 = pneg %p182
      %p266 = scmp.lt.s32.totalorder %s18, 1
      %s267 = scalar_select %p266, %s18, 1
      %s268 = smul.addr %s267, 8
      %s269 = scalar_lea.vmem %s6, %s268
      %p270 = scmp.lt.s32.totalorder %s18, 1
      %s271 = scalar_select %p270, %s18, 1
      %s272 = smul.addr %s271, 2
      %s273 = smul.addr %s272, 4
      %s274 = scalar_lea.vmem %s0, %s273
      %p275 = scmp.lt.s32.totalorder %s18, 1
      %s276 = scalar_select %p275, %s18, 1
      %s277 = smul.addr %s276, 2
      %s278 = smul.addr %s277, 4
      %s279 = scalar_lea.vmem %s1, %s278
      %p280 = scmp.lt.s32.totalorder %s18, 1
      %s281 = scalar_select %p280, %s18, 1
      %s282 = smul.addr %s281, 2
      %s283 = smul.addr %s282, 4
      %s284 = scalar_lea.vmem %s4, %s283
      %p285 = scmp.lt.s32.totalorder %s18, 1
      %s286 = scalar_select %p285, %s18, 1
      %s287 = smul.addr %s286, 8
      %s288 = scalar_lea.vmem %s5, %s287
      %p289 = scmp.lt.s32.totalorder %s18, 1
      %s290 = scalar_select %p289, %s18, 1
      %s291 = smul.addr %s290, 8
      %s292 = scalar_lea.vmem %s6, %s291
      %v294 = vld [vmem:[%s274] sm:$0xff]
      %v296 = vrot.slane %v294, 4
      %298 = vrot.lane.b32.xlu0 %v294, 112
      %v299 = vpop.permute.xlu0 %298
      %v300 = vrot.slane %v299, 4
      %302 = vrot.lane.b32.xlu0 %v294, 96
      %v303 = vpop.permute.xlu0 %302
      %v304 = vrot.slane %v303, 4
      %306 = vrot.lane.b32.xlu0 %v294, 80
      %v307 = vpop.permute.xlu0 %306
      %v308 = vrot.slane %v307, 4
      %310 = vrot.lane.b32.xlu0 %v294, 64
      %v311 = vpop.permute.xlu0 %310
      %v312 = vrot.slane %v311, 4
      %314 = vrot.lane.b32.xlu0 %v294, 48
      %v315 = vpop.permute.xlu0 %314
      %v316 = vrot.slane %v315, 4
      %318 = vrot.lane.b32.xlu0 %v294, 32
      %v319 = vpop.permute.xlu0 %318
      %v320 = vrot.slane %v319, 4
      %322 = vrot.lane.b32.xlu0 %v294, 16
      %v323 = vpop.permute.xlu0 %322
      %v324 = vrot.slane %v323, 4
      %v333 = vcombine.low %v294, %v311
      %v335 = vunpack.c.l.s4 1983009808
      %v336 = vunpack.c.0.s8 %v335
      %v337 = vlaneseq
      %v338 = vshrl.u32 %v337, 7
      %v339 = vsub.s32 %v336, %v338
      %v340 = vrot.slane %v333, %v339
      %v341 = vcombine.low %v303, %v319
      %v343 = vunpack.c.l.s4 1983009808
      %v344 = vunpack.c.0.s8 %v343
      %v345 = vlaneseq
      %v346 = vshrl.u32 %v345, 7
      %v347 = vsub.s32 %v344, %v346
      %v348 = vrot.slane %v341, %v347
      %v349 = vcombine.low %v340, %v348
      %v350 = vcombine.high %v340, %v348
      %v352 = vunpack.c.l.s4 1934713408
      %v353 = vunpack.c.0.s8 %v352
      %v354 = vlaneseq
      %v355 = vshrl.u32 %v354, 7
      %v356 = vsub.s32 %v353, %v355
      %v357 = vrot.slane %v349, %v356
      %v359 = vunpack.c.l.s4 1934713408
      %v360 = vunpack.c.0.s8 %v359
      %v361 = vlaneseq
      %v362 = vshrl.u32 %v361, 7
      %v363 = vsub.s32 %v360, %v362
      %v364 = vrot.slane %v350, %v363
      %v365 = vcombine.high %v357, 0
      %v366 = vcombine.high %v364, 0
      %v367 = vcombine.low %v299, %v315
      %v369 = vunpack.c.l.s4 1983009808
      %v370 = vunpack.c.0.s8 %v369
      %v371 = vlaneseq
      %v372 = vshrl.u32 %v371, 7
      %v373 = vsub.s32 %v370, %v372
      %v374 = vrot.slane %v367, %v373
      %v375 = vcombine.low %v307, %v323
      %v377 = vunpack.c.l.s4 1983009808
      %v378 = vunpack.c.0.s8 %v377
      %v379 = vlaneseq
      %v380 = vshrl.u32 %v379, 7
      %v381 = vsub.s32 %v378, %v380
      %v382 = vrot.slane %v375, %v381
      %v383 = vcombine.low %v374, %v382
      %v384 = vcombine.high %v374, %v382
      %v386 = vunpack.c.l.s4 1934713408
      %v387 = vunpack.c.0.s8 %v386
      %v388 = vlaneseq
      %v389 = vshrl.u32 %v388, 7
      %v390 = vsub.s32 %v387, %v389
      %v391 = vrot.slane %v383, %v390
      %v393 = vunpack.c.l.s4 1934713408
      %v394 = vunpack.c.0.s8 %v393
      %v395 = vlaneseq
      %v396 = vshrl.u32 %v395, 7
      %v397 = vsub.s32 %v394, %v396
      %v398 = vrot.slane %v384, %v397
      %v399 = vcombine.high %v391, 0
      %v400 = vcombine.high %v398, 0
      %v401 = vcombine.low %v296, %v312
      %v403 = vunpack.c.l.s4 1983009808
      %v404 = vunpack.c.0.s8 %v403
      %v405 = vlaneseq
      %v406 = vshrl.u32 %v405, 7
      %v407 = vsub.s32 %v404, %v406
      %v408 = vrot.slane %v401, %v407
      %v409 = vcombine.low %v304, %v320
      %v411 = vunpack.c.l.s4 1983009808
      %v412 = vunpack.c.0.s8 %v411
      %v413 = vlaneseq
      %v414 = vshrl.u32 %v413, 7
      %v415 = vsub.s32 %v412, %v414
      %v416 = vrot.slane %v409, %v415
      %v417 = vcombine.low %v408, %v416
      %v418 = vcombine.high %v408, %v416
      %v420 = vunpack.c.l.s4 1934713408
      %v421 = vunpack.c.0.s8 %v420
      %v422 = vlaneseq
      %v423 = vshrl.u32 %v422, 7
      %v424 = vsub.s32 %v421, %v423
      %v425 = vrot.slane %v417, %v424
      %v427 = vunpack.c.l.s4 1934713408
      %v428 = vunpack.c.0.s8 %v427
      %v429 = vlaneseq
      %v430 = vshrl.u32 %v429, 7
      %v431 = vsub.s32 %v428, %v430
      %v432 = vrot.slane %v418, %v431
      %v433 = vcombine.high %v425, 0
      %v434 = vcombine.high %v432, 0
      %v435 = vcombine.low %v300, %v316
      %v437 = vunpack.c.l.s4 1983009808
      %v438 = vunpack.c.0.s8 %v437
      %v439 = vlaneseq
      %v440 = vshrl.u32 %v439, 7
      %v441 = vsub.s32 %v438, %v440
      %v442 = vrot.slane %v435, %v441
      %v443 = vcombine.low %v308, %v324
      %v445 = vunpack.c.l.s4 1983009808
      %v446 = vunpack.c.0.s8 %v445
      %v447 = vlaneseq
      %v448 = vshrl.u32 %v447, 7
      %v449 = vsub.s32 %v446, %v448
      %v450 = vrot.slane %v443, %v449
      %v451 = vcombine.low %v442, %v450
      %v452 = vcombine.high %v442, %v450
      %v454 = vunpack.c.l.s4 1934713408
      %v455 = vunpack.c.0.s8 %v454
      %v456 = vlaneseq
      %v457 = vshrl.u32 %v456, 7
      %v458 = vsub.s32 %v455, %v457
      %v459 = vrot.slane %v451, %v458
      %v461 = vunpack.c.l.s4 1934713408
      %v462 = vunpack.c.0.s8 %v461
      %v463 = vlaneseq
      %v464 = vshrl.u32 %v463, 7
      %v465 = vsub.s32 %v462, %v464
      %v466 = vrot.slane %v452, %v465
      %v467 = vcombine.high %v459, 0
      %v468 = vcombine.high %v466, 0
      %v471 = vpack.i.b16 %v391, %v357
      %v473 = vshrl.u32 %v357, 16
      %v474 = vshrl.u32 %v391, 16
      %v475 = vpack.i.b16 %v474, %v473
      %v479 = vpack.i.b16 %v399, %v365
      %v481 = vshrl.u32 %v365, 16
      %v482 = vshrl.u32 %v399, 16
      %v483 = vpack.i.b16 %v482, %v481
      %v487 = vpack.i.b16 %v398, %v364
      %v489 = vshrl.u32 %v364, 16
      %v490 = vshrl.u32 %v398, 16
      %v491 = vpack.i.b16 %v490, %v489
      %v495 = vpack.i.b16 %v400, %v366
      %v497 = vshrl.u32 %v366, 16
      %v498 = vshrl.u32 %v400, 16
      %v499 = vpack.i.b16 %v498, %v497
      %v503 = vpack.i.b16 %v459, %v425
      %v505 = vshrl.u32 %v425, 16
      %v506 = vshrl.u32 %v459, 16
      %v507 = vpack.i.b16 %v506, %v505
      %v511 = vpack.i.b16 %v467, %v433
      %v513 = vshrl.u32 %v433, 16
      %v514 = vshrl.u32 %v467, 16
      %v515 = vpack.i.b16 %v514, %v513
      %v519 = vpack.i.b16 %v466, %v432
      %v521 = vshrl.u32 %v432, 16
      %v522 = vshrl.u32 %v466, 16
      %v523 = vpack.i.b16 %v522, %v521
      %v527 = vpack.i.b16 %v468, %v434
      %v529 = vshrl.u32 %v434, 16
      %v530 = vshrl.u32 %v468, 16
      %v531 = vpack.i.b16 %v530, %v529
      %v533 = vld [vmem:[%s279] sm:$0xff]
      %v535 = vrot.slane %v533, 4
      %537 = vrot.lane.b32.xlu0 %v533, 112
      %v538 = vpop.permute.xlu0 %537
      %v539 = vrot.slane %v538, 4
      %541 = vrot.lane.b32.xlu0 %v533, 96
      %v542 = vpop.permute.xlu0 %541
      %v543 = vrot.slane %v542, 4
      %545 = vrot.lane.b32.xlu0 %v533, 80
      %v546 = vpop.permute.xlu0 %545
      %v547 = vrot.slane %v546, 4
      %549 = vrot.lane.b32.xlu0 %v533, 64
      %v550 = vpop.permute.xlu0 %549
      %v551 = vrot.slane %v550, 4
      %553 = vrot.lane.b32.xlu0 %v533, 48
      %v554 = vpop.permute.xlu0 %553
      %v555 = vrot.slane %v554, 4
      %557 = vrot.lane.b32.xlu0 %v533, 32
      %v558 = vpop.permute.xlu0 %557
      %v559 = vrot.slane %v558, 4
      %561 = vrot.lane.b32.xlu0 %v533, 16
      %v562 = vpop.permute.xlu0 %561
      %v563 = vrot.slane %v562, 4
      %v572 = vcombine.low %v533, %v542
      %v574 = vunpack.c.l.s4 1983009808
      %v575 = vunpack.c.0.s8 %v574
      %v576 = vlaneseq
      %v577 = vshrl.u32 %v576, 7
      %v578 = vsub.s32 %v575, %v577
      %v579 = vrot.slane %v572, %v578
      %v580 = vcombine.low %v538, %v546
      %v582 = vunpack.c.l.s4 1983009808
      %v583 = vunpack.c.0.s8 %v582
      %v584 = vlaneseq
      %v585 = vshrl.u32 %v584, 7
      %v586 = vsub.s32 %v583, %v585
      %v587 = vrot.slane %v580, %v586
      %v588 = vcombine.low %v579, %v587
      %v589 = vcombine.high %v579, %v587
      %v591 = vunpack.c.l.s4 1934713408
      %v592 = vunpack.c.0.s8 %v591
      %v593 = vlaneseq
      %v594 = vshrl.u32 %v593, 7
      %v595 = vsub.s32 %v592, %v594
      %v596 = vrot.slane %v588, %v595
      %v598 = vunpack.c.l.s4 1934713408
      %v599 = vunpack.c.0.s8 %v598
      %v600 = vlaneseq
      %v601 = vshrl.u32 %v600, 7
      %v602 = vsub.s32 %v599, %v601
      %v603 = vrot.slane %v589, %v602
      %v604 = vcombine.high %v596, 0.0
      %v605 = vcombine.high %v603, 0.0
      %v606 = vcombine.low %v550, %v558
      %v608 = vunpack.c.l.s4 1983009808
      %v609 = vunpack.c.0.s8 %v608
      %v610 = vlaneseq
      %v611 = vshrl.u32 %v610, 7
      %v612 = vsub.s32 %v609, %v611
      %v613 = vrot.slane %v606, %v612
      %v614 = vcombine.low %v554, %v562
      %v616 = vunpack.c.l.s4 1983009808
      %v617 = vunpack.c.0.s8 %v616
      %v618 = vlaneseq
      %v619 = vshrl.u32 %v618, 7
      %v620 = vsub.s32 %v617, %v619
      %v621 = vrot.slane %v614, %v620
      %v622 = vcombine.low %v613, %v621
      %v623 = vcombine.high %v613, %v621
      %v625 = vunpack.c.l.s4 1934713408
      %v626 = vunpack.c.0.s8 %v625
      %v627 = vlaneseq
      %v628 = vshrl.u32 %v627, 7
      %v629 = vsub.s32 %v626, %v628
      %v630 = vrot.slane %v622, %v629
      %v632 = vunpack.c.l.s4 1934713408
      %v633 = vunpack.c.0.s8 %v632
      %v634 = vlaneseq
      %v635 = vshrl.u32 %v634, 7
      %v636 = vsub.s32 %v633, %v635
      %v637 = vrot.slane %v623, %v636
      %v638 = vcombine.high %v630, 0.0
      %v639 = vcombine.high %v637, 0.0
      %v640 = vcombine.low %v535, %v543
      %v642 = vunpack.c.l.s4 1983009808
      %v643 = vunpack.c.0.s8 %v642
      %v644 = vlaneseq
      %v645 = vshrl.u32 %v644, 7
      %v646 = vsub.s32 %v643, %v645
      %v647 = vrot.slane %v640, %v646
      %v648 = vcombine.low %v539, %v547
      %v650 = vunpack.c.l.s4 1983009808
      %v651 = vunpack.c.0.s8 %v650
      %v652 = vlaneseq
      %v653 = vshrl.u32 %v652, 7
      %v654 = vsub.s32 %v651, %v653
      %v655 = vrot.slane %v648, %v654
      %v656 = vcombine.low %v647, %v655
      %v657 = vcombine.high %v647, %v655
      %v659 = vunpack.c.l.s4 1934713408
      %v660 = vunpack.c.0.s8 %v659
      %v661 = vlaneseq
      %v662 = vshrl.u32 %v661, 7
      %v663 = vsub.s32 %v660, %v662
      %v664 = vrot.slane %v656, %v663
      %v666 = vunpack.c.l.s4 1934713408
      %v667 = vunpack.c.0.s8 %v666
      %v668 = vlaneseq
      %v669 = vshrl.u32 %v668, 7
      %v670 = vsub.s32 %v667, %v669
      %v671 = vrot.slane %v657, %v670
      %v672 = vcombine.high %v664, 0.0
      %v673 = vcombine.high %v671, 0.0
      %v674 = vcombine.low %v551, %v559
      %v676 = vunpack.c.l.s4 1983009808
      %v677 = vunpack.c.0.s8 %v676
      %v678 = vlaneseq
      %v679 = vshrl.u32 %v678, 7
      %v680 = vsub.s32 %v677, %v679
      %v681 = vrot.slane %v674, %v680
      %v682 = vcombine.low %v555, %v563
      %v684 = vunpack.c.l.s4 1983009808
      %v685 = vunpack.c.0.s8 %v684
      %v686 = vlaneseq
      %v687 = vshrl.u32 %v686, 7
      %v688 = vsub.s32 %v685, %v687
      %v689 = vrot.slane %v682, %v688
      %v690 = vcombine.low %v681, %v689
      %v691 = vcombine.high %v681, %v689
      %v693 = vunpack.c.l.s4 1934713408
      %v694 = vunpack.c.0.s8 %v693
      %v695 = vlaneseq
      %v696 = vshrl.u32 %v695, 7
      %v697 = vsub.s32 %v694, %v696
      %v698 = vrot.slane %v690, %v697
      %v700 = vunpack.c.l.s4 1934713408
      %v701 = vunpack.c.0.s8 %v700
      %v702 = vlaneseq
      %v703 = vshrl.u32 %v702, 7
      %v704 = vsub.s32 %v701, %v703
      %v705 = vrot.slane %v691, %v704
      %v706 = vcombine.high %v698, 0.0
      %v707 = vcombine.high %v705, 0.0
      %v724 = vcombine.low %v596, %v630
      %v725 = vcombine.low %v664, %v698
      %v726 = vcombine.low %v604, %v638
      %v727 = vcombine.low %v672, %v706
      %v728 = vcombine.low %v603, %v637
      %v729 = vcombine.low %v671, %v705
      %v730 = vcombine.low %v605, %v639
      %v731 = vcombine.low %v673, %v707
      %v740 = vpack.c.bf16 %v725, %v724
      %v741 = vpack.c.bf16 %v727, %v726
      %v742 = vpack.c.bf16 %v729, %v728
      %v743 = vpack.c.bf16 %v731, %v730
      %v748 = vunpack.c.l.b16 %v740
      %v749 = vunpack.c.h.b16 %v740
      %v750 = vunpack.c.l.b16 %v741
      %v751 = vunpack.c.h.b16 %v741
      %v752 = vunpack.c.l.b16 %v742
      %v753 = vunpack.c.h.b16 %v742
      %v754 = vunpack.c.l.b16 %v743
      %v755 = vunpack.c.h.b16 %v743
      %v756 = vpack.c.b16 %v748, %v748
      %v757 = vpack.c.b16 %v749, %v749
      %v758 = vpack.c.b16 %v750, %v750
      %v759 = vpack.c.b16 %v751, %v751
      %v760 = vpack.c.b16 %v752, %v752
      %v761 = vpack.c.b16 %v753, %v753
      %v762 = vpack.c.b16 %v754, %v754
      %v763 = vpack.c.b16 %v755, %v755
      %v772 = vld [vmem:[%s2] sm:$0xf]
      %v773 = vld [vmem:[%s3] sm:$0xff]
      %774 = vrot.lane.b32.xlu0 %v471, 127
      %v775 = vpop.permute.xlu0 %774
      %776 = vrot.lane.b32.xlu0 %v503, 127
      %v777 = vpop.permute.xlu0 %776
      %778 = vrot.lane.b32.xlu0 %v475, 127
      %v779 = vpop.permute.xlu0 %778
      %780 = vrot.lane.b32.xlu0 %v507, 127
      %v781 = vpop.permute.xlu0 %780
      %782 = vrot.lane.b32.xlu0 %v479, 127
      %v783 = vpop.permute.xlu0 %782
      %784 = vrot.lane.b32.xlu0 %v511, 127
      %v785 = vpop.permute.xlu0 %784
      %786 = vrot.lane.b32.xlu0 %v483, 127
      %v787 = vpop.permute.xlu0 %786
      %788 = vrot.lane.b32.xlu0 %v515, 127
      %v789 = vpop.permute.xlu0 %788
      %790 = vrot.lane.b32.xlu0 %v487, 127
      %v791 = vpop.permute.xlu0 %790
      %792 = vrot.lane.b32.xlu0 %v519, 127
      %v793 = vpop.permute.xlu0 %792
      %794 = vrot.lane.b32.xlu0 %v491, 127
      %v795 = vpop.permute.xlu0 %794
      %796 = vrot.lane.b32.xlu0 %v523, 127
      %v797 = vpop.permute.xlu0 %796
      %798 = vrot.lane.b32.xlu0 %v495, 127
      %v799 = vpop.permute.xlu0 %798
      %800 = vrot.lane.b32.xlu0 %v527, 127
      %v801 = vpop.permute.xlu0 %800
      %802 = vrot.lane.b32.xlu0 %v499, 127
      %v803 = vpop.permute.xlu0 %802
      %804 = vrot.lane.b32.xlu0 %v531, 127
      %v805 = vpop.permute.xlu0 %804
      %806 = vrot.lane.b32.xlu0 %v756, 127
      %v807 = vpop.permute.xlu0 %806
      %808 = vrot.lane.b32.xlu0 %v757, 127
      %v809 = vpop.permute.xlu0 %808
      %810 = vrot.lane.b32.xlu0 %v758, 127
      %v811 = vpop.permute.xlu0 %810
      %812 = vrot.lane.b32.xlu0 %v759, 127
      %v813 = vpop.permute.xlu0 %812
      %814 = vrot.lane.b32.xlu0 %v760, 127
      %v815 = vpop.permute.xlu0 %814
      %816 = vrot.lane.b32.xlu0 %v761, 127
      %v817 = vpop.permute.xlu0 %816
      %818 = vrot.lane.b32.xlu0 %v762, 127
      %v819 = vpop.permute.xlu0 %818
      %820 = vrot.lane.b32.xlu0 %v763, 127
      %v821 = vpop.permute.xlu0 %820
      %846 = vrot.lane.b32.xlu0 %v471, 126
      %v847 = vpop.permute.xlu0 %846
      %848 = vrot.lane.b32.xlu0 %v503, 126
      %v849 = vpop.permute.xlu0 %848
      %850 = vrot.lane.b32.xlu0 %v475, 126
      %v851 = vpop.permute.xlu0 %850
      %852 = vrot.lane.b32.xlu0 %v507, 126
      %v853 = vpop.permute.xlu0 %852
      %854 = vrot.lane.b32.xlu0 %v479, 126
      %v855 = vpop.permute.xlu0 %854
      %856 = vrot.lane.b32.xlu0 %v511, 126
      %v857 = vpop.permute.xlu0 %856
      %858 = vrot.lane.b32.xlu0 %v483, 126
      %v859 = vpop.permute.xlu0 %858
      %860 = vrot.lane.b32.xlu0 %v515, 126
      %v861 = vpop.permute.xlu0 %860
      %862 = vrot.lane.b32.xlu0 %v487, 126
      %v863 = vpop.permute.xlu0 %862
      %864 = vrot.lane.b32.xlu0 %v519, 126
      %v865 = vpop.permute.xlu0 %864
      %866 = vrot.lane.b32.xlu0 %v491, 126
      %v867 = vpop.permute.xlu0 %866
      %868 = vrot.lane.b32.xlu0 %v523, 126
      %v869 = vpop.permute.xlu0 %868
      %870 = vrot.lane.b32.xlu0 %v495, 126
      %v871 = vpop.permute.xlu0 %870
      %872 = vrot.lane.b32.xlu0 %v527, 126
      %v873 = vpop.permute.xlu0 %872
      %874 = vrot.lane.b32.xlu0 %v499, 126
      %v875 = vpop.permute.xlu0 %874
      %876 = vrot.lane.b32.xlu0 %v531, 126
      %v877 = vpop.permute.xlu0 %876
      %878 = vrot.lane.b32.xlu0 %v756, 126
      %v879 = vpop.permute.xlu0 %878
      %880 = vrot.lane.b32.xlu0 %v757, 126
      %v881 = vpop.permute.xlu0 %880
      %882 = vrot.lane.b32.xlu0 %v758, 126
      %v883 = vpop.permute.xlu0 %882
      %884 = vrot.lane.b32.xlu0 %v759, 126
      %v885 = vpop.permute.xlu0 %884
      %886 = vrot.lane.b32.xlu0 %v760, 126
      %v887 = vpop.permute.xlu0 %886
      %888 = vrot.lane.b32.xlu0 %v761, 126
      %v889 = vpop.permute.xlu0 %888
      %890 = vrot.lane.b32.xlu0 %v762, 126
      %v891 = vpop.permute.xlu0 %890
      %892 = vrot.lane.b32.xlu0 %v763, 126
      %v893 = vpop.permute.xlu0 %892
      %vm918 = vsmask.f32 3328
      %vm919 = vsmask.f32 7440
      %vm920 = vmor %vm918, %vm919
      %v922 = vshrl.u32 %v471, 16
      %v924 = vrot.slane %v922, 4
      %v925 = vshll.u32 %v471, 16
      %v927 = vrot.slane %v925, 5
      %v928 = vor.u32 %v924, %v927
      %v929 = vrot.slane %v928, 4
      %v931 = vshll.u32 %v503, 16
      %v933 = vrot.slane %v931, 5
      %v934 = vsel %vm920, %v929, %v933
      %v935 = vshrl.u32 %v503, 16
      %v937 = vrot.slane %v935, 4
      %v938 = vor.u32 %v937, %v933
      %v939 = vrot.slane %v938, 4
      %v941 = vshrl.u32 %v475, 16
      %v943 = vrot.slane %v941, 4
      %v944 = vshll.u32 %v475, 16
      %v946 = vrot.slane %v944, 5
      %v947 = vor.u32 %v943, %v946
      %v948 = vrot.slane %v947, 4
      %v950 = vshll.u32 %v507, 16
      %v952 = vrot.slane %v950, 5
      %v953 = vsel %vm920, %v948, %v952
      %v954 = vshrl.u32 %v507, 16
      %v956 = vrot.slane %v954, 4
      %v957 = vor.u32 %v956, %v952
      %v958 = vrot.slane %v957, 4
      %v960 = vshrl.u32 %v479, 16
      %v962 = vrot.slane %v960, 4
      %v963 = vshll.u32 %v479, 16
      %v965 = vrot.slane %v963, 5
      %v966 = vor.u32 %v962, %v965
      %v967 = vrot.slane %v966, 4
      %v969 = vshll.u32 %v511, 16
      %v971 = vrot.slane %v969, 5
      %v972 = vsel %vm920, %v967, %v971
      %v973 = vshrl.u32 %v511, 16
      %v975 = vrot.slane %v973, 4
      %v976 = vor.u32 %v975, %v971
      %v977 = vrot.slane %v976, 4
      %v979 = vshrl.u32 %v483, 16
      %v981 = vrot.slane %v979, 4
      %v982 = vshll.u32 %v483, 16
      %v984 = vrot.slane %v982, 5
      %v985 = vor.u32 %v981, %v984
      %v986 = vrot.slane %v985, 4
      %v988 = vshll.u32 %v515, 16
      %v990 = vrot.slane %v988, 5
      %v991 = vsel %vm920, %v986, %v990
      %v992 = vshrl.u32 %v515, 16
      %v994 = vrot.slane %v992, 4
      %v995 = vor.u32 %v994, %v990
      %v996 = vrot.slane %v995, 4
      %v998 = vshrl.u32 %v487, 16
      %v1000 = vrot.slane %v998, 4
      %v1001 = vshll.u32 %v487, 16
      %v1003 = vrot.slane %v1001, 5
      %v1004 = vor.u32 %v1000, %v1003
      %v1005 = vrot.slane %v1004, 4
      %v1007 = vshll.u32 %v519, 16
      %v1009 = vrot.slane %v1007, 5
      %v1010 = vsel %vm920, %v1005, %v1009
      %v1011 = vshrl.u32 %v519, 16
      %v1013 = vrot.slane %v1011, 4
      %v1014 = vor.u32 %v1013, %v1009
      %v1015 = vrot.slane %v1014, 4
      %v1017 = vshrl.u32 %v491, 16
      %v1019 = vrot.slane %v1017, 4
      %v1020 = vshll.u32 %v491, 16
      %v1022 = vrot.slane %v1020, 5
      %v1023 = vor.u32 %v1019, %v1022
      %v1024 = vrot.slane %v1023, 4
      %v1026 = vshll.u32 %v523, 16
      %v1028 = vrot.slane %v1026, 5
      %v1029 = vsel %vm920, %v1024, %v1028
      %v1030 = vshrl.u32 %v523, 16
      %v1032 = vrot.slane %v1030, 4
      %v1033 = vor.u32 %v1032, %v1028
      %v1034 = vrot.slane %v1033, 4
      %v1036 = vshrl.u32 %v495, 16
      %v1038 = vrot.slane %v1036, 4
      %v1039 = vshll.u32 %v495, 16
      %v1041 = vrot.slane %v1039, 5
      %v1042 = vor.u32 %v1038, %v1041
      %v1043 = vrot.slane %v1042, 4
      %v1045 = vshll.u32 %v527, 16
      %v1047 = vrot.slane %v1045, 5
      %v1048 = vsel %vm920, %v1043, %v1047
      %v1049 = vshrl.u32 %v527, 16
      %v1051 = vrot.slane %v1049, 4
      %v1052 = vor.u32 %v1051, %v1047
      %v1053 = vrot.slane %v1052, 4
      %v1055 = vshrl.u32 %v499, 16
      %v1057 = vrot.slane %v1055, 4
      %v1058 = vshll.u32 %v499, 16
      %v1060 = vrot.slane %v1058, 5
      %v1061 = vor.u32 %v1057, %v1060
      %v1062 = vrot.slane %v1061, 4
      %v1064 = vshll.u32 %v531, 16
      %v1066 = vrot.slane %v1064, 5
      %v1067 = vsel %vm920, %v1062, %v1066
      %v1068 = vshrl.u32 %v531, 16
      %v1070 = vrot.slane %v1068, 4
      %v1071 = vor.u32 %v1070, %v1066
      %v1072 = vrot.slane %v1071, 4
      %v1074 = vshrl.u32 %v756, 16
      %v1076 = vrot.slane %v1074, 4
      %v1077 = vshll.u32 %v756, 16
      %v1079 = vrot.slane %v1077, 5
      %v1080 = vor.u32 %v1076, %v1079
      %v1081 = vrot.slane %v1080, 4
      %v1083 = vshll.u32 %v757, 16
      %v1085 = vrot.slane %v1083, 5
      %v1086 = vsel %vm920, %v1081, %v1085
      %v1087 = vshrl.u32 %v757, 16
      %v1089 = vrot.slane %v1087, 4
      %v1090 = vor.u32 %v1089, %v1085
      %v1091 = vrot.slane %v1090, 4
      %v1093 = vshrl.u32 %v758, 16
      %v1095 = vrot.slane %v1093, 4
      %v1096 = vshll.u32 %v758, 16
      %v1098 = vrot.slane %v1096, 5
      %v1099 = vor.u32 %v1095, %v1098
      %v1100 = vrot.slane %v1099, 4
      %v1102 = vshll.u32 %v759, 16
      %v1104 = vrot.slane %v1102, 5
      %v1105 = vsel %vm920, %v1100, %v1104
      %v1106 = vshrl.u32 %v759, 16
      %v1108 = vrot.slane %v1106, 4
      %v1109 = vor.u32 %v1108, %v1104
      %v1110 = vrot.slane %v1109, 4
      %v1112 = vshrl.u32 %v760, 16
      %v1114 = vrot.slane %v1112, 4
      %v1115 = vshll.u32 %v760, 16
      %v1117 = vrot.slane %v1115, 5
      %v1118 = vor.u32 %v1114, %v1117
      %v1119 = vrot.slane %v1118, 4
      %v1121 = vshll.u32 %v761, 16
      %v1123 = vrot.slane %v1121, 5
      %v1124 = vsel %vm920, %v1119, %v1123
      %v1125 = vshrl.u32 %v761, 16
      %v1127 = vrot.slane %v1125, 4
      %v1128 = vor.u32 %v1127, %v1123
      %v1129 = vrot.slane %v1128, 4
      %v1131 = vshrl.u32 %v762, 16
      %v1133 = vrot.slane %v1131, 4
      %v1134 = vshll.u32 %v762, 16
      %v1136 = vrot.slane %v1134, 5
      %v1137 = vor.u32 %v1133, %v1136
      %v1138 = vrot.slane %v1137, 4
      %v1140 = vshll.u32 %v763, 16
      %v1142 = vrot.slane %v1140, 5
      %v1143 = vsel %vm920, %v1138, %v1142
      %v1144 = vshrl.u32 %v763, 16
      %v1146 = vrot.slane %v1144, 4
      %v1147 = vor.u32 %v1146, %v1142
      %v1148 = vrot.slane %v1147, 4
      %1173 = vrot.lane.b32.xlu0 %v934, 127
      %v1174 = vpop.permute.xlu0 %1173
      %1175 = vrot.lane.b32.xlu0 %v939, 127
      %v1176 = vpop.permute.xlu0 %1175
      %1177 = vrot.lane.b32.xlu0 %v953, 127
      %v1178 = vpop.permute.xlu0 %1177
      %1179 = vrot.lane.b32.xlu0 %v958, 127
      %v1180 = vpop.permute.xlu0 %1179
      %1181 = vrot.lane.b32.xlu0 %v972, 127
      %v1182 = vpop.permute.xlu0 %1181
      %1183 = vrot.lane.b32.xlu0 %v977, 127
      %v1184 = vpop.permute.xlu0 %1183
      %1185 = vrot.lane.b32.xlu0 %v991, 127
      %v1186 = vpop.permute.xlu0 %1185
      %1187 = vrot.lane.b32.xlu0 %v996, 127
      %v1188 = vpop.permute.xlu0 %1187
      %1189 = vrot.lane.b32.xlu0 %v1010, 127
      %v1190 = vpop.permute.xlu0 %1189
      %1191 = vrot.lane.b32.xlu0 %v1015, 127
      %v1192 = vpop.permute.xlu0 %1191
      %1193 = vrot.lane.b32.xlu0 %v1029, 127
      %v1194 = vpop.permute.xlu0 %1193
      %1195 = vrot.lane.b32.xlu0 %v1034, 127
      %v1196 = vpop.permute.xlu0 %1195
      %1197 = vrot.lane.b32.xlu0 %v1048, 127
      %v1198 = vpop.permute.xlu0 %1197
      %1199 = vrot.lane.b32.xlu0 %v1053, 127
      %v1200 = vpop.permute.xlu0 %1199
      %1201 = vrot.lane.b32.xlu0 %v1067, 127
      %v1202 = vpop.permute.xlu0 %1201
      %1203 = vrot.lane.b32.xlu0 %v1072, 127
      %v1204 = vpop.permute.xlu0 %1203
      %1205 = vrot.lane.b32.xlu0 %v1086, 127
      %v1206 = vpop.permute.xlu0 %1205
      %1207 = vrot.lane.b32.xlu0 %v1091, 127
      %v1208 = vpop.permute.xlu0 %1207
      %1209 = vrot.lane.b32.xlu0 %v1105, 127
      %v1210 = vpop.permute.xlu0 %1209
      %1211 = vrot.lane.b32.xlu0 %v1110, 127
      %v1212 = vpop.permute.xlu0 %1211
      %1213 = vrot.lane.b32.xlu0 %v1124, 127
      %v1214 = vpop.permute.xlu0 %1213
      %1215 = vrot.lane.b32.xlu0 %v1129, 127
      %v1216 = vpop.permute.xlu0 %1215
      %1217 = vrot.lane.b32.xlu0 %v1143, 127
      %v1218 = vpop.permute.xlu0 %1217
      %1219 = vrot.lane.b32.xlu0 %v1148, 127
      %v1220 = vpop.permute.xlu0 %1219
      %1245 = vrot.lane.b32.xlu0 %v934, 126
      %v1246 = vpop.permute.xlu0 %1245
      %1247 = vrot.lane.b32.xlu0 %v939, 126
      %v1248 = vpop.permute.xlu0 %1247
      %1249 = vrot.lane.b32.xlu0 %v953, 126
      %v1250 = vpop.permute.xlu0 %1249
      %1251 = vrot.lane.b32.xlu0 %v958, 126
      %v1252 = vpop.permute.xlu0 %1251
      %1253 = vrot.lane.b32.xlu0 %v972, 126
      %v1254 = vpop.permute.xlu0 %1253
      %1255 = vrot.lane.b32.xlu0 %v977, 126
      %v1256 = vpop.permute.xlu0 %1255
      %1257 = vrot.lane.b32.xlu0 %v991, 126
      %v1258 = vpop.permute.xlu0 %1257
      %1259 = vrot.lane.b32.xlu0 %v996, 126
      %v1260 = vpop.permute.xlu0 %1259
      %1261 = vrot.lane.b32.xlu0 %v1010, 126
      %v1262 = vpop.permute.xlu0 %1261
      %1263 = vrot.lane.b32.xlu0 %v1015, 126
      %v1264 = vpop.permute.xlu0 %1263
      %1265 = vrot.lane.b32.xlu0 %v1029, 126
      %v1266 = vpop.permute.xlu0 %1265
      %1267 = vrot.lane.b32.xlu0 %v1034, 126
      %v1268 = vpop.permute.xlu0 %1267
      %1269 = vrot.lane.b32.xlu0 %v1048, 126
      %v1270 = vpop.permute.xlu0 %1269
      %1271 = vrot.lane.b32.xlu0 %v1053, 126
      %v1272 = vpop.permute.xlu0 %1271
      %1273 = vrot.lane.b32.xlu0 %v1067, 126
      %v1274 = vpop.permute.xlu0 %1273
      %1275 = vrot.lane.b32.xlu0 %v1072, 126
      %v1276 = vpop.permute.xlu0 %1275
      %1277 = vrot.lane.b32.xlu0 %v1086, 126
      %v1278 = vpop.permute.xlu0 %1277
      %1279 = vrot.lane.b32.xlu0 %v1091, 126
      %v1280 = vpop.permute.xlu0 %1279
      %1281 = vrot.lane.b32.xlu0 %v1105, 126
      %v1282 = vpop.permute.xlu0 %1281
      %1283 = vrot.lane.b32.xlu0 %v1110, 126
      %v1284 = vpop.permute.xlu0 %1283
      %1285 = vrot.lane.b32.xlu0 %v1124, 126
      %v1286 = vpop.permute.xlu0 %1285
      %1287 = vrot.lane.b32.xlu0 %v1129, 126
      %v1288 = vpop.permute.xlu0 %1287
      %1289 = vrot.lane.b32.xlu0 %v1143, 126
      %v1290 = vpop.permute.xlu0 %1289
      %1291 = vrot.lane.b32.xlu0 %v1148, 126
      %v1292 = vpop.permute.xlu0 %1291
      %vm1317 = vcmask 1042432
      %vm1318 = vcmask 1046532
      %vm1319 = vmor %vm1317, %vm1318
      %v1320 = vrot.slane %v471, 5
      %v1321 = vrot.slane %v1320, 4
      %v1322 = vrot.slane %v503, 5
      %v1323 = vsel %vm1319, %v1321, %v1322
      %v1324 = vrot.slane %v1322, 4
      %v1325 = vrot.slane %v475, 5
      %v1326 = vrot.slane %v1325, 4
      %v1327 = vrot.slane %v507, 5
      %v1328 = vsel %vm1319, %v1326, %v1327
      %v1329 = vrot.slane %v1327, 4
      %v1330 = vrot.slane %v479, 5
      %v1331 = vrot.slane %v1330, 4
      %v1332 = vrot.slane %v511, 5
      %v1333 = vsel %vm1319, %v1331, %v1332
      %v1334 = vrot.slane %v1332, 4
      %v1335 = vrot.slane %v483, 5
      %v1336 = vrot.slane %v1335, 4
      %v1337 = vrot.slane %v515, 5
      %v1338 = vsel %vm1319, %v1336, %v1337
      %v1339 = vrot.slane %v1337, 4
      %v1340 = vrot.slane %v487, 5
      %v1341 = vrot.slane %v1340, 4
      %v1342 = vrot.slane %v519, 5
      %v1343 = vsel %vm1319, %v1341, %v1342
      %v1344 = vrot.slane %v1342, 4
      %v1345 = vrot.slane %v491, 5
      %v1346 = vrot.slane %v1345, 4
      %v1347 = vrot.slane %v523, 5
      %v1348 = vsel %vm1319, %v1346, %v1347
      %v1349 = vrot.slane %v1347, 4
      %v1350 = vrot.slane %v495, 5
      %v1351 = vrot.slane %v1350, 4
      %v1352 = vrot.slane %v527, 5
      %v1353 = vsel %vm1319, %v1351, %v1352
      %v1354 = vrot.slane %v1352, 4
      %v1355 = vrot.slane %v499, 5
      %v1356 = vrot.slane %v1355, 4
      %v1357 = vrot.slane %v531, 5
      %v1358 = vsel %vm1319, %v1356, %v1357
      %v1359 = vrot.slane %v1357, 4
      %v1360 = vrot.slane %v756, 5
      %v1361 = vrot.slane %v1360, 4
      %v1362 = vrot.slane %v757, 5
      %v1363 = vsel %vm1319, %v1361, %v1362
      %v1364 = vrot.slane %v1362, 4
      %v1365 = vrot.slane %v758, 5
      %v1366 = vrot.slane %v1365, 4
      %v1367 = vrot.slane %v759, 5
      %v1368 = vsel %vm1319, %v1366, %v1367
      %v1369 = vrot.slane %v1367, 4
      %v1370 = vrot.slane %v760, 5
      %v1371 = vrot.slane %v1370, 4
      %v1372 = vrot.slane %v761, 5
      %v1373 = vsel %vm1319, %v1371, %v1372
      %v1374 = vrot.slane %v1372, 4
      %v1375 = vrot.slane %v762, 5
      %v1376 = vrot.slane %v1375, 4
      %v1377 = vrot.slane %v763, 5
      %v1378 = vsel %vm1319, %v1376, %v1377
      %v1379 = vrot.slane %v1377, 4
      %1404 = vrot.lane.b32.xlu0 %v1323, 127
      %v1405 = vpop.permute.xlu0 %1404
      %1406 = vrot.lane.b32.xlu0 %v1324, 127
      %v1407 = vpop.permute.xlu0 %1406
      %1408 = vrot.lane.b32.xlu0 %v1328, 127
      %v1409 = vpop.permute.xlu0 %1408
      %1410 = vrot.lane.b32.xlu0 %v1329, 127
      %v1411 = vpop.permute.xlu0 %1410
      %1412 = vrot.lane.b32.xlu0 %v1333, 127
      %v1413 = vpop.permute.xlu0 %1412
      %1414 = vrot.lane.b32.xlu0 %v1334, 127
      %v1415 = vpop.permute.xlu0 %1414
      %1416 = vrot.lane.b32.xlu0 %v1338, 127
      %v1417 = vpop.permute.xlu0 %1416
      %1418 = vrot.lane.b32.xlu0 %v1339, 127
      %v1419 = vpop.permute.xlu0 %1418
      %1420 = vrot.lane.b32.xlu0 %v1343, 127
      %v1421 = vpop.permute.xlu0 %1420
      %1422 = vrot.lane.b32.xlu0 %v1344, 127
      %v1423 = vpop.permute.xlu0 %1422
      %1424 = vrot.lane.b32.xlu0 %v1348, 127
      %v1425 = vpop.permute.xlu0 %1424
      %1426 = vrot.lane.b32.xlu0 %v1349, 127
      %v1427 = vpop.permute.xlu0 %1426
      %1428 = vrot.lane.b32.xlu0 %v1353, 127
      %v1429 = vpop.permute.xlu0 %1428
      %1430 = vrot.lane.b32.xlu0 %v1354, 127
      %v1431 = vpop.permute.xlu0 %1430
      %1432 = vrot.lane.b32.xlu0 %v1358, 127
      %v1433 = vpop.permute.xlu0 %1432
      %1434 = vrot.lane.b32.xlu0 %v1359, 127
      %v1435 = vpop.permute.xlu0 %1434
      %1436 = vrot.lane.b32.xlu0 %v1363, 127
      %v1437 = vpop.permute.xlu0 %1436
      %1438 = vrot.lane.b32.xlu0 %v1364, 127
      %v1439 = vpop.permute.xlu0 %1438
      %1440 = vrot.lane.b32.xlu0 %v1368, 127
      %v1441 = vpop.permute.xlu0 %1440
      %1442 = vrot.lane.b32.xlu0 %v1369, 127
      %v1443 = vpop.permute.xlu0 %1442
      %1444 = vrot.lane.b32.xlu0 %v1373, 127
      %v1445 = vpop.permute.xlu0 %1444
      %1446 = vrot.lane.b32.xlu0 %v1374, 127
      %v1447 = vpop.permute.xlu0 %1446
      %1448 = vrot.lane.b32.xlu0 %v1378, 127
      %v1449 = vpop.permute.xlu0 %1448
      %1450 = vrot.lane.b32.xlu0 %v1379, 127
      %v1451 = vpop.permute.xlu0 %1450
      %1476 = vrot.lane.b32.xlu0 %v1323, 126
      %v1477 = vpop.permute.xlu0 %1476
      %1478 = vrot.lane.b32.xlu0 %v1324, 126
      %v1479 = vpop.permute.xlu0 %1478
      %1480 = vrot.lane.b32.xlu0 %v1328, 126
      %v1481 = vpop.permute.xlu0 %1480
      %1482 = vrot.lane.b32.xlu0 %v1329, 126
      %v1483 = vpop.permute.xlu0 %1482
      %1484 = vrot.lane.b32.xlu0 %v1333, 126
      %v1485 = vpop.permute.xlu0 %1484
      %1486 = vrot.lane.b32.xlu0 %v1334, 126
      %v1487 = vpop.permute.xlu0 %1486
      %1488 = vrot.lane.b32.xlu0 %v1338, 126
      %v1489 = vpop.permute.xlu0 %1488
      %1490 = vrot.lane.b32.xlu0 %v1339, 126
      %v1491 = vpop.permute.xlu0 %1490
      %1492 = vrot.lane.b32.xlu0 %v1343, 126
      %v1493 = vpop.permute.xlu0 %1492
      %1494 = vrot.lane.b32.xlu0 %v1344, 126
      %v1495 = vpop.permute.xlu0 %1494
      %1496 = vrot.lane.b32.xlu0 %v1348, 126
      %v1497 = vpop.permute.xlu0 %1496
      %1498 = vrot.lane.b32.xlu0 %v1349, 126
      %v1499 = vpop.permute.xlu0 %1498
      %1500 = vrot.lane.b32.xlu0 %v1353, 126
      %v1501 = vpop.permute.xlu0 %1500
      %1502 = vrot.lane.b32.xlu0 %v1354, 126
      %v1503 = vpop.permute.xlu0 %1502
      %1504 = vrot.lane.b32.xlu0 %v1358, 126
      %v1505 = vpop.permute.xlu0 %1504
      %1506 = vrot.lane.b32.xlu0 %v1359, 126
      %v1507 = vpop.permute.xlu0 %1506
      %1508 = vrot.lane.b32.xlu0 %v1363, 126
      %v1509 = vpop.permute.xlu0 %1508
      %1510 = vrot.lane.b32.xlu0 %v1364, 126
      %v1511 = vpop.permute.xlu0 %1510
      %1512 = vrot.lane.b32.xlu0 %v1368, 126
      %v1513 = vpop.permute.xlu0 %1512
      %1514 = vrot.lane.b32.xlu0 %v1369, 126
      %v1515 = vpop.permute.xlu0 %1514
      %1516 = vrot.lane.b32.xlu0 %v1373, 126
      %v1517 = vpop.permute.xlu0 %1516
      %1518 = vrot.lane.b32.xlu0 %v1374, 126
      %v1519 = vpop.permute.xlu0 %1518
      %1520 = vrot.lane.b32.xlu0 %v1378, 126
      %v1521 = vpop.permute.xlu0 %1520
      %1522 = vrot.lane.b32.xlu0 %v1379, 126
      %v1523 = vpop.permute.xlu0 %1522
      %v1540 = vcombine.low %v471, %v487
      %v1542 = vunpack.c.l.s4 1983009808
      %v1543 = vunpack.c.0.s8 %v1542
      %v1544 = vlaneseq
      %v1545 = vshrl.u32 %v1544, 7
      %v1546 = vsub.s32 %v1543, %v1545
      %v1547 = vrot.slane %v1540, %v1546
      %v1548 = vcombine.low %v479, %v495
      %v1550 = vunpack.c.l.s4 1983009808
      %v1551 = vunpack.c.0.s8 %v1550
      %v1552 = vlaneseq
      %v1553 = vshrl.u32 %v1552, 7
      %v1554 = vsub.s32 %v1551, %v1553
      %v1555 = vrot.slane %v1548, %v1554
      %v1556 = vcombine.low %v1547, %v1555
      %v1557 = vcombine.high %v1547, %v1555
      %v1559 = vunpack.c.l.s4 1934713408
      %v1560 = vunpack.c.0.s8 %v1559
      %v1561 = vlaneseq
      %v1562 = vshrl.u32 %v1561, 7
      %v1563 = vsub.s32 %v1560, %v1562
      %v1564 = vrot.slane %v1556, %v1563
      %v1566 = vunpack.c.l.s4 1934713408
      %v1567 = vunpack.c.0.s8 %v1566
      %v1568 = vlaneseq
      %v1569 = vshrl.u32 %v1568, 7
      %v1570 = vsub.s32 %v1567, %v1569
      %v1571 = vrot.slane %v1557, %v1570
      %v1572 = vcombine.high %v1564, 0
      %v1573 = vcombine.high %v1571, 0
      %v1574 = vcombine.low %v475, %v491
      %v1576 = vunpack.c.l.s4 1983009808
      %v1577 = vunpack.c.0.s8 %v1576
      %v1578 = vlaneseq
      %v1579 = vshrl.u32 %v1578, 7
      %v1580 = vsub.s32 %v1577, %v1579
      %v1581 = vrot.slane %v1574, %v1580
      %v1582 = vcombine.low %v483, %v499
      %v1584 = vunpack.c.l.s4 1983009808
      %v1585 = vunpack.c.0.s8 %v1584
      %v1586 = vlaneseq
      %v1587 = vshrl.u32 %v1586, 7
      %v1588 = vsub.s32 %v1585, %v1587
      %v1589 = vrot.slane %v1582, %v1588
      %v1590 = vcombine.low %v1581, %v1589
      %v1591 = vcombine.high %v1581, %v1589
      %v1593 = vunpack.c.l.s4 1934713408
      %v1594 = vunpack.c.0.s8 %v1593
      %v1595 = vlaneseq
      %v1596 = vshrl.u32 %v1595, 7
      %v1597 = vsub.s32 %v1594, %v1596
      %v1598 = vrot.slane %v1590, %v1597
      %v1600 = vunpack.c.l.s4 1934713408
      %v1601 = vunpack.c.0.s8 %v1600
      %v1602 = vlaneseq
      %v1603 = vshrl.u32 %v1602, 7
      %v1604 = vsub.s32 %v1601, %v1603
      %v1605 = vrot.slane %v1591, %v1604
      %v1606 = vcombine.high %v1598, 0
      %v1607 = vcombine.high %v1605, 0
      %v1608 = vcombine.low %v756, %v775
      %v1610 = vunpack.c.l.s4 1983009808
      %v1611 = vunpack.c.0.s8 %v1610
      %v1612 = vlaneseq
      %v1613 = vshrl.u32 %v1612, 7
      %v1614 = vsub.s32 %v1611, %v1613
      %v1615 = vrot.slane %v1608, %v1614
      %v1616 = vcombine.low %v760, %v783
      %v1618 = vunpack.c.l.s4 1983009808
      %v1619 = vunpack.c.0.s8 %v1618
      %v1620 = vlaneseq
      %v1621 = vshrl.u32 %v1620, 7
      %v1622 = vsub.s32 %v1619, %v1621
      %v1623 = vrot.slane %v1616, %v1622
      %v1624 = vcombine.low %v1615, %v1623
      %v1625 = vcombine.high %v1615, %v1623
      %v1627 = vunpack.c.l.s4 1934713408
      %v1628 = vunpack.c.0.s8 %v1627
      %v1629 = vlaneseq
      %v1630 = vshrl.u32 %v1629, 7
      %v1631 = vsub.s32 %v1628, %v1630
      %v1632 = vrot.slane %v1624, %v1631
      %v1634 = vunpack.c.l.s4 1934713408
      %v1635 = vunpack.c.0.s8 %v1634
      %v1636 = vlaneseq
      %v1637 = vshrl.u32 %v1636, 7
      %v1638 = vsub.s32 %v1635, %v1637
      %v1639 = vrot.slane %v1625, %v1638
      %v1640 = vcombine.high %v1632, 0
      %v1641 = vcombine.high %v1639, 0
      %v1642 = vcombine.low %v758, %v779
      %v1644 = vunpack.c.l.s4 1983009808
      %v1645 = vunpack.c.0.s8 %v1644
      %v1646 = vlaneseq
      %v1647 = vshrl.u32 %v1646, 7
      %v1648 = vsub.s32 %v1645, %v1647
      %v1649 = vrot.slane %v1642, %v1648
      %v1650 = vcombine.low %v762, %v787
      %v1652 = vunpack.c.l.s4 1983009808
      %v1653 = vunpack.c.0.s8 %v1652
      %v1654 = vlaneseq
      %v1655 = vshrl.u32 %v1654, 7
      %v1656 = vsub.s32 %v1653, %v1655
      %v1657 = vrot.slane %v1650, %v1656
      %v1658 = vcombine.low %v1649, %v1657
      %v1659 = vcombine.high %v1649, %v1657
      %v1661 = vunpack.c.l.s4 1934713408
      %v1662 = vunpack.c.0.s8 %v1661
      %v1663 = vlaneseq
      %v1664 = vshrl.u32 %v1663, 7
      %v1665 = vsub.s32 %v1662, %v1664
      %v1666 = vrot.slane %v1658, %v1665
      %v1668 = vunpack.c.l.s4 1934713408
      %v1669 = vunpack.c.0.s8 %v1668
      %v1670 = vlaneseq
      %v1671 = vshrl.u32 %v1670, 7
      %v1672 = vsub.s32 %v1669, %v1671
      %v1673 = vrot.slane %v1659, %v1672
      %v1674 = vcombine.high %v1666, 0
      %v1675 = vcombine.high %v1673, 0
      %v1676 = vcombine.low %v791, %v807
      %v1678 = vunpack.c.l.s4 1983009808
      %v1679 = vunpack.c.0.s8 %v1678
      %v1680 = vlaneseq
      %v1681 = vshrl.u32 %v1680, 7
      %v1682 = vsub.s32 %v1679, %v1681
      %v1683 = vrot.slane %v1676, %v1682
      %v1684 = vcombine.low %v799, %v815
      %v1686 = vunpack.c.l.s4 1983009808
      %v1687 = vunpack.c.0.s8 %v1686
      %v1688 = vlaneseq
      %v1689 = vshrl.u32 %v1688, 7
      %v1690 = vsub.s32 %v1687, %v1689
      %v1691 = vrot.slane %v1684, %v1690
      %v1692 = vcombine.low %v1683, %v1691
      %v1693 = vcombine.high %v1683, %v1691
      %v1695 = vunpack.c.l.s4 1934713408
      %v1696 = vunpack.c.0.s8 %v1695
      %v1697 = vlaneseq
      %v1698 = vshrl.u32 %v1697, 7
      %v1699 = vsub.s32 %v1696, %v1698
      %v1700 = vrot.slane %v1692, %v1699
      %v1702 = vunpack.c.l.s4 1934713408
      %v1703 = vunpack.c.0.s8 %v1702
      %v1704 = vlaneseq
      %v1705 = vshrl.u32 %v1704, 7
      %v1706 = vsub.s32 %v1703, %v1705
      %v1707 = vrot.slane %v1693, %v1706
      %v1708 = vcombine.high %v1700, 0
      %v1709 = vcombine.high %v1707, 0
      %v1710 = vcombine.low %v795, %v811
      %v1712 = vunpack.c.l.s4 1983009808
      %v1713 = vunpack.c.0.s8 %v1712
      %v1714 = vlaneseq
      %v1715 = vshrl.u32 %v1714, 7
      %v1716 = vsub.s32 %v1713, %v1715
      %v1717 = vrot.slane %v1710, %v1716
      %v1718 = vcombine.low %v803, %v819
      %v1720 = vunpack.c.l.s4 1983009808
      %v1721 = vunpack.c.0.s8 %v1720
      %v1722 = vlaneseq
      %v1723 = vshrl.u32 %v1722, 7
      %v1724 = vsub.s32 %v1721, %v1723
      %v1725 = vrot.slane %v1718, %v1724
      %v1726 = vcombine.low %v1717, %v1725
      %v1727 = vcombine.high %v1717, %v1725
      %v1729 = vunpack.c.l.s4 1934713408
      %v1730 = vunpack.c.0.s8 %v1729
      %v1731 = vlaneseq
      %v1732 = vshrl.u32 %v1731, 7
      %v1733 = vsub.s32 %v1730, %v1732
      %v1734 = vrot.slane %v1726, %v1733
      %v1736 = vunpack.c.l.s4 1934713408
      %v1737 = vunpack.c.0.s8 %v1736
      %v1738 = vlaneseq
      %v1739 = vshrl.u32 %v1738, 7
      %v1740 = vsub.s32 %v1737, %v1739
      %v1741 = vrot.slane %v1727, %v1740
      %v1742 = vcombine.high %v1734, 0
      %v1743 = vcombine.high %v1741, 0
      %v1744 = vcombine.low %v847, %v863
      %v1746 = vunpack.c.l.s4 1983009808
      %v1747 = vunpack.c.0.s8 %v1746
      %v1748 = vlaneseq
      %v1749 = vshrl.u32 %v1748, 7
      %v1750 = vsub.s32 %v1747, %v1749
      %v1751 = vrot.slane %v1744, %v1750
      %v1752 = vcombine.low %v855, %v871
      %v1754 = vunpack.c.l.s4 1983009808
      %v1755 = vunpack.c.0.s8 %v1754
      %v1756 = vlaneseq
      %v1757 = vshrl.u32 %v1756, 7
      %v1758 = vsub.s32 %v1755, %v1757
      %v1759 = vrot.slane %v1752, %v1758
      %v1760 = vcombine.low %v1751, %v1759
      %v1761 = vcombine.high %v1751, %v1759
      %v1763 = vunpack.c.l.s4 1934713408
      %v1764 = vunpack.c.0.s8 %v1763
      %v1765 = vlaneseq
      %v1766 = vshrl.u32 %v1765, 7
      %v1767 = vsub.s32 %v1764, %v1766
      %v1768 = vrot.slane %v1760, %v1767
      %v1770 = vunpack.c.l.s4 1934713408
      %v1771 = vunpack.c.0.s8 %v1770
      %v1772 = vlaneseq
      %v1773 = vshrl.u32 %v1772, 7
      %v1774 = vsub.s32 %v1771, %v1773
      %v1775 = vrot.slane %v1761, %v1774
      %v1776 = vcombine.high %v1768, 0
      %v1777 = vcombine.high %v1775, 0
      %v1778 = vcombine.low %v851, %v867
      %v1780 = vunpack.c.l.s4 1983009808
      %v1781 = vunpack.c.0.s8 %v1780
      %v1782 = vlaneseq
      %v1783 = vshrl.u32 %v1782, 7
      %v1784 = vsub.s32 %v1781, %v1783
      %v1785 = vrot.slane %v1778, %v1784
      %v1786 = vcombine.low %v859, %v875
      %v1788 = vunpack.c.l.s4 1983009808
      %v1789 = vunpack.c.0.s8 %v1788
      %v1790 = vlaneseq
      %v1791 = vshrl.u32 %v1790, 7
      %v1792 = vsub.s32 %v1789, %v1791
      %v1793 = vrot.slane %v1786, %v1792
      %v1794 = vcombine.low %v1785, %v1793
      %v1795 = vcombine.high %v1785, %v1793
      %v1797 = vunpack.c.l.s4 1934713408
      %v1798 = vunpack.c.0.s8 %v1797
      %v1799 = vlaneseq
      %v1800 = vshrl.u32 %v1799, 7
      %v1801 = vsub.s32 %v1798, %v1800
      %v1802 = vrot.slane %v1794, %v1801
      %v1804 = vunpack.c.l.s4 1934713408
      %v1805 = vunpack.c.0.s8 %v1804
      %v1806 = vlaneseq
      %v1807 = vshrl.u32 %v1806, 7
      %v1808 = vsub.s32 %v1805, %v1807
      %v1809 = vrot.slane %v1795, %v1808
      %v1810 = vcombine.high %v1802, 0
      %v1811 = vcombine.high %v1809, 0
      %v1812 = vcombine.low %v879, %v934
      %v1814 = vunpack.c.l.s4 1983009808
      %v1815 = vunpack.c.0.s8 %v1814
      %v1816 = vlaneseq
      %v1817 = vshrl.u32 %v1816, 7
      %v1818 = vsub.s32 %v1815, %v1817
      %v1819 = vrot.slane %v1812, %v1818
      %v1820 = vcombine.low %v887, %v972
      %v1822 = vunpack.c.l.s4 1983009808
      %v1823 = vunpack.c.0.s8 %v1822
      %v1824 = vlaneseq
      %v1825 = vshrl.u32 %v1824, 7
      %v1826 = vsub.s32 %v1823, %v1825
      %v1827 = vrot.slane %v1820, %v1826
      %v1828 = vcombine.low %v1819, %v1827
      %v1829 = vcombine.high %v1819, %v1827
      %v1831 = vunpack.c.l.s4 1934713408
      %v1832 = vunpack.c.0.s8 %v1831
      %v1833 = vlaneseq
      %v1834 = vshrl.u32 %v1833, 7
      %v1835 = vsub.s32 %v1832, %v1834
      %v1836 = vrot.slane %v1828, %v1835
      %v1838 = vunpack.c.l.s4 1934713408
      %v1839 = vunpack.c.0.s8 %v1838
      %v1840 = vlaneseq
      %v1841 = vshrl.u32 %v1840, 7
      %v1842 = vsub.s32 %v1839, %v1841
      %v1843 = vrot.slane %v1829, %v1842
      %v1844 = vcombine.high %v1836, 0
      %v1845 = vcombine.high %v1843, 0
      %v1846 = vcombine.low %v883, %v953
      %v1848 = vunpack.c.l.s4 1983009808
      %v1849 = vunpack.c.0.s8 %v1848
      %v1850 = vlaneseq
      %v1851 = vshrl.u32 %v1850, 7
      %v1852 = vsub.s32 %v1849, %v1851
      %v1853 = vrot.slane %v1846, %v1852
      %v1854 = vcombine.low %v891, %v991
      %v1856 = vunpack.c.l.s4 1983009808
      %v1857 = vunpack.c.0.s8 %v1856
      %v1858 = vlaneseq
      %v1859 = vshrl.u32 %v1858, 7
      %v1860 = vsub.s32 %v1857, %v1859
      %v1861 = vrot.slane %v1854, %v1860
      %v1862 = vcombine.low %v1853, %v1861
      %v1863 = vcombine.high %v1853, %v1861
      %v1865 = vunpack.c.l.s4 1934713408
      %v1866 = vunpack.c.0.s8 %v1865
      %v1867 = vlaneseq
      %v1868 = vshrl.u32 %v1867, 7
      %v1869 = vsub.s32 %v1866, %v1868
      %v1870 = vrot.slane %v1862, %v1869
      %v1872 = vunpack.c.l.s4 1934713408
      %v1873 = vunpack.c.0.s8 %v1872
      %v1874 = vlaneseq
      %v1875 = vshrl.u32 %v1874, 7
      %v1876 = vsub.s32 %v1873, %v1875
      %v1877 = vrot.slane %v1863, %v1876
      %v1878 = vcombine.high %v1870, 0
      %v1879 = vcombine.high %v1877, 0
      %v1880 = vcombine.low %v1010, %v1086
      %v1882 = vunpack.c.l.s4 1983009808
      %v1883 = vunpack.c.0.s8 %v1882
      %v1884 = vlaneseq
      %v1885 = vshrl.u32 %v1884, 7
      %v1886 = vsub.s32 %v1883, %v1885
      %v1887 = vrot.slane %v1880, %v1886
      %v1888 = vcombine.low %v1048, %v1124
      %v1890 = vunpack.c.l.s4 1983009808
      %v1891 = vunpack.c.0.s8 %v1890
      %v1892 = vlaneseq
      %v1893 = vshrl.u32 %v1892, 7
      %v1894 = vsub.s32 %v1891, %v1893
      %v1895 = vrot.slane %v1888, %v1894
      %v1896 = vcombine.low %v1887, %v1895
      %v1897 = vcombine.high %v1887, %v1895
      %v1899 = vunpack.c.l.s4 1934713408
      %v1900 = vunpack.c.0.s8 %v1899
      %v1901 = vlaneseq
      %v1902 = vshrl.u32 %v1901, 7
      %v1903 = vsub.s32 %v1900, %v1902
      %v1904 = vrot.slane %v1896, %v1903
      %v1906 = vunpack.c.l.s4 1934713408
      %v1907 = vunpack.c.0.s8 %v1906
      %v1908 = vlaneseq
      %v1909 = vshrl.u32 %v1908, 7
      %v1910 = vsub.s32 %v1907, %v1909
      %v1911 = vrot.slane %v1897, %v1910
      %v1912 = vcombine.high %v1904, 0
      %v1913 = vcombine.high %v1911, 0
      %v1914 = vcombine.low %v1029, %v1105
      %v1916 = vunpack.c.l.s4 1983009808
      %v1917 = vunpack.c.0.s8 %v1916
      %v1918 = vlaneseq
      %v1919 = vshrl.u32 %v1918, 7
      %v1920 = vsub.s32 %v1917, %v1919
      %v1921 = vrot.slane %v1914, %v1920
      %v1922 = vcombine.low %v1067, %v1143
      %v1924 = vunpack.c.l.s4 1983009808
      %v1925 = vunpack.c.0.s8 %v1924
      %v1926 = vlaneseq
      %v1927 = vshrl.u32 %v1926, 7
      %v1928 = vsub.s32 %v1925, %v1927
      %v1929 = vrot.slane %v1922, %v1928
      %v1930 = vcombine.low %v1921, %v1929
      %v1931 = vcombine.high %v1921, %v1929
      %v1933 = vunpack.c.l.s4 1934713408
      %v1934 = vunpack.c.0.s8 %v1933
      %v1935 = vlaneseq
      %v1936 = vshrl.u32 %v1935, 7
      %v1937 = vsub.s32 %v1934, %v1936
      %v1938 = vrot.slane %v1930, %v1937
      %v1940 = vunpack.c.l.s4 1934713408
      %v1941 = vunpack.c.0.s8 %v1940
      %v1942 = vlaneseq
      %v1943 = vshrl.u32 %v1942, 7
      %v1944 = vsub.s32 %v1941, %v1943
      %v1945 = vrot.slane %v1931, %v1944
      %v1946 = vcombine.high %v1938, 0
      %v1947 = vcombine.high %v1945, 0
      %v1948 = vcombine.low %v1174, %v1190
      %v1950 = vunpack.c.l.s4 1983009808
      %v1951 = vunpack.c.0.s8 %v1950
      %v1952 = vlaneseq
      %v1953 = vshrl.u32 %v1952, 7
      %v1954 = vsub.s32 %v1951, %v1953
      %v1955 = vrot.slane %v1948, %v1954
      %v1956 = vcombine.low %v1182, %v1198
      %v1958 = vunpack.c.l.s4 1983009808
      %v1959 = vunpack.c.0.s8 %v1958
      %v1960 = vlaneseq
      %v1961 = vshrl.u32 %v1960, 7
      %v1962 = vsub.s32 %v1959, %v1961
      %v1963 = vrot.slane %v1956, %v1962
      %v1964 = vcombine.low %v1955, %v1963
      %v1965 = vcombine.high %v1955, %v1963
      %v1967 = vunpack.c.l.s4 1934713408
      %v1968 = vunpack.c.0.s8 %v1967
      %v1969 = vlaneseq
      %v1970 = vshrl.u32 %v1969, 7
      %v1971 = vsub.s32 %v1968, %v1970
      %v1972 = vrot.slane %v1964, %v1971
      %v1974 = vunpack.c.l.s4 1934713408
      %v1975 = vunpack.c.0.s8 %v1974
      %v1976 = vlaneseq
      %v1977 = vshrl.u32 %v1976, 7
      %v1978 = vsub.s32 %v1975, %v1977
      %v1979 = vrot.slane %v1965, %v1978
      %v1980 = vcombine.high %v1972, 0
      %v1981 = vcombine.high %v1979, 0
      %v1982 = vcombine.low %v1178, %v1194
      %v1984 = vunpack.c.l.s4 1983009808
      %v1985 = vunpack.c.0.s8 %v1984
      %v1986 = vlaneseq
      %v1987 = vshrl.u32 %v1986, 7
      %v1988 = vsub.s32 %v1985, %v1987
      %v1989 = vrot.slane %v1982, %v1988
      %v1990 = vcombine.low %v1186, %v1202
      %v1992 = vunpack.c.l.s4 1983009808
      %v1993 = vunpack.c.0.s8 %v1992
      %v1994 = vlaneseq
      %v1995 = vshrl.u32 %v1994, 7
      %v1996 = vsub.s32 %v1993, %v1995
      %v1997 = vrot.slane %v1990, %v1996
      %v1998 = vcombine.low %v1989, %v1997
      %v1999 = vcombine.high %v1989, %v1997
      %v2001 = vunpack.c.l.s4 1934713408
      %v2002 = vunpack.c.0.s8 %v2001
      %v2003 = vlaneseq
      %v2004 = vshrl.u32 %v2003, 7
      %v2005 = vsub.s32 %v2002, %v2004
      %v2006 = vrot.slane %v1998, %v2005
      %v2008 = vunpack.c.l.s4 1934713408
      %v2009 = vunpack.c.0.s8 %v2008
      %v2010 = vlaneseq
      %v2011 = vshrl.u32 %v2010, 7
      %v2012 = vsub.s32 %v2009, %v2011
      %v2013 = vrot.slane %v1999, %v2012
      %v2014 = vcombine.high %v2006, 0
      %v2015 = vcombine.high %v2013, 0
      %v2016 = vcombine.low %v1206, %v1246
      %v2018 = vunpack.c.l.s4 1983009808
      %v2019 = vunpack.c.0.s8 %v2018
      %v2020 = vlaneseq
      %v2021 = vshrl.u32 %v2020, 7
      %v2022 = vsub.s32 %v2019, %v2021
      %v2023 = vrot.slane %v2016, %v2022
      %v2024 = vcombine.low %v1214, %v1254
      %v2026 = vunpack.c.l.s4 1983009808
      %v2027 = vunpack.c.0.s8 %v2026
      %v2028 = vlaneseq
      %v2029 = vshrl.u32 %v2028, 7
      %v2030 = vsub.s32 %v2027, %v2029
      %v2031 = vrot.slane %v2024, %v2030
      %v2032 = vcombine.low %v2023, %v2031
      %v2033 = vcombine.high %v2023, %v2031
      %v2035 = vunpack.c.l.s4 1934713408
      %v2036 = vunpack.c.0.s8 %v2035
      %v2037 = vlaneseq
      %v2038 = vshrl.u32 %v2037, 7
      %v2039 = vsub.s32 %v2036, %v2038
      %v2040 = vrot.slane %v2032, %v2039
      %v2042 = vunpack.c.l.s4 1934713408
      %v2043 = vunpack.c.0.s8 %v2042
      %v2044 = vlaneseq
      %v2045 = vshrl.u32 %v2044, 7
      %v2046 = vsub.s32 %v2043, %v2045
      %v2047 = vrot.slane %v2033, %v2046
      %v2048 = vcombine.high %v2040, 0
      %v2049 = vcombine.high %v2047, 0
      %v2050 = vcombine.low %v1210, %v1250
      %v2052 = vunpack.c.l.s4 1983009808
      %v2053 = vunpack.c.0.s8 %v2052
      %v2054 = vlaneseq
      %v2055 = vshrl.u32 %v2054, 7
      %v2056 = vsub.s32 %v2053, %v2055
      %v2057 = vrot.slane %v2050, %v2056
      %v2058 = vcombine.low %v1218, %v1258
      %v2060 = vunpack.c.l.s4 1983009808
      %v2061 = vunpack.c.0.s8 %v2060
      %v2062 = vlaneseq
      %v2063 = vshrl.u32 %v2062, 7
      %v2064 = vsub.s32 %v2061, %v2063
      %v2065 = vrot.slane %v2058, %v2064
      %v2066 = vcombine.low %v2057, %v2065
      %v2067 = vcombine.high %v2057, %v2065
      %v2069 = vunpack.c.l.s4 1934713408
      %v2070 = vunpack.c.0.s8 %v2069
      %v2071 = vlaneseq
      %v2072 = vshrl.u32 %v2071, 7
      %v2073 = vsub.s32 %v2070, %v2072
      %v2074 = vrot.slane %v2066, %v2073
      %v2076 = vunpack.c.l.s4 1934713408
      %v2077 = vunpack.c.0.s8 %v2076
      %v2078 = vlaneseq
      %v2079 = vshrl.u32 %v2078, 7
      %v2080 = vsub.s32 %v2077, %v2079
      %v2081 = vrot.slane %v2067, %v2080
      %v2082 = vcombine.high %v2074, 0
      %v2083 = vcombine.high %v2081, 0
      %v2084 = vcombine.low %v1262, %v1278
      %v2086 = vunpack.c.l.s4 1983009808
      %v2087 = vunpack.c.0.s8 %v2086
      %v2088 = vlaneseq
      %v2089 = vshrl.u32 %v2088, 7
      %v2090 = vsub.s32 %v2087, %v2089
      %v2091 = vrot.slane %v2084, %v2090
      %v2092 = vcombine.low %v1270, %v1286
      %v2094 = vunpack.c.l.s4 1983009808
      %v2095 = vunpack.c.0.s8 %v2094
      %v2096 = vlaneseq
      %v2097 = vshrl.u32 %v2096, 7
      %v2098 = vsub.s32 %v2095, %v2097
      %v2099 = vrot.slane %v2092, %v2098
      %v2100 = vcombine.low %v2091, %v2099
      %v2101 = vcombine.high %v2091, %v2099
      %v2103 = vunpack.c.l.s4 1934713408
      %v2104 = vunpack.c.0.s8 %v2103
      %v2105 = vlaneseq
      %v2106 = vshrl.u32 %v2105, 7
      %v2107 = vsub.s32 %v2104, %v2106
      %v2108 = vrot.slane %v2100, %v2107
      %v2110 = vunpack.c.l.s4 1934713408
      %v2111 = vunpack.c.0.s8 %v2110
      %v2112 = vlaneseq
      %v2113 = vshrl.u32 %v2112, 7
      %v2114 = vsub.s32 %v2111, %v2113
      %v2115 = vrot.slane %v2101, %v2114
      %v2116 = vcombine.high %v2108, 0
      %v2117 = vcombine.high %v2115, 0
      %v2118 = vcombine.low %v1266, %v1282
      %v2120 = vunpack.c.l.s4 1983009808
      %v2121 = vunpack.c.0.s8 %v2120
      %v2122 = vlaneseq
      %v2123 = vshrl.u32 %v2122, 7
      %v2124 = vsub.s32 %v2121, %v2123
      %v2125 = vrot.slane %v2118, %v2124
      %v2126 = vcombine.low %v1274, %v1290
      %v2128 = vunpack.c.l.s4 1983009808
      %v2129 = vunpack.c.0.s8 %v2128
      %v2130 = vlaneseq
      %v2131 = vshrl.u32 %v2130, 7
      %v2132 = vsub.s32 %v2129, %v2131
      %v2133 = vrot.slane %v2126, %v2132
      %v2134 = vcombine.low %v2125, %v2133
      %v2135 = vcombine.high %v2125, %v2133
      %v2137 = vunpack.c.l.s4 1934713408
      %v2138 = vunpack.c.0.s8 %v2137
      %v2139 = vlaneseq
      %v2140 = vshrl.u32 %v2139, 7
      %v2141 = vsub.s32 %v2138, %v2140
      %v2142 = vrot.slane %v2134, %v2141
      %v2144 = vunpack.c.l.s4 1934713408
      %v2145 = vunpack.c.0.s8 %v2144
      %v2146 = vlaneseq
      %v2147 = vshrl.u32 %v2146, 7
      %v2148 = vsub.s32 %v2145, %v2147
      %v2149 = vrot.slane %v2135, %v2148
      %v2150 = vcombine.high %v2142, 0
      %v2151 = vcombine.high %v2149, 0
      %v2152 = vcombine.low %v1323, %v1343
      %v2154 = vunpack.c.l.s4 1983009808
      %v2155 = vunpack.c.0.s8 %v2154
      %v2156 = vlaneseq
      %v2157 = vshrl.u32 %v2156, 7
      %v2158 = vsub.s32 %v2155, %v2157
      %v2159 = vrot.slane %v2152, %v2158
      %v2160 = vcombine.low %v1333, %v1353
      %v2162 = vunpack.c.l.s4 1983009808
      %v2163 = vunpack.c.0.s8 %v2162
      %v2164 = vlaneseq
      %v2165 = vshrl.u32 %v2164, 7
      %v2166 = vsub.s32 %v2163, %v2165
      %v2167 = vrot.slane %v2160, %v2166
      %v2168 = vcombine.low %v2159, %v2167
      %v2169 = vcombine.high %v2159, %v2167
      %v2171 = vunpack.c.l.s4 1934713408
      %v2172 = vunpack.c.0.s8 %v2171
      %v2173 = vlaneseq
      %v2174 = vshrl.u32 %v2173, 7
      %v2175 = vsub.s32 %v2172, %v2174
      %v2176 = vrot.slane %v2168, %v2175
      %v2178 = vunpack.c.l.s4 1934713408
      %v2179 = vunpack.c.0.s8 %v2178
      %v2180 = vlaneseq
      %v2181 = vshrl.u32 %v2180, 7
      %v2182 = vsub.s32 %v2179, %v2181
      %v2183 = vrot.slane %v2169, %v2182
      %v2184 = vcombine.high %v2176, 0
      %v2185 = vcombine.high %v2183, 0
      %v2186 = vcombine.low %v1328, %v1348
      %v2188 = vunpack.c.l.s4 1983009808
      %v2189 = vunpack.c.0.s8 %v2188
      %v2190 = vlaneseq
      %v2191 = vshrl.u32 %v2190, 7
      %v2192 = vsub.s32 %v2189, %v2191
      %v2193 = vrot.slane %v2186, %v2192
      %v2194 = vcombine.low %v1338, %v1358
      %v2196 = vunpack.c.l.s4 1983009808
      %v2197 = vunpack.c.0.s8 %v2196
      %v2198 = vlaneseq
      %v2199 = vshrl.u32 %v2198, 7
      %v2200 = vsub.s32 %v2197, %v2199
      %v2201 = vrot.slane %v2194, %v2200
      %v2202 = vcombine.low %v2193, %v2201
      %v2203 = vcombine.high %v2193, %v2201
      %v2205 = vunpack.c.l.s4 1934713408
      %v2206 = vunpack.c.0.s8 %v2205
      %v2207 = vlaneseq
      %v2208 = vshrl.u32 %v2207, 7
      %v2209 = vsub.s32 %v2206, %v2208
      %v2210 = vrot.slane %v2202, %v2209
      %v2212 = vunpack.c.l.s4 1934713408
      %v2213 = vunpack.c.0.s8 %v2212
      %v2214 = vlaneseq
      %v2215 = vshrl.u32 %v2214, 7
      %v2216 = vsub.s32 %v2213, %v2215
      %v2217 = vrot.slane %v2203, %v2216
      %v2218 = vcombine.high %v2210, 0
      %v2219 = vcombine.high %v2217, 0
      %v2220 = vcombine.low %v1363, %v1405
      %v2222 = vunpack.c.l.s4 1983009808
      %v2223 = vunpack.c.0.s8 %v2222
      %v2224 = vlaneseq
      %v2225 = vshrl.u32 %v2224, 7
      %v2226 = vsub.s32 %v2223, %v2225
      %v2227 = vrot.slane %v2220, %v2226
      %v2228 = vcombine.low %v1373, %v1413
      %v2230 = vunpack.c.l.s4 1983009808
      %v2231 = vunpack.c.0.s8 %v2230
      %v2232 = vlaneseq
      %v2233 = vshrl.u32 %v2232, 7
      %v2234 = vsub.s32 %v2231, %v2233
      %v2235 = vrot.slane %v2228, %v2234
      %v2236 = vcombine.low %v2227, %v2235
      %v2237 = vcombine.high %v2227, %v2235
      %v2239 = vunpack.c.l.s4 1934713408
      %v2240 = vunpack.c.0.s8 %v2239
      %v2241 = vlaneseq
      %v2242 = vshrl.u32 %v2241, 7
      %v2243 = vsub.s32 %v2240, %v2242
      %v2244 = vrot.slane %v2236, %v2243
      %v2246 = vunpack.c.l.s4 1934713408
      %v2247 = vunpack.c.0.s8 %v2246
      %v2248 = vlaneseq
      %v2249 = vshrl.u32 %v2248, 7
      %v2250 = vsub.s32 %v2247, %v2249
      %v2251 = vrot.slane %v2237, %v2250
      %v2252 = vcombine.high %v2244, 0
      %v2253 = vcombine.high %v2251, 0
      %v2254 = vcombine.low %v1368, %v1409
      %v2256 = vunpack.c.l.s4 1983009808
      %v2257 = vunpack.c.0.s8 %v2256
      %v2258 = vlaneseq
      %v2259 = vshrl.u32 %v2258, 7
      %v2260 = vsub.s32 %v2257, %v2259
      %v2261 = vrot.slane %v2254, %v2260
      %v2262 = vcombine.low %v1378, %v1417
      %v2264 = vunpack.c.l.s4 1983009808
      %v2265 = vunpack.c.0.s8 %v2264
      %v2266 = vlaneseq
      %v2267 = vshrl.u32 %v2266, 7
      %v2268 = vsub.s32 %v2265, %v2267
      %v2269 = vrot.slane %v2262, %v2268
      %v2270 = vcombine.low %v2261, %v2269
      %v2271 = vcombine.high %v2261, %v2269
      %v2273 = vunpack.c.l.s4 1934713408
      %v2274 = vunpack.c.0.s8 %v2273
      %v2275 = vlaneseq
      %v2276 = vshrl.u32 %v2275, 7
      %v2277 = vsub.s32 %v2274, %v2276
      %v2278 = vrot.slane %v2270, %v2277
      %v2280 = vunpack.c.l.s4 1934713408
      %v2281 = vunpack.c.0.s8 %v2280
      %v2282 = vlaneseq
      %v2283 = vshrl.u32 %v2282, 7
      %v2284 = vsub.s32 %v2281, %v2283
      %v2285 = vrot.slane %v2271, %v2284
      %v2286 = vcombine.high %v2278, 0
      %v2287 = vcombine.high %v2285, 0
      %v2288 = vcombine.low %v1421, %v1437
      %v2290 = vunpack.c.l.s4 1983009808
      %v2291 = vunpack.c.0.s8 %v2290
      %v2292 = vlaneseq
      %v2293 = vshrl.u32 %v2292, 7
      %v2294 = vsub.s32 %v2291, %v2293
      %v2295 = vrot.slane %v2288, %v2294
      %v2296 = vcombine.low %v1429, %v1445
      %v2298 = vunpack.c.l.s4 1983009808
      %v2299 = vunpack.c.0.s8 %v2298
      %v2300 = vlaneseq
      %v2301 = vshrl.u32 %v2300, 7
      %v2302 = vsub.s32 %v2299, %v2301
      %v2303 = vrot.slane %v2296, %v2302
      %v2304 = vcombine.low %v2295, %v2303
      %v2305 = vcombine.high %v2295, %v2303
      %v2307 = vunpack.c.l.s4 1934713408
      %v2308 = vunpack.c.0.s8 %v2307
      %v2309 = vlaneseq
      %v2310 = vshrl.u32 %v2309, 7
      %v2311 = vsub.s32 %v2308, %v2310
      %v2312 = vrot.slane %v2304, %v2311
      %v2314 = vunpack.c.l.s4 1934713408
      %v2315 = vunpack.c.0.s8 %v2314
      %v2316 = vlaneseq
      %v2317 = vshrl.u32 %v2316, 7
      %v2318 = vsub.s32 %v2315, %v2317
      %v2319 = vrot.slane %v2305, %v2318
      %v2320 = vcombine.high %v2312, 0
      %v2321 = vcombine.high %v2319, 0
      %v2322 = vcombine.low %v1425, %v1441
      %v2324 = vunpack.c.l.s4 1983009808
      %v2325 = vunpack.c.0.s8 %v2324
      %v2326 = vlaneseq
      %v2327 = vshrl.u32 %v2326, 7
      %v2328 = vsub.s32 %v2325, %v2327
      %v2329 = vrot.slane %v2322, %v2328
      %v2330 = vcombine.low %v1433, %v1449
      %v2332 = vunpack.c.l.s4 1983009808
      %v2333 = vunpack.c.0.s8 %v2332
      %v2334 = vlaneseq
      %v2335 = vshrl.u32 %v2334, 7
      %v2336 = vsub.s32 %v2333, %v2335
      %v2337 = vrot.slane %v2330, %v2336
      %v2338 = vcombine.low %v2329, %v2337
      %v2339 = vcombine.high %v2329, %v2337
      %v2341 = vunpack.c.l.s4 1934713408
      %v2342 = vunpack.c.0.s8 %v2341
      %v2343 = vlaneseq
      %v2344 = vshrl.u32 %v2343, 7
      %v2345 = vsub.s32 %v2342, %v2344
      %v2346 = vrot.slane %v2338, %v2345
      %v2348 = vunpack.c.l.s4 1934713408
      %v2349 = vunpack.c.0.s8 %v2348
      %v2350 = vlaneseq
      %v2351 = vshrl.u32 %v2350, 7
      %v2352 = vsub.s32 %v2349, %v2351
      %v2353 = vrot.slane %v2339, %v2352
      %v2354 = vcombine.high %v2346, 0
      %v2355 = vcombine.high %v2353, 0
      %v2356 = vcombine.low %v1477, %v1493
      %v2358 = vunpack.c.l.s4 1983009808
      %v2359 = vunpack.c.0.s8 %v2358
      %v2360 = vlaneseq
      %v2361 = vshrl.u32 %v2360, 7
      %v2362 = vsub.s32 %v2359, %v2361
      %v2363 = vrot.slane %v2356, %v2362
      %v2364 = vcombine.low %v1485, %v1501
      %v2366 = vunpack.c.l.s4 1983009808
      %v2367 = vunpack.c.0.s8 %v2366
      %v2368 = vlaneseq
      %v2369 = vshrl.u32 %v2368, 7
      %v2370 = vsub.s32 %v2367, %v2369
      %v2371 = vrot.slane %v2364, %v2370
      %v2372 = vcombine.low %v2363, %v2371
      %v2373 = vcombine.high %v2363, %v2371
      %v2375 = vunpack.c.l.s4 1934713408
      %v2376 = vunpack.c.0.s8 %v2375
      %v2377 = vlaneseq
      %v2378 = vshrl.u32 %v2377, 7
      %v2379 = vsub.s32 %v2376, %v2378
      %v2380 = vrot.slane %v2372, %v2379
      %v2382 = vunpack.c.l.s4 1934713408
      %v2383 = vunpack.c.0.s8 %v2382
      %v2384 = vlaneseq
      %v2385 = vshrl.u32 %v2384, 7
      %v2386 = vsub.s32 %v2383, %v2385
      %v2387 = vrot.slane %v2373, %v2386
      %v2388 = vcombine.high %v2380, 0
      %v2389 = vcombine.high %v2387, 0
      %v2390 = vcombine.low %v1481, %v1497
      %v2392 = vunpack.c.l.s4 1983009808
      %v2393 = vunpack.c.0.s8 %v2392
      %v2394 = vlaneseq
      %v2395 = vshrl.u32 %v2394, 7
      %v2396 = vsub.s32 %v2393, %v2395
      %v2397 = vrot.slane %v2390, %v2396
      %v2398 = vcombine.low %v1489, %v1505
      %v2400 = vunpack.c.l.s4 1983009808
      %v2401 = vunpack.c.0.s8 %v2400
      %v2402 = vlaneseq
      %v2403 = vshrl.u32 %v2402, 7
      %v2404 = vsub.s32 %v2401, %v2403
      %v2405 = vrot.slane %v2398, %v2404
      %v2406 = vcombine.low %v2397, %v2405
      %v2407 = vcombine.high %v2397, %v2405
      %v2409 = vunpack.c.l.s4 1934713408
      %v2410 = vunpack.c.0.s8 %v2409
      %v2411 = vlaneseq
      %v2412 = vshrl.u32 %v2411, 7
      %v2413 = vsub.s32 %v2410, %v2412
      %v2414 = vrot.slane %v2406, %v2413
      %v2416 = vunpack.c.l.s4 1934713408
      %v2417 = vunpack.c.0.s8 %v2416
      %v2418 = vlaneseq
      %v2419 = vshrl.u32 %v2418, 7
      %v2420 = vsub.s32 %v2417, %v2419
      %v2421 = vrot.slane %v2407, %v2420
      %v2422 = vcombine.high %v2414, 0
      %v2423 = vcombine.high %v2421, 0
      %v2426 = vunpack.c.l.s4 1983009808
      %v2427 = vunpack.c.0.s8 %v2426
      %v2428 = vlaneseq
      %v2429 = vshrl.u32 %v2428, 7
      %v2430 = vsub.s32 %v2427, %v2429
      %v2431 = vrot.slane %v1509, %v2430
      %v2434 = vunpack.c.l.s4 1983009808
      %v2435 = vunpack.c.0.s8 %v2434
      %v2436 = vlaneseq
      %v2437 = vshrl.u32 %v2436, 7
      %v2438 = vsub.s32 %v2435, %v2437
      %v2439 = vrot.slane %v1517, %v2438
      %v2440 = vcombine.low %v2431, %v2439
      %v2441 = vcombine.high %v2431, %v2439
      %v2443 = vunpack.c.l.s4 1934713408
      %v2444 = vunpack.c.0.s8 %v2443
      %v2445 = vlaneseq
      %v2446 = vshrl.u32 %v2445, 7
      %v2447 = vsub.s32 %v2444, %v2446
      %v2448 = vrot.slane %v2440, %v2447
      %v2450 = vunpack.c.l.s4 1934713408
      %v2451 = vunpack.c.0.s8 %v2450
      %v2452 = vlaneseq
      %v2453 = vshrl.u32 %v2452, 7
      %v2454 = vsub.s32 %v2451, %v2453
      %v2455 = vrot.slane %v2441, %v2454
      %v2456 = vcombine.high %v2448, 0
      %v2457 = vcombine.high %v2455, 0
      %v2460 = vunpack.c.l.s4 1983009808
      %v2461 = vunpack.c.0.s8 %v2460
      %v2462 = vlaneseq
      %v2463 = vshrl.u32 %v2462, 7
      %v2464 = vsub.s32 %v2461, %v2463
      %v2465 = vrot.slane %v1513, %v2464
      %v2468 = vunpack.c.l.s4 1983009808
      %v2469 = vunpack.c.0.s8 %v2468
      %v2470 = vlaneseq
      %v2471 = vshrl.u32 %v2470, 7
      %v2472 = vsub.s32 %v2469, %v2471
      %v2473 = vrot.slane %v1521, %v2472
      %v2474 = vcombine.low %v2465, %v2473
      %v2475 = vcombine.high %v2465, %v2473
      %v2477 = vunpack.c.l.s4 1934713408
      %v2478 = vunpack.c.0.s8 %v2477
      %v2479 = vlaneseq
      %v2480 = vshrl.u32 %v2479, 7
      %v2481 = vsub.s32 %v2478, %v2480
      %v2482 = vrot.slane %v2474, %v2481
      %v2484 = vunpack.c.l.s4 1934713408
      %v2485 = vunpack.c.0.s8 %v2484
      %v2486 = vlaneseq
      %v2487 = vshrl.u32 %v2486, 7
      %v2488 = vsub.s32 %v2485, %v2487
      %v2489 = vrot.slane %v2475, %v2488
      %v2490 = vcombine.high %v2482, 0
      %v2491 = vcombine.high %v2489, 0
      %v2492 = vcombine.low %v503, %v519
      %v2494 = vunpack.c.l.s4 1983009808
      %v2495 = vunpack.c.0.s8 %v2494
      %v2496 = vlaneseq
      %v2497 = vshrl.u32 %v2496, 7
      %v2498 = vsub.s32 %v2495, %v2497
      %v2499 = vrot.slane %v2492, %v2498
      %v2500 = vcombine.low %v511, %v527
      %v2502 = vunpack.c.l.s4 1983009808
      %v2503 = vunpack.c.0.s8 %v2502
      %v2504 = vlaneseq
      %v2505 = vshrl.u32 %v2504, 7
      %v2506 = vsub.s32 %v2503, %v2505
      %v2507 = vrot.slane %v2500, %v2506
      %v2508 = vcombine.low %v2499, %v2507
      %v2509 = vcombine.high %v2499, %v2507
      %v2511 = vunpack.c.l.s4 1934713408
      %v2512 = vunpack.c.0.s8 %v2511
      %v2513 = vlaneseq
      %v2514 = vshrl.u32 %v2513, 7
      %v2515 = vsub.s32 %v2512, %v2514
      %v2516 = vrot.slane %v2508, %v2515
      %v2517 = vcombine.high %v2516, 0
      %v2519 = vunpack.c.l.s4 1934713408
      %v2520 = vunpack.c.0.s8 %v2519
      %v2521 = vlaneseq
      %v2522 = vshrl.u32 %v2521, 7
      %v2523 = vsub.s32 %v2520, %v2522
      %v2524 = vrot.slane %v2509, %v2523
      %v2525 = vcombine.low %v507, %v523
      %v2527 = vunpack.c.l.s4 1983009808
      %v2528 = vunpack.c.0.s8 %v2527
      %v2529 = vlaneseq
      %v2530 = vshrl.u32 %v2529, 7
      %v2531 = vsub.s32 %v2528, %v2530
      %v2532 = vrot.slane %v2525, %v2531
      %v2533 = vcombine.low %v515, %v531
      %v2535 = vunpack.c.l.s4 1983009808
      %v2536 = vunpack.c.0.s8 %v2535
      %v2537 = vlaneseq
      %v2538 = vshrl.u32 %v2537, 7
      %v2539 = vsub.s32 %v2536, %v2538
      %v2540 = vrot.slane %v2533, %v2539
      %v2541 = vcombine.low %v2532, %v2540
      %v2542 = vcombine.high %v2532, %v2540
      %v2544 = vunpack.c.l.s4 1934713408
      %v2545 = vunpack.c.0.s8 %v2544
      %v2546 = vlaneseq
      %v2547 = vshrl.u32 %v2546, 7
      %v2548 = vsub.s32 %v2545, %v2547
      %v2549 = vrot.slane %v2541, %v2548
      %v2550 = vcombine.high %v2549, 0
      %v2552 = vunpack.c.l.s4 1934713408
      %v2553 = vunpack.c.0.s8 %v2552
      %v2554 = vlaneseq
      %v2555 = vshrl.u32 %v2554, 7
      %v2556 = vsub.s32 %v2553, %v2555
      %v2557 = vrot.slane %v2542, %v2556
      %v2558 = vcombine.low %v757, %v777
      %v2560 = vunpack.c.l.s4 1983009808
      %v2561 = vunpack.c.0.s8 %v2560
      %v2562 = vlaneseq
      %v2563 = vshrl.u32 %v2562, 7
      %v2564 = vsub.s32 %v2561, %v2563
      %v2565 = vrot.slane %v2558, %v2564
      %v2566 = vcombine.low %v761, %v785
      %v2568 = vunpack.c.l.s4 1983009808
      %v2569 = vunpack.c.0.s8 %v2568
      %v2570 = vlaneseq
      %v2571 = vshrl.u32 %v2570, 7
      %v2572 = vsub.s32 %v2569, %v2571
      %v2573 = vrot.slane %v2566, %v2572
      %v2574 = vcombine.low %v2565, %v2573
      %v2575 = vcombine.high %v2565, %v2573
      %v2577 = vunpack.c.l.s4 1934713408
      %v2578 = vunpack.c.0.s8 %v2577
      %v2579 = vlaneseq
      %v2580 = vshrl.u32 %v2579, 7
      %v2581 = vsub.s32 %v2578, %v2580
      %v2582 = vrot.slane %v2574, %v2581
      %v2583 = vcombine.high %v2582, 0
      %v2585 = vunpack.c.l.s4 1934713408
      %v2586 = vunpack.c.0.s8 %v2585
      %v2587 = vlaneseq
      %v2588 = vshrl.u32 %v2587, 7
      %v2589 = vsub.s32 %v2586, %v2588
      %v2590 = vrot.slane %v2575, %v2589
      %v2591 = vcombine.low %v759, %v781
      %v2593 = vunpack.c.l.s4 1983009808
      %v2594 = vunpack.c.0.s8 %v2593
      %v2595 = vlaneseq
      %v2596 = vshrl.u32 %v2595, 7
      %v2597 = vsub.s32 %v2594, %v2596
      %v2598 = vrot.slane %v2591, %v2597
      %v2599 = vcombine.low %v763, %v789
      %v2601 = vunpack.c.l.s4 1983009808
      %v2602 = vunpack.c.0.s8 %v2601
      %v2603 = vlaneseq
      %v2604 = vshrl.u32 %v2603, 7
      %v2605 = vsub.s32 %v2602, %v2604
      %v2606 = vrot.slane %v2599, %v2605
      %v2607 = vcombine.low %v2598, %v2606
      %v2608 = vcombine.high %v2598, %v2606
      %v2610 = vunpack.c.l.s4 1934713408
      %v2611 = vunpack.c.0.s8 %v2610
      %v2612 = vlaneseq
      %v2613 = vshrl.u32 %v2612, 7
      %v2614 = vsub.s32 %v2611, %v2613
      %v2615 = vrot.slane %v2607, %v2614
      %v2616 = vcombine.high %v2615, 0
      %v2618 = vunpack.c.l.s4 1934713408
      %v2619 = vunpack.c.0.s8 %v2618
      %v2620 = vlaneseq
      %v2621 = vshrl.u32 %v2620, 7
      %v2622 = vsub.s32 %v2619, %v2621
      %v2623 = vrot.slane %v2608, %v2622
      %v2624 = vcombine.low %v793, %v809
      %v2626 = vunpack.c.l.s4 1983009808
      %v2627 = vunpack.c.0.s8 %v2626
      %v2628 = vlaneseq
      %v2629 = vshrl.u32 %v2628, 7
      %v2630 = vsub.s32 %v2627, %v2629
      %v2631 = vrot.slane %v2624, %v2630
      %v2632 = vcombine.low %v801, %v817
      %v2634 = vunpack.c.l.s4 1983009808
      %v2635 = vunpack.c.0.s8 %v2634
      %v2636 = vlaneseq
      %v2637 = vshrl.u32 %v2636, 7
      %v2638 = vsub.s32 %v2635, %v2637
      %v2639 = vrot.slane %v2632, %v2638
      %v2640 = vcombine.low %v2631, %v2639
      %v2641 = vcombine.high %v2631, %v2639
      %v2643 = vunpack.c.l.s4 1934713408
      %v2644 = vunpack.c.0.s8 %v2643
      %v2645 = vlaneseq
      %v2646 = vshrl.u32 %v2645, 7
      %v2647 = vsub.s32 %v2644, %v2646
      %v2648 = vrot.slane %v2640, %v2647
      %v2649 = vcombine.high %v2648, 0
      %v2651 = vunpack.c.l.s4 1934713408
      %v2652 = vunpack.c.0.s8 %v2651
      %v2653 = vlaneseq
      %v2654 = vshrl.u32 %v2653, 7
      %v2655 = vsub.s32 %v2652, %v2654
      %v2656 = vrot.slane %v2641, %v2655
      %v2657 = vcombine.low %v797, %v813
      %v2659 = vunpack.c.l.s4 1983009808
      %v2660 = vunpack.c.0.s8 %v2659
      %v2661 = vlaneseq
      %v2662 = vshrl.u32 %v2661, 7
      %v2663 = vsub.s32 %v2660, %v2662
      %v2664 = vrot.slane %v2657, %v2663
      %v2665 = vcombine.low %v805, %v821
      %v2667 = vunpack.c.l.s4 1983009808
      %v2668 = vunpack.c.0.s8 %v2667
      %v2669 = vlaneseq
      %v2670 = vshrl.u32 %v2669, 7
      %v2671 = vsub.s32 %v2668, %v2670
      %v2672 = vrot.slane %v2665, %v2671
      %v2673 = vcombine.low %v2664, %v2672
      %v2674 = vcombine.high %v2664, %v2672
      %v2676 = vunpack.c.l.s4 1934713408
      %v2677 = vunpack.c.0.s8 %v2676
      %v2678 = vlaneseq
      %v2679 = vshrl.u32 %v2678, 7
      %v2680 = vsub.s32 %v2677, %v2679
      %v2681 = vrot.slane %v2673, %v2680
      %v2682 = vcombine.high %v2681, 0
      %v2684 = vunpack.c.l.s4 1934713408
      %v2685 = vunpack.c.0.s8 %v2684
      %v2686 = vlaneseq
      %v2687 = vshrl.u32 %v2686, 7
      %v2688 = vsub.s32 %v2685, %v2687
      %v2689 = vrot.slane %v2674, %v2688
      %v2690 = vcombine.low %v849, %v865
      %v2692 = vunpack.c.l.s4 1983009808
      %v2693 = vunpack.c.0.s8 %v2692
      %v2694 = vlaneseq
      %v2695 = vshrl.u32 %v2694, 7
      %v2696 = vsub.s32 %v2693, %v2695
      %v2697 = vrot.slane %v2690, %v2696
      %v2698 = vcombine.low %v857, %v873
      %v2700 = vunpack.c.l.s4 1983009808
      %v2701 = vunpack.c.0.s8 %v2700
      %v2702 = vlaneseq
      %v2703 = vshrl.u32 %v2702, 7
      %v2704 = vsub.s32 %v2701, %v2703
      %v2705 = vrot.slane %v2698, %v2704
      %v2706 = vcombine.low %v2697, %v2705
      %v2707 = vcombine.high %v2697, %v2705
      %v2709 = vunpack.c.l.s4 1934713408
      %v2710 = vunpack.c.0.s8 %v2709
      %v2711 = vlaneseq
      %v2712 = vshrl.u32 %v2711, 7
      %v2713 = vsub.s32 %v2710, %v2712
      %v2714 = vrot.slane %v2706, %v2713
      %v2715 = vcombine.high %v2714, 0
      %v2717 = vunpack.c.l.s4 1934713408
      %v2718 = vunpack.c.0.s8 %v2717
      %v2719 = vlaneseq
      %v2720 = vshrl.u32 %v2719, 7
      %v2721 = vsub.s32 %v2718, %v2720
      %v2722 = vrot.slane %v2707, %v2721
      %v2723 = vcombine.low %v853, %v869
      %v2725 = vunpack.c.l.s4 1983009808
      %v2726 = vunpack.c.0.s8 %v2725
      %v2727 = vlaneseq
      %v2728 = vshrl.u32 %v2727, 7
      %v2729 = vsub.s32 %v2726, %v2728
      %v2730 = vrot.slane %v2723, %v2729
      %v2731 = vcombine.low %v861, %v877
      %v2733 = vunpack.c.l.s4 1983009808
      %v2734 = vunpack.c.0.s8 %v2733
      %v2735 = vlaneseq
      %v2736 = vshrl.u32 %v2735, 7
      %v2737 = vsub.s32 %v2734, %v2736
      %v2738 = vrot.slane %v2731, %v2737
      %v2739 = vcombine.low %v2730, %v2738
      %v2740 = vcombine.high %v2730, %v2738
      %v2742 = vunpack.c.l.s4 1934713408
      %v2743 = vunpack.c.0.s8 %v2742
      %v2744 = vlaneseq
      %v2745 = vshrl.u32 %v2744, 7
      %v2746 = vsub.s32 %v2743, %v2745
      %v2747 = vrot.slane %v2739, %v2746
      %v2748 = vcombine.high %v2747, 0
      %v2750 = vunpack.c.l.s4 1934713408
      %v2751 = vunpack.c.0.s8 %v2750
      %v2752 = vlaneseq
      %v2753 = vshrl.u32 %v2752, 7
      %v2754 = vsub.s32 %v2751, %v2753
      %v2755 = vrot.slane %v2740, %v2754
      %v2756 = vcombine.low %v881, %v939
      %v2758 = vunpack.c.l.s4 1983009808
      %v2759 = vunpack.c.0.s8 %v2758
      %v2760 = vlaneseq
      %v2761 = vshrl.u32 %v2760, 7
      %v2762 = vsub.s32 %v2759, %v2761
      %v2763 = vrot.slane %v2756, %v2762
      %v2764 = vcombine.low %v889, %v977
      %v2766 = vunpack.c.l.s4 1983009808
      %v2767 = vunpack.c.0.s8 %v2766
      %v2768 = vlaneseq
      %v2769 = vshrl.u32 %v2768, 7
      %v2770 = vsub.s32 %v2767, %v2769
      %v2771 = vrot.slane %v2764, %v2770
      %v2772 = vcombine.low %v2763, %v2771
      %v2773 = vcombine.high %v2763, %v2771
      %v2775 = vunpack.c.l.s4 1934713408
      %v2776 = vunpack.c.0.s8 %v2775
      %v2777 = vlaneseq
      %v2778 = vshrl.u32 %v2777, 7
      %v2779 = vsub.s32 %v2776, %v2778
      %v2780 = vrot.slane %v2772, %v2779
      %v2781 = vcombine.high %v2780, 0
      %v2783 = vunpack.c.l.s4 1934713408
      %v2784 = vunpack.c.0.s8 %v2783
      %v2785 = vlaneseq
      %v2786 = vshrl.u32 %v2785, 7
      %v2787 = vsub.s32 %v2784, %v2786
      %v2788 = vrot.slane %v2773, %v2787
      %v2789 = vcombine.low %v885, %v958
      %v2791 = vunpack.c.l.s4 1983009808
      %v2792 = vunpack.c.0.s8 %v2791
      %v2793 = vlaneseq
      %v2794 = vshrl.u32 %v2793, 7
      %v2795 = vsub.s32 %v2792, %v2794
      %v2796 = vrot.slane %v2789, %v2795
      %v2797 = vcombine.low %v893, %v996
      %v2799 = vunpack.c.l.s4 1983009808
      %v2800 = vunpack.c.0.s8 %v2799
      %v2801 = vlaneseq
      %v2802 = vshrl.u32 %v2801, 7
      %v2803 = vsub.s32 %v2800, %v2802
      %v2804 = vrot.slane %v2797, %v2803
      %v2805 = vcombine.low %v2796, %v2804
      %v2806 = vcombine.high %v2796, %v2804
      %v2808 = vunpack.c.l.s4 1934713408
      %v2809 = vunpack.c.0.s8 %v2808
      %v2810 = vlaneseq
      %v2811 = vshrl.u32 %v2810, 7
      %v2812 = vsub.s32 %v2809, %v2811
      %v2813 = vrot.slane %v2805, %v2812
      %v2814 = vcombine.high %v2813, 0
      %v2816 = vunpack.c.l.s4 1934713408
      %v2817 = vunpack.c.0.s8 %v2816
      %v2818 = vlaneseq
      %v2819 = vshrl.u32 %v2818, 7
      %v2820 = vsub.s32 %v2817, %v2819
      %v2821 = vrot.slane %v2806, %v2820
      %v2822 = vcombine.low %v1015, %v1091
      %v2824 = vunpack.c.l.s4 1983009808
      %v2825 = vunpack.c.0.s8 %v2824
      %v2826 = vlaneseq
      %v2827 = vshrl.u32 %v2826, 7
      %v2828 = vsub.s32 %v2825, %v2827
      %v2829 = vrot.slane %v2822, %v2828
      %v2830 = vcombine.low %v1053, %v1129
      %v2832 = vunpack.c.l.s4 1983009808
      %v2833 = vunpack.c.0.s8 %v2832
      %v2834 = vlaneseq
      %v2835 = vshrl.u32 %v2834, 7
      %v2836 = vsub.s32 %v2833, %v2835
      %v2837 = vrot.slane %v2830, %v2836
      %v2838 = vcombine.low %v2829, %v2837
      %v2839 = vcombine.high %v2829, %v2837
      %v2841 = vunpack.c.l.s4 1934713408
      %v2842 = vunpack.c.0.s8 %v2841
      %v2843 = vlaneseq
      %v2844 = vshrl.u32 %v2843, 7
      %v2845 = vsub.s32 %v2842, %v2844
      %v2846 = vrot.slane %v2838, %v2845
      %v2847 = vcombine.high %v2846, 0
      %v2849 = vunpack.c.l.s4 1934713408
      %v2850 = vunpack.c.0.s8 %v2849
      %v2851 = vlaneseq
      %v2852 = vshrl.u32 %v2851, 7
      %v2853 = vsub.s32 %v2850, %v2852
      %v2854 = vrot.slane %v2839, %v2853
      %v2855 = vcombine.low %v1034, %v1110
      %v2857 = vunpack.c.l.s4 1983009808
      %v2858 = vunpack.c.0.s8 %v2857
      %v2859 = vlaneseq
      %v2860 = vshrl.u32 %v2859, 7
      %v2861 = vsub.s32 %v2858, %v2860
      %v2862 = vrot.slane %v2855, %v2861
      %v2863 = vcombine.low %v1072, %v1148
      %v2865 = vunpack.c.l.s4 1983009808
      %v2866 = vunpack.c.0.s8 %v2865
      %v2867 = vlaneseq
      %v2868 = vshrl.u32 %v2867, 7
      %v2869 = vsub.s32 %v2866, %v2868
      %v2870 = vrot.slane %v2863, %v2869
      %v2871 = vcombine.low %v2862, %v2870
      %v2872 = vcombine.high %v2862, %v2870
      %v2874 = vunpack.c.l.s4 1934713408
      %v2875 = vunpack.c.0.s8 %v2874
      %v2876 = vlaneseq
      %v2877 = vshrl.u32 %v2876, 7
      %v2878 = vsub.s32 %v2875, %v2877
      %v2879 = vrot.slane %v2871, %v2878
      %v2880 = vcombine.high %v2879, 0
      %v2882 = vunpack.c.l.s4 1934713408
      %v2883 = vunpack.c.0.s8 %v2882
      %v2884 = vlaneseq
      %v2885 = vshrl.u32 %v2884, 7
      %v2886 = vsub.s32 %v2883, %v2885
      %v2887 = vrot.slane %v2872, %v2886
      %v2888 = vcombine.low %v1176, %v1192
      %v2890 = vunpack.c.l.s4 1983009808
      %v2891 = vunpack.c.0.s8 %v2890
      %v2892 = vlaneseq
      %v2893 = vshrl.u32 %v2892, 7
      %v2894 = vsub.s32 %v2891, %v2893
      %v2895 = vrot.slane %v2888, %v2894
      %v2896 = vcombine.low %v1184, %v1200
      %v2898 = vunpack.c.l.s4 1983009808
      %v2899 = vunpack.c.0.s8 %v2898
      %v2900 = vlaneseq
      %v2901 = vshrl.u32 %v2900, 7
      %v2902 = vsub.s32 %v2899, %v2901
      %v2903 = vrot.slane %v2896, %v2902
      %v2904 = vcombine.low %v2895, %v2903
      %v2905 = vcombine.high %v2895, %v2903
      %v2907 = vunpack.c.l.s4 1934713408
      %v2908 = vunpack.c.0.s8 %v2907
      %v2909 = vlaneseq
      %v2910 = vshrl.u32 %v2909, 7
      %v2911 = vsub.s32 %v2908, %v2910
      %v2912 = vrot.slane %v2904, %v2911
      %v2913 = vcombine.high %v2912, 0
      %v2915 = vunpack.c.l.s4 1934713408
      %v2916 = vunpack.c.0.s8 %v2915
      %v2917 = vlaneseq
      %v2918 = vshrl.u32 %v2917, 7
      %v2919 = vsub.s32 %v2916, %v2918
      %v2920 = vrot.slane %v2905, %v2919
      %v2921 = vcombine.low %v1180, %v1196
      %v2923 = vunpack.c.l.s4 1983009808
      %v2924 = vunpack.c.0.s8 %v2923
      %v2925 = vlaneseq
      %v2926 = vshrl.u32 %v2925, 7
      %v2927 = vsub.s32 %v2924, %v2926
      %v2928 = vrot.slane %v2921, %v2927
      %v2929 = vcombine.low %v1188, %v1204
      %v2931 = vunpack.c.l.s4 1983009808
      %v2932 = vunpack.c.0.s8 %v2931
      %v2933 = vlaneseq
      %v2934 = vshrl.u32 %v2933, 7
      %v2935 = vsub.s32 %v2932, %v2934
      %v2936 = vrot.slane %v2929, %v2935
      %v2937 = vcombine.low %v2928, %v2936
      %v2938 = vcombine.high %v2928, %v2936
      %v2940 = vunpack.c.l.s4 1934713408
      %v2941 = vunpack.c.0.s8 %v2940
      %v2942 = vlaneseq
      %v2943 = vshrl.u32 %v2942, 7
      %v2944 = vsub.s32 %v2941, %v2943
      %v2945 = vrot.slane %v2937, %v2944
      %v2946 = vcombine.high %v2945, 0
      %v2948 = vunpack.c.l.s4 1934713408
      %v2949 = vunpack.c.0.s8 %v2948
      %v2950 = vlaneseq
      %v2951 = vshrl.u32 %v2950, 7
      %v2952 = vsub.s32 %v2949, %v2951
      %v2953 = vrot.slane %v2938, %v2952
      %v2954 = vcombine.low %v1208, %v1248
      %v2956 = vunpack.c.l.s4 1983009808
      %v2957 = vunpack.c.0.s8 %v2956
      %v2958 = vlaneseq
      %v2959 = vshrl.u32 %v2958, 7
      %v2960 = vsub.s32 %v2957, %v2959
      %v2961 = vrot.slane %v2954, %v2960
      %v2962 = vcombine.low %v1216, %v1256
      %v2964 = vunpack.c.l.s4 1983009808
      %v2965 = vunpack.c.0.s8 %v2964
      %v2966 = vlaneseq
      %v2967 = vshrl.u32 %v2966, 7
      %v2968 = vsub.s32 %v2965, %v2967
      %v2969 = vrot.slane %v2962, %v2968
      %v2970 = vcombine.low %v2961, %v2969
      %v2971 = vcombine.high %v2961, %v2969
      %v2973 = vunpack.c.l.s4 1934713408
      %v2974 = vunpack.c.0.s8 %v2973
      %v2975 = vlaneseq
      %v2976 = vshrl.u32 %v2975, 7
      %v2977 = vsub.s32 %v2974, %v2976
      %v2978 = vrot.slane %v2970, %v2977
      %v2979 = vcombine.high %v2978, 0
      %v2981 = vunpack.c.l.s4 1934713408
      %v2982 = vunpack.c.0.s8 %v2981
      %v2983 = vlaneseq
      %v2984 = vshrl.u32 %v2983, 7
      %v2985 = vsub.s32 %v2982, %v2984
      %v2986 = vrot.slane %v2971, %v2985
      %v2987 = vcombine.low %v1212, %v1252
      %v2989 = vunpack.c.l.s4 1983009808
      %v2990 = vunpack.c.0.s8 %v2989
      %v2991 = vlaneseq
      %v2992 = vshrl.u32 %v2991, 7
      %v2993 = vsub.s32 %v2990, %v2992
      %v2994 = vrot.slane %v2987, %v2993
      %v2995 = vcombine.low %v1220, %v1260
      %v2997 = vunpack.c.l.s4 1983009808
      %v2998 = vunpack.c.0.s8 %v2997
      %v2999 = vlaneseq
      %v3000 = vshrl.u32 %v2999, 7
      %v3001 = vsub.s32 %v2998, %v3000
      %v3002 = vrot.slane %v2995, %v3001
      %v3003 = vcombine.low %v2994, %v3002
      %v3004 = vcombine.high %v2994, %v3002
      %v3006 = vunpack.c.l.s4 1934713408
      %v3007 = vunpack.c.0.s8 %v3006
      %v3008 = vlaneseq
      %v3009 = vshrl.u32 %v3008, 7
      %v3010 = vsub.s32 %v3007, %v3009
      %v3011 = vrot.slane %v3003, %v3010
      %v3012 = vcombine.high %v3011, 0
      %v3014 = vunpack.c.l.s4 1934713408
      %v3015 = vunpack.c.0.s8 %v3014
      %v3016 = vlaneseq
      %v3017 = vshrl.u32 %v3016, 7
      %v3018 = vsub.s32 %v3015, %v3017
      %v3019 = vrot.slane %v3004, %v3018
      %v3020 = vcombine.low %v1264, %v1280
      %v3022 = vunpack.c.l.s4 1983009808
      %v3023 = vunpack.c.0.s8 %v3022
      %v3024 = vlaneseq
      %v3025 = vshrl.u32 %v3024, 7
      %v3026 = vsub.s32 %v3023, %v3025
      %v3027 = vrot.slane %v3020, %v3026
      %v3028 = vcombine.low %v1272, %v1288
      %v3030 = vunpack.c.l.s4 1983009808
      %v3031 = vunpack.c.0.s8 %v3030
      %v3032 = vlaneseq
      %v3033 = vshrl.u32 %v3032, 7
      %v3034 = vsub.s32 %v3031, %v3033
      %v3035 = vrot.slane %v3028, %v3034
      %v3036 = vcombine.low %v3027, %v3035
      %v3037 = vcombine.high %v3027, %v3035
      %v3039 = vunpack.c.l.s4 1934713408
      %v3040 = vunpack.c.0.s8 %v3039
      %v3041 = vlaneseq
      %v3042 = vshrl.u32 %v3041, 7
      %v3043 = vsub.s32 %v3040, %v3042
      %v3044 = vrot.slane %v3036, %v3043
      %v3045 = vcombine.high %v3044, 0
      %v3047 = vunpack.c.l.s4 1934713408
      %v3048 = vunpack.c.0.s8 %v3047
      %v3049 = vlaneseq
      %v3050 = vshrl.u32 %v3049, 7
      %v3051 = vsub.s32 %v3048, %v3050
      %v3052 = vrot.slane %v3037, %v3051
      %v3053 = vcombine.low %v1268, %v1284
      %v3055 = vunpack.c.l.s4 1983009808
      %v3056 = vunpack.c.0.s8 %v3055
      %v3057 = vlaneseq
      %v3058 = vshrl.u32 %v3057, 7
      %v3059 = vsub.s32 %v3056, %v3058
      %v3060 = vrot.slane %v3053, %v3059
      %v3061 = vcombine.low %v1276, %v1292
      %v3063 = vunpack.c.l.s4 1983009808
      %v3064 = vunpack.c.0.s8 %v3063
      %v3065 = vlaneseq
      %v3066 = vshrl.u32 %v3065, 7
      %v3067 = vsub.s32 %v3064, %v3066
      %v3068 = vrot.slane %v3061, %v3067
      %v3069 = vcombine.low %v3060, %v3068
      %v3070 = vcombine.high %v3060, %v3068
      %v3072 = vunpack.c.l.s4 1934713408
      %v3073 = vunpack.c.0.s8 %v3072
      %v3074 = vlaneseq
      %v3075 = vshrl.u32 %v3074, 7
      %v3076 = vsub.s32 %v3073, %v3075
      %v3077 = vrot.slane %v3069, %v3076
      %v3078 = vcombine.high %v3077, 0
      %v3080 = vunpack.c.l.s4 1934713408
      %v3081 = vunpack.c.0.s8 %v3080
      %v3082 = vlaneseq
      %v3083 = vshrl.u32 %v3082, 7
      %v3084 = vsub.s32 %v3081, %v3083
      %v3085 = vrot.slane %v3070, %v3084
      %v3086 = vcombine.low %v1324, %v1344
      %v3088 = vunpack.c.l.s4 1983009808
      %v3089 = vunpack.c.0.s8 %v3088
      %v3090 = vlaneseq
      %v3091 = vshrl.u32 %v3090, 7
      %v3092 = vsub.s32 %v3089, %v3091
      %v3093 = vrot.slane %v3086, %v3092
      %v3094 = vcombine.low %v1334, %v1354
      %v3096 = vunpack.c.l.s4 1983009808
      %v3097 = vunpack.c.0.s8 %v3096
      %v3098 = vlaneseq
      %v3099 = vshrl.u32 %v3098, 7
      %v3100 = vsub.s32 %v3097, %v3099
      %v3101 = vrot.slane %v3094, %v3100
      %v3102 = vcombine.low %v3093, %v3101
      %v3103 = vcombine.high %v3093, %v3101
      %v3105 = vunpack.c.l.s4 1934713408
      %v3106 = vunpack.c.0.s8 %v3105
      %v3107 = vlaneseq
      %v3108 = vshrl.u32 %v3107, 7
      %v3109 = vsub.s32 %v3106, %v3108
      %v3110 = vrot.slane %v3102, %v3109
      %v3111 = vcombine.high %v3110, 0
      %v3113 = vunpack.c.l.s4 1934713408
      %v3114 = vunpack.c.0.s8 %v3113
      %v3115 = vlaneseq
      %v3116 = vshrl.u32 %v3115, 7
      %v3117 = vsub.s32 %v3114, %v3116
      %v3118 = vrot.slane %v3103, %v3117
      %v3119 = vcombine.low %v1329, %v1349
      %v3121 = vunpack.c.l.s4 1983009808
      %v3122 = vunpack.c.0.s8 %v3121
      %v3123 = vlaneseq
      %v3124 = vshrl.u32 %v3123, 7
      %v3125 = vsub.s32 %v3122, %v3124
      %v3126 = vrot.slane %v3119, %v3125
      %v3127 = vcombine.low %v1339, %v1359
      %v3129 = vunpack.c.l.s4 1983009808
      %v3130 = vunpack.c.0.s8 %v3129
      %v3131 = vlaneseq
      %v3132 = vshrl.u32 %v3131, 7
      %v3133 = vsub.s32 %v3130, %v3132
      %v3134 = vrot.slane %v3127, %v3133
      %v3135 = vcombine.low %v3126, %v3134
      %v3136 = vcombine.high %v3126, %v3134
      %v3138 = vunpack.c.l.s4 1934713408
      %v3139 = vunpack.c.0.s8 %v3138
      %v3140 = vlaneseq
      %v3141 = vshrl.u32 %v3140, 7
      %v3142 = vsub.s32 %v3139, %v3141
      %v3143 = vrot.slane %v3135, %v3142
      %v3144 = vcombine.high %v3143, 0
      %v3146 = vunpack.c.l.s4 1934713408
      %v3147 = vunpack.c.0.s8 %v3146
      %v3148 = vlaneseq
      %v3149 = vshrl.u32 %v3148, 7
      %v3150 = vsub.s32 %v3147, %v3149
      %v3151 = vrot.slane %v3136, %v3150
      %v3152 = vcombine.low %v1364, %v1407
      %v3154 = vunpack.c.l.s4 1983009808
      %v3155 = vunpack.c.0.s8 %v3154
      %v3156 = vlaneseq
      %v3157 = vshrl.u32 %v3156, 7
      %v3158 = vsub.s32 %v3155, %v3157
      %v3159 = vrot.slane %v3152, %v3158
      %v3160 = vcombine.low %v1374, %v1415
      %v3162 = vunpack.c.l.s4 1983009808
      %v3163 = vunpack.c.0.s8 %v3162
      %v3164 = vlaneseq
      %v3165 = vshrl.u32 %v3164, 7
      %v3166 = vsub.s32 %v3163, %v3165
      %v3167 = vrot.slane %v3160, %v3166
      %v3168 = vcombine.low %v3159, %v3167
      %v3169 = vcombine.high %v3159, %v3167
      %v3171 = vunpack.c.l.s4 1934713408
      %v3172 = vunpack.c.0.s8 %v3171
      %v3173 = vlaneseq
      %v3174 = vshrl.u32 %v3173, 7
      %v3175 = vsub.s32 %v3172, %v3174
      %v3176 = vrot.slane %v3168, %v3175
      %v3177 = vcombine.high %v3176, 0
      %v3179 = vunpack.c.l.s4 1934713408
      %v3180 = vunpack.c.0.s8 %v3179
      %v3181 = vlaneseq
      %v3182 = vshrl.u32 %v3181, 7
      %v3183 = vsub.s32 %v3180, %v3182
      %v3184 = vrot.slane %v3169, %v3183
      %v3185 = vcombine.low %v1369, %v1411
      %v3187 = vunpack.c.l.s4 1983009808
      %v3188 = vunpack.c.0.s8 %v3187
      %v3189 = vlaneseq
      %v3190 = vshrl.u32 %v3189, 7
      %v3191 = vsub.s32 %v3188, %v3190
      %v3192 = vrot.slane %v3185, %v3191
      %v3193 = vcombine.low %v1379, %v1419
      %v3195 = vunpack.c.l.s4 1983009808
      %v3196 = vunpack.c.0.s8 %v3195
      %v3197 = vlaneseq
      %v3198 = vshrl.u32 %v3197, 7
      %v3199 = vsub.s32 %v3196, %v3198
      %v3200 = vrot.slane %v3193, %v3199
      %v3201 = vcombine.low %v3192, %v3200
      %v3202 = vcombine.high %v3192, %v3200
      %v3204 = vunpack.c.l.s4 1934713408
      %v3205 = vunpack.c.0.s8 %v3204
      %v3206 = vlaneseq
      %v3207 = vshrl.u32 %v3206, 7
      %v3208 = vsub.s32 %v3205, %v3207
      %v3209 = vrot.slane %v3201, %v3208
      %v3210 = vcombine.high %v3209, 0
      %v3212 = vunpack.c.l.s4 1934713408
      %v3213 = vunpack.c.0.s8 %v3212
      %v3214 = vlaneseq
      %v3215 = vshrl.u32 %v3214, 7
      %v3216 = vsub.s32 %v3213, %v3215
      %v3217 = vrot.slane %v3202, %v3216
      %v3218 = vcombine.low %v1423, %v1439
      %v3220 = vunpack.c.l.s4 1983009808
      %v3221 = vunpack.c.0.s8 %v3220
      %v3222 = vlaneseq
      %v3223 = vshrl.u32 %v3222, 7
      %v3224 = vsub.s32 %v3221, %v3223
      %v3225 = vrot.slane %v3218, %v3224
      %v3226 = vcombine.low %v1431, %v1447
      %v3228 = vunpack.c.l.s4 1983009808
      %v3229 = vunpack.c.0.s8 %v3228
      %v3230 = vlaneseq
      %v3231 = vshrl.u32 %v3230, 7
      %v3232 = vsub.s32 %v3229, %v3231
      %v3233 = vrot.slane %v3226, %v3232
      %v3234 = vcombine.low %v3225, %v3233
      %v3235 = vcombine.high %v3225, %v3233
      %v3237 = vunpack.c.l.s4 1934713408
      %v3238 = vunpack.c.0.s8 %v3237
      %v3239 = vlaneseq
      %v3240 = vshrl.u32 %v3239, 7
      %v3241 = vsub.s32 %v3238, %v3240
      %v3242 = vrot.slane %v3234, %v3241
      %v3243 = vcombine.high %v3242, 0
      %v3245 = vunpack.c.l.s4 1934713408
      %v3246 = vunpack.c.0.s8 %v3245
      %v3247 = vlaneseq
      %v3248 = vshrl.u32 %v3247, 7
      %v3249 = vsub.s32 %v3246, %v3248
      %v3250 = vrot.slane %v3235, %v3249
      %v3251 = vcombine.low %v1427, %v1443
      %v3253 = vunpack.c.l.s4 1983009808
      %v3254 = vunpack.c.0.s8 %v3253
      %v3255 = vlaneseq
      %v3256 = vshrl.u32 %v3255, 7
      %v3257 = vsub.s32 %v3254, %v3256
      %v3258 = vrot.slane %v3251, %v3257
      %v3259 = vcombine.low %v1435, %v1451
      %v3261 = vunpack.c.l.s4 1983009808
      %v3262 = vunpack.c.0.s8 %v3261
      %v3263 = vlaneseq
      %v3264 = vshrl.u32 %v3263, 7
      %v3265 = vsub.s32 %v3262, %v3264
      %v3266 = vrot.slane %v3259, %v3265
      %v3267 = vcombine.low %v3258, %v3266
      %v3268 = vcombine.high %v3258, %v3266
      %v3270 = vunpack.c.l.s4 1934713408
      %v3271 = vunpack.c.0.s8 %v3270
      %v3272 = vlaneseq
      %v3273 = vshrl.u32 %v3272, 7
      %v3274 = vsub.s32 %v3271, %v3273
      %v3275 = vrot.slane %v3267, %v3274
      %v3276 = vcombine.high %v3275, 0
      %v3278 = vunpack.c.l.s4 1934713408
      %v3279 = vunpack.c.0.s8 %v3278
      %v3280 = vlaneseq
      %v3281 = vshrl.u32 %v3280, 7
      %v3282 = vsub.s32 %v3279, %v3281
      %v3283 = vrot.slane %v3268, %v3282
      %v3284 = vcombine.low %v1479, %v1495
      %v3286 = vunpack.c.l.s4 1983009808
      %v3287 = vunpack.c.0.s8 %v3286
      %v3288 = vlaneseq
      %v3289 = vshrl.u32 %v3288, 7
      %v3290 = vsub.s32 %v3287, %v3289
      %v3291 = vrot.slane %v3284, %v3290
      %v3292 = vcombine.low %v1487, %v1503
      %v3294 = vunpack.c.l.s4 1983009808
      %v3295 = vunpack.c.0.s8 %v3294
      %v3296 = vlaneseq
      %v3297 = vshrl.u32 %v3296, 7
      %v3298 = vsub.s32 %v3295, %v3297
      %v3299 = vrot.slane %v3292, %v3298
      %v3300 = vcombine.low %v3291, %v3299
      %v3301 = vcombine.high %v3291, %v3299
      %v3303 = vunpack.c.l.s4 1934713408
      %v3304 = vunpack.c.0.s8 %v3303
      %v3305 = vlaneseq
      %v3306 = vshrl.u32 %v3305, 7
      %v3307 = vsub.s32 %v3304, %v3306
      %v3308 = vrot.slane %v3300, %v3307
      %v3309 = vcombine.high %v3308, 0
      %v3311 = vunpack.c.l.s4 1934713408
      %v3312 = vunpack.c.0.s8 %v3311
      %v3313 = vlaneseq
      %v3314 = vshrl.u32 %v3313, 7
      %v3315 = vsub.s32 %v3312, %v3314
      %v3316 = vrot.slane %v3301, %v3315
      %v3317 = vcombine.low %v1483, %v1499
      %v3319 = vunpack.c.l.s4 1983009808
      %v3320 = vunpack.c.0.s8 %v3319
      %v3321 = vlaneseq
      %v3322 = vshrl.u32 %v3321, 7
      %v3323 = vsub.s32 %v3320, %v3322
      %v3324 = vrot.slane %v3317, %v3323
      %v3325 = vcombine.low %v1491, %v1507
      %v3327 = vunpack.c.l.s4 1983009808
      %v3328 = vunpack.c.0.s8 %v3327
      %v3329 = vlaneseq
      %v3330 = vshrl.u32 %v3329, 7
      %v3331 = vsub.s32 %v3328, %v3330
      %v3332 = vrot.slane %v3325, %v3331
      %v3333 = vcombine.low %v3324, %v3332
      %v3334 = vcombine.high %v3324, %v3332
      %v3336 = vunpack.c.l.s4 1934713408
      %v3337 = vunpack.c.0.s8 %v3336
      %v3338 = vlaneseq
      %v3339 = vshrl.u32 %v3338, 7
      %v3340 = vsub.s32 %v3337, %v3339
      %v3341 = vrot.slane %v3333, %v3340
      %v3342 = vcombine.high %v3341, 0
      %v3344 = vunpack.c.l.s4 1934713408
      %v3345 = vunpack.c.0.s8 %v3344
      %v3346 = vlaneseq
      %v3347 = vshrl.u32 %v3346, 7
      %v3348 = vsub.s32 %v3345, %v3347
      %v3349 = vrot.slane %v3334, %v3348
      %v3352 = vunpack.c.l.s4 1983009808
      %v3353 = vunpack.c.0.s8 %v3352
      %v3354 = vlaneseq
      %v3355 = vshrl.u32 %v3354, 7
      %v3356 = vsub.s32 %v3353, %v3355
      %v3357 = vrot.slane %v1511, %v3356
      %v3360 = vunpack.c.l.s4 1983009808
      %v3361 = vunpack.c.0.s8 %v3360
      %v3362 = vlaneseq
      %v3363 = vshrl.u32 %v3362, 7
      %v3364 = vsub.s32 %v3361, %v3363
      %v3365 = vrot.slane %v1519, %v3364
      %v3366 = vcombine.low %v3357, %v3365
      %v3367 = vcombine.high %v3357, %v3365
      %v3369 = vunpack.c.l.s4 1934713408
      %v3370 = vunpack.c.0.s8 %v3369
      %v3371 = vlaneseq
      %v3372 = vshrl.u32 %v3371, 7
      %v3373 = vsub.s32 %v3370, %v3372
      %v3374 = vrot.slane %v3366, %v3373
      %v3375 = vcombine.high %v3374, 0
      %v3377 = vunpack.c.l.s4 1934713408
      %v3378 = vunpack.c.0.s8 %v3377
      %v3379 = vlaneseq
      %v3380 = vshrl.u32 %v3379, 7
      %v3381 = vsub.s32 %v3378, %v3380
      %v3382 = vrot.slane %v3367, %v3381
      %v3385 = vunpack.c.l.s4 1983009808
      %v3386 = vunpack.c.0.s8 %v3385
      %v3387 = vlaneseq
      %v3388 = vshrl.u32 %v3387, 7
      %v3389 = vsub.s32 %v3386, %v3388
      %v3390 = vrot.slane %v1515, %v3389
      %v3393 = vunpack.c.l.s4 1983009808
      %v3394 = vunpack.c.0.s8 %v3393
      %v3395 = vlaneseq
      %v3396 = vshrl.u32 %v3395, 7
      %v3397 = vsub.s32 %v3394, %v3396
      %v3398 = vrot.slane %v1523, %v3397
      %v3399 = vcombine.low %v3390, %v3398
      %v3400 = vcombine.high %v3390, %v3398
      %v3402 = vunpack.c.l.s4 1934713408
      %v3403 = vunpack.c.0.s8 %v3402
      %v3404 = vlaneseq
      %v3405 = vshrl.u32 %v3404, 7
      %v3406 = vsub.s32 %v3403, %v3405
      %v3407 = vrot.slane %v3399, %v3406
      %v3408 = vcombine.high %v3407, 0
      %v3410 = vunpack.c.l.s4 1934713408
      %v3411 = vunpack.c.0.s8 %v3410
      %v3412 = vlaneseq
      %v3413 = vshrl.u32 %v3412, 7
      %v3414 = vsub.s32 %v3411, %v3413
      %v3415 = vrot.slane %v3400, %v3414
      %v3418 = vpack.i.b16 %v1598, %v1564
      %v3419 = vshrl.u32 %v1564, 16
      %v3420 = vshrl.u32 %v1598, 16
      %v3421 = vpack.i.b16 %v3420, %v3419
      %v3424 = vpack.i.b16 %v1606, %v1572
      %v3425 = vshrl.u32 %v1572, 16
      %v3426 = vshrl.u32 %v1606, 16
      %v3427 = vpack.i.b16 %v3426, %v3425
      %v3430 = vpack.i.b16 %v1605, %v1571
      %v3431 = vshrl.u32 %v1571, 16
      %v3432 = vshrl.u32 %v1605, 16
      %v3433 = vpack.i.b16 %v3432, %v3431
      %v3436 = vpack.i.b16 %v1607, %v1573
      %v3437 = vshrl.u32 %v1573, 16
      %v3438 = vshrl.u32 %v1607, 16
      %v3439 = vpack.i.b16 %v3438, %v3437
      %v3442 = vpack.i.b16 %v2549, %v2516
      %v3443 = vshrl.u32 %v2516, 16
      %v3444 = vshrl.u32 %v2549, 16
      %v3445 = vpack.i.b16 %v3444, %v3443
      %v3448 = vpack.i.b16 %v2550, %v2517
      %v3449 = vshrl.u32 %v2517, 16
      %v3450 = vshrl.u32 %v2550, 16
      %v3451 = vpack.i.b16 %v3450, %v3449
      %v3454 = vpack.i.b16 %v2557, %v2524
      %v3455 = vshrl.u32 %v2524, 16
      %v3456 = vshrl.u32 %v2557, 16
      %v3457 = vpack.i.b16 %v3456, %v3455
      %v3460 = vpack.i.b16 %v1666, %v1632
      %v3461 = vshrl.u32 %v1632, 16
      %v3462 = vshrl.u32 %v1666, 16
      %v3463 = vpack.i.b16 %v3462, %v3461
      %v3466 = vpack.i.b16 %v1674, %v1640
      %v3467 = vshrl.u32 %v1640, 16
      %v3468 = vshrl.u32 %v1674, 16
      %v3469 = vpack.i.b16 %v3468, %v3467
      %v3472 = vpack.i.b16 %v1673, %v1639
      %v3473 = vshrl.u32 %v1639, 16
      %v3474 = vshrl.u32 %v1673, 16
      %v3475 = vpack.i.b16 %v3474, %v3473
      %v3478 = vpack.i.b16 %v1675, %v1641
      %v3479 = vshrl.u32 %v1641, 16
      %v3480 = vshrl.u32 %v1675, 16
      %v3481 = vpack.i.b16 %v3480, %v3479
      %v3484 = vpack.i.b16 %v2615, %v2582
      %v3485 = vshrl.u32 %v2582, 16
      %v3486 = vshrl.u32 %v2615, 16
      %v3487 = vpack.i.b16 %v3486, %v3485
      %v3490 = vpack.i.b16 %v2616, %v2583
      %v3491 = vshrl.u32 %v2583, 16
      %v3492 = vshrl.u32 %v2616, 16
      %v3493 = vpack.i.b16 %v3492, %v3491
      %v3496 = vpack.i.b16 %v2623, %v2590
      %v3497 = vshrl.u32 %v2590, 16
      %v3498 = vshrl.u32 %v2623, 16
      %v3499 = vpack.i.b16 %v3498, %v3497
      %v3502 = vpack.i.b16 %v1734, %v1700
      %v3503 = vshrl.u32 %v1700, 16
      %v3504 = vshrl.u32 %v1734, 16
      %v3505 = vpack.i.b16 %v3504, %v3503
      %v3508 = vpack.i.b16 %v1742, %v1708
      %v3509 = vshrl.u32 %v1708, 16
      %v3510 = vshrl.u32 %v1742, 16
      %v3511 = vpack.i.b16 %v3510, %v3509
      %v3514 = vpack.i.b16 %v1741, %v1707
      %v3515 = vshrl.u32 %v1707, 16
      %v3516 = vshrl.u32 %v1741, 16
      %v3517 = vpack.i.b16 %v3516, %v3515
      %v3520 = vpack.i.b16 %v1743, %v1709
      %v3521 = vshrl.u32 %v1709, 16
      %v3522 = vshrl.u32 %v1743, 16
      %v3523 = vpack.i.b16 %v3522, %v3521
      %v3526 = vpack.i.b16 %v2681, %v2648
      %v3527 = vshrl.u32 %v2648, 16
      %v3528 = vshrl.u32 %v2681, 16
      %v3529 = vpack.i.b16 %v3528, %v3527
      %v3532 = vpack.i.b16 %v2682, %v2649
      %v3533 = vshrl.u32 %v2649, 16
      %v3534 = vshrl.u32 %v2682, 16
      %v3535 = vpack.i.b16 %v3534, %v3533
      %v3538 = vpack.i.b16 %v2689, %v2656
      %v3539 = vshrl.u32 %v2656, 16
      %v3540 = vshrl.u32 %v2689, 16
      %v3541 = vpack.i.b16 %v3540, %v3539
      %v3544 = vpack.i.b16 %v1802, %v1768
      %v3545 = vshrl.u32 %v1768, 16
      %v3546 = vshrl.u32 %v1802, 16
      %v3547 = vpack.i.b16 %v3546, %v3545
      %v3550 = vpack.i.b16 %v1810, %v1776
      %v3551 = vshrl.u32 %v1776, 16
      %v3552 = vshrl.u32 %v1810, 16
      %v3553 = vpack.i.b16 %v3552, %v3551
      %v3556 = vpack.i.b16 %v1809, %v1775
      %v3557 = vshrl.u32 %v1775, 16
      %v3558 = vshrl.u32 %v1809, 16
      %v3559 = vpack.i.b16 %v3558, %v3557
      %v3562 = vpack.i.b16 %v1811, %v1777
      %v3563 = vshrl.u32 %v1777, 16
      %v3564 = vshrl.u32 %v1811, 16
      %v3565 = vpack.i.b16 %v3564, %v3563
      %v3568 = vpack.i.b16 %v2747, %v2714
      %v3569 = vshrl.u32 %v2714, 16
      %v3570 = vshrl.u32 %v2747, 16
      %v3571 = vpack.i.b16 %v3570, %v3569
      %v3574 = vpack.i.b16 %v2748, %v2715
      %v3575 = vshrl.u32 %v2715, 16
      %v3576 = vshrl.u32 %v2748, 16
      %v3577 = vpack.i.b16 %v3576, %v3575
      %v3580 = vpack.i.b16 %v2755, %v2722
      %v3581 = vshrl.u32 %v2722, 16
      %v3582 = vshrl.u32 %v2755, 16
      %v3583 = vpack.i.b16 %v3582, %v3581
      %v3586 = vpack.i.b16 %v1870, %v1836
      %v3587 = vshrl.u32 %v1836, 16
      %v3588 = vshrl.u32 %v1870, 16
      %v3589 = vpack.i.b16 %v3588, %v3587
      %v3592 = vpack.i.b16 %v1878, %v1844
      %v3593 = vshrl.u32 %v1844, 16
      %v3594 = vshrl.u32 %v1878, 16
      %v3595 = vpack.i.b16 %v3594, %v3593
      %v3598 = vpack.i.b16 %v1877, %v1843
      %v3599 = vshrl.u32 %v1843, 16
      %v3600 = vshrl.u32 %v1877, 16
      %v3601 = vpack.i.b16 %v3600, %v3599
      %v3604 = vpack.i.b16 %v1879, %v1845
      %v3605 = vshrl.u32 %v1845, 16
      %v3606 = vshrl.u32 %v1879, 16
      %v3607 = vpack.i.b16 %v3606, %v3605
      %v3610 = vpack.i.b16 %v2813, %v2780
      %v3611 = vshrl.u32 %v2780, 16
      %v3612 = vshrl.u32 %v2813, 16
      %v3613 = vpack.i.b16 %v3612, %v3611
      %v3616 = vpack.i.b16 %v2814, %v2781
      %v3617 = vshrl.u32 %v2781, 16
      %v3618 = vshrl.u32 %v2814, 16
      %v3619 = vpack.i.b16 %v3618, %v3617
      %v3622 = vpack.i.b16 %v2821, %v2788
      %v3623 = vshrl.u32 %v2788, 16
      %v3624 = vshrl.u32 %v2821, 16
      %v3625 = vpack.i.b16 %v3624, %v3623
      %v3628 = vpack.i.b16 %v1938, %v1904
      %v3629 = vshrl.u32 %v1904, 16
      %v3630 = vshrl.u32 %v1938, 16
      %v3631 = vpack.i.b16 %v3630, %v3629
      %v3634 = vpack.i.b16 %v1946, %v1912
      %v3635 = vshrl.u32 %v1912, 16
      %v3636 = vshrl.u32 %v1946, 16
      %v3637 = vpack.i.b16 %v3636, %v3635
      %v3640 = vpack.i.b16 %v1945, %v1911
      %v3641 = vshrl.u32 %v1911, 16
      %v3642 = vshrl.u32 %v1945, 16
      %v3643 = vpack.i.b16 %v3642, %v3641
      %v3646 = vpack.i.b16 %v1947, %v1913
      %v3647 = vshrl.u32 %v1913, 16
      %v3648 = vshrl.u32 %v1947, 16
      %v3649 = vpack.i.b16 %v3648, %v3647
      %v3652 = vpack.i.b16 %v2879, %v2846
      %v3653 = vshrl.u32 %v2846, 16
      %v3654 = vshrl.u32 %v2879, 16
      %v3655 = vpack.i.b16 %v3654, %v3653
      %v3658 = vpack.i.b16 %v2880, %v2847
      %v3659 = vshrl.u32 %v2847, 16
      %v3660 = vshrl.u32 %v2880, 16
      %v3661 = vpack.i.b16 %v3660, %v3659
      %v3664 = vpack.i.b16 %v2887, %v2854
      %v3665 = vshrl.u32 %v2854, 16
      %v3666 = vshrl.u32 %v2887, 16
      %v3667 = vpack.i.b16 %v3666, %v3665
      %v3670 = vpack.i.b16 %v2006, %v1972
      %v3671 = vshrl.u32 %v1972, 16
      %v3672 = vshrl.u32 %v2006, 16
      %v3673 = vpack.i.b16 %v3672, %v3671
      %v3676 = vpack.i.b16 %v2014, %v1980
      %v3677 = vshrl.u32 %v1980, 16
      %v3678 = vshrl.u32 %v2014, 16
      %v3679 = vpack.i.b16 %v3678, %v3677
      %v3682 = vpack.i.b16 %v2013, %v1979
      %v3683 = vshrl.u32 %v1979, 16
      %v3684 = vshrl.u32 %v2013, 16
      %v3685 = vpack.i.b16 %v3684, %v3683
      %v3688 = vpack.i.b16 %v2015, %v1981
      %v3689 = vshrl.u32 %v1981, 16
      %v3690 = vshrl.u32 %v2015, 16
      %v3691 = vpack.i.b16 %v3690, %v3689
      %v3694 = vpack.i.b16 %v2945, %v2912
      %v3695 = vshrl.u32 %v2912, 16
      %v3696 = vshrl.u32 %v2945, 16
      %v3697 = vpack.i.b16 %v3696, %v3695
      %v3700 = vpack.i.b16 %v2946, %v2913
      %v3701 = vshrl.u32 %v2913, 16
      %v3702 = vshrl.u32 %v2946, 16
      %v3703 = vpack.i.b16 %v3702, %v3701
      %v3706 = vpack.i.b16 %v2953, %v2920
      %v3707 = vshrl.u32 %v2920, 16
      %v3708 = vshrl.u32 %v2953, 16
      %v3709 = vpack.i.b16 %v3708, %v3707
      %v3712 = vpack.i.b16 %v2074, %v2040
      %v3713 = vshrl.u32 %v2040, 16
      %v3714 = vshrl.u32 %v2074, 16
      %v3715 = vpack.i.b16 %v3714, %v3713
      %v3718 = vpack.i.b16 %v2082, %v2048
      %v3719 = vshrl.u32 %v2048, 16
      %v3720 = vshrl.u32 %v2082, 16
      %v3721 = vpack.i.b16 %v3720, %v3719
      %v3724 = vpack.i.b16 %v2081, %v2047
      %v3725 = vshrl.u32 %v2047, 16
      %v3726 = vshrl.u32 %v2081, 16
      %v3727 = vpack.i.b16 %v3726, %v3725
      %v3730 = vpack.i.b16 %v2083, %v2049
      %v3731 = vshrl.u32 %v2049, 16
      %v3732 = vshrl.u32 %v2083, 16
      %v3733 = vpack.i.b16 %v3732, %v3731
      %v3736 = vpack.i.b16 %v3011, %v2978
      %v3737 = vshrl.u32 %v2978, 16
      %v3738 = vshrl.u32 %v3011, 16
      %v3739 = vpack.i.b16 %v3738, %v3737
      %v3742 = vpack.i.b16 %v3012, %v2979
      %v3743 = vshrl.u32 %v2979, 16
      %v3744 = vshrl.u32 %v3012, 16
      %v3745 = vpack.i.b16 %v3744, %v3743
      %v3748 = vpack.i.b16 %v3019, %v2986
      %v3749 = vshrl.u32 %v2986, 16
      %v3750 = vshrl.u32 %v3019, 16
      %v3751 = vpack.i.b16 %v3750, %v3749
      %v3754 = vpack.i.b16 %v2142, %v2108
      %v3755 = vshrl.u32 %v2108, 16
      %v3756 = vshrl.u32 %v2142, 16
      %v3757 = vpack.i.b16 %v3756, %v3755
      %v3760 = vpack.i.b16 %v2150, %v2116
      %v3761 = vshrl.u32 %v2116, 16
      %v3762 = vshrl.u32 %v2150, 16
      %v3763 = vpack.i.b16 %v3762, %v3761
      %v3766 = vpack.i.b16 %v2149, %v2115
      %v3767 = vshrl.u32 %v2115, 16
      %v3768 = vshrl.u32 %v2149, 16
      %v3769 = vpack.i.b16 %v3768, %v3767
      %v3772 = vpack.i.b16 %v2151, %v2117
      %v3773 = vshrl.u32 %v2117, 16
      %v3774 = vshrl.u32 %v2151, 16
      %v3775 = vpack.i.b16 %v3774, %v3773
      %v3778 = vpack.i.b16 %v3077, %v3044
      %v3779 = vshrl.u32 %v3044, 16
      %v3780 = vshrl.u32 %v3077, 16
      %v3781 = vpack.i.b16 %v3780, %v3779
      %v3784 = vpack.i.b16 %v3078, %v3045
      %v3785 = vshrl.u32 %v3045, 16
      %v3786 = vshrl.u32 %v3078, 16
      %v3787 = vpack.i.b16 %v3786, %v3785
      %v3790 = vpack.i.b16 %v3085, %v3052
      %v3791 = vshrl.u32 %v3052, 16
      %v3792 = vshrl.u32 %v3085, 16
      %v3793 = vpack.i.b16 %v3792, %v3791
      %v3796 = vpack.i.b16 %v2210, %v2176
      %v3797 = vshrl.u32 %v2176, 16
      %v3798 = vshrl.u32 %v2210, 16
      %v3799 = vpack.i.b16 %v3798, %v3797
      %v3802 = vpack.i.b16 %v2218, %v2184
      %v3803 = vshrl.u32 %v2184, 16
      %v3804 = vshrl.u32 %v2218, 16
      %v3805 = vpack.i.b16 %v3804, %v3803
      %v3808 = vpack.i.b16 %v2217, %v2183
      %v3809 = vshrl.u32 %v2183, 16
      %v3810 = vshrl.u32 %v2217, 16
      %v3811 = vpack.i.b16 %v3810, %v3809
      %v3814 = vpack.i.b16 %v2219, %v2185
      %v3815 = vshrl.u32 %v2185, 16
      %v3816 = vshrl.u32 %v2219, 16
      %v3817 = vpack.i.b16 %v3816, %v3815
      %v3820 = vpack.i.b16 %v3143, %v3110
      %v3821 = vshrl.u32 %v3110, 16
      %v3822 = vshrl.u32 %v3143, 16
      %v3823 = vpack.i.b16 %v3822, %v3821
      %v3826 = vpack.i.b16 %v3144, %v3111
      %v3827 = vshrl.u32 %v3111, 16
      %v3828 = vshrl.u32 %v3144, 16
      %v3829 = vpack.i.b16 %v3828, %v3827
      %v3832 = vpack.i.b16 %v3151, %v3118
      %v3833 = vshrl.u32 %v3118, 16
      %v3834 = vshrl.u32 %v3151, 16
      %v3835 = vpack.i.b16 %v3834, %v3833
      %v3838 = vpack.i.b16 %v2278, %v2244
      %v3839 = vshrl.u32 %v2244, 16
      %v3840 = vshrl.u32 %v2278, 16
      %v3841 = vpack.i.b16 %v3840, %v3839
      %v3844 = vpack.i.b16 %v2286, %v2252
      %v3845 = vshrl.u32 %v2252, 16
      %v3846 = vshrl.u32 %v2286, 16
      %v3847 = vpack.i.b16 %v3846, %v3845
      %v3850 = vpack.i.b16 %v2285, %v2251
      %v3851 = vshrl.u32 %v2251, 16
      %v3852 = vshrl.u32 %v2285, 16
      %v3853 = vpack.i.b16 %v3852, %v3851
      %v3856 = vpack.i.b16 %v2287, %v2253
      %v3857 = vshrl.u32 %v2253, 16
      %v3858 = vshrl.u32 %v2287, 16
      %v3859 = vpack.i.b16 %v3858, %v3857
      %v3862 = vpack.i.b16 %v3209, %v3176
      %v3863 = vshrl.u32 %v3176, 16
      %v3864 = vshrl.u32 %v3209, 16
      %v3865 = vpack.i.b16 %v3864, %v3863
      %v3868 = vpack.i.b16 %v3210, %v3177
      %v3869 = vshrl.u32 %v3177, 16
      %v3870 = vshrl.u32 %v3210, 16
      %v3871 = vpack.i.b16 %v3870, %v3869
      %v3874 = vpack.i.b16 %v3217, %v3184
      %v3875 = vshrl.u32 %v3184, 16
      %v3876 = vshrl.u32 %v3217, 16
      %v3877 = vpack.i.b16 %v3876, %v3875
      %v3880 = vpack.i.b16 %v2346, %v2312
      %v3881 = vshrl.u32 %v2312, 16
      %v3882 = vshrl.u32 %v2346, 16
      %v3883 = vpack.i.b16 %v3882, %v3881
      %v3886 = vpack.i.b16 %v2354, %v2320
      %v3887 = vshrl.u32 %v2320, 16
      %v3888 = vshrl.u32 %v2354, 16
      %v3889 = vpack.i.b16 %v3888, %v3887
      %v3892 = vpack.i.b16 %v2353, %v2319
      %v3893 = vshrl.u32 %v2319, 16
      %v3894 = vshrl.u32 %v2353, 16
      %v3895 = vpack.i.b16 %v3894, %v3893
      %v3898 = vpack.i.b16 %v2355, %v2321
      %v3899 = vshrl.u32 %v2321, 16
      %v3900 = vshrl.u32 %v2355, 16
      %v3901 = vpack.i.b16 %v3900, %v3899
      %v3904 = vpack.i.b16 %v3275, %v3242
      %v3905 = vshrl.u32 %v3242, 16
      %v3906 = vshrl.u32 %v3275, 16
      %v3907 = vpack.i.b16 %v3906, %v3905
      %v3910 = vpack.i.b16 %v3276, %v3243
      %v3911 = vshrl.u32 %v3243, 16
      %v3912 = vshrl.u32 %v3276, 16
      %v3913 = vpack.i.b16 %v3912, %v3911
      %v3916 = vpack.i.b16 %v3283, %v3250
      %v3917 = vshrl.u32 %v3250, 16
      %v3918 = vshrl.u32 %v3283, 16
      %v3919 = vpack.i.b16 %v3918, %v3917
      %v3922 = vpack.i.b16 %v2414, %v2380
      %v3923 = vshrl.u32 %v2380, 16
      %v3924 = vshrl.u32 %v2414, 16
      %v3925 = vpack.i.b16 %v3924, %v3923
      %v3928 = vpack.i.b16 %v2422, %v2388
      %v3929 = vshrl.u32 %v2388, 16
      %v3930 = vshrl.u32 %v2422, 16
      %v3931 = vpack.i.b16 %v3930, %v3929
      %v3934 = vpack.i.b16 %v2421, %v2387
      %v3935 = vshrl.u32 %v2387, 16
      %v3936 = vshrl.u32 %v2421, 16
      %v3937 = vpack.i.b16 %v3936, %v3935
      %v3940 = vpack.i.b16 %v2423, %v2389
      %v3941 = vshrl.u32 %v2389, 16
      %v3942 = vshrl.u32 %v2423, 16
      %v3943 = vpack.i.b16 %v3942, %v3941
      %v3946 = vpack.i.b16 %v3341, %v3308
      %v3947 = vshrl.u32 %v3308, 16
      %v3948 = vshrl.u32 %v3341, 16
      %v3949 = vpack.i.b16 %v3948, %v3947
      %v3952 = vpack.i.b16 %v3342, %v3309
      %v3953 = vshrl.u32 %v3309, 16
      %v3954 = vshrl.u32 %v3342, 16
      %v3955 = vpack.i.b16 %v3954, %v3953
      %v3958 = vpack.i.b16 %v3349, %v3316
      %v3959 = vshrl.u32 %v3316, 16
      %v3960 = vshrl.u32 %v3349, 16
      %v3961 = vpack.i.b16 %v3960, %v3959
      %v3964 = vpack.i.b16 %v2482, %v2448
      %v3965 = vshrl.u32 %v2448, 16
      %v3966 = vshrl.u32 %v2482, 16
      %v3967 = vpack.i.b16 %v3966, %v3965
      %v3970 = vpack.i.b16 %v2490, %v2456
      %v3971 = vshrl.u32 %v2456, 16
      %v3972 = vshrl.u32 %v2490, 16
      %v3973 = vpack.i.b16 %v3972, %v3971
      %v3976 = vpack.i.b16 %v2489, %v2455
      %v3977 = vshrl.u32 %v2455, 16
      %v3978 = vshrl.u32 %v2489, 16
      %v3979 = vpack.i.b16 %v3978, %v3977
      %v3982 = vpack.i.b16 %v2491, %v2457
      %v3983 = vshrl.u32 %v2457, 16
      %v3984 = vshrl.u32 %v2491, 16
      %v3985 = vpack.i.b16 %v3984, %v3983
      %v3988 = vpack.i.b16 %v3407, %v3374
      %v3989 = vshrl.u32 %v3374, 16
      %v3990 = vshrl.u32 %v3407, 16
      %v3991 = vpack.i.b16 %v3990, %v3989
      %v3994 = vpack.i.b16 %v3408, %v3375
      %v3995 = vshrl.u32 %v3375, 16
      %v3996 = vshrl.u32 %v3408, 16
      %v3997 = vpack.i.b16 %v3996, %v3995
      %v4000 = vpack.i.b16 %v3415, %v3382
      %v4001 = vshrl.u32 %v3382, 16
      %v4002 = vshrl.u32 %v3415, 16
      %v4003 = vpack.i.b16 %v4002, %v4001
      %v4004 = vunpack.c.l.b16 %v3418
      %v4005 = vunpack.c.l.b16 %v3460
      %v4006 = vunpack.c.l.b16 %v3502
      %v4007 = vunpack.c.l.b16 %v3544
      %v4008 = vunpack.c.l.b16 %v3586
      %v4009 = vunpack.c.l.b16 %v3628
      %v4010 = vunpack.c.l.b16 %v3670
      %v4011 = vunpack.c.l.b16 %v3712
      %v4012 = vunpack.c.l.b16 %v3754
      %v4013 = vunpack.c.l.b16 %v3796
      %v4014 = vunpack.c.l.b16 %v3838
      %v4015 = vunpack.c.l.b16 %v3880
      %v4016 = vunpack.c.l.b16 %v3922
      %v4017 = vunpack.c.l.b16 %v3964
      %v4018 = vpack.c.b16 %v4005, %v4004
      %v4019 = vpack.c.b16 %v4007, %v4006
      %v4020 = vpack.c.b16 %v4009, %v4008
      %v4021 = vpack.c.b16 %v4011, %v4010
      %v4022 = vpack.c.b16 %v4013, %v4012
      %v4023 = vpack.c.b16 %v4015, %v4014
      %v4024 = vpack.c.b16 %v4017, %v4016
      %v4025 = vunpack.c.l.b16 %v3421
      %v4026 = vunpack.c.l.b16 %v3463
      %v4027 = vunpack.c.l.b16 %v3505
      %v4028 = vunpack.c.l.b16 %v3547
      %v4029 = vunpack.c.l.b16 %v3589
      %v4030 = vunpack.c.l.b16 %v3631
      %v4031 = vunpack.c.l.b16 %v3673
      %v4032 = vunpack.c.l.b16 %v3715
      %v4033 = vunpack.c.l.b16 %v3757
      %v4034 = vunpack.c.l.b16 %v3799
      %v4035 = vunpack.c.l.b16 %v3841
      %v4036 = vunpack.c.l.b16 %v3883
      %v4037 = vunpack.c.l.b16 %v3925
      %v4038 = vunpack.c.l.b16 %v3967
      %v4039 = vpack.c.b16 %v4026, %v4025
      %v4040 = vpack.c.b16 %v4028, %v4027
      %v4041 = vpack.c.b16 %v4030, %v4029
      %v4042 = vpack.c.b16 %v4032, %v4031
      %v4043 = vpack.c.b16 %v4034, %v4033
      %v4044 = vpack.c.b16 %v4036, %v4035
      %v4045 = vpack.c.b16 %v4038, %v4037
      %4046 = vrot.lane.b32.xlu0 %v4039, 14
      %v4047 = vpop.permute.xlu0 %4046
      %4048 = vrot.lane.b32.xlu0 %v4040, 14
      %v4049 = vpop.permute.xlu0 %4048
      %4050 = vrot.lane.b32.xlu0 %v4041, 14
      %v4051 = vpop.permute.xlu0 %4050
      %4052 = vrot.lane.b32.xlu0 %v4042, 14
      %v4053 = vpop.permute.xlu0 %4052
      %4054 = vrot.lane.b32.xlu0 %v4043, 14
      %v4055 = vpop.permute.xlu0 %4054
      %4056 = vrot.lane.b32.xlu0 %v4044, 14
      %v4057 = vpop.permute.xlu0 %4056
      %4058 = vrot.lane.b32.xlu0 %v4045, 14
      %v4059 = vpop.permute.xlu0 %4058
      %v4060 = vunpack.c.l.b16 %v3424
      %v4061 = vunpack.c.l.b16 %v3466
      %v4062 = vunpack.c.l.b16 %v3508
      %v4063 = vunpack.c.l.b16 %v3550
      %v4064 = vunpack.c.l.b16 %v3592
      %v4065 = vunpack.c.l.b16 %v3634
      %v4066 = vunpack.c.l.b16 %v3676
      %v4067 = vunpack.c.l.b16 %v3718
      %v4068 = vunpack.c.l.b16 %v3760
      %v4069 = vunpack.c.l.b16 %v3802
      %v4070 = vunpack.c.l.b16 %v3844
      %v4071 = vunpack.c.l.b16 %v3886
      %v4072 = vunpack.c.l.b16 %v3928
      %v4073 = vunpack.c.l.b16 %v3970
      %v4074 = vpack.c.b16 %v4061, %v4060
      %v4075 = vpack.c.b16 %v4063, %v4062
      %v4076 = vpack.c.b16 %v4065, %v4064
      %v4077 = vpack.c.b16 %v4067, %v4066
      %v4078 = vpack.c.b16 %v4069, %v4068
      %v4079 = vpack.c.b16 %v4071, %v4070
      %v4080 = vpack.c.b16 %v4073, %v4072
      %4081 = vrot.lane.b32.xlu0 %v4074, 28
      %v4082 = vpop.permute.xlu0 %4081
      %4083 = vrot.lane.b32.xlu0 %v4075, 28
      %v4084 = vpop.permute.xlu0 %4083
      %4085 = vrot.lane.b32.xlu0 %v4076, 28
      %v4086 = vpop.permute.xlu0 %4085
      %4087 = vrot.lane.b32.xlu0 %v4077, 28
      %v4088 = vpop.permute.xlu0 %4087
      %4089 = vrot.lane.b32.xlu0 %v4078, 28
      %v4090 = vpop.permute.xlu0 %4089
      %4091 = vrot.lane.b32.xlu0 %v4079, 28
      %v4092 = vpop.permute.xlu0 %4091
      %4093 = vrot.lane.b32.xlu0 %v4080, 28
      %v4094 = vpop.permute.xlu0 %4093
      %v4095 = vunpack.c.l.b16 %v3427
      %v4096 = vunpack.c.l.b16 %v3469
      %v4097 = vunpack.c.l.b16 %v3511
      %v4098 = vunpack.c.l.b16 %v3553
      %v4099 = vunpack.c.l.b16 %v3595
      %v4100 = vunpack.c.l.b16 %v3637
      %v4101 = vunpack.c.l.b16 %v3679
      %v4102 = vunpack.c.l.b16 %v3721
      %v4103 = vunpack.c.l.b16 %v3763
      %v4104 = vunpack.c.l.b16 %v3805
      %v4105 = vunpack.c.l.b16 %v3847
      %v4106 = vunpack.c.l.b16 %v3889
      %v4107 = vunpack.c.l.b16 %v3931
      %v4108 = vunpack.c.l.b16 %v3973
      %v4109 = vpack.c.b16 %v4096, %v4095
      %v4110 = vpack.c.b16 %v4098, %v4097
      %v4111 = vpack.c.b16 %v4100, %v4099
      %v4112 = vpack.c.b16 %v4102, %v4101
      %v4113 = vpack.c.b16 %v4104, %v4103
      %v4114 = vpack.c.b16 %v4106, %v4105
      %v4115 = vpack.c.b16 %v4108, %v4107
      %4116 = vrot.lane.b32.xlu0 %v4109, 42
      %v4117 = vpop.permute.xlu0 %4116
      %4118 = vrot.lane.b32.xlu0 %v4110, 42
      %v4119 = vpop.permute.xlu0 %4118
      %4120 = vrot.lane.b32.xlu0 %v4111, 42
      %v4121 = vpop.permute.xlu0 %4120
      %4122 = vrot.lane.b32.xlu0 %v4112, 42
      %v4123 = vpop.permute.xlu0 %4122
      %4124 = vrot.lane.b32.xlu0 %v4113, 42
      %v4125 = vpop.permute.xlu0 %4124
      %4126 = vrot.lane.b32.xlu0 %v4114, 42
      %v4127 = vpop.permute.xlu0 %4126
      %4128 = vrot.lane.b32.xlu0 %v4115, 42
      %v4129 = vpop.permute.xlu0 %4128
      %v4130 = vunpack.c.l.b16 %v3430
      %v4131 = vunpack.c.l.b16 %v3472
      %v4132 = vunpack.c.l.b16 %v3514
      %v4133 = vunpack.c.l.b16 %v3556
      %v4134 = vunpack.c.l.b16 %v3598
      %v4135 = vunpack.c.l.b16 %v3640
      %v4136 = vunpack.c.l.b16 %v3682
      %v4137 = vunpack.c.l.b16 %v3724
      %v4138 = vunpack.c.l.b16 %v3766
      %v4139 = vunpack.c.l.b16 %v3808
      %v4140 = vunpack.c.l.b16 %v3850
      %v4141 = vunpack.c.l.b16 %v3892
      %v4142 = vunpack.c.l.b16 %v3934
      %v4143 = vunpack.c.l.b16 %v3976
      %v4144 = vpack.c.b16 %v4131, %v4130
      %v4145 = vpack.c.b16 %v4133, %v4132
      %v4146 = vpack.c.b16 %v4135, %v4134
      %v4147 = vpack.c.b16 %v4137, %v4136
      %v4148 = vpack.c.b16 %v4139, %v4138
      %v4149 = vpack.c.b16 %v4141, %v4140
      %v4150 = vpack.c.b16 %v4143, %v4142
      %4151 = vrot.lane.b32.xlu0 %v4144, 56
      %v4152 = vpop.permute.xlu0 %4151
      %4153 = vrot.lane.b32.xlu0 %v4145, 56
      %v4154 = vpop.permute.xlu0 %4153
      %4155 = vrot.lane.b32.xlu0 %v4146, 56
      %v4156 = vpop.permute.xlu0 %4155
      %4157 = vrot.lane.b32.xlu0 %v4147, 56
      %v4158 = vpop.permute.xlu0 %4157
      %4159 = vrot.lane.b32.xlu0 %v4148, 56
      %v4160 = vpop.permute.xlu0 %4159
      %4161 = vrot.lane.b32.xlu0 %v4149, 56
      %v4162 = vpop.permute.xlu0 %4161
      %4163 = vrot.lane.b32.xlu0 %v4150, 56
      %v4164 = vpop.permute.xlu0 %4163
      %v4165 = vunpack.c.l.b16 %v3433
      %v4166 = vunpack.c.l.b16 %v3475
      %v4167 = vunpack.c.l.b16 %v3517
      %v4168 = vunpack.c.l.b16 %v3559
      %v4169 = vunpack.c.l.b16 %v3601
      %v4170 = vunpack.c.l.b16 %v3643
      %v4171 = vunpack.c.l.b16 %v3685
      %v4172 = vunpack.c.l.b16 %v3727
      %v4173 = vunpack.c.l.b16 %v3769
      %v4174 = vunpack.c.l.b16 %v3811
      %v4175 = vunpack.c.l.b16 %v3853
      %v4176 = vunpack.c.l.b16 %v3895
      %v4177 = vunpack.c.l.b16 %v3937
      %v4178 = vunpack.c.l.b16 %v3979
      %v4179 = vpack.c.b16 %v4166, %v4165
      %v4180 = vpack.c.b16 %v4168, %v4167
      %v4181 = vpack.c.b16 %v4170, %v4169
      %v4182 = vpack.c.b16 %v4172, %v4171
      %v4183 = vpack.c.b16 %v4174, %v4173
      %v4184 = vpack.c.b16 %v4176, %v4175
      %v4185 = vpack.c.b16 %v4178, %v4177
      %4186 = vrot.lane.b32.xlu0 %v4179, 70
      %v4187 = vpop.permute.xlu0 %4186
      %4188 = vrot.lane.b32.xlu0 %v4180, 70
      %v4189 = vpop.permute.xlu0 %4188
      %4190 = vrot.lane.b32.xlu0 %v4181, 70
      %v4191 = vpop.permute.xlu0 %4190
      %4192 = vrot.lane.b32.xlu0 %v4182, 70
      %v4193 = vpop.permute.xlu0 %4192
      %4194 = vrot.lane.b32.xlu0 %v4183, 70
      %v4195 = vpop.permute.xlu0 %4194
      %4196 = vrot.lane.b32.xlu0 %v4184, 70
      %v4197 = vpop.permute.xlu0 %4196
      %4198 = vrot.lane.b32.xlu0 %v4185, 70
      %v4199 = vpop.permute.xlu0 %4198
      %v4200 = vunpack.c.l.b16 %v3436
      %v4201 = vunpack.c.l.b16 %v3478
      %v4202 = vunpack.c.l.b16 %v3520
      %v4203 = vunpack.c.l.b16 %v3562
      %v4204 = vunpack.c.l.b16 %v3604
      %v4205 = vunpack.c.l.b16 %v3646
      %v4206 = vunpack.c.l.b16 %v3688
      %v4207 = vunpack.c.l.b16 %v3730
      %v4208 = vunpack.c.l.b16 %v3772
      %v4209 = vunpack.c.l.b16 %v3814
      %v4210 = vunpack.c.l.b16 %v3856
      %v4211 = vunpack.c.l.b16 %v3898
      %v4212 = vunpack.c.l.b16 %v3940
      %v4213 = vunpack.c.l.b16 %v3982
      %v4214 = vpack.c.b16 %v4201, %v4200
      %v4215 = vpack.c.b16 %v4203, %v4202
      %v4216 = vpack.c.b16 %v4205, %v4204
      %v4217 = vpack.c.b16 %v4207, %v4206
      %v4218 = vpack.c.b16 %v4209, %v4208
      %v4219 = vpack.c.b16 %v4211, %v4210
      %v4220 = vpack.c.b16 %v4213, %v4212
      %4221 = vrot.lane.b32.xlu0 %v4214, 84
      %v4222 = vpop.permute.xlu0 %4221
      %4223 = vrot.lane.b32.xlu0 %v4215, 84
      %v4224 = vpop.permute.xlu0 %4223
      %4225 = vrot.lane.b32.xlu0 %v4216, 84
      %v4226 = vpop.permute.xlu0 %4225
      %4227 = vrot.lane.b32.xlu0 %v4217, 84
      %v4228 = vpop.permute.xlu0 %4227
      %4229 = vrot.lane.b32.xlu0 %v4218, 84
      %v4230 = vpop.permute.xlu0 %4229
      %4231 = vrot.lane.b32.xlu0 %v4219, 84
      %v4232 = vpop.permute.xlu0 %4231
      %4233 = vrot.lane.b32.xlu0 %v4220, 84
      %v4234 = vpop.permute.xlu0 %4233
      %v4235 = vunpack.c.l.b16 %v3439
      %v4236 = vunpack.c.l.b16 %v3481
      %v4237 = vunpack.c.l.b16 %v3523
      %v4238 = vunpack.c.l.b16 %v3565
      %v4239 = vunpack.c.l.b16 %v3607
      %v4240 = vunpack.c.l.b16 %v3649
      %v4241 = vunpack.c.l.b16 %v3691
      %v4242 = vunpack.c.l.b16 %v3733
      %v4243 = vunpack.c.l.b16 %v3775
      %v4244 = vunpack.c.l.b16 %v3817
      %v4245 = vunpack.c.l.b16 %v3859
      %v4246 = vunpack.c.l.b16 %v3901
      %v4247 = vunpack.c.l.b16 %v3943
      %v4248 = vunpack.c.l.b16 %v3985
      %v4249 = vpack.c.b16 %v4236, %v4235
      %v4250 = vpack.c.b16 %v4238, %v4237
      %v4251 = vpack.c.b16 %v4240, %v4239
      %v4252 = vpack.c.b16 %v4242, %v4241
      %v4253 = vpack.c.b16 %v4244, %v4243
      %v4254 = vpack.c.b16 %v4246, %v4245
      %v4255 = vpack.c.b16 %v4248, %v4247
      %4256 = vrot.lane.b32.xlu0 %v4249, 98
      %v4257 = vpop.permute.xlu0 %4256
      %4258 = vrot.lane.b32.xlu0 %v4250, 98
      %v4259 = vpop.permute.xlu0 %4258
      %4260 = vrot.lane.b32.xlu0 %v4251, 98
      %v4261 = vpop.permute.xlu0 %4260
      %4262 = vrot.lane.b32.xlu0 %v4252, 98
      %v4263 = vpop.permute.xlu0 %4262
      %4264 = vrot.lane.b32.xlu0 %v4253, 98
      %v4265 = vpop.permute.xlu0 %4264
      %4266 = vrot.lane.b32.xlu0 %v4254, 98
      %v4267 = vpop.permute.xlu0 %4266
      %4268 = vrot.lane.b32.xlu0 %v4255, 98
      %v4269 = vpop.permute.xlu0 %4268
      %v4270 = vunpack.c.l.b16 %v3442
      %v4271 = vunpack.c.l.b16 %v3484
      %v4272 = vunpack.c.l.b16 %v3526
      %v4273 = vunpack.c.l.b16 %v3568
      %v4274 = vunpack.c.l.b16 %v3610
      %v4275 = vunpack.c.l.b16 %v3652
      %v4276 = vunpack.c.l.b16 %v3694
      %v4277 = vunpack.c.l.b16 %v3736
      %v4278 = vunpack.c.l.b16 %v3778
      %v4279 = vunpack.c.l.b16 %v3820
      %v4280 = vunpack.c.l.b16 %v3862
      %v4281 = vunpack.c.l.b16 %v3904
      %v4282 = vunpack.c.l.b16 %v3946
      %v4283 = vunpack.c.l.b16 %v3988
      %v4284 = vpack.c.b16 %v4271, %v4270
      %v4285 = vpack.c.b16 %v4273, %v4272
      %v4286 = vpack.c.b16 %v4275, %v4274
      %v4287 = vpack.c.b16 %v4277, %v4276
      %v4288 = vpack.c.b16 %v4279, %v4278
      %v4289 = vpack.c.b16 %v4281, %v4280
      %v4290 = vpack.c.b16 %v4283, %v4282
      %4291 = vrot.lane.b32.xlu0 %v4284, 112
      %v4292 = vpop.permute.xlu0 %4291
      %4293 = vrot.lane.b32.xlu0 %v4285, 112
      %v4294 = vpop.permute.xlu0 %4293
      %4295 = vrot.lane.b32.xlu0 %v4286, 112
      %v4296 = vpop.permute.xlu0 %4295
      %4297 = vrot.lane.b32.xlu0 %v4287, 112
      %v4298 = vpop.permute.xlu0 %4297
      %4299 = vrot.lane.b32.xlu0 %v4288, 112
      %v4300 = vpop.permute.xlu0 %4299
      %4301 = vrot.lane.b32.xlu0 %v4289, 112
      %v4302 = vpop.permute.xlu0 %4301
      %4303 = vrot.lane.b32.xlu0 %v4290, 112
      %v4304 = vpop.permute.xlu0 %4303
      %v4305 = vunpack.c.l.b16 %v3445
      %v4306 = vunpack.c.l.b16 %v3487
      %v4307 = vunpack.c.l.b16 %v3529
      %v4308 = vunpack.c.l.b16 %v3571
      %v4309 = vunpack.c.l.b16 %v3613
      %v4310 = vunpack.c.l.b16 %v3655
      %v4311 = vunpack.c.l.b16 %v3697
      %v4312 = vunpack.c.l.b16 %v3739
      %v4313 = vunpack.c.l.b16 %v3781
      %v4314 = vunpack.c.l.b16 %v3823
      %v4315 = vunpack.c.l.b16 %v3865
      %v4316 = vunpack.c.l.b16 %v3907
      %v4317 = vunpack.c.l.b16 %v3949
      %v4318 = vunpack.c.l.b16 %v3991
      %v4319 = vpack.c.b16 %v4306, %v4305
      %v4320 = vpack.c.b16 %v4308, %v4307
      %v4321 = vpack.c.b16 %v4310, %v4309
      %v4322 = vpack.c.b16 %v4312, %v4311
      %v4323 = vpack.c.b16 %v4314, %v4313
      %v4324 = vpack.c.b16 %v4316, %v4315
      %v4325 = vpack.c.b16 %v4318, %v4317
      %4326 = vrot.lane.b32.xlu0 %v4319, 126
      %v4327 = vpop.permute.xlu0 %4326
      %4328 = vrot.lane.b32.xlu0 %v4320, 126
      %v4329 = vpop.permute.xlu0 %4328
      %4330 = vrot.lane.b32.xlu0 %v4321, 126
      %v4331 = vpop.permute.xlu0 %4330
      %4332 = vrot.lane.b32.xlu0 %v4322, 126
      %v4333 = vpop.permute.xlu0 %4332
      %4334 = vrot.lane.b32.xlu0 %v4323, 126
      %v4335 = vpop.permute.xlu0 %4334
      %4336 = vrot.lane.b32.xlu0 %v4324, 126
      %v4337 = vpop.permute.xlu0 %4336
      %4338 = vrot.lane.b32.xlu0 %v4325, 126
      %v4339 = vpop.permute.xlu0 %4338
      %v4340 = vunpack.c.l.b16 %v3448
      %v4341 = vunpack.c.l.b16 %v3490
      %v4342 = vunpack.c.l.b16 %v3532
      %v4343 = vunpack.c.l.b16 %v3574
      %v4344 = vunpack.c.l.b16 %v3616
      %v4345 = vunpack.c.l.b16 %v3658
      %v4346 = vunpack.c.l.b16 %v3700
      %v4347 = vunpack.c.l.b16 %v3742
      %v4348 = vunpack.c.l.b16 %v3784
      %v4349 = vunpack.c.l.b16 %v3826
      %v4350 = vunpack.c.l.b16 %v3868
      %v4351 = vunpack.c.l.b16 %v3910
      %v4352 = vunpack.c.l.b16 %v3952
      %v4353 = vunpack.c.l.b16 %v3994
      %v4354 = vpack.c.b16 %v4341, %v4340
      %v4355 = vpack.c.b16 %v4343, %v4342
      %v4356 = vpack.c.b16 %v4345, %v4344
      %v4357 = vpack.c.b16 %v4347, %v4346
      %v4358 = vpack.c.b16 %v4349, %v4348
      %v4359 = vpack.c.b16 %v4351, %v4350
      %v4360 = vpack.c.b16 %v4353, %v4352
      %4361 = vrot.lane.b32.xlu0 %v4354, 12
      %v4362 = vpop.permute.xlu0 %4361
      %4363 = vrot.lane.b32.xlu0 %v4355, 12
      %v4364 = vpop.permute.xlu0 %4363
      %4365 = vrot.lane.b32.xlu0 %v4356, 12
      %v4366 = vpop.permute.xlu0 %4365
      %4367 = vrot.lane.b32.xlu0 %v4357, 12
      %v4368 = vpop.permute.xlu0 %4367
      %4369 = vrot.lane.b32.xlu0 %v4358, 12
      %v4370 = vpop.permute.xlu0 %4369
      %4371 = vrot.lane.b32.xlu0 %v4359, 12
      %v4372 = vpop.permute.xlu0 %4371
      %4373 = vrot.lane.b32.xlu0 %v4360, 12
      %v4374 = vpop.permute.xlu0 %4373
      %v4375 = vunpack.c.l.b16 %v3451
      %v4376 = vunpack.c.l.b16 %v3493
      %v4377 = vunpack.c.l.b16 %v3535
      %v4378 = vunpack.c.l.b16 %v3577
      %v4379 = vunpack.c.l.b16 %v3619
      %v4380 = vunpack.c.l.b16 %v3661
      %v4381 = vunpack.c.l.b16 %v3703
      %v4382 = vunpack.c.l.b16 %v3745
      %v4383 = vunpack.c.l.b16 %v3787
      %v4384 = vunpack.c.l.b16 %v3829
      %v4385 = vunpack.c.l.b16 %v3871
      %v4386 = vunpack.c.l.b16 %v3913
      %v4387 = vunpack.c.l.b16 %v3955
      %v4388 = vunpack.c.l.b16 %v3997
      %v4389 = vpack.c.b16 %v4376, %v4375
      %v4390 = vpack.c.b16 %v4378, %v4377
      %v4391 = vpack.c.b16 %v4380, %v4379
      %v4392 = vpack.c.b16 %v4382, %v4381
      %v4393 = vpack.c.b16 %v4384, %v4383
      %v4394 = vpack.c.b16 %v4386, %v4385
      %v4395 = vpack.c.b16 %v4388, %v4387
      %4396 = vrot.lane.b32.xlu0 %v4389, 26
      %v4397 = vpop.permute.xlu0 %4396
      %4398 = vrot.lane.b32.xlu0 %v4390, 26
      %v4399 = vpop.permute.xlu0 %4398
      %4400 = vrot.lane.b32.xlu0 %v4391, 26
      %v4401 = vpop.permute.xlu0 %4400
      %4402 = vrot.lane.b32.xlu0 %v4392, 26
      %v4403 = vpop.permute.xlu0 %4402
      %4404 = vrot.lane.b32.xlu0 %v4393, 26
      %v4405 = vpop.permute.xlu0 %4404
      %4406 = vrot.lane.b32.xlu0 %v4394, 26
      %v4407 = vpop.permute.xlu0 %4406
      %4408 = vrot.lane.b32.xlu0 %v4395, 26
      %v4409 = vpop.permute.xlu0 %4408
      %v4410 = vunpack.c.l.b16 %v3454
      %v4411 = vunpack.c.l.b16 %v3496
      %v4412 = vunpack.c.l.b16 %v3538
      %v4413 = vunpack.c.l.b16 %v3580
      %v4414 = vunpack.c.l.b16 %v3622
      %v4415 = vunpack.c.l.b16 %v3664
      %v4416 = vunpack.c.l.b16 %v3706
      %v4417 = vunpack.c.l.b16 %v3748
      %v4418 = vunpack.c.l.b16 %v3790
      %v4419 = vunpack.c.l.b16 %v3832
      %v4420 = vunpack.c.l.b16 %v3874
      %v4421 = vunpack.c.l.b16 %v3916
      %v4422 = vunpack.c.l.b16 %v3958
      %v4423 = vunpack.c.l.b16 %v4000
      %v4424 = vpack.c.b16 %v4411, %v4410
      %v4425 = vpack.c.b16 %v4413, %v4412
      %v4426 = vpack.c.b16 %v4415, %v4414
      %v4427 = vpack.c.b16 %v4417, %v4416
      %v4428 = vpack.c.b16 %v4419, %v4418
      %v4429 = vpack.c.b16 %v4421, %v4420
      %v4430 = vpack.c.b16 %v4423, %v4422
      %4431 = vrot.lane.b32.xlu0 %v4424, 40
      %v4432 = vpop.permute.xlu0 %4431
      %4433 = vrot.lane.b32.xlu0 %v4425, 40
      %v4434 = vpop.permute.xlu0 %4433
      %4435 = vrot.lane.b32.xlu0 %v4426, 40
      %v4436 = vpop.permute.xlu0 %4435
      %4437 = vrot.lane.b32.xlu0 %v4427, 40
      %v4438 = vpop.permute.xlu0 %4437
      %4439 = vrot.lane.b32.xlu0 %v4428, 40
      %v4440 = vpop.permute.xlu0 %4439
      %4441 = vrot.lane.b32.xlu0 %v4429, 40
      %v4442 = vpop.permute.xlu0 %4441
      %4443 = vrot.lane.b32.xlu0 %v4430, 40
      %v4444 = vpop.permute.xlu0 %4443
      %v4445 = vunpack.c.l.b16 %v3457
      %v4446 = vunpack.c.l.b16 %v3499
      %v4447 = vunpack.c.l.b16 %v3541
      %v4448 = vunpack.c.l.b16 %v3583
      %v4449 = vunpack.c.l.b16 %v3625
      %v4450 = vunpack.c.l.b16 %v3667
      %v4451 = vunpack.c.l.b16 %v3709
      %v4452 = vunpack.c.l.b16 %v3751
      %v4453 = vunpack.c.l.b16 %v3793
      %v4454 = vunpack.c.l.b16 %v3835
      %v4455 = vunpack.c.l.b16 %v3877
      %v4456 = vunpack.c.l.b16 %v3919
      %v4457 = vunpack.c.l.b16 %v3961
      %v4458 = vunpack.c.l.b16 %v4003
      %v4459 = vpack.c.b16 %v4446, %v4445
      %v4460 = vpack.c.b16 %v4448, %v4447
      %v4461 = vpack.c.b16 %v4450, %v4449
      %v4462 = vpack.c.b16 %v4452, %v4451
      %v4463 = vpack.c.b16 %v4454, %v4453
      %v4464 = vpack.c.b16 %v4456, %v4455
      %v4465 = vpack.c.b16 %v4458, %v4457
      %4466 = vrot.lane.b32.xlu0 %v4459, 54
      %v4467 = vpop.permute.xlu0 %4466
      %4468 = vrot.lane.b32.xlu0 %v4460, 54
      %v4469 = vpop.permute.xlu0 %4468
      %4470 = vrot.lane.b32.xlu0 %v4461, 54
      %v4471 = vpop.permute.xlu0 %4470
      %4472 = vrot.lane.b32.xlu0 %v4462, 54
      %v4473 = vpop.permute.xlu0 %4472
      %4474 = vrot.lane.b32.xlu0 %v4463, 54
      %v4475 = vpop.permute.xlu0 %4474
      %4476 = vrot.lane.b32.xlu0 %v4464, 54
      %v4477 = vpop.permute.xlu0 %4476
      %4478 = vrot.lane.b32.xlu0 %v4465, 54
      %v4479 = vpop.permute.xlu0 %4478
      %vm4480 = vcmask 113664
      %v4483 = vsel %vm4480, %v4018, %v4047
      %v4486 = vsel %vm4480, %v4019, %v4049
      %v4489 = vsel %vm4480, %v4020, %v4051
      %v4492 = vsel %vm4480, %v4021, %v4053
      %v4495 = vsel %vm4480, %v4022, %v4055
      %v4498 = vsel %vm4480, %v4023, %v4057
      %v4501 = vsel %vm4480, %v4024, %v4059
      %vm4502 = vcmask 228352
      %v4504 = vsel %vm4502, %v4483, %v4082
      %v4506 = vsel %vm4502, %v4486, %v4084
      %v4508 = vsel %vm4502, %v4489, %v4086
      %v4510 = vsel %vm4502, %v4492, %v4088
      %v4512 = vsel %vm4502, %v4495, %v4090
      %v4514 = vsel %vm4502, %v4498, %v4092
      %v4516 = vsel %vm4502, %v4501, %v4094
      %vm4517 = vcmask 343040
      %v4519 = vsel %vm4517, %v4504, %v4117
      %v4521 = vsel %vm4517, %v4506, %v4119
      %v4523 = vsel %vm4517, %v4508, %v4121
      %v4525 = vsel %vm4517, %v4510, %v4123
      %v4527 = vsel %vm4517, %v4512, %v4125
      %v4529 = vsel %vm4517, %v4514, %v4127
      %v4531 = vsel %vm4517, %v4516, %v4129
      %vm4532 = vcmask 457728
      %v4534 = vsel %vm4532, %v4519, %v4152
      %v4536 = vsel %vm4532, %v4521, %v4154
      %v4538 = vsel %vm4532, %v4523, %v4156
      %v4540 = vsel %vm4532, %v4525, %v4158
      %v4542 = vsel %vm4532, %v4527, %v4160
      %v4544 = vsel %vm4532, %v4529, %v4162
      %v4546 = vsel %vm4532, %v4531, %v4164
      %vm4547 = vcmask 572416
      %v4549 = vsel %vm4547, %v4534, %v4187
      %v4551 = vsel %vm4547, %v4536, %v4189
      %v4553 = vsel %vm4547, %v4538, %v4191
      %v4555 = vsel %vm4547, %v4540, %v4193
      %v4557 = vsel %vm4547, %v4542, %v4195
      %v4559 = vsel %vm4547, %v4544, %v4197
      %v4561 = vsel %vm4547, %v4546, %v4199
      %vm4562 = vcmask 687104
      %v4564 = vsel %vm4562, %v4549, %v4222
      %v4566 = vsel %vm4562, %v4551, %v4224
      %v4568 = vsel %vm4562, %v4553, %v4226
      %v4570 = vsel %vm4562, %v4555, %v4228
      %v4572 = vsel %vm4562, %v4557, %v4230
      %v4574 = vsel %vm4562, %v4559, %v4232
      %v4576 = vsel %vm4562, %v4561, %v4234
      %vm4577 = vcmask 801792
      %v4579 = vsel %vm4577, %v4564, %v4257
      %v4581 = vsel %vm4577, %v4566, %v4259
      %v4583 = vsel %vm4577, %v4568, %v4261
      %v4585 = vsel %vm4577, %v4570, %v4263
      %v4587 = vsel %vm4577, %v4572, %v4265
      %v4589 = vsel %vm4577, %v4574, %v4267
      %v4591 = vsel %vm4577, %v4576, %v4269
      %vm4592 = vcmask 916480
      %v4594 = vsel %vm4592, %v4579, %v4292
      %v4596 = vsel %vm4592, %v4581, %v4294
      %v4598 = vsel %vm4592, %v4583, %v4296
      %v4600 = vsel %vm4592, %v4585, %v4298
      %v4602 = vsel %vm4592, %v4587, %v4300
      %v4604 = vsel %vm4592, %v4589, %v4302
      %v4606 = vsel %vm4592, %v4591, %v4304
      %vm4607 = vcmask 1031168
      %v4609 = vsel %vm4607, %v4594, %v4327
      %v4612 = vsel %vm4607, %v4596, %v4329
      %v4615 = vsel %vm4607, %v4598, %v4331
      %v4618 = vsel %vm4607, %v4600, %v4333
      %v4621 = vsel %vm4607, %v4602, %v4335
      %v4624 = vsel %vm4607, %v4604, %v4337
      %v4627 = vsel %vm4607, %v4606, %v4339
      %vm4628 = vcmask 97280
      %v4630 = vsel %vm4628, %v4327, %v4362
      %v4632 = vsel %vm4628, %v4329, %v4364
      %v4634 = vsel %vm4628, %v4331, %v4366
      %v4636 = vsel %vm4628, %v4333, %v4368
      %v4638 = vsel %vm4628, %v4335, %v4370
      %v4640 = vsel %vm4628, %v4337, %v4372
      %v4642 = vsel %vm4628, %v4339, %v4374
      %vm4643 = vcmask 211968
      %v4645 = vsel %vm4643, %v4630, %v4397
      %v4647 = vsel %vm4643, %v4632, %v4399
      %v4649 = vsel %vm4643, %v4634, %v4401
      %v4651 = vsel %vm4643, %v4636, %v4403
      %v4653 = vsel %vm4643, %v4638, %v4405
      %v4655 = vsel %vm4643, %v4640, %v4407
      %v4657 = vsel %vm4643, %v4642, %v4409
      %vm4658 = vcmask 326656
      %v4660 = vsel %vm4658, %v4645, %v4432
      %v4662 = vsel %vm4658, %v4647, %v4434
      %v4664 = vsel %vm4658, %v4649, %v4436
      %v4666 = vsel %vm4658, %v4651, %v4438
      %v4668 = vsel %vm4658, %v4653, %v4440
      %v4670 = vsel %vm4658, %v4655, %v4442
      %v4672 = vsel %vm4658, %v4657, %v4444
      %vm4673 = vcmask 441344
      %v4675 = vsel %vm4673, %v4660, %v4467
      %v4678 = vsel %vm4673, %v4662, %v4469
      %v4681 = vsel %vm4673, %v4664, %v4471
      %v4684 = vsel %vm4673, %v4666, %v4473
      %v4687 = vsel %vm4673, %v4668, %v4475
      %v4690 = vsel %vm4673, %v4670, %v4477
      %v4693 = vsel %vm4673, %v4672, %v4479
      %4695 = vset.pattern.permute.xlu0 0
      %4696 = vperm.xlu0 %4695, %v773
      %v4697 = vpop.permute.xlu0 %4696
      %vm4699 = vcmask 883712
      %v4701 = vsel %vm4699, %v772, 0
      %vm4703 = vcmask 1045504
      %v4704 = vsel %vm4703, %v4627, 0
      %v4706 = vsel %vm4703, %v4693, 0
      %4708 = vmatprep.subr.bf16.mxu0 0
      %4709 = vmatpush1.bf16.msra.mxu0 0
      %4710 = vmatprep.subr.bf16.mxu0 %v4706
      %4711 = vmatpush1.bf16.msra.mxu0 %v4704
      %4712 = vmatprep.subr.bf16.mxu0 %v4690
      %4713 = vmatpush1.bf16.msra.mxu0 %v4624
      %4714 = vmatprep.subr.bf16.mxu0 %v4687
      %4715 = vmatpush1.bf16.msra.mxu0 %v4621
      %4716 = vmatprep.subr.bf16.mxu0 %v4684
      %4717 = vmatpush1.bf16.msra.mxu0 %v4618
      %4718 = vmatprep.subr.bf16.mxu0 %v4681
      %4719 = vmatpush1.bf16.msra.mxu0 %v4615
      %4720 = vmatprep.subr.bf16.mxu0 %v4678
      %4721 = vmatpush1.bf16.msra.mxu0 %v4612
      %4722 = vmatprep.subr.bf16.mxu0 %v4675
      %4723 = vmatpush1.bf16.msra.mxu0 %v4609
      %4724 = vmatprep.subr.bf16.mxu0 0
      %4725 = vmatpush2.bf16.msra.mxu0 0
      %4726 = vmatprep.subr.bf16.mxu0 0
      %4727 = vmatpush2.bf16.msra.mxu0 0
      %4728 = vmatprep.subr.bf16.mxu0 0
      %4729 = vmatpush2.bf16.msra.mxu0 0
      %4730 = vmatprep.subr.bf16.mxu0 0
      %4731 = vmatpush2.bf16.msra.mxu0 0
      %4732 = vmatprep.subr.bf16.mxu0 0
      %4733 = vmatpush2.bf16.msra.mxu0 0
      %4734 = vmatprep.subr.bf16.mxu0 0
      %4735 = vmatpush2.bf16.msra.mxu0 0
      %4736 = vmatprep.subr.bf16.mxu0 0
      %4737 = vmatpush2.bf16.msra.mxu0 0
      %4738 = vmatprep.subr.bf16.mxu0 0
      %4739 = vmatpush2.bf16.msra.mxu0 0
      %4740 = vmatprep.mubr.bf16.mxu0 0
      %4741 = vmatmul.mubr.bf16.gmra.mxu0 %v4701
      %v4742 = vpop.f32.mrf.mxu0
      %v4743 = vadd.f32 %v4697, %v4742
      %v4744 = vpop.f32.mrf.mxu0
      %v4745 = vadd.f32 %v4697, %v4744
      %v4746 = vpop.f32.mrf.mxu0
      %v4747 = vpop.f32.mrf.mxu0
      %4748 = vdwg.mxu0
      %4750 = vrot.lane.b32.xlu0 %v4743, 114
      %v4751 = vpop.permute.xlu0 %4750
      %4753 = vrot.lane.b32.xlu0 %v4743, 100
      %v4754 = vpop.permute.xlu0 %4753
      %4756 = vrot.lane.b32.xlu0 %v4743, 86
      %v4757 = vpop.permute.xlu0 %4756
      %4759 = vrot.lane.b32.xlu0 %v4743, 72
      %v4760 = vpop.permute.xlu0 %4759
      %4762 = vrot.lane.b32.xlu0 %v4743, 58
      %v4763 = vpop.permute.xlu0 %4762
      %4765 = vrot.lane.b32.xlu0 %v4743, 44
      %v4766 = vpop.permute.xlu0 %4765
      %4768 = vrot.lane.b32.xlu0 %v4743, 30
      %v4769 = vpop.permute.xlu0 %4768
      %4771 = vrot.lane.b32.xlu0 %v4743, 16
      %v4772 = vpop.permute.xlu0 %4771
      %4775 = vrot.lane.b32.xlu0 %v4743, 2
      %v4776 = vpop.permute.xlu0 %4775
      %4777 = vrot.lane.b32.xlu0 %v4745, 2
      %v4778 = vpop.permute.xlu0 %4777
      %vm4779 = vcmask 15360
      %v4780 = vsel %vm4779, %v4776, %v4778
      %4782 = vrot.lane.b32.xlu0 %v4745, 116
      %v4783 = vpop.permute.xlu0 %4782
      %4785 = vrot.lane.b32.xlu0 %v4745, 102
      %v4786 = vpop.permute.xlu0 %4785
      %4788 = vrot.lane.b32.xlu0 %v4745, 88
      %v4789 = vpop.permute.xlu0 %4788
      %4791 = vrot.lane.b32.xlu0 %v4745, 74
      %v4792 = vpop.permute.xlu0 %4791
      %v4794 = vcombine.low %v4743, %v4754
      %v4795 = vcombine.high %v4743, %v4754
      %v4797 = vunpack.c.l.s4 1983009808
      %v4798 = vunpack.c.0.s8 %v4797
      %v4799 = vlaneseq
      %v4800 = vshrl.u32 %v4799, 7
      %v4801 = vsub.s32 %v4798, %v4800
      %v4802 = vrot.slane %v4794, %v4801
      %v4804 = vunpack.c.l.s4 1983009808
      %v4805 = vunpack.c.0.s8 %v4804
      %v4806 = vlaneseq
      %v4807 = vshrl.u32 %v4806, 7
      %v4808 = vsub.s32 %v4805, %v4807
      %v4809 = vrot.slane %v4795, %v4808
      %v4810 = vcombine.low %v4751, %v4757
      %v4811 = vcombine.high %v4751, %v4757
      %v4813 = vunpack.c.l.s4 1983009808
      %v4814 = vunpack.c.0.s8 %v4813
      %v4815 = vlaneseq
      %v4816 = vshrl.u32 %v4815, 7
      %v4817 = vsub.s32 %v4814, %v4816
      %v4818 = vrot.slane %v4810, %v4817
      %v4820 = vunpack.c.l.s4 1983009808
      %v4821 = vunpack.c.0.s8 %v4820
      %v4822 = vlaneseq
      %v4823 = vshrl.u32 %v4822, 7
      %v4824 = vsub.s32 %v4821, %v4823
      %v4825 = vrot.slane %v4811, %v4824
      %v4826 = vcombine.low %v4760, %v4766
      %v4827 = vcombine.high %v4760, %v4766
      %v4829 = vunpack.c.l.s4 1983009808
      %v4830 = vunpack.c.0.s8 %v4829
      %v4831 = vlaneseq
      %v4832 = vshrl.u32 %v4831, 7
      %v4833 = vsub.s32 %v4830, %v4832
      %v4834 = vrot.slane %v4826, %v4833
      %v4836 = vunpack.c.l.s4 1983009808
      %v4837 = vunpack.c.0.s8 %v4836
      %v4838 = vlaneseq
      %v4839 = vshrl.u32 %v4838, 7
      %v4840 = vsub.s32 %v4837, %v4839
      %v4841 = vrot.slane %v4827, %v4840
      %v4842 = vcombine.low %v4763, %v4769
      %v4843 = vcombine.high %v4763, %v4769
      %v4845 = vunpack.c.l.s4 1983009808
      %v4846 = vunpack.c.0.s8 %v4845
      %v4847 = vlaneseq
      %v4848 = vshrl.u32 %v4847, 7
      %v4849 = vsub.s32 %v4846, %v4848
      %v4850 = vrot.slane %v4842, %v4849
      %v4852 = vunpack.c.l.s4 1983009808
      %v4853 = vunpack.c.0.s8 %v4852
      %v4854 = vlaneseq
      %v4855 = vshrl.u32 %v4854, 7
      %v4856 = vsub.s32 %v4853, %v4855
      %v4857 = vrot.slane %v4843, %v4856
      %v4858 = vcombine.low %v4802, %v4818
      %v4859 = vcombine.high %v4802, %v4818
      %v4861 = vunpack.c.l.s4 1934713408
      %v4862 = vunpack.c.0.s8 %v4861
      %v4863 = vlaneseq
      %v4864 = vshrl.u32 %v4863, 7
      %v4865 = vsub.s32 %v4862, %v4864
      %v4866 = vrot.slane %v4858, %v4865
      %v4868 = vunpack.c.l.s4 1934713408
      %v4869 = vunpack.c.0.s8 %v4868
      %v4870 = vlaneseq
      %v4871 = vshrl.u32 %v4870, 7
      %v4872 = vsub.s32 %v4869, %v4871
      %v4873 = vrot.slane %v4859, %v4872
      %v4874 = vcombine.low %v4809, %v4825
      %v4875 = vcombine.high %v4809, %v4825
      %v4877 = vunpack.c.l.s4 1934713408
      %v4878 = vunpack.c.0.s8 %v4877
      %v4879 = vlaneseq
      %v4880 = vshrl.u32 %v4879, 7
      %v4881 = vsub.s32 %v4878, %v4880
      %v4882 = vrot.slane %v4874, %v4881
      %v4884 = vunpack.c.l.s4 1934713408
      %v4885 = vunpack.c.0.s8 %v4884
      %v4886 = vlaneseq
      %v4887 = vshrl.u32 %v4886, 7
      %v4888 = vsub.s32 %v4885, %v4887
      %v4889 = vrot.slane %v4875, %v4888
      %v4890 = vcombine.low %v4834, %v4850
      %v4891 = vcombine.high %v4834, %v4850
      %v4893 = vunpack.c.l.s4 1934713408
      %v4894 = vunpack.c.0.s8 %v4893
      %v4895 = vlaneseq
      %v4896 = vshrl.u32 %v4895, 7
      %v4897 = vsub.s32 %v4894, %v4896
      %v4898 = vrot.slane %v4890, %v4897
      %v4900 = vunpack.c.l.s4 1934713408
      %v4901 = vunpack.c.0.s8 %v4900
      %v4902 = vlaneseq
      %v4903 = vshrl.u32 %v4902, 7
      %v4904 = vsub.s32 %v4901, %v4903
      %v4905 = vrot.slane %v4891, %v4904
      %v4906 = vcombine.low %v4841, %v4857
      %v4907 = vcombine.high %v4841, %v4857
      %v4909 = vunpack.c.l.s4 1934713408
      %v4910 = vunpack.c.0.s8 %v4909
      %v4911 = vlaneseq
      %v4912 = vshrl.u32 %v4911, 7
      %v4913 = vsub.s32 %v4910, %v4912
      %v4914 = vrot.slane %v4906, %v4913
      %v4916 = vunpack.c.l.s4 1934713408
      %v4917 = vunpack.c.0.s8 %v4916
      %v4918 = vlaneseq
      %v4919 = vshrl.u32 %v4918, 7
      %v4920 = vsub.s32 %v4917, %v4919
      %v4921 = vrot.slane %v4907, %v4920
      %v4922 = vcombine.low %v4866, %v4898
      %v4923 = vcombine.high %v4866, %v4898
      %v4924 = vcombine.low %v4873, %v4905
      %v4925 = vcombine.high %v4873, %v4905
      %v4926 = vcombine.low %v4882, %v4914
      %v4927 = vcombine.high %v4882, %v4914
      %v4928 = vcombine.low %v4889, %v4921
      %v4929 = vcombine.high %v4889, %v4921
      %v4930 = vcombine.low %v4772, %v4783
      %v4931 = vcombine.high %v4772, %v4783
      %v4933 = vunpack.c.l.s4 1983009808
      %v4934 = vunpack.c.0.s8 %v4933
      %v4935 = vlaneseq
      %v4936 = vshrl.u32 %v4935, 7
      %v4937 = vsub.s32 %v4934, %v4936
      %v4938 = vrot.slane %v4930, %v4937
      %v4940 = vunpack.c.l.s4 1983009808
      %v4941 = vunpack.c.0.s8 %v4940
      %v4942 = vlaneseq
      %v4943 = vshrl.u32 %v4942, 7
      %v4944 = vsub.s32 %v4941, %v4943
      %v4945 = vrot.slane %v4931, %v4944
      %v4946 = vcombine.low %v4780, %v4786
      %v4947 = vcombine.high %v4780, %v4786
      %v4949 = vunpack.c.l.s4 1983009808
      %v4950 = vunpack.c.0.s8 %v4949
      %v4951 = vlaneseq
      %v4952 = vshrl.u32 %v4951, 7
      %v4953 = vsub.s32 %v4950, %v4952
      %v4954 = vrot.slane %v4946, %v4953
      %v4956 = vunpack.c.l.s4 1983009808
      %v4957 = vunpack.c.0.s8 %v4956
      %v4958 = vlaneseq
      %v4959 = vshrl.u32 %v4958, 7
      %v4960 = vsub.s32 %v4957, %v4959
      %v4961 = vrot.slane %v4947, %v4960
      %v4962 = vcombine.high %v4789, 0.0
      %v4964 = vunpack.c.l.s4 1983009808
      %v4965 = vunpack.c.0.s8 %v4964
      %v4966 = vlaneseq
      %v4967 = vshrl.u32 %v4966, 7
      %v4968 = vsub.s32 %v4965, %v4967
      %v4969 = vrot.slane %v4789, %v4968
      %v4971 = vunpack.c.l.s4 1983009808
      %v4972 = vunpack.c.0.s8 %v4971
      %v4973 = vlaneseq
      %v4974 = vshrl.u32 %v4973, 7
      %v4975 = vsub.s32 %v4972, %v4974
      %v4976 = vrot.slane %v4962, %v4975
      %v4977 = vcombine.high %v4792, 0.0
      %v4979 = vunpack.c.l.s4 1983009808
      %v4980 = vunpack.c.0.s8 %v4979
      %v4981 = vlaneseq
      %v4982 = vshrl.u32 %v4981, 7
      %v4983 = vsub.s32 %v4980, %v4982
      %v4984 = vrot.slane %v4792, %v4983
      %v4986 = vunpack.c.l.s4 1983009808
      %v4987 = vunpack.c.0.s8 %v4986
      %v4988 = vlaneseq
      %v4989 = vshrl.u32 %v4988, 7
      %v4990 = vsub.s32 %v4987, %v4989
      %v4991 = vrot.slane %v4977, %v4990
      %v4992 = vcombine.low %v4938, %v4954
      %v4993 = vcombine.high %v4938, %v4954
      %v4995 = vunpack.c.l.s4 1934713408
      %v4996 = vunpack.c.0.s8 %v4995
      %v4997 = vlaneseq
      %v4998 = vshrl.u32 %v4997, 7
      %v4999 = vsub.s32 %v4996, %v4998
      %v5000 = vrot.slane %v4992, %v4999
      %v5002 = vunpack.c.l.s4 1934713408
      %v5003 = vunpack.c.0.s8 %v5002
      %v5004 = vlaneseq
      %v5005 = vshrl.u32 %v5004, 7
      %v5006 = vsub.s32 %v5003, %v5005
      %v5007 = vrot.slane %v4993, %v5006
      %v5008 = vcombine.low %v4945, %v4961
      %v5009 = vcombine.high %v4945, %v4961
      %v5011 = vunpack.c.l.s4 1934713408
      %v5012 = vunpack.c.0.s8 %v5011
      %v5013 = vlaneseq
      %v5014 = vshrl.u32 %v5013, 7
      %v5015 = vsub.s32 %v5012, %v5014
      %v5016 = vrot.slane %v5008, %v5015
      %v5018 = vunpack.c.l.s4 1934713408
      %v5019 = vunpack.c.0.s8 %v5018
      %v5020 = vlaneseq
      %v5021 = vshrl.u32 %v5020, 7
      %v5022 = vsub.s32 %v5019, %v5021
      %v5023 = vrot.slane %v5009, %v5022
      %v5024 = vcombine.low %v4969, %v4984
      %v5025 = vcombine.high %v4969, %v4984
      %v5027 = vunpack.c.l.s4 1934713408
      %v5028 = vunpack.c.0.s8 %v5027
      %v5029 = vlaneseq
      %v5030 = vshrl.u32 %v5029, 7
      %v5031 = vsub.s32 %v5028, %v5030
      %v5032 = vrot.slane %v5024, %v5031
      %v5034 = vunpack.c.l.s4 1934713408
      %v5035 = vunpack.c.0.s8 %v5034
      %v5036 = vlaneseq
      %v5037 = vshrl.u32 %v5036, 7
      %v5038 = vsub.s32 %v5035, %v5037
      %v5039 = vrot.slane %v5025, %v5038
      %v5040 = vcombine.low %v4976, %v4991
      %v5041 = vcombine.high %v4976, %v4991
      %v5043 = vunpack.c.l.s4 1934713408
      %v5044 = vunpack.c.0.s8 %v5043
      %v5045 = vlaneseq
      %v5046 = vshrl.u32 %v5045, 7
      %v5047 = vsub.s32 %v5044, %v5046
      %v5048 = vrot.slane %v5040, %v5047
      %v5050 = vunpack.c.l.s4 1934713408
      %v5051 = vunpack.c.0.s8 %v5050
      %v5052 = vlaneseq
      %v5053 = vshrl.u32 %v5052, 7
      %v5054 = vsub.s32 %v5051, %v5053
      %v5055 = vrot.slane %v5041, %v5054
      %v5056 = vcombine.low %v5000, %v5032
      %v5057 = vcombine.high %v5000, %v5032
      %v5058 = vcombine.low %v5007, %v5039
      %v5059 = vcombine.high %v5007, %v5039
      %v5060 = vcombine.low %v5016, %v5048
      %v5061 = vcombine.high %v5016, %v5048
      %v5062 = vcombine.low %v5023, %v5055
      %v5063 = vcombine.high %v5023, %v5055
      %v5072 = vrot.slane %v4922, 1
      %v5073 = vrot.slane %v4923, 1
      %v5074 = vrot.slane %v4924, 1
      %v5075 = vrot.slane %v4925, 1
      %v5076 = vrot.slane %v4926, 1
      %v5077 = vrot.slane %v4927, 1
      %v5078 = vrot.slane %v4928, 1
      %v5079 = vrot.slane %v4929, 1
      %vm5096 = vcmask 1040384
      %v5097 = vrot.slane %v4922, 7
      %v5098 = vrot.slane %v5056, 7
      %v5099 = vsel %vm5096, %v5097, %v5098
      %v5100 = vrot.slane %v4923, 7
      %v5101 = vrot.slane %v5057, 7
      %v5102 = vsel %vm5096, %v5100, %v5101
      %v5103 = vrot.slane %v4924, 7
      %v5104 = vrot.slane %v5058, 7
      %v5105 = vsel %vm5096, %v5103, %v5104
      %v5106 = vrot.slane %v4925, 7
      %v5107 = vrot.slane %v5059, 7
      %v5108 = vsel %vm5096, %v5106, %v5107
      %v5109 = vrot.slane %v4926, 7
      %v5110 = vrot.slane %v5060, 7
      %v5111 = vsel %vm5096, %v5109, %v5110
      %v5112 = vrot.slane %v4927, 7
      %v5113 = vrot.slane %v5061, 7
      %v5114 = vsel %vm5096, %v5112, %v5113
      %v5115 = vrot.slane %v4928, 7
      %v5116 = vrot.slane %v5062, 7
      %v5117 = vsel %vm5096, %v5115, %v5116
      %v5118 = vrot.slane %v4929, 7
      %v5119 = vrot.slane %v5063, 7
      %v5120 = vsel %vm5096, %v5118, %v5119
      %v5137 = vrot.slane %v5056, 5
      %v5138 = vrot.slane %v5057, 5
      %v5139 = vrot.slane %v5058, 5
      %v5140 = vrot.slane %v5059, 5
      %v5141 = vrot.slane %v5060, 5
      %v5142 = vrot.slane %v5061, 5
      %v5143 = vrot.slane %v5062, 5
      %v5144 = vrot.slane %v5063, 5
      %v5153 = vsel %vm5096, %v5072, %v5097
      %v5154 = vsel %vm5096, %v5073, %v5100
      %v5155 = vsel %vm5096, %v5074, %v5103
      %v5156 = vsel %vm5096, %v5075, %v5106
      %v5157 = vsel %vm5096, %v5076, %v5109
      %v5158 = vsel %vm5096, %v5077, %v5112
      %v5159 = vsel %vm5096, %v5078, %v5115
      %v5160 = vsel %vm5096, %v5079, %v5118
      %vm5161 = vcmask 1046528
      %v5162 = vsel %vm5161, %v5099, %v5137
      %v5163 = vsel %vm5161, %v5102, %v5138
      %v5164 = vsel %vm5161, %v5105, %v5139
      %v5165 = vsel %vm5161, %v5108, %v5140
      %v5166 = vsel %vm5161, %v5111, %v5141
      %v5167 = vsel %vm5161, %v5114, %v5142
      %v5168 = vsel %vm5161, %v5117, %v5143
      %v5169 = vsel %vm5161, %v5120, %v5144
      %5186 = vrot.lane.b32.xlu0 %v5153, 127
      %v5187 = vpop.permute.xlu0 %5186
      %5188 = vrot.lane.b32.xlu0 %v5162, 127
      %v5189 = vpop.permute.xlu0 %5188
      %5190 = vrot.lane.b32.xlu0 %v5154, 127
      %v5191 = vpop.permute.xlu0 %5190
      %5192 = vrot.lane.b32.xlu0 %v5163, 127
      %v5193 = vpop.permute.xlu0 %5192
      %5194 = vrot.lane.b32.xlu0 %v5155, 127
      %v5195 = vpop.permute.xlu0 %5194
      %5196 = vrot.lane.b32.xlu0 %v5164, 127
      %v5197 = vpop.permute.xlu0 %5196
      %5198 = vrot.lane.b32.xlu0 %v5156, 127
      %v5199 = vpop.permute.xlu0 %5198
      %5200 = vrot.lane.b32.xlu0 %v5165, 127
      %v5201 = vpop.permute.xlu0 %5200
      %5202 = vrot.lane.b32.xlu0 %v5157, 127
      %v5203 = vpop.permute.xlu0 %5202
      %5204 = vrot.lane.b32.xlu0 %v5166, 127
      %v5205 = vpop.permute.xlu0 %5204
      %5206 = vrot.lane.b32.xlu0 %v5158, 127
      %v5207 = vpop.permute.xlu0 %5206
      %5208 = vrot.lane.b32.xlu0 %v5167, 127
      %v5209 = vpop.permute.xlu0 %5208
      %5210 = vrot.lane.b32.xlu0 %v5159, 127
      %v5211 = vpop.permute.xlu0 %5210
      %5212 = vrot.lane.b32.xlu0 %v5168, 127
      %v5213 = vpop.permute.xlu0 %5212
      %5214 = vrot.lane.b32.xlu0 %v5160, 127
      %v5215 = vpop.permute.xlu0 %5214
      %5216 = vrot.lane.b32.xlu0 %v5169, 127
      %v5217 = vpop.permute.xlu0 %5216
      %5234 = vrot.lane.b32.xlu0 %v5153, 1
      %v5235 = vpop.permute.xlu0 %5234
      %5236 = vrot.lane.b32.xlu0 %v5162, 1
      %v5237 = vpop.permute.xlu0 %5236
      %5238 = vrot.lane.b32.xlu0 %v5154, 1
      %v5239 = vpop.permute.xlu0 %5238
      %5240 = vrot.lane.b32.xlu0 %v5163, 1
      %v5241 = vpop.permute.xlu0 %5240
      %5242 = vrot.lane.b32.xlu0 %v5155, 1
      %v5243 = vpop.permute.xlu0 %5242
      %5244 = vrot.lane.b32.xlu0 %v5164, 1
      %v5245 = vpop.permute.xlu0 %5244
      %5246 = vrot.lane.b32.xlu0 %v5156, 1
      %v5247 = vpop.permute.xlu0 %5246
      %5248 = vrot.lane.b32.xlu0 %v5165, 1
      %v5249 = vpop.permute.xlu0 %5248
      %5250 = vrot.lane.b32.xlu0 %v5157, 1
      %v5251 = vpop.permute.xlu0 %5250
      %5252 = vrot.lane.b32.xlu0 %v5166, 1
      %v5253 = vpop.permute.xlu0 %5252
      %5254 = vrot.lane.b32.xlu0 %v5158, 1
      %v5255 = vpop.permute.xlu0 %5254
      %5256 = vrot.lane.b32.xlu0 %v5167, 1
      %v5257 = vpop.permute.xlu0 %5256
      %5258 = vrot.lane.b32.xlu0 %v5159, 1
      %v5259 = vpop.permute.xlu0 %5258
      %5260 = vrot.lane.b32.xlu0 %v5168, 1
      %v5261 = vpop.permute.xlu0 %5260
      %5262 = vrot.lane.b32.xlu0 %v5160, 1
      %v5263 = vpop.permute.xlu0 %5262
      %5264 = vrot.lane.b32.xlu0 %v5169, 1
      %v5265 = vpop.permute.xlu0 %5264
      %5282 = vrot.lane.b32.xlu0 %v5153, 3
      %v5283 = vpop.permute.xlu0 %5282
      %5284 = vrot.lane.b32.xlu0 %v5162, 3
      %v5285 = vpop.permute.xlu0 %5284
      %5286 = vrot.lane.b32.xlu0 %v5154, 3
      %v5287 = vpop.permute.xlu0 %5286
      %5288 = vrot.lane.b32.xlu0 %v5163, 3
      %v5289 = vpop.permute.xlu0 %5288
      %5290 = vrot.lane.b32.xlu0 %v5155, 3
      %v5291 = vpop.permute.xlu0 %5290
      %5292 = vrot.lane.b32.xlu0 %v5164, 3
      %v5293 = vpop.permute.xlu0 %5292
      %5294 = vrot.lane.b32.xlu0 %v5156, 3
      %v5295 = vpop.permute.xlu0 %5294
      %5296 = vrot.lane.b32.xlu0 %v5165, 3
      %v5297 = vpop.permute.xlu0 %5296
      %5298 = vrot.lane.b32.xlu0 %v5157, 3
      %v5299 = vpop.permute.xlu0 %5298
      %5300 = vrot.lane.b32.xlu0 %v5166, 3
      %v5301 = vpop.permute.xlu0 %5300
      %5302 = vrot.lane.b32.xlu0 %v5158, 3
      %v5303 = vpop.permute.xlu0 %5302
      %5304 = vrot.lane.b32.xlu0 %v5167, 3
      %v5305 = vpop.permute.xlu0 %5304
      %5306 = vrot.lane.b32.xlu0 %v5159, 3
      %v5307 = vpop.permute.xlu0 %5306
      %5308 = vrot.lane.b32.xlu0 %v5168, 3
      %v5309 = vpop.permute.xlu0 %5308
      %5310 = vrot.lane.b32.xlu0 %v5160, 3
      %v5311 = vpop.permute.xlu0 %5310
      %5312 = vrot.lane.b32.xlu0 %v5169, 3
      %v5313 = vpop.permute.xlu0 %5312
      %vm5330 = vcmask 7168
      %v5331 = vsel %vm5330, %v5187, %v5235
      %v5332 = vsel %vm5330, %v5189, %v5237
      %v5333 = vsel %vm5330, %v5191, %v5239
      %v5334 = vsel %vm5330, %v5193, %v5241
      %v5335 = vsel %vm5330, %v5195, %v5243
      %v5336 = vsel %vm5330, %v5197, %v5245
      %v5337 = vsel %vm5330, %v5199, %v5247
      %v5338 = vsel %vm5330, %v5201, %v5249
      %v5339 = vsel %vm5330, %v5203, %v5251
      %v5340 = vsel %vm5330, %v5205, %v5253
      %v5341 = vsel %vm5330, %v5207, %v5255
      %v5342 = vsel %vm5330, %v5209, %v5257
      %v5343 = vsel %vm5330, %v5211, %v5259
      %v5344 = vsel %vm5330, %v5213, %v5261
      %v5345 = vsel %vm5330, %v5215, %v5263
      %v5346 = vsel %vm5330, %v5217, %v5265
      %vm5347 = vcmask 121856
      %v5348 = vsel %vm5347, %v5331, %v5283
      %v5349 = vsel %vm5347, %v5332, %v5285
      %v5350 = vsel %vm5347, %v5333, %v5287
      %v5351 = vsel %vm5347, %v5334, %v5289
      %v5352 = vsel %vm5347, %v5335, %v5291
      %v5353 = vsel %vm5347, %v5336, %v5293
      %v5354 = vsel %vm5347, %v5337, %v5295
      %v5355 = vsel %vm5347, %v5338, %v5297
      %v5356 = vsel %vm5347, %v5339, %v5299
      %v5357 = vsel %vm5347, %v5340, %v5301
      %v5358 = vsel %vm5347, %v5341, %v5303
      %v5359 = vsel %vm5347, %v5342, %v5305
      %v5360 = vsel %vm5347, %v5343, %v5307
      %v5361 = vsel %vm5347, %v5344, %v5309
      %v5362 = vsel %vm5347, %v5345, %v5311
      %v5363 = vsel %vm5347, %v5346, %v5313
      %v5364 = vcombine.low %v5348, %v5352
      %v5365 = vcombine.high %v5348, %v5352
      %v5367 = vunpack.c.l.s4 1983009808
      %v5368 = vunpack.c.0.s8 %v5367
      %v5369 = vlaneseq
      %v5370 = vshrl.u32 %v5369, 7
      %v5371 = vsub.s32 %v5368, %v5370
      %v5372 = vrot.slane %v5364, %v5371
      %v5374 = vunpack.c.l.s4 1983009808
      %v5375 = vunpack.c.0.s8 %v5374
      %v5376 = vlaneseq
      %v5377 = vshrl.u32 %v5376, 7
      %v5378 = vsub.s32 %v5375, %v5377
      %v5379 = vrot.slane %v5365, %v5378
      %v5380 = vcombine.low %v5350, %v5354
      %v5381 = vcombine.high %v5350, %v5354
      %v5383 = vunpack.c.l.s4 1983009808
      %v5384 = vunpack.c.0.s8 %v5383
      %v5385 = vlaneseq
      %v5386 = vshrl.u32 %v5385, 7
      %v5387 = vsub.s32 %v5384, %v5386
      %v5388 = vrot.slane %v5380, %v5387
      %v5390 = vunpack.c.l.s4 1983009808
      %v5391 = vunpack.c.0.s8 %v5390
      %v5392 = vlaneseq
      %v5393 = vshrl.u32 %v5392, 7
      %v5394 = vsub.s32 %v5391, %v5393
      %v5395 = vrot.slane %v5381, %v5394
      %v5396 = vcombine.low %v5356, %v5360
      %v5397 = vcombine.high %v5356, %v5360
      %v5399 = vunpack.c.l.s4 1983009808
      %v5400 = vunpack.c.0.s8 %v5399
      %v5401 = vlaneseq
      %v5402 = vshrl.u32 %v5401, 7
      %v5403 = vsub.s32 %v5400, %v5402
      %v5404 = vrot.slane %v5396, %v5403
      %v5406 = vunpack.c.l.s4 1983009808
      %v5407 = vunpack.c.0.s8 %v5406
      %v5408 = vlaneseq
      %v5409 = vshrl.u32 %v5408, 7
      %v5410 = vsub.s32 %v5407, %v5409
      %v5411 = vrot.slane %v5397, %v5410
      %v5412 = vcombine.low %v5358, %v5362
      %v5413 = vcombine.high %v5358, %v5362
      %v5415 = vunpack.c.l.s4 1983009808
      %v5416 = vunpack.c.0.s8 %v5415
      %v5417 = vlaneseq
      %v5418 = vshrl.u32 %v5417, 7
      %v5419 = vsub.s32 %v5416, %v5418
      %v5420 = vrot.slane %v5412, %v5419
      %v5422 = vunpack.c.l.s4 1983009808
      %v5423 = vunpack.c.0.s8 %v5422
      %v5424 = vlaneseq
      %v5425 = vshrl.u32 %v5424, 7
      %v5426 = vsub.s32 %v5423, %v5425
      %v5427 = vrot.slane %v5413, %v5426
      %v5428 = vcombine.low %v5372, %v5388
      %v5429 = vcombine.high %v5372, %v5388
      %v5431 = vunpack.c.l.s4 1934713408
      %v5432 = vunpack.c.0.s8 %v5431
      %v5433 = vlaneseq
      %v5434 = vshrl.u32 %v5433, 7
      %v5435 = vsub.s32 %v5432, %v5434
      %v5436 = vrot.slane %v5428, %v5435
      %v5438 = vunpack.c.l.s4 1934713408
      %v5439 = vunpack.c.0.s8 %v5438
      %v5440 = vlaneseq
      %v5441 = vshrl.u32 %v5440, 7
      %v5442 = vsub.s32 %v5439, %v5441
      %v5443 = vrot.slane %v5429, %v5442
      %v5444 = vcombine.low %v5379, %v5395
      %v5445 = vcombine.high %v5379, %v5395
      %v5447 = vunpack.c.l.s4 1934713408
      %v5448 = vunpack.c.0.s8 %v5447
      %v5449 = vlaneseq
      %v5450 = vshrl.u32 %v5449, 7
      %v5451 = vsub.s32 %v5448, %v5450
      %v5452 = vrot.slane %v5444, %v5451
      %v5454 = vunpack.c.l.s4 1934713408
      %v5455 = vunpack.c.0.s8 %v5454
      %v5456 = vlaneseq
      %v5457 = vshrl.u32 %v5456, 7
      %v5458 = vsub.s32 %v5455, %v5457
      %v5459 = vrot.slane %v5445, %v5458
      %v5460 = vcombine.low %v5404, %v5420
      %v5461 = vcombine.high %v5404, %v5420
      %v5463 = vunpack.c.l.s4 1934713408
      %v5464 = vunpack.c.0.s8 %v5463
      %v5465 = vlaneseq
      %v5466 = vshrl.u32 %v5465, 7
      %v5467 = vsub.s32 %v5464, %v5466
      %v5468 = vrot.slane %v5460, %v5467
      %v5470 = vunpack.c.l.s4 1934713408
      %v5471 = vunpack.c.0.s8 %v5470
      %v5472 = vlaneseq
      %v5473 = vshrl.u32 %v5472, 7
      %v5474 = vsub.s32 %v5471, %v5473
      %v5475 = vrot.slane %v5461, %v5474
      %v5476 = vcombine.low %v5411, %v5427
      %v5477 = vcombine.high %v5411, %v5427
      %v5479 = vunpack.c.l.s4 1934713408
      %v5480 = vunpack.c.0.s8 %v5479
      %v5481 = vlaneseq
      %v5482 = vshrl.u32 %v5481, 7
      %v5483 = vsub.s32 %v5480, %v5482
      %v5484 = vrot.slane %v5476, %v5483
      %v5486 = vunpack.c.l.s4 1934713408
      %v5487 = vunpack.c.0.s8 %v5486
      %v5488 = vlaneseq
      %v5489 = vshrl.u32 %v5488, 7
      %v5490 = vsub.s32 %v5487, %v5489
      %v5491 = vrot.slane %v5477, %v5490
      %v5492 = vcombine.low %v5436, %v5468
      %v5493 = vcombine.high %v5436, %v5468
      %v5494 = vcombine.low %v5443, %v5475
      %v5495 = vcombine.high %v5443, %v5475
      %v5496 = vcombine.low %v5452, %v5484
      %v5497 = vcombine.high %v5452, %v5484
      %v5498 = vcombine.low %v5459, %v5491
      %v5499 = vcombine.high %v5459, %v5491
      %v5500 = vcombine.low %v5349, %v5353
      %v5501 = vcombine.high %v5349, %v5353
      %v5503 = vunpack.c.l.s4 1983009808
      %v5504 = vunpack.c.0.s8 %v5503
      %v5505 = vlaneseq
      %v5506 = vshrl.u32 %v5505, 7
      %v5507 = vsub.s32 %v5504, %v5506
      %v5508 = vrot.slane %v5500, %v5507
      %v5510 = vunpack.c.l.s4 1983009808
      %v5511 = vunpack.c.0.s8 %v5510
      %v5512 = vlaneseq
      %v5513 = vshrl.u32 %v5512, 7
      %v5514 = vsub.s32 %v5511, %v5513
      %v5515 = vrot.slane %v5501, %v5514
      %v5516 = vcombine.low %v5351, %v5355
      %v5517 = vcombine.high %v5351, %v5355
      %v5519 = vunpack.c.l.s4 1983009808
      %v5520 = vunpack.c.0.s8 %v5519
      %v5521 = vlaneseq
      %v5522 = vshrl.u32 %v5521, 7
      %v5523 = vsub.s32 %v5520, %v5522
      %v5524 = vrot.slane %v5516, %v5523
      %v5526 = vunpack.c.l.s4 1983009808
      %v5527 = vunpack.c.0.s8 %v5526
      %v5528 = vlaneseq
      %v5529 = vshrl.u32 %v5528, 7
      %v5530 = vsub.s32 %v5527, %v5529
      %v5531 = vrot.slane %v5517, %v5530
      %v5532 = vcombine.low %v5357, %v5361
      %v5533 = vcombine.high %v5357, %v5361
      %v5535 = vunpack.c.l.s4 1983009808
      %v5536 = vunpack.c.0.s8 %v5535
      %v5537 = vlaneseq
      %v5538 = vshrl.u32 %v5537, 7
      %v5539 = vsub.s32 %v5536, %v5538
      %v5540 = vrot.slane %v5532, %v5539
      %v5542 = vunpack.c.l.s4 1983009808
      %v5543 = vunpack.c.0.s8 %v5542
      %v5544 = vlaneseq
      %v5545 = vshrl.u32 %v5544, 7
      %v5546 = vsub.s32 %v5543, %v5545
      %v5547 = vrot.slane %v5533, %v5546
      %v5548 = vcombine.low %v5359, %v5363
      %v5549 = vcombine.high %v5359, %v5363
      %v5551 = vunpack.c.l.s4 1983009808
      %v5552 = vunpack.c.0.s8 %v5551
      %v5553 = vlaneseq
      %v5554 = vshrl.u32 %v5553, 7
      %v5555 = vsub.s32 %v5552, %v5554
      %v5556 = vrot.slane %v5548, %v5555
      %v5558 = vunpack.c.l.s4 1983009808
      %v5559 = vunpack.c.0.s8 %v5558
      %v5560 = vlaneseq
      %v5561 = vshrl.u32 %v5560, 7
      %v5562 = vsub.s32 %v5559, %v5561
      %v5563 = vrot.slane %v5549, %v5562
      %v5564 = vcombine.low %v5508, %v5524
      %v5565 = vcombine.high %v5508, %v5524
      %v5567 = vunpack.c.l.s4 1934713408
      %v5568 = vunpack.c.0.s8 %v5567
      %v5569 = vlaneseq
      %v5570 = vshrl.u32 %v5569, 7
      %v5571 = vsub.s32 %v5568, %v5570
      %v5572 = vrot.slane %v5564, %v5571
      %v5574 = vunpack.c.l.s4 1934713408
      %v5575 = vunpack.c.0.s8 %v5574
      %v5576 = vlaneseq
      %v5577 = vshrl.u32 %v5576, 7
      %v5578 = vsub.s32 %v5575, %v5577
      %v5579 = vrot.slane %v5565, %v5578
      %v5580 = vcombine.low %v5515, %v5531
      %v5581 = vcombine.high %v5515, %v5531
      %v5583 = vunpack.c.l.s4 1934713408
      %v5584 = vunpack.c.0.s8 %v5583
      %v5585 = vlaneseq
      %v5586 = vshrl.u32 %v5585, 7
      %v5587 = vsub.s32 %v5584, %v5586
      %v5588 = vrot.slane %v5580, %v5587
      %v5590 = vunpack.c.l.s4 1934713408
      %v5591 = vunpack.c.0.s8 %v5590
      %v5592 = vlaneseq
      %v5593 = vshrl.u32 %v5592, 7
      %v5594 = vsub.s32 %v5591, %v5593
      %v5595 = vrot.slane %v5581, %v5594
      %v5596 = vcombine.low %v5540, %v5556
      %v5597 = vcombine.high %v5540, %v5556
      %v5599 = vunpack.c.l.s4 1934713408
      %v5600 = vunpack.c.0.s8 %v5599
      %v5601 = vlaneseq
      %v5602 = vshrl.u32 %v5601, 7
      %v5603 = vsub.s32 %v5600, %v5602
      %v5604 = vrot.slane %v5596, %v5603
      %v5606 = vunpack.c.l.s4 1934713408
      %v5607 = vunpack.c.0.s8 %v5606
      %v5608 = vlaneseq
      %v5609 = vshrl.u32 %v5608, 7
      %v5610 = vsub.s32 %v5607, %v5609
      %v5611 = vrot.slane %v5597, %v5610
      %v5612 = vcombine.low %v5547, %v5563
      %v5613 = vcombine.high %v5547, %v5563
      %v5615 = vunpack.c.l.s4 1934713408
      %v5616 = vunpack.c.0.s8 %v5615
      %v5617 = vlaneseq
      %v5618 = vshrl.u32 %v5617, 7
      %v5619 = vsub.s32 %v5616, %v5618
      %v5620 = vrot.slane %v5612, %v5619
      %v5622 = vunpack.c.l.s4 1934713408
      %v5623 = vunpack.c.0.s8 %v5622
      %v5624 = vlaneseq
      %v5625 = vshrl.u32 %v5624, 7
      %v5626 = vsub.s32 %v5623, %v5625
      %v5627 = vrot.slane %v5613, %v5626
      %v5628 = vcombine.low %v5572, %v5604
      %v5629 = vcombine.high %v5572, %v5604
      %v5630 = vcombine.low %v5579, %v5611
      %v5631 = vcombine.high %v5579, %v5611
      %v5632 = vcombine.low %v5588, %v5620
      %v5633 = vcombine.high %v5588, %v5620
      %v5634 = vcombine.low %v5595, %v5627
      %v5635 = vcombine.high %v5595, %v5627
      %5637 = vrot.lane.b32.xlu0 %v5493, 16
      %v5638 = vpop.permute.xlu0 %5637
      %5641 = vrot.lane.b32.xlu0 %v5494, 32
      %v5642 = vpop.permute.xlu0 %5641
      %5645 = vrot.lane.b32.xlu0 %v5495, 48
      %v5646 = vpop.permute.xlu0 %5645
      %5649 = vrot.lane.b32.xlu0 %v5496, 64
      %v5650 = vpop.permute.xlu0 %5649
      %5653 = vrot.lane.b32.xlu0 %v5497, 80
      %v5654 = vpop.permute.xlu0 %5653
      %5657 = vrot.lane.b32.xlu0 %v5498, 96
      %v5658 = vpop.permute.xlu0 %5657
      %5661 = vrot.lane.b32.xlu0 %v5499, 112
      %v5662 = vpop.permute.xlu0 %5661
      %5665 = vrot.lane.b32.xlu0 %v5629, 16
      %v5666 = vpop.permute.xlu0 %5665
      %5669 = vrot.lane.b32.xlu0 %v5630, 32
      %v5670 = vpop.permute.xlu0 %5669
      %5673 = vrot.lane.b32.xlu0 %v5631, 48
      %v5674 = vpop.permute.xlu0 %5673
      %5677 = vrot.lane.b32.xlu0 %v5632, 64
      %v5678 = vpop.permute.xlu0 %5677
      %5681 = vrot.lane.b32.xlu0 %v5633, 80
      %v5682 = vpop.permute.xlu0 %5681
      %5685 = vrot.lane.b32.xlu0 %v5634, 96
      %v5686 = vpop.permute.xlu0 %5685
      %5689 = vrot.lane.b32.xlu0 %v5635, 112
      %v5690 = vpop.permute.xlu0 %5689
      %vm5692 = vcmask 130048
      %v5693 = vsel %vm5692, %v5492, %v5638
      %vm5694 = vcmask 261120
      %v5695 = vsel %vm5694, %v5693, %v5642
      %vm5696 = vcmask 392192
      %v5697 = vsel %vm5696, %v5695, %v5646
      %vm5698 = vcmask 523264
      %v5699 = vsel %vm5698, %v5697, %v5650
      %vm5700 = vcmask 654336
      %v5701 = vsel %vm5700, %v5699, %v5654
      %vm5702 = vcmask 785408
      %v5703 = vsel %vm5702, %v5701, %v5658
      %v5704 = vsel %vm4592, %v5703, %v5662
      %v5705 = vsel %vm5692, %v5628, %v5666
      %v5706 = vsel %vm5694, %v5705, %v5670
      %v5707 = vsel %vm5696, %v5706, %v5674
      %v5708 = vsel %vm5698, %v5707, %v5678
      %v5709 = vsel %vm5700, %v5708, %v5682
      %v5710 = vsel %vm5702, %v5709, %v5686
      %v5711 = vsel %vm4592, %v5710, %v5690
      %v5712 = vadd.f32 %v5704, %v5711
      %5713 = vadd.xlane.f32.xlu0 %v5712
      %v5714 = vpop.xlane.xlu0 %5713
      %5715 = vst.msk [vmem:[%s288] sm:$0xff] %vm5330, %v5714
      %v5716 = vmul.f32 %v5704, %v5704
      %v5717 = vmul.f32 %v5711, %v5711
      %v5718 = vadd.f32 %v5716, %v5717
      %5719 = vadd.xlane.f32.xlu0 %v5718
      %v5720 = vpop.xlane.xlu0 %5719
      %5721 = vst.msk [vmem:[%s292] sm:$0xff] %vm5330, %v5720
      %v5722 = vpack.c.bf16 %v5704, %v5704
      %v5723 = vpack.c.bf16 %v5711, %v5711
      %v5726 = vunpack.c.l.b16 %v5722
      %v5727 = vunpack.c.l.b16 %v5723
      %v5728 = vpack.c.b16 %v5727, %v5726
      %5730 = vst [vmem:[%s284] sm:$0xff] %v5728
      %p5731 = scmp.lt.s32.totalorder %s18, 1
      %s5732 = scalar_select %p5731, %s18, 1
      %s5733 = smul.addr %s5732, 2
      %s5734 = smul.addr %s5733, 4
      %s5735 = scalar_lea.vmem %s4, %s5734
      %p5736 = scmp.lt.s32.totalorder %s18, 1
      %s5737 = scalar_select %p5736, %s18, 1
      %s5738 = smul.addr %s5737, 8
      %s5739 = scalar_lea.vmem %s5, %s5738
      %p5740 = scmp.lt.s32.totalorder %s18, 1
      %s5741 = scalar_select %p5740, %s18, 1
      %s5742 = smul.addr %s5741, 8
      %s5743 = scalar_lea.vmem %s6, %s5742
      // Predicated region
      $region37: #{uupblock_forward.7} parent=35 // pred_check
        %p5744 = pneg %p130
      $region38: #{uupblock_forward.7} parent=35 // pred_check_branch
        %5746 = sbr.rel (%p5744) target = $region40
      $region39: #{uupblock_forward.7} parent=35 // pred_region
        _
      $region40: #{uupblock_forward.7} parent=35 // pred_fallthru
        _
      // Predicated region
      $region41: #{uupblock_forward.7} parent=35 // pred_check
        %p5747 = pneg %p156
      $region42: #{uupblock_forward.7} parent=35 // pred_check_branch
        %5749 = sbr.rel (%p5747) target = $region44
      $region43: #{uupblock_forward.7} parent=35 // pred_region
        _
      $region44: #{uupblock_forward.7} parent=35 // pred_fallthru
        _
      // Predicated region
      $region45: #{uupblock_forward.7} parent=35 // pred_check
        %p5750 = pneg %p182
      $region46: #{uupblock_forward.7} parent=35 // pred_check_branch
        %5752 = sbr.rel (%p5750) target = $region48
      $region47: #{uupblock_forward.7} parent=35 // pred_region
        _
      $region48: #{uupblock_forward.7} parent=35 // pred_fallthru
        _
    $region36: #{uupblock_forward.7} parent=5 // pred_fallthru
      _
    %p5753 = scmp.le.s32.totalorder 2, %s13
    // Predicated region
    $region49: #{uupblock_forward.7} parent=5 // pred_check
      %p5754 = pneg %p5753
    $region50: #{uupblock_forward.7} parent=5 // pred_check_branch
      %5756 = sbr.rel (%p5754) target = $region52
    $region51: #{uupblock_forward.7} parent=5 // pred_region
      %s5757 = ssub.s32 %s13, 2
      // Predicated region
      $region53: #{uupblock_forward.7} parent=51 // pred_check
        %p5758 = pneg %p136
      $region54: #{uupblock_forward.7} parent=51 // pred_check_branch
        %5760 = sbr.rel (%p5758) target = $region56
      $region55: #{uupblock_forward.7} parent=51 // pred_region
        %p5761 = scmp.lt.s32.totalorder %s19, 1
        %s5762 = scalar_select %p5761, %s19, 1
        %s5763 = smul.addr %s5762, 2
        %s5764 = smul.addr %s5763, 4
        %s5765 = scalar_lea.vmem %s4, %s5764
      $region56: #{uupblock_forward.7} parent=51 // pred_fallthru
        _
      // Predicated region
      $region57: #{uupblock_forward.7} parent=51 // pred_check
        %p5766 = pneg %p162
      $region58: #{uupblock_forward.7} parent=51 // pred_check_branch
        %5768 = sbr.rel (%p5766) target = $region60
      $region59: #{uupblock_forward.7} parent=51 // pred_region
        %p5769 = scmp.lt.s32.totalorder %s19, 1
        %s5770 = scalar_select %p5769, %s19, 1
        %s5771 = smul.addr %s5770, 8
        %s5772 = scalar_lea.vmem %s5, %s5771
      $region60: #{uupblock_forward.7} parent=51 // pred_fallthru
        _
      // Predicated region
      $region61: #{uupblock_forward.7} parent=51 // pred_check
        %p5773 = pneg %p188
      $region62: #{uupblock_forward.7} parent=51 // pred_check_branch
        %5775 = sbr.rel (%p5773) target = $region64
      $region63: #{uupblock_forward.7} parent=51 // pred_region
        %p5776 = scmp.lt.s32.totalorder %s19, 1
        %s5777 = scalar_select %p5776, %s19, 1
        %s5778 = smul.addr %s5777, 8
        %s5779 = scalar_lea.vmem %s6, %s5778
      $region64: #{uupblock_forward.7} parent=51 // pred_fallthru
        _
    $region52: #{uupblock_forward.7} parent=5 // pred_fallthru
      _
  $region6: #{uupblock_forward.7} parent=0 // loop_footer
    %s17 = sadd.s32 1, %s13
  $region7: #{uupblock_forward.7} parent=0 // loop_footer_branch
    %12 = sbr.rel target = $region3
  $region8: #{uupblock_forward.7} parent=0 // loop_exit
    _

</llo_original>
